<compile_context>
chip_gen: v5e
topology: v5e:2x2
jax: 0.10.0
libtpu: 0.0.40
codegen_flags: <defaults>
</compile_context>

<pallas_src>
import functools

import jax
import jax.numpy as jnp
from jax import lax
from jax.experimental import pallas as pl
from jax.experimental.pallas import tpu as pltpu


def _leaky(x, slope):
    return jnp.where(x >= 0, x, x * slope)


# ----------------------------------------------------------------------------
# Fused FPN kernel: one grid step == one batch element, everything in VMEM.
# ----------------------------------------------------------------------------

def _fpn_kernel(x1_ref, x2_ref, x3_ref,
                w1_ref, b1_ref, w2_ref, b2_ref, w3_ref, b3_ref,
                wm2_ref, bm2_ref, wm1_ref, bm1_ref,
                t32_ref, t21_ref,
                o1_ref, o2_ref, o3_ref,
                g_ref, z3_ref, z2_ref,
                *, dims, slope):
    H1, W1, H2, W2, H3, W3, C, R1, R2 = dims

    def build_level(x_ref, w_ref, b_ref, zsrc_ref, t_ref, H, W, Wsrc, R):
        """s = leaky(1x1conv(x) + b) + up2x(zsrc); write s into the dx-folded,
        row-padded g bands, one block of R destination rows at a time."""
        # Zero only the halo / wrap lanes (W+1 at each end of every band); the
        # interior is fully overwritten below.  Done every grid step so it is
        # safe under "parallel" (megacore) scheduling.
        zeros_halo = jnp.zeros((3 * C, W + 1), jnp.bfloat16)
        g_ref[:, pl.ds(0, W + 1)] = zeros_halo
        g_ref[:, pl.ds((H + 1) * W - 1, W + 1)] = zeros_halo

        w = w_ref[...]
        b = b_ref[...]
        t = t_ref[...]
        blk = R * W
        col = lax.broadcasted_iota(jnp.int32, (1, blk), 1) % W

        for bi in range(H // R):                 # statically unrolled row blocks
            base = bi * blk
            lat = jnp.dot(w, x_ref[0, :, pl.ds(base, blk)],
                          preferred_element_type=jnp.float32)
            lat = _leaky(lat + b, slope)
            # 2x nearest upsample of the matching R/2 source rows via a tiny
            # block-invariant 0/1 matrix (exact: each output picks one source).
            src = zsrc_ref[:, pl.ds(bi * (R // 2) * Wsrc, (R // 2) * Wsrc)]
            up = jnp.dot(src, t, preferred_element_type=jnp.float32)
            s16 = (lat + up).astype(jnp.bfloat16)
            zero = jnp.zeros_like(s16)
            pbase = base + W                     # +1 padded-row offset
            g_ref[C:2 * C, pl.ds(pbase, blk)] = s16                                    # dx=1
            g_ref[0:C, pl.ds(pbase + 1, blk)] = jnp.where(col == W - 1, zero, s16)     # dx=0
            g_ref[2 * C:3 * C, pl.ds(pbase - 1, blk)] = jnp.where(col == 0, zero, s16)  # dx=2

    def merge_level(wm_ref, bm_ref, out_ref, z_ref, H, W, R):
        """3x3 conv (+ folded BN + leaky) over the g bands, row block by block.
        Each block is 3 MXU matmuls with K = 3*C and a register-sized acc."""
        wm = (wm_ref[0], wm_ref[1], wm_ref[2])
        bm = bm_ref[...]
        blk = R * W
        for bi in range(H // R):
            base = bi * blk
            acc = jnp.dot(wm[0], g_ref[:, pl.ds(base, blk)],
                          preferred_element_type=jnp.float32)
            acc += jnp.dot(wm[1], g_ref[:, pl.ds(base + W, blk)],
                           preferred_element_type=jnp.float32)
            acc += jnp.dot(wm[2], g_ref[:, pl.ds(base + 2 * W, blk)],
                           preferred_element_type=jnp.float32)
            y = _leaky(acc + bm, slope)
            out_ref[0, :, pl.ds(base, blk)] = y
            if z_ref is not None:
                z_ref[:, pl.ds(base, blk)] = y.astype(jnp.bfloat16)

    # Level 3: 1x1 lateral only (also the source of up3).
    o3 = _leaky(jnp.dot(w3_ref[...], x3_ref[0],
                        preferred_element_type=jnp.float32) + b3_ref[...], slope)
    o3_ref[0] = o3
    z3_ref[...] = o3.astype(jnp.bfloat16)

    # Level 2: lateral + nearest-2x(o3), then 3x3 merge (result kept for up2).
    build_level(x2_ref, w2_ref, b2_ref, z3_ref, t32_ref, H2, W2, W3, R2)
    merge_level(wm2_ref, bm2_ref, o2_ref, z2_ref, H2, W2, R2)

    # Level 1: lateral + nearest-2x(merged o2), then 3x3 merge.
    build_level(x1_ref, w1_ref, b1_ref, z2_ref, t21_ref, H1, W1, W2, R1)
    merge_level(wm1_ref, bm1_ref, o1_ref, None, H1, W1, R1)


# ----------------------------------------------------------------------------
# Wrapper
# ----------------------------------------------------------------------------

def _pick_row_block(h, w, target_lanes=128):
    """Largest even divisor R of h with R*w <= target_lanes (fallback 2)."""
    best = 2
    for r in range(2, h + 1, 2):
        if h % r == 0 and r * w <= target_lanes:
            best = r
    return best


def _upsample_block_matrix(r_dst, w_src, w_dst):
    """Block-invariant 0/1 matrix for exact-2x nearest upsampling of R/2 source
    rows into R destination rows: T[h*w_src+w, p*w_dst+j] = (h==p//2)&(w==j//2)."""
    r_src = r_dst // 2
    hh = jnp.arange(r_src)[:, None, None, None]
    ww = jnp.arange(w_src)[None, :, None, None]
    pp = jnp.arange(r_dst)[None, None, :, None]
    jj = jnp.arange(w_dst)[None, None, None, :]
    t = (hh == pp // 2) & (ww == jj // 2)
    return t.reshape(r_src * w_src, r_dst * w_dst).astype(jnp.bfloat16)


def _vmem_limit_bytes():
    # Generation-aware budget (~3/4 of physical VMEM: 64 MiB on v7x, 128 MiB
    # on v5e/v6e), well above the 16-32 MiB default scoped limit.
    cap = 128 * 1024 * 1024
    try:
        info = pltpu.get_tpu_info()
        cap = int(getattr(info, "vmem_capacity_bytes", cap)) or cap
    except Exception:
        pass
    return int(max(32 * 1024 * 1024, min(cap * 3 // 4, 96 * 1024 * 1024)))


def fpn_forward(inputs_nchw, packed, leaky):
    x1, x2, x3 = inputs_nchw
    N, C1, H1, W1 = x1.shape
    _, C2, H2, W2 = x2.shape
    _, C3, H3, W3 = x3.shape
    C = packed["output1"][0].shape[0]
    M1, M2, M3 = H1 * W1, H2 * W2, H3 * W3

    # TODO(synk): non-2x nearest sizes would need per-level index tables.
    assert H1 == 2 * H2 and W1 == 2 * W2 and H2 == 2 * H3 and W2 == 2 * W3, (
        "kernel assumes the exact 2x nearest upsampling used by RetinaFace")

    R1 = _pick_row_block(H1, W1)
    R2 = _pick_row_block(H2, W2)

    # NCHW -> (N, C, H*W) is a free reshape; bf16 halves the input DMA bytes.
    xs = (x1.reshape(N, C1, M1).astype(jnp.bfloat16),
          x2.reshape(N, C2, M2).astype(jnp.bfloat16),
          x3.reshape(N, C3, M3).astype(jnp.bfloat16))
    t32 = _upsample_block_matrix(R2, W3, W2)
    t21 = _upsample_block_matrix(R1, W2, W1)

    w1, b1 = packed["output1"]
    w2, b2 = packed["output2"]
    w3, b3 = packed["output3"]
    wm2, bm2 = packed["merge2"]
    wm1, bm1 = packed["merge1"]
    invariants = (w1, b1, w2, b2, w3, b3, wm2, bm2, wm1, bm1, t32, t21)
    operands = (*xs, *invariants)

    kern = functools.partial(
        _fpn_kernel,
        dims=(H1, W1, H2, W2, H3, W3, C, R1, R2),
        slope=float(leaky))

    out_shape = (jax.ShapeDtypeStruct((N, C, M1), jnp.float32),
                 jax.ShapeDtypeStruct((N, C, M2), jnp.float32),
                 jax.ShapeDtypeStruct((N, C, M3), jnp.float32))
    out_specs = (pl.BlockSpec((1, C, M1), lambda n: (n, 0, 0)),
                 pl.BlockSpec((1, C, M2), lambda n: (n, 0, 0)),
                 pl.BlockSpec((1, C, M3), lambda n: (n, 0, 0)))
    scratch_shapes = [
        pltpu.VMEM((3 * C, (H1 + 2) * W1), jnp.bfloat16),  # g bands (reused by both merges)
        pltpu.VMEM((C, M3), jnp.bfloat16),                 # o3 (source of up3)
        pltpu.VMEM((C, M2), jnp.bfloat16),                 # merged o2 (source of up2)
    ]

    def batch_spec(a):
        return pl.BlockSpec((1,) + a.shape[1:], lambda n: (n, 0, 0))

    def rep_spec(a, single_buffer):
        zeros = (0,) * a.ndim
        imap = lambda n, _z=zeros: _z
        if single_buffer:
            # Grid-invariant operands: no need for double buffering.
            return pl.BlockSpec(a.shape, imap, pipeline_mode=pl.Buffered(1))
        return pl.BlockSpec(a.shape, imap)

    def run(single_buffer):
        in_specs = ([batch_spec(a) for a in xs]
                    + [rep_spec(a, single_buffer) for a in invariants])
        return pl.pallas_call(
            kern,
            grid=(N,),
            in_specs=in_specs,
            out_specs=out_specs,
            out_shape=out_shape,
            scratch_shapes=scratch_shapes,
            compiler_params=pltpu.CompilerParams(
                dimension_semantics=("parallel",),
                vmem_limit_bytes=_vmem_limit_bytes()),
        )(*operands)

    try:
        o1, o2, o3 = run(single_buffer=True)
    except Exception:   # pl.Buffered(1) not supported -> default double buffering
        o1, o2, o3 = run(single_buffer=False)

    return [o1.reshape(N, C, H1, W1),
            o2.reshape(N, C, H2, W2),
            o3.reshape(N, C, H3, W3)]


# ----------------------------------------------------------------------------
# Parameter construction (deterministic), BN folding, one-time kernel packing
# ----------------------------------------------------------------------------

def _fold_bn(w, gamma, beta, mean, var, eps=1e-5):
    scale = gamma / jnp.sqrt(var + eps)           # broadcasts over Cout (last axis)
    return w * scale, beta - mean * scale


def init_fpn_params(key, in_channels_list, out_channels):
    leaky = 0.1 if out_channels <= 64 else 0.0
    ks = jax.random.split(key, 25)
    params = {"leaky": leaky}
    i = 0

    def bn_pack(k0, k1, k2, k3):
        gamma = 1.0 + 0.1 * jax.random.normal(k0, (out_channels,), jnp.float32)
        beta = 0.1 * jax.random.normal(k1, (out_channels,), jnp.float32)
        mean = 0.05 * jax.random.normal(k2, (out_channels,), jnp.float32)
        var = 1.0 + 0.1 * jnp.abs(jax.random.normal(k3, (out_channels,), jnp.float32))
        return gamma, beta, mean, var

    for lvl, cin in enumerate(in_channels_list):
        w = 0.1 * jax.random.normal(ks[i], (cin, out_channels), jnp.float32)
        gamma, beta, mean, var = bn_pack(ks[i + 1], ks[i + 2], ks[i + 3], ks[i + 4])
        i += 5
        params[f"output{lvl + 1}"] = _fold_bn(w, gamma, beta, mean, var)

    for name in ("merge1", "merge2"):
        w = 0.05 * jax.random.normal(
            ks[i], (3, 3, out_channels, out_channels), jnp.float32)
        gamma, beta, mean, var = bn_pack(ks[i + 1], ks[i + 2], ks[i + 3], ks[i + 4])
        i += 5
        params[name] = _fold_bn(w, gamma, beta, mean, var)
    return params


def pack_fpn_params(params):
    """One-time repack of folded conv+BN params into the kernel layout:
    channels-major bf16 weights (dx folded into the contraction for merges),
    (C, 1) f32 biases."""
    packed = {}
    for name in ("output1", "output2", "output3"):
        w, b = params[name]                               # (Cin, C), (C,)
        packed[name] = (jnp.asarray(w.T, jnp.bfloat16),
                        jnp.asarray(b.reshape(-1, 1), jnp.float32))
    for name in ("merge1", "merge2"):
        w, b = params[name]                               # (3, 3, C, C), (C,)
        kh, kw, ci, co = w.shape
        wm = jnp.transpose(w, (0, 3, 1, 2)).reshape(kh, co, kw * ci)   # (dy, C, 3*C)
        packed[name] = (jnp.asarray(wm, jnp.bfloat16),
                        jnp.asarray(b.reshape(-1, 1), jnp.float32))
    return packed


# ----------------------------------------------------------------------------
# Pure-JAX f32 reference (matches the PyTorch module's eval-mode forward)
# ----------------------------------------------------------------------------

def nearest_resize(x_nhwc, out_h, out_w):
    N, H, W, _ = x_nhwc.shape
    ri = (jnp.arange(out_h) * H) // out_h
    ci = (jnp.arange(out_w) * W) // out_w
    return x_nhwc[:, ri][:, :, ci]


def _conv_ref_nhwc(x, w_hwio, pad):
    return jax.lax.conv_general_dilated(
        x, w_hwio, window_strides=(1, 1), padding=pad,
        dimension_numbers=("NHWC", "HWIO", "NHWC"))


def fpn_forward_ref(inputs_nchw, params):
    leaky = params["leaky"]
    xs = [jnp.transpose(x, (0, 2, 3, 1)) for x in inputs_nchw]

    def lat(x, wb):
        w, b = wb
        y = _conv_ref_nhwc(x, w.reshape(1, 1, *w.shape), [(0, 0), (0, 0)]) + b
        return _leaky(y, leaky)

    def mrg(x, wb):
        w, b = wb
        y = _conv_ref_nhwc(x, w, [(1, 1), (1, 1)]) + b
        return _leaky(y, leaky)

    o1 = lat(xs[0], params["output1"])
    o2 = lat(xs[1], params["output2"])
    o3 = lat(xs[2], params["output3"])
    up3 = nearest_resize(o3, o2.shape[1], o2.shape[2])
    o2 = mrg(o2 + up3, params["merge2"])
    up2 = nearest_resize(o2, o1.shape[1], o1.shape[2])
    o1 = mrg(o1 + up2, params["merge1"])
    return [jnp.transpose(o, (0, 3, 1, 2)) for o in (o1, o2, o3)]


# ----------------------------------------------------------------------------

if __name__ == "__main__":
    key = jax.random.PRNGKey(0)
    k_in0, k_in1, k_in2, k_par = jax.random.split(key, 4)

    in_channels_list = [16, 32, 64]
    out_channels = 64          # <= 64 -> LeakyReLU(0.1), matching the PyTorch branch
    N = 2
    inputs = [
        jax.random.normal(k_in0, (N, in_channels_list[0], 16, 16), jnp.float32),
        jax.random.normal(k_in1, (N, in_channels_list[1], 8, 8), jnp.float32),
        jax.random.normal(k_in2, (N, in_channels_list[2], 4, 4), jnp.float32),
    ]
    params = init_fpn_params(k_par, in_channels_list, out_channels)
    packed = pack_fpn_params(params)

    outs = fpn_forward(inputs, packed, params["leaky"])
    outs = jax.block_until_ready(outs)

    refs = fpn_forward_ref(inputs, params)
    for o, r in zip(outs, refs):
        assert o.shape == r.shape, (o.shape, r.shape)
        err = float(jnp.max(jnp.abs(o - r)))
        # bf16 MXU matmuls (f32 accumulate) vs the f32 reference.
        assert jnp.allclose(o, r, atol=5e-2, rtol=5e-2), err

    print("KERNEL_OK")
</pallas_src>

<mosaic_0001>
module attributes {stable_mosaic.version = 11 : i64} {
  func.func @_fpn_kernel(%arg0: i32, %arg1: memref<1x16x256xbf16, #tpu.memory_space<vmem>>, %arg2: memref<1x32x64xbf16, #tpu.memory_space<vmem>>, %arg3: memref<1x64x16xbf16, #tpu.memory_space<vmem>>, %arg4: memref<64x16xbf16, #tpu.memory_space<vmem>>, %arg5: memref<64x1xf32, #tpu.memory_space<vmem>>, %arg6: memref<64x32xbf16, #tpu.memory_space<vmem>>, %arg7: memref<64x1xf32, #tpu.memory_space<vmem>>, %arg8: memref<64x64xbf16, #tpu.memory_space<vmem>>, %arg9: memref<64x1xf32, #tpu.memory_space<vmem>>, %arg10: memref<3x64x192xbf16, #tpu.memory_space<vmem>>, %arg11: memref<64x1xf32, #tpu.memory_space<vmem>>, %arg12: memref<3x64x192xbf16, #tpu.memory_space<vmem>>, %arg13: memref<64x1xf32, #tpu.memory_space<vmem>>, %arg14: memref<16x64xbf16, #tpu.memory_space<vmem>>, %arg15: memref<32x128xbf16, #tpu.memory_space<vmem>>, %arg16: memref<1x64x256xf32, #tpu.memory_space<vmem>>, %arg17: memref<1x64x64xf32, #tpu.memory_space<vmem>>, %arg18: memref<1x64x16xf32, #tpu.memory_space<vmem>>, %arg19: memref<192x288xbf16, #tpu.memory_space<vmem>>, %arg20: memref<64x16xbf16, #tpu.memory_space<vmem>>, %arg21: memref<64x64xbf16, #tpu.memory_space<vmem>>) attributes {dimension_semantics = [#tpu.dimension_semantics<parallel>], iteration_bounds = array<i64: 2>, scalar_prefetch = 0 : i64, scratch_operands = 3 : i64, tpu.core_type = #tpu.core_type<tc>, window_params = [{transform_indices = @transform_0, window_bounds = array<i64: 1, 16, 256>}, {transform_indices = @transform_1, window_bounds = array<i64: 1, 32, 64>}, {transform_indices = @transform_2, window_bounds = array<i64: 1, 64, 16>}, {pipeline_mode = #tpu.pipeline_mode<synchronous>, transform_indices = @transform_3, window_bounds = array<i64: 64, 16>}, {pipeline_mode = #tpu.pipeline_mode<synchronous>, transform_indices = @transform_4, window_bounds = array<i64: 64, 1>}, {pipeline_mode = #tpu.pipeline_mode<synchronous>, transform_indices = @transform_5, window_bounds = array<i64: 64, 32>}, {pipeline_mode = #tpu.pipeline_mode<synchronous>, transform_indices = @transform_6, window_bounds = array<i64: 64, 1>}, {pipeline_mode = #tpu.pipeline_mode<synchronous>, transform_indices = @transform_7, window_bounds = array<i64: 64, 64>}, {pipeline_mode = #tpu.pipeline_mode<synchronous>, transform_indices = @transform_8, window_bounds = array<i64: 64, 1>}, {pipeline_mode = #tpu.pipeline_mode<synchronous>, transform_indices = @transform_9, window_bounds = array<i64: 3, 64, 192>}, {pipeline_mode = #tpu.pipeline_mode<synchronous>, transform_indices = @transform_10, window_bounds = array<i64: 64, 1>}, {pipeline_mode = #tpu.pipeline_mode<synchronous>, transform_indices = @transform_11, window_bounds = array<i64: 3, 64, 192>}, {pipeline_mode = #tpu.pipeline_mode<synchronous>, transform_indices = @transform_12, window_bounds = array<i64: 64, 1>}, {pipeline_mode = #tpu.pipeline_mode<synchronous>, transform_indices = @transform_13, window_bounds = array<i64: 16, 64>}, {pipeline_mode = #tpu.pipeline_mode<synchronous>, transform_indices = @transform_14, window_bounds = array<i64: 32, 128>}, {transform_indices = @transform_15, window_bounds = array<i64: 1, 64, 256>}, {transform_indices = @transform_16, window_bounds = array<i64: 1, 64, 64>}, {transform_indices = @transform_17, window_bounds = array<i64: 1, 64, 16>}]} {
    %c0 = arith.constant 0 : index
    %c0_0 = arith.constant 0 : index
    %0 = vector.load %arg8[%c0, %c0_0] : memref<64x64xbf16, #tpu.memory_space<vmem>>, vector<64x64xbf16>
    %c0_1 = arith.constant 0 : index
    %c0_2 = arith.constant 0 : index
    %c0_3 = arith.constant 0 : index
    %1 = vector.load %arg3[%c0_1, %c0_2, %c0_3] : memref<1x64x16xbf16, #tpu.memory_space<vmem>>, vector<1x64x16xbf16>
    %2 = vector.shape_cast %1 : vector<1x64x16xbf16> to vector<64x16xbf16>
    %cst = arith.constant dense<0.000000e+00> : vector<64x16xf32>
    %3 = tpu.matmul %0, %2, %cst {dimension_numbers = #tpu.dot_dimension_numbers<[1], [0], [0], [1], [0, 0, 1, 1], [], []>} : vector<64x64xbf16>, vector<64x16xbf16>, vector<64x16xf32> -> vector<64x16xf32>
    %c0_4 = arith.constant 0 : index
    %c0_5 = arith.constant 0 : index
    %4 = vector.load %arg9[%c0_4, %c0_5] : memref<64x1xf32, #tpu.memory_space<vmem>>, vector<64x1xf32>
    %5 = vector.broadcast %4 : vector<64x1xf32> to vector<64x16xf32>
    %6 = arith.addf %3, %5 : vector<64x16xf32>
    %cst_6 = arith.constant 0.000000e+00 : f32
    %7 = vector.broadcast %cst_6 : f32 to vector<64x16xf32>
    %8 = arith.cmpf oge, %6, %7 : vector<64x16xf32>
    %cst_7 = arith.constant 1.000000e-01 : f32
    %9 = vector.broadcast %cst_7 : f32 to vector<64x16xf32>
    %10 = arith.mulf %6, %9 : vector<64x16xf32>
    %11 = arith.select %8, %6, %10 : vector<64x16xi1>, vector<64x16xf32>
    %c0_8 = arith.constant 0 : index
    %c0_9 = arith.constant 0 : index
    %c0_10 = arith.constant 0 : index
    %12 = vector.load %arg18[%c0_8, %c0_9, %c0_10] : memref<1x64x16xf32, #tpu.memory_space<vmem>>, vector<1x64x16xf32>
    %13 = vector.shape_cast %12 : vector<1x64x16xf32> to vector<64x16xf32>
    %14 = vector.shape_cast %11 : vector<64x16xf32> to vector<1x64x16xf32>
    tpu.vector_store %arg18[%c0_8, %c0_9, %c0_10], %14 {strides = array<i32>} : memref<1x64x16xf32, #tpu.memory_space<vmem>>, vector<1x64x16xf32>,
    %15 = arith.truncf %11 : vector<64x16xf32> to vector<64x16xbf16>
    %c0_11 = arith.constant 0 : index
    %c0_12 = arith.constant 0 : index
    %16 = vector.load %arg20[%c0_11, %c0_12] : memref<64x16xbf16, #tpu.memory_space<vmem>>, vector<64x16xbf16>
    tpu.vector_store %arg20[%c0_11, %c0_12], %15 {strides = array<i32>} : memref<64x16xbf16, #tpu.memory_space<vmem>>, vector<64x16xbf16>,
    %cst_13 = arith.constant 0.000000e+00 : bf16
    %17 = vector.broadcast %cst_13 : bf16 to vector<192x9xbf16>
    %c0_14 = arith.constant 0 : index
    %c0_15 = arith.constant 0 : index
    %18 = vector.load %arg19[%c0_14, %c0_15] : memref<192x288xbf16, #tpu.memory_space<vmem>>, vector<192x9xbf16>
    tpu.vector_store %arg19[%c0_14, %c0_15], %17 {strides = array<i32>} : memref<192x288xbf16, #tpu.memory_space<vmem>>, vector<192x9xbf16>,
    %c0_16 = arith.constant 0 : index
    %c71 = arith.constant 71 : index
    %19 = vector.load %arg19[%c0_16, %c71] : memref<192x288xbf16, #tpu.memory_space<vmem>>, vector<192x9xbf16>
    tpu.vector_store %arg19[%c0_16, %c71], %17 {strides = array<i32>} : memref<192x288xbf16, #tpu.memory_space<vmem>>, vector<192x9xbf16>,
    %c0_17 = arith.constant 0 : index
    %c0_18 = arith.constant 0 : index
    %20 = vector.load %arg6[%c0_17, %c0_18] : memref<64x32xbf16, #tpu.memory_space<vmem>>, vector<64x32xbf16>
    %c0_19 = arith.constant 0 : index
    %c0_20 = arith.constant 0 : index
    %21 = vector.load %arg7[%c0_19, %c0_20] : memref<64x1xf32, #tpu.memory_space<vmem>>, vector<64x1xf32>
    %c0_21 = arith.constant 0 : index
    %c0_22 = arith.constant 0 : index
    %22 = vector.load %arg14[%c0_21, %c0_22] : memref<16x64xbf16, #tpu.memory_space<vmem>>, vector<16x64xbf16>
    %23 = tpu.iota {dimensions = array<i32: 1>} : vector<1x64xi32>
    %c8_i32 = arith.constant 8 : i32
    %c0_i32 = arith.constant 0 : i32
    %24 = arith.cmpi eq, %c8_i32, %c0_i32 : i32
    %c1_i32 = arith.constant 1 : i32
    %25 = arith.select %24, %c1_i32, %c8_i32 : i32
    %26 = vector.broadcast %25 : i32 to vector<1x64xi32>
    %27 = arith.remsi %23, %26 : vector<1x64xi32>
    %c0_i32_23 = arith.constant 0 : i32
    %28 = vector.broadcast %c0_i32_23 : i32 to vector<1x64xi32>
    %29 = arith.cmpi ne, %27, %28 : vector<1x64xi32>
    %c0_i32_24 = arith.constant 0 : i32
    %30 = vector.broadcast %c0_i32_24 : i32 to vector<1x64xi32>
    %31 = arith.cmpi slt, %27, %30 : vector<1x64xi32>
    %c0_i32_25 = arith.constant 0 : i32
    %32 = arith.cmpi slt, %25, %c0_i32_25 : i32
    %33 = vector.broadcast %32 : i1 to vector<1x64xi1>
    %34 = vector.broadcast %33 : vector<1x64xi1> to vector<1x64xi1>
    %35 = arith.xori %31, %34 : vector<1x64xi1>
    %36 = arith.andi %35, %29 : vector<1x64xi1>
    %37 = vector.broadcast %25 : i32 to vector<1x64xi32>
    %38 = arith.addi %27, %37 : vector<1x64xi32>
    %39 = arith.select %36, %38, %27 : vector<1x64xi1>, vector<1x64xi32>
    %c0_26 = arith.constant 0 : index
    %c0_27 = arith.constant 0 : index
    %c0_28 = arith.constant 0 : index
    %40 = vector.load %arg2[%c0_26, %c0_27, %c0_28] : memref<1x32x64xbf16, #tpu.memory_space<vmem>>, vector<1x32x64xbf16>
    %41 = vector.shape_cast %40 : vector<1x32x64xbf16> to vector<32x64xbf16>
    %cst_29 = arith.constant dense<0.000000e+00> : vector<64x64xf32>
    %42 = tpu.matmul %20, %41, %cst_29 {dimension_numbers = #tpu.dot_dimension_numbers<[1], [0], [0], [1], [0, 0, 1, 1], [], []>} : vector<64x32xbf16>, vector<32x64xbf16>, vector<64x64xf32> -> vector<64x64xf32>
    %43 = vector.broadcast %21 : vector<64x1xf32> to vector<64x64xf32>
    %44 = arith.addf %42, %43 : vector<64x64xf32>
    %cst_30 = arith.constant 0.000000e+00 : f32
    %45 = vector.broadcast %cst_30 : f32 to vector<64x64xf32>
    %46 = arith.cmpf oge, %44, %45 : vector<64x64xf32>
    %cst_31 = arith.constant 1.000000e-01 : f32
    %47 = vector.broadcast %cst_31 : f32 to vector<64x64xf32>
    %48 = arith.mulf %44, %47 : vector<64x64xf32>
    %49 = arith.select %46, %44, %48 : vector<64x64xi1>, vector<64x64xf32>
    %c0_32 = arith.constant 0 : index
    %c0_33 = arith.constant 0 : index
    %50 = vector.load %arg20[%c0_32, %c0_33] : memref<64x16xbf16, #tpu.memory_space<vmem>>, vector<64x16xbf16>
    %cst_34 = arith.constant dense<0.000000e+00> : vector<64x64xf32>
    %51 = tpu.matmul %50, %22, %cst_34 {dimension_numbers = #tpu.dot_dimension_numbers<[1], [0], [0], [1], [0, 0, 1, 1], [], []>} : vector<64x16xbf16>, vector<16x64xbf16>, vector<64x64xf32> -> vector<64x64xf32>
    %52 = arith.addf %49, %51 : vector<64x64xf32>
    %53 = arith.truncf %52 : vector<64x64xf32> to vector<64x64xbf16>
    %cst_35 = arith.constant 0.000000e+00 : bf16
    %54 = vector.broadcast %cst_35 : bf16 to vector<64x64xbf16>
    %c64 = arith.constant 64 : index
    %c8 = arith.constant 8 : index
    %55 = vector.load %arg19[%c64, %c8] : memref<192x288xbf16, #tpu.memory_space<vmem>>, vector<64x64xbf16>
    tpu.vector_store %arg19[%c64, %c8], %53 {strides = array<i32>} : memref<192x288xbf16, #tpu.memory_space<vmem>>, vector<64x64xbf16>,
    %c7_i32 = arith.constant 7 : i32
    %56 = vector.broadcast %c7_i32 : i32 to vector<1x64xi32>
    %57 = arith.cmpi eq, %39, %56 : vector<1x64xi32>
    %58 = vector.shape_cast %57 : vector<1x64xi1> to vector<1x64xi1>
    %59 = vector.broadcast %58 : vector<1x64xi1> to vector<64x64xi1>
    %60 = arith.select %59, %54, %53 : vector<64x64xi1>, vector<64x64xbf16>
    %c0_36 = arith.constant 0 : index
    %c9 = arith.constant 9 : index
    %61 = vector.load %arg19[%c0_36, %c9] : memref<192x288xbf16, #tpu.memory_space<vmem>>, vector<64x64xbf16>
    tpu.vector_store %arg19[%c0_36, %c9], %60 {strides = array<i32>} : memref<192x288xbf16, #tpu.memory_space<vmem>>, vector<64x64xbf16>,
    %c0_i32_37 = arith.constant 0 : i32
    %62 = vector.broadcast %c0_i32_37 : i32 to vector<1x64xi32>
    %63 = arith.cmpi eq, %39, %62 : vector<1x64xi32>
    %64 = vector.shape_cast %63 : vector<1x64xi1> to vector<1x64xi1>
    %65 = vector.broadcast %64 : vector<1x64xi1> to vector<64x64xi1>
    %66 = arith.select %65, %54, %53 : vector<64x64xi1>, vector<64x64xbf16>
    %c128 = arith.constant 128 : index
    %c7 = arith.constant 7 : index
    %67 = vector.load %arg19[%c128, %c7] : memref<192x288xbf16, #tpu.memory_space<vmem>>, vector<64x64xbf16>
    tpu.vector_store %arg19[%c128, %c7], %66 {strides = array<i32>} : memref<192x288xbf16, #tpu.memory_space<vmem>>, vector<64x64xbf16>,
    %c0_38 = arith.constant 0 : index
    %c0_39 = arith.constant 0 : index
    %c0_40 = arith.constant 0 : index
    %68 = vector.load %arg10[%c0_38, %c0_39, %c0_40] : memref<3x64x192xbf16, #tpu.memory_space<vmem>>, vector<1x64x192xbf16>
    %69 = vector.shape_cast %68 : vector<1x64x192xbf16> to vector<64x192xbf16>
    %c1 = arith.constant 1 : index
    %c0_41 = arith.constant 0 : index
    %c0_42 = arith.constant 0 : index
    %70 = vector.load %arg10[%c1, %c0_41, %c0_42] : memref<3x64x192xbf16, #tpu.memory_space<vmem>>, vector<1x64x192xbf16>
    %71 = vector.shape_cast %70 : vector<1x64x192xbf16> to vector<64x192xbf16>
    %c2 = arith.constant 2 : index
    %c0_43 = arith.constant 0 : index
    %c0_44 = arith.constant 0 : index
    %72 = vector.load %arg10[%c2, %c0_43, %c0_44] : memref<3x64x192xbf16, #tpu.memory_space<vmem>>, vector<1x64x192xbf16>
    %73 = vector.shape_cast %72 : vector<1x64x192xbf16> to vector<64x192xbf16>
    %c0_45 = arith.constant 0 : index
    %c0_46 = arith.constant 0 : index
    %74 = vector.load %arg11[%c0_45, %c0_46] : memref<64x1xf32, #tpu.memory_space<vmem>>, vector<64x1xf32>
    %c0_47 = arith.constant 0 : index
    %c0_48 = arith.constant 0 : index
    %75 = vector.load %arg19[%c0_47, %c0_48] : memref<192x288xbf16, #tpu.memory_space<vmem>>, vector<192x64xbf16>
    %cst_49 = arith.constant dense<0.000000e+00> : vector<64x64xf32>
    %76 = tpu.matmul %69, %75, %cst_49 {dimension_numbers = #tpu.dot_dimension_numbers<[1], [0], [0], [1], [0, 0, 1, 1], [], []>} : vector<64x192xbf16>, vector<192x64xbf16>, vector<64x64xf32> -> vector<64x64xf32>
    %c0_50 = arith.constant 0 : index
    %c8_51 = arith.constant 8 : index
    %77 = vector.load %arg19[%c0_50, %c8_51] : memref<192x288xbf16, #tpu.memory_space<vmem>>, vector<192x64xbf16>
    %cst_52 = arith.constant dense<0.000000e+00> : vector<64x64xf32>
    %78 = tpu.matmul %71, %77, %cst_52 {dimension_numbers = #tpu.dot_dimension_numbers<[1], [0], [0], [1], [0, 0, 1, 1], [], []>} : vector<64x192xbf16>, vector<192x64xbf16>, vector<64x64xf32> -> vector<64x64xf32>
    %79 = arith.addf %76, %78 : vector<64x64xf32>
    %c0_53 = arith.constant 0 : index
    %c16 = arith.constant 16 : index
    %80 = vector.load %arg19[%c0_53, %c16] : memref<192x288xbf16, #tpu.memory_space<vmem>>, vector<192x64xbf16>
    %cst_54 = arith.constant dense<0.000000e+00> : vector<64x64xf32>
    %81 = tpu.matmul %73, %80, %cst_54 {dimension_numbers = #tpu.dot_dimension_numbers<[1], [0], [0], [1], [0, 0, 1, 1], [], []>} : vector<64x192xbf16>, vector<192x64xbf16>, vector<64x64xf32> -> vector<64x64xf32>
    %82 = arith.addf %79, %81 : vector<64x64xf32>
    %83 = vector.broadcast %74 : vector<64x1xf32> to vector<64x64xf32>
    %84 = arith.addf %82, %83 : vector<64x64xf32>
    %cst_55 = arith.constant 0.000000e+00 : f32
    %85 = vector.broadcast %cst_55 : f32 to vector<64x64xf32>
    %86 = arith.cmpf oge, %84, %85 : vector<64x64xf32>
    %cst_56 = arith.constant 1.000000e-01 : f32
    %87 = vector.broadcast %cst_56 : f32 to vector<64x64xf32>
    %88 = arith.mulf %84, %87 : vector<64x64xf32>
    %89 = arith.select %86, %84, %88 : vector<64x64xi1>, vector<64x64xf32>
    %c0_57 = arith.constant 0 : index
    %c0_58 = arith.constant 0 : index
    %c0_59 = arith.constant 0 : index
    %90 = vector.load %arg17[%c0_57, %c0_58, %c0_59] : memref<1x64x64xf32, #tpu.memory_space<vmem>>, vector<1x64x64xf32>
    %91 = vector.shape_cast %90 : vector<1x64x64xf32> to vector<64x64xf32>
    %92 = vector.shape_cast %89 : vector<64x64xf32> to vector<1x64x64xf32>
    tpu.vector_store %arg17[%c0_57, %c0_58, %c0_59], %92 {strides = array<i32>} : memref<1x64x64xf32, #tpu.memory_space<vmem>>, vector<1x64x64xf32>,
    %93 = arith.truncf %89 : vector<64x64xf32> to vector<64x64xbf16>
    %c0_60 = arith.constant 0 : index
    %c0_61 = arith.constant 0 : index
    %94 = vector.load %arg21[%c0_60, %c0_61] : memref<64x64xbf16, #tpu.memory_space<vmem>>, vector<64x64xbf16>
    tpu.vector_store %arg21[%c0_60, %c0_61], %93 {strides = array<i32>} : memref<64x64xbf16, #tpu.memory_space<vmem>>, vector<64x64xbf16>,
    %cst_62 = arith.constant 0.000000e+00 : bf16
    %95 = vector.broadcast %cst_62 : bf16 to vector<192x17xbf16>
    %c0_63 = arith.constant 0 : index
    %c0_64 = arith.constant 0 : index
    %96 = vector.load %arg19[%c0_63, %c0_64] : memref<192x288xbf16, #tpu.memory_space<vmem>>, vector<192x17xbf16>
    tpu.vector_store %arg19[%c0_63, %c0_64], %95 {strides = array<i32>} : memref<192x288xbf16, #tpu.memory_space<vmem>>, vector<192x17xbf16>,
    %c0_65 = arith.constant 0 : index
    %c271 = arith.constant 271 : index
    %97 = vector.load %arg19[%c0_65, %c271] : memref<192x288xbf16, #tpu.memory_space<vmem>>, vector<192x17xbf16>
    tpu.vector_store %arg19[%c0_65, %c271], %95 {strides = array<i32>} : memref<192x288xbf16, #tpu.memory_space<vmem>>, vector<192x17xbf16>,
    %c0_66 = arith.constant 0 : index
    %c0_67 = arith.constant 0 : index
    %98 = vector.load %arg4[%c0_66, %c0_67] : memref<64x16xbf16, #tpu.memory_space<vmem>>, vector<64x16xbf16>
    %c0_68 = arith.constant 0 : index
    %c0_69 = arith.constant 0 : index
    %99 = vector.load %arg5[%c0_68, %c0_69] : memref<64x1xf32, #tpu.memory_space<vmem>>, vector<64x1xf32>
    %c0_70 = arith.constant 0 : index
    %c0_71 = arith.constant 0 : index
    %100 = vector.load %arg15[%c0_70, %c0_71] : memref<32x128xbf16, #tpu.memory_space<vmem>>, vector<32x128xbf16>
    %101 = tpu.iota {dimensions = array<i32: 1>} : vector<1x128xi32>
    %c16_i32 = arith.constant 16 : i32
    %c0_i32_72 = arith.constant 0 : i32
    %102 = arith.cmpi eq, %c16_i32, %c0_i32_72 : i32
    %c1_i32_73 = arith.constant 1 : i32
    %103 = arith.select %102, %c1_i32_73, %c16_i32 : i32
    %104 = vector.broadcast %103 : i32 to vector<1x128xi32>
    %105 = arith.remsi %101, %104 : vector<1x128xi32>
    %c0_i32_74 = arith.constant 0 : i32
    %106 = vector.broadcast %c0_i32_74 : i32 to vector<1x128xi32>
    %107 = arith.cmpi ne, %105, %106 : vector<1x128xi32>
    %c0_i32_75 = arith.constant 0 : i32
    %108 = vector.broadcast %c0_i32_75 : i32 to vector<1x128xi32>
    %109 = arith.cmpi slt, %105, %108 : vector<1x128xi32>
    %c0_i32_76 = arith.constant 0 : i32
    %110 = arith.cmpi slt, %103, %c0_i32_76 : i32
    %111 = vector.broadcast %110 : i1 to vector<1x128xi1>
    %112 = vector.broadcast %111 : vector<1x128xi1> to vector<1x128xi1>
    %113 = arith.xori %109, %112 : vector<1x128xi1>
    %114 = arith.andi %113, %107 : vector<1x128xi1>
    %115 = vector.broadcast %103 : i32 to vector<1x128xi32>
    %116 = arith.addi %105, %115 : vector<1x128xi32>
    %117 = arith.select %114, %116, %105 : vector<1x128xi1>, vector<1x128xi32>
    %c0_77 = arith.constant 0 : index
    %c0_78 = arith.constant 0 : index
    %c0_79 = arith.constant 0 : index
    %118 = vector.load %arg1[%c0_77, %c0_78, %c0_79] : memref<1x16x256xbf16, #tpu.memory_space<vmem>>, vector<1x16x128xbf16>
    %119 = vector.shape_cast %118 : vector<1x16x128xbf16> to vector<16x128xbf16>
    %cst_80 = arith.constant dense<0.000000e+00> : vector<64x128xf32>
    %120 = tpu.matmul %98, %119, %cst_80 {dimension_numbers = #tpu.dot_dimension_numbers<[1], [0], [0], [1], [0, 0, 1, 1], [], []>} : vector<64x16xbf16>, vector<16x128xbf16>, vector<64x128xf32> -> vector<64x128xf32>
    %121 = vector.broadcast %99 : vector<64x1xf32> to vector<64x128xf32>
    %122 = arith.addf %120, %121 : vector<64x128xf32>
    %cst_81 = arith.constant 0.000000e+00 : f32
    %123 = vector.broadcast %cst_81 : f32 to vector<64x128xf32>
    %124 = arith.cmpf oge, %122, %123 : vector<64x128xf32>
    %cst_82 = arith.constant 1.000000e-01 : f32
    %125 = vector.broadcast %cst_82 : f32 to vector<64x128xf32>
    %126 = arith.mulf %122, %125 : vector<64x128xf32>
    %127 = arith.select %124, %122, %126 : vector<64x128xi1>, vector<64x128xf32>
    %c0_83 = arith.constant 0 : index
    %c0_84 = arith.constant 0 : index
    %128 = vector.load %arg21[%c0_83, %c0_84] : memref<64x64xbf16, #tpu.memory_space<vmem>>, vector<64x32xbf16>
    %cst_85 = arith.constant dense<0.000000e+00> : vector<64x128xf32>
    %129 = tpu.matmul %128, %100, %cst_85 {dimension_numbers = #tpu.dot_dimension_numbers<[1], [0], [0], [1], [0, 0, 1, 1], [], []>} : vector<64x32xbf16>, vector<32x128xbf16>, vector<64x128xf32> -> vector<64x128xf32>
    %130 = arith.addf %127, %129 : vector<64x128xf32>
    %131 = arith.truncf %130 : vector<64x128xf32> to vector<64x128xbf16>
    %cst_86 = arith.constant 0.000000e+00 : bf16
    %132 = vector.broadcast %cst_86 : bf16 to vector<64x128xbf16>
    %c64_87 = arith.constant 64 : index
    %c16_88 = arith.constant 16 : index
    %133 = vector.load %arg19[%c64_87, %c16_88] : memref<192x288xbf16, #tpu.memory_space<vmem>>, vector<64x128xbf16>
    tpu.vector_store %arg19[%c64_87, %c16_88], %131 {strides = array<i32>} : memref<192x288xbf16, #tpu.memory_space<vmem>>, vector<64x128xbf16>,
    %c15_i32 = arith.constant 15 : i32
    %134 = vector.broadcast %c15_i32 : i32 to vector<1x128xi32>
    %135 = arith.cmpi eq, %117, %134 : vector<1x128xi32>
    %136 = vector.shape_cast %135 : vector<1x128xi1> to vector<1x128xi1>
    %137 = vector.broadcast %136 : vector<1x128xi1> to vector<64x128xi1>
    %138 = arith.select %137, %132, %131 : vector<64x128xi1>, vector<64x128xbf16>
    %c0_89 = arith.constant 0 : index
    %c17 = arith.constant 17 : index
    %139 = vector.load %arg19[%c0_89, %c17] : memref<192x288xbf16, #tpu.memory_space<vmem>>, vector<64x128xbf16>
    tpu.vector_store %arg19[%c0_89, %c17], %138 {strides = array<i32>} : memref<192x288xbf16, #tpu.memory_space<vmem>>, vector<64x128xbf16>,
    %c0_i32_90 = arith.constant 0 : i32
    %140 = vector.broadcast %c0_i32_90 : i32 to vector<1x128xi32>
    %141 = arith.cmpi eq, %117, %140 : vector<1x128xi32>
    %142 = vector.shape_cast %141 : vector<1x128xi1> to vector<1x128xi1>
    %143 = vector.broadcast %142 : vector<1x128xi1> to vector<64x128xi1>
    %144 = arith.select %143, %132, %131 : vector<64x128xi1>, vector<64x128xbf16>
    %c128_91 = arith.constant 128 : index
    %c15 = arith.constant 15 : index
    %145 = vector.load %arg19[%c128_91, %c15] : memref<192x288xbf16, #tpu.memory_space<vmem>>, vector<64x128xbf16>
    tpu.vector_store %arg19[%c128_91, %c15], %144 {strides = array<i32>} : memref<192x288xbf16, #tpu.memory_space<vmem>>, vector<64x128xbf16>,
    %c0_92 = arith.constant 0 : index
    %c0_93 = arith.constant 0 : index
    %c128_94 = arith.constant 128 : index
    %146 = vector.load %arg1[%c0_92, %c0_93, %c128_94] : memref<1x16x256xbf16, #tpu.memory_space<vmem>>, vector<1x16x128xbf16>
    %147 = vector.shape_cast %146 : vector<1x16x128xbf16> to vector<16x128xbf16>
    %cst_95 = arith.constant dense<0.000000e+00> : vector<64x128xf32>
    %148 = tpu.matmul %98, %147, %cst_95 {dimension_numbers = #tpu.dot_dimension_numbers<[1], [0], [0], [1], [0, 0, 1, 1], [], []>} : vector<64x16xbf16>, vector<16x128xbf16>, vector<64x128xf32> -> vector<64x128xf32>
    %149 = vector.broadcast %99 : vector<64x1xf32> to vector<64x128xf32>
    %150 = arith.addf %148, %149 : vector<64x128xf32>
    %cst_96 = arith.constant 0.000000e+00 : f32
    %151 = vector.broadcast %cst_96 : f32 to vector<64x128xf32>
    %152 = arith.cmpf oge, %150, %151 : vector<64x128xf32>
    %cst_97 = arith.constant 1.000000e-01 : f32
    %153 = vector.broadcast %cst_97 : f32 to vector<64x128xf32>
    %154 = arith.mulf %150, %153 : vector<64x128xf32>
    %155 = arith.select %152, %150, %154 : vector<64x128xi1>, vector<64x128xf32>
    %c0_98 = arith.constant 0 : index
    %c32 = arith.constant 32 : index
    %156 = vector.load %arg21[%c0_98, %c32] : memref<64x64xbf16, #tpu.memory_space<vmem>>, vector<64x32xbf16>
    %cst_99 = arith.constant dense<0.000000e+00> : vector<64x128xf32>
    %157 = tpu.matmul %156, %100, %cst_99 {dimension_numbers = #tpu.dot_dimension_numbers<[1], [0], [0], [1], [0, 0, 1, 1], [], []>} : vector<64x32xbf16>, vector<32x128xbf16>, vector<64x128xf32> -> vector<64x128xf32>
    %158 = arith.addf %155, %157 : vector<64x128xf32>
    %159 = arith.truncf %158 : vector<64x128xf32> to vector<64x128xbf16>
    %cst_100 = arith.constant 0.000000e+00 : bf16
    %160 = vector.broadcast %cst_100 : bf16 to vector<64x128xbf16>
    %c64_101 = arith.constant 64 : index
    %c144 = arith.constant 144 : index
    %161 = vector.load %arg19[%c64_101, %c144] : memref<192x288xbf16, #tpu.memory_space<vmem>>, vector<64x128xbf16>
    tpu.vector_store %arg19[%c64_101, %c144], %159 {strides = array<i32>} : memref<192x288xbf16, #tpu.memory_space<vmem>>, vector<64x128xbf16>,
    %c15_i32_102 = arith.constant 15 : i32
    %162 = vector.broadcast %c15_i32_102 : i32 to vector<1x128xi32>
    %163 = arith.cmpi eq, %117, %162 : vector<1x128xi32>
    %164 = vector.shape_cast %163 : vector<1x128xi1> to vector<1x128xi1>
    %165 = vector.broadcast %164 : vector<1x128xi1> to vector<64x128xi1>
    %166 = arith.select %165, %160, %159 : vector<64x128xi1>, vector<64x128xbf16>
    %c0_103 = arith.constant 0 : index
    %c145 = arith.constant 145 : index
    %167 = vector.load %arg19[%c0_103, %c145] : memref<192x288xbf16, #tpu.memory_space<vmem>>, vector<64x128xbf16>
    tpu.vector_store %arg19[%c0_103, %c145], %166 {strides = array<i32>} : memref<192x288xbf16, #tpu.memory_space<vmem>>, vector<64x128xbf16>,
    %c0_i32_104 = arith.constant 0 : i32
    %168 = vector.broadcast %c0_i32_104 : i32 to vector<1x128xi32>
    %169 = arith.cmpi eq, %117, %168 : vector<1x128xi32>
    %170 = vector.shape_cast %169 : vector<1x128xi1> to vector<1x128xi1>
    %171 = vector.broadcast %170 : vector<1x128xi1> to vector<64x128xi1>
    %172 = arith.select %171, %160, %159 : vector<64x128xi1>, vector<64x128xbf16>
    %c128_105 = arith.constant 128 : index
    %c143 = arith.constant 143 : index
    %173 = vector.load %arg19[%c128_105, %c143] : memref<192x288xbf16, #tpu.memory_space<vmem>>, vector<64x128xbf16>
    tpu.vector_store %arg19[%c128_105, %c143], %172 {strides = array<i32>} : memref<192x288xbf16, #tpu.memory_space<vmem>>, vector<64x128xbf16>,
    %c0_106 = arith.constant 0 : index
    %c0_107 = arith.constant 0 : index
    %c0_108 = arith.constant 0 : index
    %174 = vector.load %arg12[%c0_106, %c0_107, %c0_108] : memref<3x64x192xbf16, #tpu.memory_space<vmem>>, vector<1x64x192xbf16>
    %175 = vector.shape_cast %174 : vector<1x64x192xbf16> to vector<64x192xbf16>
    %c1_109 = arith.constant 1 : index
    %c0_110 = arith.constant 0 : index
    %c0_111 = arith.constant 0 : index
    %176 = vector.load %arg12[%c1_109, %c0_110, %c0_111] : memref<3x64x192xbf16, #tpu.memory_space<vmem>>, vector<1x64x192xbf16>
    %177 = vector.shape_cast %176 : vector<1x64x192xbf16> to vector<64x192xbf16>
    %c2_112 = arith.constant 2 : index
    %c0_113 = arith.constant 0 : index
    %c0_114 = arith.constant 0 : index
    %178 = vector.load %arg12[%c2_112, %c0_113, %c0_114] : memref<3x64x192xbf16, #tpu.memory_space<vmem>>, vector<1x64x192xbf16>
    %179 = vector.shape_cast %178 : vector<1x64x192xbf16> to vector<64x192xbf16>
    %c0_115 = arith.constant 0 : index
    %c0_116 = arith.constant 0 : index
    %180 = vector.load %arg13[%c0_115, %c0_116] : memref<64x1xf32, #tpu.memory_space<vmem>>, vector<64x1xf32>
    %c0_117 = arith.constant 0 : index
    %c0_118 = arith.constant 0 : index
    %181 = vector.load %arg19[%c0_117, %c0_118] : memref<192x288xbf16, #tpu.memory_space<vmem>>, vector<192x128xbf16>
    %cst_119 = arith.constant dense<0.000000e+00> : vector<64x128xf32>
    %182 = tpu.matmul %175, %181, %cst_119 {dimension_numbers = #tpu.dot_dimension_numbers<[1], [0], [0], [1], [0, 0, 1, 1], [], []>} : vector<64x192xbf16>, vector<192x128xbf16>, vector<64x128xf32> -> vector<64x128xf32>
    %c0_120 = arith.constant 0 : index
    %c16_121 = arith.constant 16 : index
    %183 = vector.load %arg19[%c0_120, %c16_121] : memref<192x288xbf16, #tpu.memory_space<vmem>>, vector<192x128xbf16>
    %cst_122 = arith.constant dense<0.000000e+00> : vector<64x128xf32>
    %184 = tpu.matmul %177, %183, %cst_122 {dimension_numbers = #tpu.dot_dimension_numbers<[1], [0], [0], [1], [0, 0, 1, 1], [], []>} : vector<64x192xbf16>, vector<192x128xbf16>, vector<64x128xf32> -> vector<64x128xf32>
    %185 = arith.addf %182, %184 : vector<64x128xf32>
    %c0_123 = arith.constant 0 : index
    %c32_124 = arith.constant 32 : index
    %186 = vector.load %arg19[%c0_123, %c32_124] : memref<192x288xbf16, #tpu.memory_space<vmem>>, vector<192x128xbf16>
    %cst_125 = arith.constant dense<0.000000e+00> : vector<64x128xf32>
    %187 = tpu.matmul %179, %186, %cst_125 {dimension_numbers = #tpu.dot_dimension_numbers<[1], [0], [0], [1], [0, 0, 1, 1], [], []>} : vector<64x192xbf16>, vector<192x128xbf16>, vector<64x128xf32> -> vector<64x128xf32>
    %188 = arith.addf %185, %187 : vector<64x128xf32>
    %189 = vector.broadcast %180 : vector<64x1xf32> to vector<64x128xf32>
    %190 = arith.addf %188, %189 : vector<64x128xf32>
    %cst_126 = arith.constant 0.000000e+00 : f32
    %191 = vector.broadcast %cst_126 : f32 to vector<64x128xf32>
    %192 = arith.cmpf oge, %190, %191 : vector<64x128xf32>
    %cst_127 = arith.constant 1.000000e-01 : f32
    %193 = vector.broadcast %cst_127 : f32 to vector<64x128xf32>
    %194 = arith.mulf %190, %193 : vector<64x128xf32>
    %195 = arith.select %192, %190, %194 : vector<64x128xi1>, vector<64x128xf32>
    %c0_128 = arith.constant 0 : index
    %c0_129 = arith.constant 0 : index
    %c0_130 = arith.constant 0 : index
    %196 = vector.load %arg16[%c0_128, %c0_129, %c0_130] : memref<1x64x256xf32, #tpu.memory_space<vmem>>, vector<1x64x128xf32>
    %197 = vector.shape_cast %196 : vector<1x64x128xf32> to vector<64x128xf32>
    %198 = vector.shape_cast %195 : vector<64x128xf32> to vector<1x64x128xf32>
    tpu.vector_store %arg16[%c0_128, %c0_129, %c0_130], %198 {strides = array<i32>} : memref<1x64x256xf32, #tpu.memory_space<vmem>>, vector<1x64x128xf32>,
    %c0_131 = arith.constant 0 : index
    %c128_132 = arith.constant 128 : index
    %199 = vector.load %arg19[%c0_131, %c128_132] : memref<192x288xbf16, #tpu.memory_space<vmem>>, vector<192x128xbf16>
    %cst_133 = arith.constant dense<0.000000e+00> : vector<64x128xf32>
    %200 = tpu.matmul %175, %199, %cst_133 {dimension_numbers = #tpu.dot_dimension_numbers<[1], [0], [0], [1], [0, 0, 1, 1], [], []>} : vector<64x192xbf16>, vector<192x128xbf16>, vector<64x128xf32> -> vector<64x128xf32>
    %c0_134 = arith.constant 0 : index
    %c144_135 = arith.constant 144 : index
    %201 = vector.load %arg19[%c0_134, %c144_135] : memref<192x288xbf16, #tpu.memory_space<vmem>>, vector<192x128xbf16>
    %cst_136 = arith.constant dense<0.000000e+00> : vector<64x128xf32>
    %202 = tpu.matmul %177, %201, %cst_136 {dimension_numbers = #tpu.dot_dimension_numbers<[1], [0], [0], [1], [0, 0, 1, 1], [], []>} : vector<64x192xbf16>, vector<192x128xbf16>, vector<64x128xf32> -> vector<64x128xf32>
    %203 = arith.addf %200, %202 : vector<64x128xf32>
    %c0_137 = arith.constant 0 : index
    %c160 = arith.constant 160 : index
    %204 = vector.load %arg19[%c0_137, %c160] : memref<192x288xbf16, #tpu.memory_space<vmem>>, vector<192x128xbf16>
    %cst_138 = arith.constant dense<0.000000e+00> : vector<64x128xf32>
    %205 = tpu.matmul %179, %204, %cst_138 {dimension_numbers = #tpu.dot_dimension_numbers<[1], [0], [0], [1], [0, 0, 1, 1], [], []>} : vector<64x192xbf16>, vector<192x128xbf16>, vector<64x128xf32> -> vector<64x128xf32>
    %206 = arith.addf %203, %205 : vector<64x128xf32>
    %207 = vector.broadcast %180 : vector<64x1xf32> to vector<64x128xf32>
    %208 = arith.addf %206, %207 : vector<64x128xf32>
    %cst_139 = arith.constant 0.000000e+00 : f32
    %209 = vector.broadcast %cst_139 : f32 to vector<64x128xf32>
    %210 = arith.cmpf oge, %208, %209 : vector<64x128xf32>
    %cst_140 = arith.constant 1.000000e-01 : f32
    %211 = vector.broadcast %cst_140 : f32 to vector<64x128xf32>
    %212 = arith.mulf %208, %211 : vector<64x128xf32>
    %213 = arith.select %210, %208, %212 : vector<64x128xi1>, vector<64x128xf32>
    %c0_141 = arith.constant 0 : index
    %c0_142 = arith.constant 0 : index
    %c128_143 = arith.constant 128 : index
    %214 = vector.load %arg16[%c0_141, %c0_142, %c128_143] : memref<1x64x256xf32, #tpu.memory_space<vmem>>, vector<1x64x128xf32>
    %215 = vector.shape_cast %214 : vector<1x64x128xf32> to vector<64x128xf32>
    %216 = vector.shape_cast %213 : vector<64x128xf32> to vector<1x64x128xf32>
    tpu.vector_store %arg16[%c0_141, %c0_142, %c128_143], %216 {strides = array<i32>} : memref<1x64x256xf32, #tpu.memory_space<vmem>>, vector<1x64x128xf32>,
    return
  }
  func.func @transform_0(%arg0: i32) -> (i32, i32, i32) {
    %c0_i32 = arith.constant 0 : i32
    %c0_i32_0 = arith.constant 0 : i32
    %c0_i32_1 = arith.constant 0 : i32
    return %arg0, %c0_i32, %c0_i32_0 : i32, i32, i32
  }
  func.func @transform_1(%arg0: i32) -> (i32, i32, i32) {
    %c0_i32 = arith.constant 0 : i32
    %c0_i32_0 = arith.constant 0 : i32
    %c0_i32_1 = arith.constant 0 : i32
    return %arg0, %c0_i32, %c0_i32_0 : i32, i32, i32
  }
  func.func @transform_2(%arg0: i32) -> (i32, i32, i32) {
    %c0_i32 = arith.constant 0 : i32
    %c0_i32_0 = arith.constant 0 : i32
    %c0_i32_1 = arith.constant 0 : i32
    return %arg0, %c0_i32, %c0_i32_0 : i32, i32, i32
  }
  func.func @transform_3(%arg0: i32) -> (i32, i32) {
    %c0_i32 = arith.constant 0 : i32
    %c0_i32_0 = arith.constant 0 : i32
    %c0_i32_1 = arith.constant 0 : i32
    return %c0_i32, %c0_i32_0 : i32, i32
  }
  func.func @transform_4(%arg0: i32) -> (i32, i32) {
    %c0_i32 = arith.constant 0 : i32
    %c0_i32_0 = arith.constant 0 : i32
    %c0_i32_1 = arith.constant 0 : i32
    return %c0_i32, %c0_i32_0 : i32, i32
  }
  func.func @transform_5(%arg0: i32) -> (i32, i32) {
    %c0_i32 = arith.constant 0 : i32
    %c0_i32_0 = arith.constant 0 : i32
    %c0_i32_1 = arith.constant 0 : i32
    return %c0_i32, %c0_i32_0 : i32, i32
  }
  func.func @transform_6(%arg0: i32) -> (i32, i32) {
    %c0_i32 = arith.constant 0 : i32
    %c0_i32_0 = arith.constant 0 : i32
    %c0_i32_1 = arith.constant 0 : i32
    return %c0_i32, %c0_i32_0 : i32, i32
  }
  func.func @transform_7(%arg0: i32) -> (i32, i32) {
    %c0_i32 = arith.constant 0 : i32
    %c0_i32_0 = arith.constant 0 : i32
    %c0_i32_1 = arith.constant 0 : i32
    return %c0_i32, %c0_i32_0 : i32, i32
  }
  func.func @transform_8(%arg0: i32) -> (i32, i32) {
    %c0_i32 = arith.constant 0 : i32
    %c0_i32_0 = arith.constant 0 : i32
    %c0_i32_1 = arith.constant 0 : i32
    return %c0_i32, %c0_i32_0 : i32, i32
  }
  func.func @transform_9(%arg0: i32) -> (i32, i32, i32) {
    %c0_i32 = arith.constant 0 : i32
    %c0_i32_0 = arith.constant 0 : i32
    %c0_i32_1 = arith.constant 0 : i32
    %c0_i32_2 = arith.constant 0 : i32
    return %c0_i32, %c0_i32_0, %c0_i32_1 : i32, i32, i32
  }
  func.func @transform_10(%arg0: i32) -> (i32, i32) {
    %c0_i32 = arith.constant 0 : i32
    %c0_i32_0 = arith.constant 0 : i32
    %c0_i32_1 = arith.constant 0 : i32
    return %c0_i32, %c0_i32_0 : i32, i32
  }
  func.func @transform_11(%arg0: i32) -> (i32, i32, i32) {
    %c0_i32 = arith.constant 0 : i32
    %c0_i32_0 = arith.constant 0 : i32
    %c0_i32_1 = arith.constant 0 : i32
    %c0_i32_2 = arith.constant 0 : i32
    return %c0_i32, %c0_i32_0, %c0_i32_1 : i32, i32, i32
  }
  func.func @transform_12(%arg0: i32) -> (i32, i32) {
    %c0_i32 = arith.constant 0 : i32
    %c0_i32_0 = arith.constant 0 : i32
    %c0_i32_1 = arith.constant 0 : i32
    return %c0_i32, %c0_i32_0 : i32, i32
  }
  func.func @transform_13(%arg0: i32) -> (i32, i32) {
    %c0_i32 = arith.constant 0 : i32
    %c0_i32_0 = arith.constant 0 : i32
    %c0_i32_1 = arith.constant 0 : i32
    return %c0_i32, %c0_i32_0 : i32, i32
  }
  func.func @transform_14(%arg0: i32) -> (i32, i32) {
    %c0_i32 = arith.constant 0 : i32
    %c0_i32_0 = arith.constant 0 : i32
    %c0_i32_1 = arith.constant 0 : i32
    return %c0_i32, %c0_i32_0 : i32, i32
  }
  func.func @transform_15(%arg0: i32) -> (i32, i32, i32) {
    %c0_i32 = arith.constant 0 : i32
    %c0_i32_0 = arith.constant 0 : i32
    %c0_i32_1 = arith.constant 0 : i32
    return %arg0, %c0_i32, %c0_i32_0 : i32, i32, i32
  }
  func.func @transform_16(%arg0: i32) -> (i32, i32, i32) {
    %c0_i32 = arith.constant 0 : i32
    %c0_i32_0 = arith.constant 0 : i32
    %c0_i32_1 = arith.constant 0 : i32
    return %arg0, %c0_i32, %c0_i32_0 : i32, i32, i32
  }
  func.func @transform_17(%arg0: i32) -> (i32, i32, i32) {
    %c0_i32 = arith.constant 0 : i32
    %c0_i32_0 = arith.constant 0 : i32
    %c0_i32_1 = arith.constant 0 : i32
    return %arg0, %c0_i32, %c0_i32_0 : i32, i32, i32
  }
}

module attributes {stable_mosaic.version = 11 : i64} {
  func.func @_fpn_kernel(%arg0: i32, %arg1: memref<1x16x256xbf16, #tpu.memory_space<vmem>>, %arg2: memref<1x32x64xbf16, #tpu.memory_space<vmem>>, %arg3: memref<1x64x16xbf16, #tpu.memory_space<vmem>>, %arg4: memref<64x16xbf16, #tpu.memory_space<vmem>>, %arg5: memref<64x1xf32, #tpu.memory_space<vmem>>, %arg6: memref<64x32xbf16, #tpu.memory_space<vmem>>, %arg7: memref<64x1xf32, #tpu.memory_space<vmem>>, %arg8: memref<64x64xbf16, #tpu.memory_space<vmem>>, %arg9: memref<64x1xf32, #tpu.memory_space<vmem>>, %arg10: memref<3x64x192xbf16, #tpu.memory_space<vmem>>, %arg11: memref<64x1xf32, #tpu.memory_space<vmem>>, %arg12: memref<3x64x192xbf16, #tpu.memory_space<vmem>>, %arg13: memref<64x1xf32, #tpu.memory_space<vmem>>, %arg14: memref<16x64xbf16, #tpu.memory_space<vmem>>, %arg15: memref<32x128xbf16, #tpu.memory_space<vmem>>, %arg16: memref<1x64x256xf32, #tpu.memory_space<vmem>>, %arg17: memref<1x64x64xf32, #tpu.memory_space<vmem>>, %arg18: memref<1x64x16xf32, #tpu.memory_space<vmem>>, %arg19: memref<192x288xbf16, #tpu.memory_space<vmem>>, %arg20: memref<64x16xbf16, #tpu.memory_space<vmem>>, %arg21: memref<64x64xbf16, #tpu.memory_space<vmem>>) attributes {dimension_semantics = [#tpu.dimension_semantics<parallel>], iteration_bounds = array<i64: 2>, scalar_prefetch = 0 : i64, scratch_operands = 3 : i64, tpu.core_type = #tpu.core_type<tc>, window_params = [{transform_indices = @transform_0, window_bounds = array<i64: 1, 16, 256>}, {transform_indices = @transform_1, window_bounds = array<i64: 1, 32, 64>}, {transform_indices = @transform_2, window_bounds = array<i64: 1, 64, 16>}, {pipeline_mode = #tpu.pipeline_mode<synchronous>, transform_indices = @transform_3, window_bounds = array<i64: 64, 16>}, {pipeline_mode = #tpu.pipeline_mode<synchronous>, transform_indices = @transform_4, window_bounds = array<i64: 64, 1>}, {pipeline_mode = #tpu.pipeline_mode<synchronous>, transform_indices = @transform_5, window_bounds = array<i64: 64, 32>}, {pipeline_mode = #tpu.pipeline_mode<synchronous>, transform_indices = @transform_6, window_bounds = array<i64: 64, 1>}, {pipeline_mode = #tpu.pipeline_mode<synchronous>, transform_indices = @transform_7, window_bounds = array<i64: 64, 64>}, {pipeline_mode = #tpu.pipeline_mode<synchronous>, transform_indices = @transform_8, window_bounds = array<i64: 64, 1>}, {pipeline_mode = #tpu.pipeline_mode<synchronous>, transform_indices = @transform_9, window_bounds = array<i64: 3, 64, 192>}, {pipeline_mode = #tpu.pipeline_mode<synchronous>, transform_indices = @transform_10, window_bounds = array<i64: 64, 1>}, {pipeline_mode = #tpu.pipeline_mode<synchronous>, transform_indices = @transform_11, window_bounds = array<i64: 3, 64, 192>}, {pipeline_mode = #tpu.pipeline_mode<synchronous>, transform_indices = @transform_12, window_bounds = array<i64: 64, 1>}, {pipeline_mode = #tpu.pipeline_mode<synchronous>, transform_indices = @transform_13, window_bounds = array<i64: 16, 64>}, {pipeline_mode = #tpu.pipeline_mode<synchronous>, transform_indices = @transform_14, window_bounds = array<i64: 32, 128>}, {transform_indices = @transform_15, window_bounds = array<i64: 1, 64, 256>}, {transform_indices = @transform_16, window_bounds = array<i64: 1, 64, 64>}, {transform_indices = @transform_17, window_bounds = array<i64: 1, 64, 16>}]} {
    %c0 = arith.constant 0 : index
    %c0_0 = arith.constant 0 : index
    %0 = vector.load %arg8[%c0, %c0_0] : memref<64x64xbf16, #tpu.memory_space<vmem>>, vector<64x64xbf16>
    %c0_1 = arith.constant 0 : index
    %c0_2 = arith.constant 0 : index
    %c0_3 = arith.constant 0 : index
    %1 = vector.load %arg3[%c0_1, %c0_2, %c0_3] : memref<1x64x16xbf16, #tpu.memory_space<vmem>>, vector<1x64x16xbf16>
    %2 = vector.shape_cast %1 : vector<1x64x16xbf16> to vector<64x16xbf16>
    %cst = arith.constant dense<0.000000e+00> : vector<64x16xf32>
    %3 = tpu.matmul %0, %2, %cst {dimension_numbers = #tpu.dot_dimension_numbers<[1], [0], [0], [1], [0, 0, 1, 1], [], []>} : vector<64x64xbf16>, vector<64x16xbf16>, vector<64x16xf32> -> vector<64x16xf32>
    %c0_4 = arith.constant 0 : index
    %c0_5 = arith.constant 0 : index
    %4 = vector.load %arg9[%c0_4, %c0_5] : memref<64x1xf32, #tpu.memory_space<vmem>>, vector<64x1xf32>
    %5 = vector.broadcast %4 : vector<64x1xf32> to vector<64x16xf32>
    %6 = arith.addf %3, %5 : vector<64x16xf32>
    %cst_6 = arith.constant 0.000000e+00 : f32
    %7 = vector.broadcast %cst_6 : f32 to vector<64x16xf32>
    %8 = arith.cmpf oge, %6, %7 : vector<64x16xf32>
    %cst_7 = arith.constant 1.000000e-01 : f32
    %9 = vector.broadcast %cst_7 : f32 to vector<64x16xf32>
    %10 = arith.mulf %6, %9 : vector<64x16xf32>
    %11 = arith.select %8, %6, %10 : vector<64x16xi1>, vector<64x16xf32>
    %c0_8 = arith.constant 0 : index
    %c0_9 = arith.constant 0 : index
    %c0_10 = arith.constant 0 : index
    %12 = vector.load %arg18[%c0_8, %c0_9, %c0_10] : memref<1x64x16xf32, #tpu.memory_space<vmem>>, vector<1x64x16xf32>
    %13 = vector.shape_cast %12 : vector<1x64x16xf32> to vector<64x16xf32>
    %14 = vector.shape_cast %11 : vector<64x16xf32> to vector<1x64x16xf32>
    tpu.vector_store %arg18[%c0_8, %c0_9, %c0_10], %14 {strides = array<i32>} : memref<1x64x16xf32, #tpu.memory_space<vmem>>, vector<1x64x16xf32>,
    %15 = arith.truncf %11 : vector<64x16xf32> to vector<64x16xbf16>
    %c0_11 = arith.constant 0 : index
    %c0_12 = arith.constant 0 : index
    %16 = vector.load %arg20[%c0_11, %c0_12] : memref<64x16xbf16, #tpu.memory_space<vmem>>, vector<64x16xbf16>
    tpu.vector_store %arg20[%c0_11, %c0_12], %15 {strides = array<i32>} : memref<64x16xbf16, #tpu.memory_space<vmem>>, vector<64x16xbf16>,
    %cst_13 = arith.constant 0.000000e+00 : bf16
    %17 = vector.broadcast %cst_13 : bf16 to vector<192x9xbf16>
    %c0_14 = arith.constant 0 : index
    %c0_15 = arith.constant 0 : index
    %18 = vector.load %arg19[%c0_14, %c0_15] : memref<192x288xbf16, #tpu.memory_space<vmem>>, vector<192x9xbf16>
    tpu.vector_store %arg19[%c0_14, %c0_15], %17 {strides = array<i32>} : memref<192x288xbf16, #tpu.memory_space<vmem>>, vector<192x9xbf16>,
    %c0_16 = arith.constant 0 : index
    %c71 = arith.constant 71 : index
    %19 = vector.load %arg19[%c0_16, %c71] : memref<192x288xbf16, #tpu.memory_space<vmem>>, vector<192x9xbf16>
    tpu.vector_store %arg19[%c0_16, %c71], %17 {strides = array<i32>} : memref<192x288xbf16, #tpu.memory_space<vmem>>, vector<192x9xbf16>,
    %c0_17 = arith.constant 0 : index
    %c0_18 = arith.constant 0 : index
    %20 = vector.load %arg6[%c0_17, %c0_18] : memref<64x32xbf16, #tpu.memory_space<vmem>>, vector<64x32xbf16>
    %c0_19 = arith.constant 0 : index
    %c0_20 = arith.constant 0 : index
    %21 = vector.load %arg7[%c0_19, %c0_20] : memref<64x1xf32, #tpu.memory_space<vmem>>, vector<64x1xf32>
    %c0_21 = arith.constant 0 : index
    %c0_22 = arith.constant 0 : index
    %22 = vector.load %arg14[%c0_21, %c0_22] : memref<16x64xbf16, #tpu.memory_space<vmem>>, vector<16x64xbf16>
    %23 = tpu.iota {dimensions = array<i32: 1>} : vector<1x64xi32>
    %c8_i32 = arith.constant 8 : i32
    %c0_i32 = arith.constant 0 : i32
    %24 = arith.cmpi eq, %c8_i32, %c0_i32 : i32
    %c1_i32 = arith.constant 1 : i32
    %25 = arith.select %24, %c1_i32, %c8_i32 : i32
    %26 = vector.broadcast %25 : i32 to vector<1x64xi32>
    %27 = arith.remsi %23, %26 : vector<1x64xi32>
    %c0_i32_23 = arith.constant 0 : i32
    %28 = vector.broadcast %c0_i32_23 : i32 to vector<1x64xi32>
    %29 = arith.cmpi ne, %27, %28 : vector<1x64xi32>
    %c0_i32_24 = arith.constant 0 : i32
    %30 = vector.broadcast %c0_i32_24 : i32 to vector<1x64xi32>
    %31 = arith.cmpi slt, %27, %30 : vector<1x64xi32>
    %c0_i32_25 = arith.constant 0 : i32
    %32 = arith.cmpi slt, %25, %c0_i32_25 : i32
    %33 = vector.broadcast %32 : i1 to vector<1x64xi1>
    %34 = vector.broadcast %33 : vector<1x64xi1> to vector<1x64xi1>
    %35 = arith.xori %31, %34 : vector<1x64xi1>
    %36 = arith.andi %35, %29 : vector<1x64xi1>
    %37 = vector.broadcast %25 : i32 to vector<1x64xi32>
    %38 = arith.addi %27, %37 : vector<1x64xi32>
    %39 = arith.select %36, %38, %27 : vector<1x64xi1>, vector<1x64xi32>
    %c0_26 = arith.constant 0 : index
    %c0_27 = arith.constant 0 : index
    %c0_28 = arith.constant 0 : index
    %40 = vector.load %arg2[%c0_26, %c0_27, %c0_28] : memref<1x32x64xbf16, #tpu.memory_space<vmem>>, vector<1x32x64xbf16>
    %41 = vector.shape_cast %40 : vector<1x32x64xbf16> to vector<32x64xbf16>
    %cst_29 = arith.constant dense<0.000000e+00> : vector<64x64xf32>
    %42 = tpu.matmul %20, %41, %cst_29 {dimension_numbers = #tpu.dot_dimension_numbers<[1], [0], [0], [1], [0, 0, 1, 1], [], []>} : vector<64x32xbf16>, vector<32x64xbf16>, vector<64x64xf32> -> vector<64x64xf32>
    %43 = vector.broadcast %21 : vector<64x1xf32> to vector<64x64xf32>
    %44 = arith.addf %42, %43 : vector<64x64xf32>
    %cst_30 = arith.constant 0.000000e+00 : f32
    %45 = vector.broadcast %cst_30 : f32 to vector<64x64xf32>
    %46 = arith.cmpf oge, %44, %45 : vector<64x64xf32>
    %cst_31 = arith.constant 1.000000e-01 : f32
    %47 = vector.broadcast %cst_31 : f32 to vector<64x64xf32>
    %48 = arith.mulf %44, %47 : vector<64x64xf32>
    %49 = arith.select %46, %44, %48 : vector<64x64xi1>, vector<64x64xf32>
    %c0_32 = arith.constant 0 : index
    %c0_33 = arith.constant 0 : index
    %50 = vector.load %arg20[%c0_32, %c0_33] : memref<64x16xbf16, #tpu.memory_space<vmem>>, vector<64x16xbf16>
    %cst_34 = arith.constant dense<0.000000e+00> : vector<64x64xf32>
    %51 = tpu.matmul %50, %22, %cst_34 {dimension_numbers = #tpu.dot_dimension_numbers<[1], [0], [0], [1], [0, 0, 1, 1], [], []>} : vector<64x16xbf16>, vector<16x64xbf16>, vector<64x64xf32> -> vector<64x64xf32>
    %52 = arith.addf %49, %51 : vector<64x64xf32>
    %53 = arith.truncf %52 : vector<64x64xf32> to vector<64x64xbf16>
    %cst_35 = arith.constant 0.000000e+00 : bf16
    %54 = vector.broadcast %cst_35 : bf16 to vector<64x64xbf16>
    %c64 = arith.constant 64 : index
    %c8 = arith.constant 8 : index
    %55 = vector.load %arg19[%c64, %c8] : memref<192x288xbf16, #tpu.memory_space<vmem>>, vector<64x64xbf16>
    tpu.vector_store %arg19[%c64, %c8], %53 {strides = array<i32>} : memref<192x288xbf16, #tpu.memory_space<vmem>>, vector<64x64xbf16>,
    %c7_i32 = arith.constant 7 : i32
    %56 = vector.broadcast %c7_i32 : i32 to vector<1x64xi32>
    %57 = arith.cmpi eq, %39, %56 : vector<1x64xi32>
    %58 = vector.shape_cast %57 : vector<1x64xi1> to vector<1x64xi1>
    %59 = vector.broadcast %58 : vector<1x64xi1> to vector<64x64xi1>
    %60 = arith.select %59, %54, %53 : vector<64x64xi1>, vector<64x64xbf16>
    %c0_36 = arith.constant 0 : index
    %c9 = arith.constant 9 : index
    %61 = vector.load %arg19[%c0_36, %c9] : memref<192x288xbf16, #tpu.memory_space<vmem>>, vector<64x64xbf16>
    tpu.vector_store %arg19[%c0_36, %c9], %60 {strides = array<i32>} : memref<192x288xbf16, #tpu.memory_space<vmem>>, vector<64x64xbf16>,
    %c0_i32_37 = arith.constant 0 : i32
    %62 = vector.broadcast %c0_i32_37 : i32 to vector<1x64xi32>
    %63 = arith.cmpi eq, %39, %62 : vector<1x64xi32>
    %64 = vector.shape_cast %63 : vector<1x64xi1> to vector<1x64xi1>
    %65 = vector.broadcast %64 : vector<1x64xi1> to vector<64x64xi1>
    %66 = arith.select %65, %54, %53 : vector<64x64xi1>, vector<64x64xbf16>
    %c128 = arith.constant 128 : index
    %c7 = arith.constant 7 : index
    %67 = vector.load %arg19[%c128, %c7] : memref<192x288xbf16, #tpu.memory_space<vmem>>, vector<64x64xbf16>
    tpu.vector_store %arg19[%c128, %c7], %66 {strides = array<i32>} : memref<192x288xbf16, #tpu.memory_space<vmem>>, vector<64x64xbf16>,
    %c0_38 = arith.constant 0 : index
    %c0_39 = arith.constant 0 : index
    %c0_40 = arith.constant 0 : index
    %68 = vector.load %arg10[%c0_38, %c0_39, %c0_40] : memref<3x64x192xbf16, #tpu.memory_space<vmem>>, vector<1x64x192xbf16>
    %69 = vector.shape_cast %68 : vector<1x64x192xbf16> to vector<64x192xbf16>
    %c1 = arith.constant 1 : index
    %c0_41 = arith.constant 0 : index
    %c0_42 = arith.constant 0 : index
    %70 = vector.load %arg10[%c1, %c0_41, %c0_42] : memref<3x64x192xbf16, #tpu.memory_space<vmem>>, vector<1x64x192xbf16>
    %71 = vector.shape_cast %70 : vector<1x64x192xbf16> to vector<64x192xbf16>
    %c2 = arith.constant 2 : index
    %c0_43 = arith.constant 0 : index
    %c0_44 = arith.constant 0 : index
    %72 = vector.load %arg10[%c2, %c0_43, %c0_44] : memref<3x64x192xbf16, #tpu.memory_space<vmem>>, vector<1x64x192xbf16>
    %73 = vector.shape_cast %72 : vector<1x64x192xbf16> to vector<64x192xbf16>
    %c0_45 = arith.constant 0 : index
    %c0_46 = arith.constant 0 : index
    %74 = vector.load %arg11[%c0_45, %c0_46] : memref<64x1xf32, #tpu.memory_space<vmem>>, vector<64x1xf32>
    %c0_47 = arith.constant 0 : index
    %c0_48 = arith.constant 0 : index
    %75 = vector.load %arg19[%c0_47, %c0_48] : memref<192x288xbf16, #tpu.memory_space<vmem>>, vector<192x64xbf16>
    %cst_49 = arith.constant dense<0.000000e+00> : vector<64x64xf32>
    %76 = tpu.matmul %69, %75, %cst_49 {dimension_numbers = #tpu.dot_dimension_numbers<[1], [0], [0], [1], [0, 0, 1, 1], [], []>} : vector<64x192xbf16>, vector<192x64xbf16>, vector<64x64xf32> -> vector<64x64xf32>
    %c0_50 = arith.constant 0 : index
    %c8_51 = arith.constant 8 : index
    %77 = vector.load %arg19[%c0_50, %c8_51] : memref<192x288xbf16, #tpu.memory_space<vmem>>, vector<192x64xbf16>
    %cst_52 = arith.constant dense<0.000000e+00> : vector<64x64xf32>
    %78 = tpu.matmul %71, %77, %cst_52 {dimension_numbers = #tpu.dot_dimension_numbers<[1], [0], [0], [1], [0, 0, 1, 1], [], []>} : vector<64x192xbf16>, vector<192x64xbf16>, vector<64x64xf32> -> vector<64x64xf32>
    %79 = arith.addf %76, %78 : vector<64x64xf32>
    %c0_53 = arith.constant 0 : index
    %c16 = arith.constant 16 : index
    %80 = vector.load %arg19[%c0_53, %c16] : memref<192x288xbf16, #tpu.memory_space<vmem>>, vector<192x64xbf16>
    %cst_54 = arith.constant dense<0.000000e+00> : vector<64x64xf32>
    %81 = tpu.matmul %73, %80, %cst_54 {dimension_numbers = #tpu.dot_dimension_numbers<[1], [0], [0], [1], [0, 0, 1, 1], [], []>} : vector<64x192xbf16>, vector<192x64xbf16>, vector<64x64xf32> -> vector<64x64xf32>
    %82 = arith.addf %79, %81 : vector<64x64xf32>
    %83 = vector.broadcast %74 : vector<64x1xf32> to vector<64x64xf32>
    %84 = arith.addf %82, %83 : vector<64x64xf32>
    %cst_55 = arith.constant 0.000000e+00 : f32
    %85 = vector.broadcast %cst_55 : f32 to vector<64x64xf32>
    %86 = arith.cmpf oge, %84, %85 : vector<64x64xf32>
    %cst_56 = arith.constant 1.000000e-01 : f32
    %87 = vector.broadcast %cst_56 : f32 to vector<64x64xf32>
    %88 = arith.mulf %84, %87 : vector<64x64xf32>
    %89 = arith.select %86, %84, %88 : vector<64x64xi1>, vector<64x64xf32>
    %c0_57 = arith.constant 0 : index
    %c0_58 = arith.constant 0 : index
    %c0_59 = arith.constant 0 : index
    %90 = vector.load %arg17[%c0_57, %c0_58, %c0_59] : memref<1x64x64xf32, #tpu.memory_space<vmem>>, vector<1x64x64xf32>
    %91 = vector.shape_cast %90 : vector<1x64x64xf32> to vector<64x64xf32>
    %92 = vector.shape_cast %89 : vector<64x64xf32> to vector<1x64x64xf32>
    tpu.vector_store %arg17[%c0_57, %c0_58, %c0_59], %92 {strides = array<i32>} : memref<1x64x64xf32, #tpu.memory_space<vmem>>, vector<1x64x64xf32>,
    %93 = arith.truncf %89 : vector<64x64xf32> to vector<64x64xbf16>
    %c0_60 = arith.constant 0 : index
    %c0_61 = arith.constant 0 : index
    %94 = vector.load %arg21[%c0_60, %c0_61] : memref<64x64xbf16, #tpu.memory_space<vmem>>, vector<64x64xbf16>
    tpu.vector_store %arg21[%c0_60, %c0_61], %93 {strides = array<i32>} : memref<64x64xbf16, #tpu.memory_space<vmem>>, vector<64x64xbf16>,
    %cst_62 = arith.constant 0.000000e+00 : bf16
    %95 = vector.broadcast %cst_62 : bf16 to vector<192x17xbf16>
    %c0_63 = arith.constant 0 : index
    %c0_64 = arith.constant 0 : index
    %96 = vector.load %arg19[%c0_63, %c0_64] : memref<192x288xbf16, #tpu.memory_space<vmem>>, vector<192x17xbf16>
    tpu.vector_store %arg19[%c0_63, %c0_64], %95 {strides = array<i32>} : memref<192x288xbf16, #tpu.memory_space<vmem>>, vector<192x17xbf16>,
    %c0_65 = arith.constant 0 : index
    %c271 = arith.constant 271 : index
    %97 = vector.load %arg19[%c0_65, %c271] : memref<192x288xbf16, #tpu.memory_space<vmem>>, vector<192x17xbf16>
    tpu.vector_store %arg19[%c0_65, %c271], %95 {strides = array<i32>} : memref<192x288xbf16, #tpu.memory_space<vmem>>, vector<192x17xbf16>,
    %c0_66 = arith.constant 0 : index
    %c0_67 = arith.constant 0 : index
    %98 = vector.load %arg4[%c0_66, %c0_67] : memref<64x16xbf16, #tpu.memory_space<vmem>>, vector<64x16xbf16>
    %c0_68 = arith.constant 0 : index
    %c0_69 = arith.constant 0 : index
    %99 = vector.load %arg5[%c0_68, %c0_69] : memref<64x1xf32, #tpu.memory_space<vmem>>, vector<64x1xf32>
    %c0_70 = arith.constant 0 : index
    %c0_71 = arith.constant 0 : index
    %100 = vector.load %arg15[%c0_70, %c0_71] : memref<32x128xbf16, #tpu.memory_space<vmem>>, vector<32x128xbf16>
    %101 = tpu.iota {dimensions = array<i32: 1>} : vector<1x128xi32>
    %c16_i32 = arith.constant 16 : i32
    %c0_i32_72 = arith.constant 0 : i32
    %102 = arith.cmpi eq, %c16_i32, %c0_i32_72 : i32
    %c1_i32_73 = arith.constant 1 : i32
    %103 = arith.select %102, %c1_i32_73, %c16_i32 : i32
    %104 = vector.broadcast %103 : i32 to vector<1x128xi32>
    %105 = arith.remsi %101, %104 : vector<1x128xi32>
    %c0_i32_74 = arith.constant 0 : i32
    %106 = vector.broadcast %c0_i32_74 : i32 to vector<1x128xi32>
    %107 = arith.cmpi ne, %105, %106 : vector<1x128xi32>
    %c0_i32_75 = arith.constant 0 : i32
    %108 = vector.broadcast %c0_i32_75 : i32 to vector<1x128xi32>
    %109 = arith.cmpi slt, %105, %108 : vector<1x128xi32>
    %c0_i32_76 = arith.constant 0 : i32
    %110 = arith.cmpi slt, %103, %c0_i32_76 : i32
    %111 = vector.broadcast %110 : i1 to vector<1x128xi1>
    %112 = vector.broadcast %111 : vector<1x128xi1> to vector<1x128xi1>
    %113 = arith.xori %109, %112 : vector<1x128xi1>
    %114 = arith.andi %113, %107 : vector<1x128xi1>
    %115 = vector.broadcast %103 : i32 to vector<1x128xi32>
    %116 = arith.addi %105, %115 : vector<1x128xi32>
    %117 = arith.select %114, %116, %105 : vector<1x128xi1>, vector<1x128xi32>
    %c0_77 = arith.constant 0 : index
    %c0_78 = arith.constant 0 : index
    %c0_79 = arith.constant 0 : index
    %118 = vector.load %arg1[%c0_77, %c0_78, %c0_79] : memref<1x16x256xbf16, #tpu.memory_space<vmem>>, vector<1x16x128xbf16>
    %119 = vector.shape_cast %118 : vector<1x16x128xbf16> to vector<16x128xbf16>
    %cst_80 = arith.constant dense<0.000000e+00> : vector<64x128xf32>
    %120 = tpu.matmul %98, %119, %cst_80 {dimension_numbers = #tpu.dot_dimension_numbers<[1], [0], [0], [1], [0, 0, 1, 1], [], []>} : vector<64x16xbf16>, vector<16x128xbf16>, vector<64x128xf32> -> vector<64x128xf32>
    %121 = vector.broadcast %99 : vector<64x1xf32> to vector<64x128xf32>
    %122 = arith.addf %120, %121 : vector<64x128xf32>
    %cst_81 = arith.constant 0.000000e+00 : f32
    %123 = vector.broadcast %cst_81 : f32 to vector<64x128xf32>
    %124 = arith.cmpf oge, %122, %123 : vector<64x128xf32>
    %cst_82 = arith.constant 1.000000e-01 : f32
    %125 = vector.broadcast %cst_82 : f32 to vector<64x128xf32>
    %126 = arith.mulf %122, %125 : vector<64x128xf32>
    %127 = arith.select %124, %122, %126 : vector<64x128xi1>, vector<64x128xf32>
    %c0_83 = arith.constant 0 : index
    %c0_84 = arith.constant 0 : index
    %128 = vector.load %arg21[%c0_83, %c0_84] : memref<64x64xbf16, #tpu.memory_space<vmem>>, vector<64x32xbf16>
    %cst_85 = arith.constant dense<0.000000e+00> : vector<64x128xf32>
    %129 = tpu.matmul %128, %100, %cst_85 {dimension_numbers = #tpu.dot_dimension_numbers<[1], [0], [0], [1], [0, 0, 1, 1], [], []>} : vector<64x32xbf16>, vector<32x128xbf16>, vector<64x128xf32> -> vector<64x128xf32>
    %130 = arith.addf %127, %129 : vector<64x128xf32>
    %131 = arith.truncf %130 : vector<64x128xf32> to vector<64x128xbf16>
    %cst_86 = arith.constant 0.000000e+00 : bf16
    %132 = vector.broadcast %cst_86 : bf16 to vector<64x128xbf16>
    %c64_87 = arith.constant 64 : index
    %c16_88 = arith.constant 16 : index
    %133 = vector.load %arg19[%c64_87, %c16_88] : memref<192x288xbf16, #tpu.memory_space<vmem>>, vector<64x128xbf16>
    tpu.vector_store %arg19[%c64_87, %c16_88], %131 {strides = array<i32>} : memref<192x288xbf16, #tpu.memory_space<vmem>>, vector<64x128xbf16>,
    %c15_i32 = arith.constant 15 : i32
    %134 = vector.broadcast %c15_i32 : i32 to vector<1x128xi32>
    %135 = arith.cmpi eq, %117, %134 : vector<1x128xi32>
    %136 = vector.shape_cast %135 : vector<1x128xi1> to vector<1x128xi1>
    %137 = vector.broadcast %136 : vector<1x128xi1> to vector<64x128xi1>
    %138 = arith.select %137, %132, %131 : vector<64x128xi1>, vector<64x128xbf16>
    %c0_89 = arith.constant 0 : index
    %c17 = arith.constant 17 : index
    %139 = vector.load %arg19[%c0_89, %c17] : memref<192x288xbf16, #tpu.memory_space<vmem>>, vector<64x128xbf16>
    tpu.vector_store %arg19[%c0_89, %c17], %138 {strides = array<i32>} : memref<192x288xbf16, #tpu.memory_space<vmem>>, vector<64x128xbf16>,
    %c0_i32_90 = arith.constant 0 : i32
    %140 = vector.broadcast %c0_i32_90 : i32 to vector<1x128xi32>
    %141 = arith.cmpi eq, %117, %140 : vector<1x128xi32>
    %142 = vector.shape_cast %141 : vector<1x128xi1> to vector<1x128xi1>
    %143 = vector.broadcast %142 : vector<1x128xi1> to vector<64x128xi1>
    %144 = arith.select %143, %132, %131 : vector<64x128xi1>, vector<64x128xbf16>
    %c128_91 = arith.constant 128 : index
    %c15 = arith.constant 15 : index
    %145 = vector.load %arg19[%c128_91, %c15] : memref<192x288xbf16, #tpu.memory_space<vmem>>, vector<64x128xbf16>
    tpu.vector_store %arg19[%c128_91, %c15], %144 {strides = array<i32>} : memref<192x288xbf16, #tpu.memory_space<vmem>>, vector<64x128xbf16>,
    %c0_92 = arith.constant 0 : index
    %c0_93 = arith.constant 0 : index
    %c128_94 = arith.constant 128 : index
    %146 = vector.load %arg1[%c0_92, %c0_93, %c128_94] : memref<1x16x256xbf16, #tpu.memory_space<vmem>>, vector<1x16x128xbf16>
    %147 = vector.shape_cast %146 : vector<1x16x128xbf16> to vector<16x128xbf16>
    %cst_95 = arith.constant dense<0.000000e+00> : vector<64x128xf32>
    %148 = tpu.matmul %98, %147, %cst_95 {dimension_numbers = #tpu.dot_dimension_numbers<[1], [0], [0], [1], [0, 0, 1, 1], [], []>} : vector<64x16xbf16>, vector<16x128xbf16>, vector<64x128xf32> -> vector<64x128xf32>
    %149 = vector.broadcast %99 : vector<64x1xf32> to vector<64x128xf32>
    %150 = arith.addf %148, %149 : vector<64x128xf32>
    %cst_96 = arith.constant 0.000000e+00 : f32
    %151 = vector.broadcast %cst_96 : f32 to vector<64x128xf32>
    %152 = arith.cmpf oge, %150, %151 : vector<64x128xf32>
    %cst_97 = arith.constant 1.000000e-01 : f32
    %153 = vector.broadcast %cst_97 : f32 to vector<64x128xf32>
    %154 = arith.mulf %150, %153 : vector<64x128xf32>
    %155 = arith.select %152, %150, %154 : vector<64x128xi1>, vector<64x128xf32>
    %c0_98 = arith.constant 0 : index
    %c32 = arith.constant 32 : index
    %156 = vector.load %arg21[%c0_98, %c32] : memref<64x64xbf16, #tpu.memory_space<vmem>>, vector<64x32xbf16>
    %cst_99 = arith.constant dense<0.000000e+00> : vector<64x128xf32>
    %157 = tpu.matmul %156, %100, %cst_99 {dimension_numbers = #tpu.dot_dimension_numbers<[1], [0], [0], [1], [0, 0, 1, 1], [], []>} : vector<64x32xbf16>, vector<32x128xbf16>, vector<64x128xf32> -> vector<64x128xf32>
    %158 = arith.addf %155, %157 : vector<64x128xf32>
    %159 = arith.truncf %158 : vector<64x128xf32> to vector<64x128xbf16>
    %cst_100 = arith.constant 0.000000e+00 : bf16
    %160 = vector.broadcast %cst_100 : bf16 to vector<64x128xbf16>
    %c64_101 = arith.constant 64 : index
    %c144 = arith.constant 144 : index
    %161 = vector.load %arg19[%c64_101, %c144] : memref<192x288xbf16, #tpu.memory_space<vmem>>, vector<64x128xbf16>
    tpu.vector_store %arg19[%c64_101, %c144], %159 {strides = array<i32>} : memref<192x288xbf16, #tpu.memory_space<vmem>>, vector<64x128xbf16>,
    %c15_i32_102 = arith.constant 15 : i32
    %162 = vector.broadcast %c15_i32_102 : i32 to vector<1x128xi32>
    %163 = arith.cmpi eq, %117, %162 : vector<1x128xi32>
    %164 = vector.shape_cast %163 : vector<1x128xi1> to vector<1x128xi1>
    %165 = vector.broadcast %164 : vector<1x128xi1> to vector<64x128xi1>
    %166 = arith.select %165, %160, %159 : vector<64x128xi1>, vector<64x128xbf16>
    %c0_103 = arith.constant 0 : index
    %c145 = arith.constant 145 : index
    %167 = vector.load %arg19[%c0_103, %c145] : memref<192x288xbf16, #tpu.memory_space<vmem>>, vector<64x128xbf16>
    tpu.vector_store %arg19[%c0_103, %c145], %166 {strides = array<i32>} : memref<192x288xbf16, #tpu.memory_space<vmem>>, vector<64x128xbf16>,
    %c0_i32_104 = arith.constant 0 : i32
    %168 = vector.broadcast %c0_i32_104 : i32 to vector<1x128xi32>
    %169 = arith.cmpi eq, %117, %168 : vector<1x128xi32>
    %170 = vector.shape_cast %169 : vector<1x128xi1> to vector<1x128xi1>
    %171 = vector.broadcast %170 : vector<1x128xi1> to vector<64x128xi1>
    %172 = arith.select %171, %160, %159 : vector<64x128xi1>, vector<64x128xbf16>
    %c128_105 = arith.constant 128 : index
    %c143 = arith.constant 143 : index
    %173 = vector.load %arg19[%c128_105, %c143] : memref<192x288xbf16, #tpu.memory_space<vmem>>, vector<64x128xbf16>
    tpu.vector_store %arg19[%c128_105, %c143], %172 {strides = array<i32>} : memref<192x288xbf16, #tpu.memory_space<vmem>>, vector<64x128xbf16>,
    %c0_106 = arith.constant 0 : index
    %c0_107 = arith.constant 0 : index
    %c0_108 = arith.constant 0 : index
    %174 = vector.load %arg12[%c0_106, %c0_107, %c0_108] : memref<3x64x192xbf16, #tpu.memory_space<vmem>>, vector<1x64x192xbf16>
    %175 = vector.shape_cast %174 : vector<1x64x192xbf16> to vector<64x192xbf16>
    %c1_109 = arith.constant 1 : index
    %c0_110 = arith.constant 0 : index
    %c0_111 = arith.constant 0 : index
    %176 = vector.load %arg12[%c1_109, %c0_110, %c0_111] : memref<3x64x192xbf16, #tpu.memory_space<vmem>>, vector<1x64x192xbf16>
    %177 = vector.shape_cast %176 : vector<1x64x192xbf16> to vector<64x192xbf16>
    %c2_112 = arith.constant 2 : index
    %c0_113 = arith.constant 0 : index
    %c0_114 = arith.constant 0 : index
    %178 = vector.load %arg12[%c2_112, %c0_113, %c0_114] : memref<3x64x192xbf16, #tpu.memory_space<vmem>>, vector<1x64x192xbf16>
    %179 = vector.shape_cast %178 : vector<1x64x192xbf16> to vector<64x192xbf16>
    %c0_115 = arith.constant 0 : index
    %c0_116 = arith.constant 0 : index
    %180 = vector.load %arg13[%c0_115, %c0_116] : memref<64x1xf32, #tpu.memory_space<vmem>>, vector<64x1xf32>
    %c0_117 = arith.constant 0 : index
    %c0_118 = arith.constant 0 : index
    %181 = vector.load %arg19[%c0_117, %c0_118] : memref<192x288xbf16, #tpu.memory_space<vmem>>, vector<192x128xbf16>
    %cst_119 = arith.constant dense<0.000000e+00> : vector<64x128xf32>
    %182 = tpu.matmul %175, %181, %cst_119 {dimension_numbers = #tpu.dot_dimension_numbers<[1], [0], [0], [1], [0, 0, 1, 1], [], []>} : vector<64x192xbf16>, vector<192x128xbf16>, vector<64x128xf32> -> vector<64x128xf32>
    %c0_120 = arith.constant 0 : index
    %c16_121 = arith.constant 16 : index
    %183 = vector.load %arg19[%c0_120, %c16_121] : memref<192x288xbf16, #tpu.memory_space<vmem>>, vector<192x128xbf16>
    %cst_122 = arith.constant dense<0.000000e+00> : vector<64x128xf32>
    %184 = tpu.matmul %177, %183, %cst_122 {dimension_numbers = #tpu.dot_dimension_numbers<[1], [0], [0], [1], [0, 0, 1, 1], [], []>} : vector<64x192xbf16>, vector<192x128xbf16>, vector<64x128xf32> -> vector<64x128xf32>
    %185 = arith.addf %182, %184 : vector<64x128xf32>
    %c0_123 = arith.constant 0 : index
    %c32_124 = arith.constant 32 : index
    %186 = vector.load %arg19[%c0_123, %c32_124] : memref<192x288xbf16, #tpu.memory_space<vmem>>, vector<192x128xbf16>
    %cst_125 = arith.constant dense<0.000000e+00> : vector<64x128xf32>
    %187 = tpu.matmul %179, %186, %cst_125 {dimension_numbers = #tpu.dot_dimension_numbers<[1], [0], [0], [1], [0, 0, 1, 1], [], []>} : vector<64x192xbf16>, vector<192x128xbf16>, vector<64x128xf32> -> vector<64x128xf32>
    %188 = arith.addf %185, %187 : vector<64x128xf32>
    %189 = vector.broadcast %180 : vector<64x1xf32> to vector<64x128xf32>
    %190 = arith.addf %188, %189 : vector<64x128xf32>
    %cst_126 = arith.constant 0.000000e+00 : f32
    %191 = vector.broadcast %cst_126 : f32 to vector<64x128xf32>
    %192 = arith.cmpf oge, %190, %191 : vector<64x128xf32>
    %cst_127 = arith.constant 1.000000e-01 : f32
    %193 = vector.broadcast %cst_127 : f32 to vector<64x128xf32>
    %194 = arith.mulf %190, %193 : vector<64x128xf32>
    %195 = arith.select %192, %190, %194 : vector<64x128xi1>, vector<64x128xf32>
    %c0_128 = arith.constant 0 : index
    %c0_129 = arith.constant 0 : index
    %c0_130 = arith.constant 0 : index
    %196 = vector.load %arg16[%c0_128, %c0_129, %c0_130] : memref<1x64x256xf32, #tpu.memory_space<vmem>>, vector<1x64x128xf32>
    %197 = vector.shape_cast %196 : vector<1x64x128xf32> to vector<64x128xf32>
    %198 = vector.shape_cast %195 : vector<64x128xf32> to vector<1x64x128xf32>
    tpu.vector_store %arg16[%c0_128, %c0_129, %c0_130], %198 {strides = array<i32>} : memref<1x64x256xf32, #tpu.memory_space<vmem>>, vector<1x64x128xf32>,
    %c0_131 = arith.constant 0 : index
    %c128_132 = arith.constant 128 : index
    %199 = vector.load %arg19[%c0_131, %c128_132] : memref<192x288xbf16, #tpu.memory_space<vmem>>, vector<192x128xbf16>
    %cst_133 = arith.constant dense<0.000000e+00> : vector<64x128xf32>
    %200 = tpu.matmul %175, %199, %cst_133 {dimension_numbers = #tpu.dot_dimension_numbers<[1], [0], [0], [1], [0, 0, 1, 1], [], []>} : vector<64x192xbf16>, vector<192x128xbf16>, vector<64x128xf32> -> vector<64x128xf32>
    %c0_134 = arith.constant 0 : index
    %c144_135 = arith.constant 144 : index
    %201 = vector.load %arg19[%c0_134, %c144_135] : memref<192x288xbf16, #tpu.memory_space<vmem>>, vector<192x128xbf16>
    %cst_136 = arith.constant dense<0.000000e+00> : vector<64x128xf32>
    %202 = tpu.matmul %177, %201, %cst_136 {dimension_numbers = #tpu.dot_dimension_numbers<[1], [0], [0], [1], [0, 0, 1, 1], [], []>} : vector<64x192xbf16>, vector<192x128xbf16>, vector<64x128xf32> -> vector<64x128xf32>
    %203 = arith.addf %200, %202 : vector<64x128xf32>
    %c0_137 = arith.constant 0 : index
    %c160 = arith.constant 160 : index
    %204 = vector.load %arg19[%c0_137, %c160] : memref<192x288xbf16, #tpu.memory_space<vmem>>, vector<192x128xbf16>
    %cst_138 = arith.constant dense<0.000000e+00> : vector<64x128xf32>
    %205 = tpu.matmul %179, %204, %cst_138 {dimension_numbers = #tpu.dot_dimension_numbers<[1], [0], [0], [1], [0, 0, 1, 1], [], []>} : vector<64x192xbf16>, vector<192x128xbf16>, vector<64x128xf32> -> vector<64x128xf32>
    %206 = arith.addf %203, %205 : vector<64x128xf32>
    %207 = vector.broadcast %180 : vector<64x1xf32> to vector<64x128xf32>
    %208 = arith.addf %206, %207 : vector<64x128xf32>
    %cst_139 = arith.constant 0.000000e+00 : f32
    %209 = vector.broadcast %cst_139 : f32 to vector<64x128xf32>
    %210 = arith.cmpf oge, %208, %209 : vector<64x128xf32>
    %cst_140 = arith.constant 1.000000e-01 : f32
    %211 = vector.broadcast %cst_140 : f32 to vector<64x128xf32>
    %212 = arith.mulf %208, %211 : vector<64x128xf32>
    %213 = arith.select %210, %208, %212 : vector<64x128xi1>, vector<64x128xf32>
    %c0_141 = arith.constant 0 : index
    %c0_142 = arith.constant 0 : index
    %c128_143 = arith.constant 128 : index
    %214 = vector.load %arg16[%c0_141, %c0_142, %c128_143] : memref<1x64x256xf32, #tpu.memory_space<vmem>>, vector<1x64x128xf32>
    %215 = vector.shape_cast %214 : vector<1x64x128xf32> to vector<64x128xf32>
    %216 = vector.shape_cast %213 : vector<64x128xf32> to vector<1x64x128xf32>
    tpu.vector_store %arg16[%c0_141, %c0_142, %c128_143], %216 {strides = array<i32>} : memref<1x64x256xf32, #tpu.memory_space<vmem>>, vector<1x64x128xf32>,
    return
  }
  func.func @transform_0(%arg0: i32) -> (i32, i32, i32) {
    %c0_i32 = arith.constant 0 : i32
    %c0_i32_0 = arith.constant 0 : i32
    %c0_i32_1 = arith.constant 0 : i32
    return %arg0, %c0_i32, %c0_i32_0 : i32, i32, i32
  }
  func.func @transform_1(%arg0: i32) -> (i32, i32, i32) {
    %c0_i32 = arith.constant 0 : i32
    %c0_i32_0 = arith.constant 0 : i32
    %c0_i32_1 = arith.constant 0 : i32
    return %arg0, %c0_i32, %c0_i32_0 : i32, i32, i32
  }
  func.func @transform_2(%arg0: i32) -> (i32, i32, i32) {
    %c0_i32 = arith.constant 0 : i32
    %c0_i32_0 = arith.constant 0 : i32
    %c0_i32_1 = arith.constant 0 : i32
    return %arg0, %c0_i32, %c0_i32_0 : i32, i32, i32
  }
  func.func @transform_3(%arg0: i32) -> (i32, i32) {
    %c0_i32 = arith.constant 0 : i32
    %c0_i32_0 = arith.constant 0 : i32
    %c0_i32_1 = arith.constant 0 : i32
    return %c0_i32, %c0_i32_0 : i32, i32
  }
  func.func @transform_4(%arg0: i32) -> (i32, i32) {
    %c0_i32 = arith.constant 0 : i32
    %c0_i32_0 = arith.constant 0 : i32
    %c0_i32_1 = arith.constant 0 : i32
    return %c0_i32, %c0_i32_0 : i32, i32
  }
  func.func @transform_5(%arg0: i32) -> (i32, i32) {
    %c0_i32 = arith.constant 0 : i32
    %c0_i32_0 = arith.constant 0 : i32
    %c0_i32_1 = arith.constant 0 : i32
    return %c0_i32, %c0_i32_0 : i32, i32
  }
  func.func @transform_6(%arg0: i32) -> (i32, i32) {
    %c0_i32 = arith.constant 0 : i32
    %c0_i32_0 = arith.constant 0 : i32
    %c0_i32_1 = arith.constant 0 : i32
    return %c0_i32, %c0_i32_0 : i32, i32
  }
  func.func @transform_7(%arg0: i32) -> (i32, i32) {
    %c0_i32 = arith.constant 0 : i32
    %c0_i32_0 = arith.constant 0 : i32
    %c0_i32_1 = arith.constant 0 : i32
    return %c0_i32, %c0_i32_0 : i32, i32
  }
  func.func @transform_8(%arg0: i32) -> (i32, i32) {
    %c0_i32 = arith.constant 0 : i32
    %c0_i32_0 = arith.constant 0 : i32
    %c0_i32_1 = arith.constant 0 : i32
    return %c0_i32, %c0_i32_0 : i32, i32
  }
  func.func @transform_9(%arg0: i32) -> (i32, i32, i32) {
    %c0_i32 = arith.constant 0 : i32
    %c0_i32_0 = arith.constant 0 : i32
    %c0_i32_1 = arith.constant 0 : i32
    %c0_i32_2 = arith.constant 0 : i32
    return %c0_i32, %c0_i32_0, %c0_i32_1 : i32, i32, i32
  }
  func.func @transform_10(%arg0: i32) -> (i32, i32) {
    %c0_i32 = arith.constant 0 : i32
    %c0_i32_0 = arith.constant 0 : i32
    %c0_i32_1 = arith.constant 0 : i32
    return %c0_i32, %c0_i32_0 : i32, i32
  }
  func.func @transform_11(%arg0: i32) -> (i32, i32, i32) {
    %c0_i32 = arith.constant 0 : i32
    %c0_i32_0 = arith.constant 0 : i32
    %c0_i32_1 = arith.constant 0 : i32
    %c0_i32_2 = arith.constant 0 : i32
    return %c0_i32, %c0_i32_0, %c0_i32_1 : i32, i32, i32
  }
  func.func @transform_12(%arg0: i32) -> (i32, i32) {
    %c0_i32 = arith.constant 0 : i32
    %c0_i32_0 = arith.constant 0 : i32
    %c0_i32_1 = arith.constant 0 : i32
    return %c0_i32, %c0_i32_0 : i32, i32
  }
  func.func @transform_13(%arg0: i32) -> (i32, i32) {
    %c0_i32 = arith.constant 0 : i32
    %c0_i32_0 = arith.constant 0 : i32
    %c0_i32_1 = arith.constant 0 : i32
    return %c0_i32, %c0_i32_0 : i32, i32
  }
  func.func @transform_14(%arg0: i32) -> (i32, i32) {
    %c0_i32 = arith.constant 0 : i32
    %c0_i32_0 = arith.constant 0 : i32
    %c0_i32_1 = arith.constant 0 : i32
    return %c0_i32, %c0_i32_0 : i32, i32
  }
  func.func @transform_15(%arg0: i32) -> (i32, i32, i32) {
    %c0_i32 = arith.constant 0 : i32
    %c0_i32_0 = arith.constant 0 : i32
    %c0_i32_1 = arith.constant 0 : i32
    return %arg0, %c0_i32, %c0_i32_0 : i32, i32, i32
  }
  func.func @transform_16(%arg0: i32) -> (i32, i32, i32) {
    %c0_i32 = arith.constant 0 : i32
    %c0_i32_0 = arith.constant 0 : i32
    %c0_i32_1 = arith.constant 0 : i32
    return %arg0, %c0_i32, %c0_i32_0 : i32, i32, i32
  }
  func.func @transform_17(%arg0: i32) -> (i32, i32, i32) {
    %c0_i32 = arith.constant 0 : i32
    %c0_i32_0 = arith.constant 0 : i32
    %c0_i32_1 = arith.constant 0 : i32
    return %arg0, %c0_i32, %c0_i32_0 : i32, i32, i32
  }
}

</mosaic_0001>

<llo_original>
// kernel: tpu_custom_call.1
$region0: #{tpu_custom_call.1}
  #allocation0 [shape = 'u32[]', space=smem, size = 0x4, offset = 0x4, fixed_abs, tag = 'smem constant byte address 0x4 - core index']
  #allocation1 [shape = 'u32[72,128]{1,0:T(1,128)}', space=vmem, size = 0x9000, scoped, tag = 'internal scratch']
  #allocation2 [shape = 'bf16[192,288]{1,0:T(8,128)(2,1)}', space=vmem, size = 0x24000, scoped, tag = 'scratch operand']
  #allocation3 [shape = 'bf16[64,16]{1,0:T(8,128)(2,1)}', space=vmem, size = 0x4000, scoped, tag = 'scratch operand']
  #allocation4 [shape = 'bf16[64,64]{1,0:T(8,128)(2,1)}', space=vmem, size = 0x4000, scoped, tag = 'scratch operand']
  %s0 = inlined_call_operand.vmem [shape: bf16[2,16,256], index: 0, kind: input, shape index: {}]
  %s1 = inlined_call_operand.vmem [shape: bf16[2,32,64], index: 1, kind: input, shape index: {}]
  %s2 = inlined_call_operand.vmem [shape: bf16[2,64,16], index: 2, kind: input, shape index: {}]
  %s3 = inlined_call_operand.vmem [shape: bf16[64,16], index: 3, kind: input, shape index: {}]
  %s4 = inlined_call_operand.vmem [shape: f32[64,1], index: 4, kind: input, shape index: {}]
  %s5 = inlined_call_operand.vmem [shape: bf16[64,32], index: 5, kind: input, shape index: {}]
  %s6 = inlined_call_operand.vmem [shape: f32[64,1], index: 6, kind: input, shape index: {}]
  %s7 = inlined_call_operand.vmem [shape: bf16[64,64], index: 7, kind: input, shape index: {}]
  %s8 = inlined_call_operand.vmem [shape: f32[64,1], index: 8, kind: input, shape index: {}]
  %s9 = inlined_call_operand.hbm [shape: bf16[3,64,192], index: 9, kind: input, shape index: {}]
  %s10 = inlined_call_operand.vmem [shape: f32[64,1], index: 10, kind: input, shape index: {}]
  %s11 = inlined_call_operand.hbm [shape: bf16[3,64,192], index: 11, kind: input, shape index: {}]
  %s12 = inlined_call_operand.vmem [shape: f32[64,1], index: 12, kind: input, shape index: {}]
  %s13 = inlined_call_operand.vmem [shape: bf16[16,64], index: 13, kind: input, shape index: {}]
  %s14 = inlined_call_operand.vmem [shape: bf16[32,128], index: 14, kind: input, shape index: {}]
  %s15 = inlined_call_operand.hbm [shape: f32[2,64,256], index: 15, kind: output, shape index: {0}]
  %s16 = inlined_call_operand.hbm [shape: f32[2,64,64], index: 16, kind: output, shape index: {1}]
  %s17 = inlined_call_operand.vmem [shape: f32[2,64,16], index: 17, kind: output, shape index: {2}]
  %18 = xla_tuple %s15, %s16, %s17
  %s19 = sld [smem:[#allocation0]]
  $region117: #{tpu_custom_call.1} parent=0
    _
  %s21 = ssub.s32 1, %s19
  %s22 = scalar_select 0, %s21, %s19
  $region1: #{tpu_custom_call.1} parent=0
    #allocation5 [shape = 'u8[98304]{0}', space=vmem, size = 0x18000, scoped, tag = 'input window, operand 9, single buffered']
    #allocation6 [shape = 's32[2]{0}', space=sflag, size = 0x8, scoped, tag = 'scoped memory for tpu_custom_call.1']
    #allocation7 [shape = 's32[2]{0}', space=sflag, size = 0x8, scoped, tag = 'scoped memory for tpu_custom_call.1']
    #allocation8 [shape = 'u8[98304]{0}', space=vmem, size = 0x18000, scoped, tag = 'input window, operand 11, single buffered']
    #allocation9 [shape = 's32[1]{0}', space=sflag, size = 0x4, scoped, tag = 'scoped memory for tpu_custom_call.1']
    #allocation10 [shape = 'u8[131072]{0}', space=vmem, size = 0x20000, scoped, tag = 'output window, operand 0']
    #allocation11 [shape = 'u8[65536]{0}', space=vmem, size = 0x10000, scoped, tag = 'output window, operand 1']
    #allocation12 [shape = 's32[2]{0}', space=sflag, size = 0x8, scoped, tag = 'scoped memory for tpu_custom_call.1']
    %23 = vsyncpa [#allocation6], 0
    %24 = vsyncpa [#allocation9], 0
    %25 = vsyncpa [#allocation7], 0
    %s26 = scalar_lea.sflag [#allocation7], 1
    %27 = vsyncpa %s26, 0
    %28 = vsyncpa [#allocation12], 0
    %s29 = scalar_lea.sflag [#allocation12], 1
    %30 = vsyncpa %s29, 0
    loop: start=0, step=1, limit=4
    $region2: #{tpu_custom_call.1} parent=1 // loop_pre_header
      _
    $region3: #{tpu_custom_call.1} parent=1 // loop_header
      %s32 = sphi 0, %s36
      %p33 = scmp.ge.s32.totalorder %s32, 4
      %s42 = sphi 0, %s44
      %s45 = sphi 0, %s42
      %s46 = sphi 0, %s45
      %s62 = sphi 0, %s46
      %s68 = sphi 0, %s70
      %s71 = sphi 0, %s68
      %s72 = sphi 0, %s71
      %s88 = sphi 0, %s72
      %s94 = sphi 0, %s96
      %s97 = sphi 0, %s94
      %s98 = sphi 0, %s97
      %s114 = sphi 0, %s98
      %s118 = sphi 0, %s118
      %s120 = sphi 0, %s118
      %s121 = sphi 0, %s120
      %s135 = sphi 0, %s121
      %s139 = sphi 0, %s139
      %s141 = sphi 0, %s139
      %s142 = sphi 0, %s141
      %s156 = sphi 0, %s142
      %s160 = sphi 0, %s160
      %s162 = sphi 0, %s160
      %s163 = sphi 0, %s162
      %s177 = sphi 0, %s163
      %s181 = sphi 0, %s181
      %s183 = sphi 0, %s181
      %s184 = sphi 0, %s183
      %s198 = sphi 0, %s184
      %s202 = sphi 0, %s202
      %s204 = sphi 0, %s202
      %s205 = sphi 0, %s204
      %s219 = sphi 0, %s205
      %s223 = sphi 0, %s223
      %s225 = sphi 0, %s223
      %s226 = sphi 0, %s225
      %s240 = sphi 0, %s226
      %s244 = sphi 0, %s244
      %s246 = sphi 0, %s244
      %s247 = sphi 0, %s246
      %s261 = sphi 0, %s247
      %s265 = sphi 0, %s265
      %s267 = sphi 0, %s265
      %s268 = sphi 0, %s267
      %s282 = sphi 0, %s268
      %s286 = sphi 0, %s286
      %s288 = sphi 0, %s286
      %s289 = sphi 0, %s288
      %s303 = sphi 0, %s289
      %s307 = sphi 0, %s307
      %s309 = sphi 0, %s307
      %s310 = sphi 0, %s309
      %s324 = sphi 0, %s310
      %s328 = sphi 0, %s328
      %s330 = sphi 0, %s328
      %s331 = sphi 0, %s330
      %s345 = sphi 0, %s331
      %s349 = sphi 0, %s349
      %s351 = sphi 0, %s349
      %s352 = sphi 0, %s351
      %s366 = sphi 0, %s352
      %s372 = sphi 0, %s374
      %s375 = sphi 0, %s372
      %s376 = sphi 0, %s375
      %s392 = sphi 0, %s376
      %s398 = sphi 0, %s400
      %s401 = sphi 0, %s398
      %s402 = sphi 0, %s401
      %s418 = sphi 0, %s402
      %s424 = sphi 0, %s426
      %s427 = sphi 0, %s424
      %s428 = sphi 0, %s427
      %s444 = sphi 0, %s428
    $region4: #{tpu_custom_call.1} parent=1 // loop_header_branch
      %35 = sbr.rel (%p33) target = $region8
    $region5: #{tpu_custom_call.1} parent=1 // loop_body
      %s37 = ssub.s32 %s32, 1
      %s38 = ssub.s32 %s32, 2
      %s39 = sadd.s32 %s32, 1
      %s40 = ssub.s32 %s32, %s39
      %p41 = scmp.eq.s32.totalorder %s40, 0
      %s43 = sadd.s32 %s42, 1
      %s44 = scalar_select %p41, %s42, %s43
      %p47 = pneg %p41
      %p48 = scmp.eq.s32.totalorder %s32, 1
      %p49 = por %p47, %p48
      %p50 = scmp.ne.s32.totalorder %s42, %s45
      %p51 = scmp.eq.s32.totalorder %s32, 0
      %p52 = por %p50, %p51
      %p53 = scmp.ne.s32.totalorder %s42, %s45
      %p54 = scmp.eq.s32.totalorder %s37, 1
      %p55 = por %p53, %p54
      %p56 = scmp.ne.s32.totalorder %s45, %s46
      %p57 = scmp.eq.s32.totalorder %s37, 0
      %p58 = por %p56, %p57
      %p59 = scmp.ne.s32.totalorder %s45, %s46
      %p60 = scmp.eq.s32.totalorder %s38, 1
      %p61 = por %p59, %p60
      %p63 = scmp.ne.s32.totalorder %s46, %s62
      %p64 = scmp.eq.s32.totalorder %s38, 0
      %p65 = por %p63, %p64
      %s66 = ssub.s32 %s32, %s39
      %p67 = scmp.eq.s32.totalorder %s66, 0
      %s69 = sadd.s32 %s68, 1
      %s70 = scalar_select %p67, %s68, %s69
      %p73 = pneg %p67
      %p74 = scmp.eq.s32.totalorder %s32, 1
      %p75 = por %p73, %p74
      %p76 = scmp.ne.s32.totalorder %s68, %s71
      %p77 = scmp.eq.s32.totalorder %s32, 0
      %p78 = por %p76, %p77
      %p79 = scmp.ne.s32.totalorder %s68, %s71
      %p80 = scmp.eq.s32.totalorder %s37, 1
      %p81 = por %p79, %p80
      %p82 = scmp.ne.s32.totalorder %s71, %s72
      %p83 = scmp.eq.s32.totalorder %s37, 0
      %p84 = por %p82, %p83
      %p85 = scmp.ne.s32.totalorder %s71, %s72
      %p86 = scmp.eq.s32.totalorder %s38, 1
      %p87 = por %p85, %p86
      %p89 = scmp.ne.s32.totalorder %s72, %s88
      %p90 = scmp.eq.s32.totalorder %s38, 0
      %p91 = por %p89, %p90
      %s92 = ssub.s32 %s32, %s39
      %p93 = scmp.eq.s32.totalorder %s92, 0
      %s95 = sadd.s32 %s94, 1
      %s96 = scalar_select %p93, %s94, %s95
      %p99 = pneg %p93
      %p100 = scmp.eq.s32.totalorder %s32, 1
      %p101 = por %p99, %p100
      %p102 = scmp.ne.s32.totalorder %s94, %s97
      %p103 = scmp.eq.s32.totalorder %s32, 0
      %p104 = por %p102, %p103
      %p105 = scmp.ne.s32.totalorder %s94, %s97
      %p106 = scmp.eq.s32.totalorder %s37, 1
      %p107 = por %p105, %p106
      %p108 = scmp.ne.s32.totalorder %s97, %s98
      %p109 = scmp.eq.s32.totalorder %s37, 0
      %p110 = por %p108, %p109
      %p111 = scmp.ne.s32.totalorder %s97, %s98
      %p112 = scmp.eq.s32.totalorder %s38, 1
      %p113 = por %p111, %p112
      %p115 = scmp.ne.s32.totalorder %s98, %s114
      %p116 = scmp.eq.s32.totalorder %s38, 0
      %p117 = por %p115, %p116
      %s119 = sadd.s32 %s118, 1
      %p122 = scmp.eq.s32.totalorder %s32, 1
      %p123 = scmp.ne.s32.totalorder %s118, %s120
      %p124 = scmp.eq.s32.totalorder %s32, 0
      %p125 = por %p123, %p124
      %p126 = scmp.ne.s32.totalorder %s118, %s120
      %p127 = scmp.eq.s32.totalorder %s37, 1
      %p128 = por %p126, %p127
      %p129 = scmp.ne.s32.totalorder %s120, %s121
      %p130 = scmp.eq.s32.totalorder %s37, 0
      %p131 = por %p129, %p130
      %p132 = scmp.ne.s32.totalorder %s120, %s121
      %p133 = scmp.eq.s32.totalorder %s38, 1
      %p134 = por %p132, %p133
      %p136 = scmp.ne.s32.totalorder %s121, %s135
      %p137 = scmp.eq.s32.totalorder %s38, 0
      %p138 = por %p136, %p137
      %s140 = sadd.s32 %s139, 1
      %p143 = scmp.eq.s32.totalorder %s32, 1
      %p144 = scmp.ne.s32.totalorder %s139, %s141
      %p145 = scmp.eq.s32.totalorder %s32, 0
      %p146 = por %p144, %p145
      %p147 = scmp.ne.s32.totalorder %s139, %s141
      %p148 = scmp.eq.s32.totalorder %s37, 1
      %p149 = por %p147, %p148
      %p150 = scmp.ne.s32.totalorder %s141, %s142
      %p151 = scmp.eq.s32.totalorder %s37, 0
      %p152 = por %p150, %p151
      %p153 = scmp.ne.s32.totalorder %s141, %s142
      %p154 = scmp.eq.s32.totalorder %s38, 1
      %p155 = por %p153, %p154
      %p157 = scmp.ne.s32.totalorder %s142, %s156
      %p158 = scmp.eq.s32.totalorder %s38, 0
      %p159 = por %p157, %p158
      %s161 = sadd.s32 %s160, 1
      %p164 = scmp.eq.s32.totalorder %s32, 1
      %p165 = scmp.ne.s32.totalorder %s160, %s162
      %p166 = scmp.eq.s32.totalorder %s32, 0
      %p167 = por %p165, %p166
      %p168 = scmp.ne.s32.totalorder %s160, %s162
      %p169 = scmp.eq.s32.totalorder %s37, 1
      %p170 = por %p168, %p169
      %p171 = scmp.ne.s32.totalorder %s162, %s163
      %p172 = scmp.eq.s32.totalorder %s37, 0
      %p173 = por %p171, %p172
      %p174 = scmp.ne.s32.totalorder %s162, %s163
      %p175 = scmp.eq.s32.totalorder %s38, 1
      %p176 = por %p174, %p175
      %p178 = scmp.ne.s32.totalorder %s163, %s177
      %p179 = scmp.eq.s32.totalorder %s38, 0
      %p180 = por %p178, %p179
      %s182 = sadd.s32 %s181, 1
      %p185 = scmp.eq.s32.totalorder %s32, 1
      %p186 = scmp.ne.s32.totalorder %s181, %s183
      %p187 = scmp.eq.s32.totalorder %s32, 0
      %p188 = por %p186, %p187
      %p189 = scmp.ne.s32.totalorder %s181, %s183
      %p190 = scmp.eq.s32.totalorder %s37, 1
      %p191 = por %p189, %p190
      %p192 = scmp.ne.s32.totalorder %s183, %s184
      %p193 = scmp.eq.s32.totalorder %s37, 0
      %p194 = por %p192, %p193
      %p195 = scmp.ne.s32.totalorder %s183, %s184
      %p196 = scmp.eq.s32.totalorder %s38, 1
      %p197 = por %p195, %p196
      %p199 = scmp.ne.s32.totalorder %s184, %s198
      %p200 = scmp.eq.s32.totalorder %s38, 0
      %p201 = por %p199, %p200
      %s203 = sadd.s32 %s202, 1
      %p206 = scmp.eq.s32.totalorder %s32, 1
      %p207 = scmp.ne.s32.totalorder %s202, %s204
      %p208 = scmp.eq.s32.totalorder %s32, 0
      %p209 = por %p207, %p208
      %p210 = scmp.ne.s32.totalorder %s202, %s204
      %p211 = scmp.eq.s32.totalorder %s37, 1
      %p212 = por %p210, %p211
      %p213 = scmp.ne.s32.totalorder %s204, %s205
      %p214 = scmp.eq.s32.totalorder %s37, 0
      %p215 = por %p213, %p214
      %p216 = scmp.ne.s32.totalorder %s204, %s205
      %p217 = scmp.eq.s32.totalorder %s38, 1
      %p218 = por %p216, %p217
      %p220 = scmp.ne.s32.totalorder %s205, %s219
      %p221 = scmp.eq.s32.totalorder %s38, 0
      %p222 = por %p220, %p221
      %s224 = sadd.s32 %s223, 1
      %p227 = scmp.eq.s32.totalorder %s32, 1
      %p228 = scmp.ne.s32.totalorder %s223, %s225
      %p229 = scmp.eq.s32.totalorder %s32, 0
      %p230 = por %p228, %p229
      %p231 = scmp.ne.s32.totalorder %s223, %s225
      %p232 = scmp.eq.s32.totalorder %s37, 1
      %p233 = por %p231, %p232
      %p234 = scmp.ne.s32.totalorder %s225, %s226
      %p235 = scmp.eq.s32.totalorder %s37, 0
      %p236 = por %p234, %p235
      %p237 = scmp.ne.s32.totalorder %s225, %s226
      %p238 = scmp.eq.s32.totalorder %s38, 1
      %p239 = por %p237, %p238
      %p241 = scmp.ne.s32.totalorder %s226, %s240
      %p242 = scmp.eq.s32.totalorder %s38, 0
      %p243 = por %p241, %p242
      %s245 = sadd.s32 %s244, 1
      %p248 = scmp.eq.s32.totalorder %s32, 1
      %p249 = scmp.ne.s32.totalorder %s244, %s246
      %p250 = scmp.eq.s32.totalorder %s32, 0
      %p251 = por %p249, %p250
      %p252 = scmp.ne.s32.totalorder %s244, %s246
      %p253 = scmp.eq.s32.totalorder %s37, 1
      %p254 = por %p252, %p253
      %p255 = scmp.ne.s32.totalorder %s246, %s247
      %p256 = scmp.eq.s32.totalorder %s37, 0
      %p257 = por %p255, %p256
      %p258 = scmp.ne.s32.totalorder %s246, %s247
      %p259 = scmp.eq.s32.totalorder %s38, 1
      %p260 = por %p258, %p259
      %p262 = scmp.ne.s32.totalorder %s247, %s261
      %p263 = scmp.eq.s32.totalorder %s38, 0
      %p264 = por %p262, %p263
      %s266 = sadd.s32 %s265, 1
      %p269 = scmp.eq.s32.totalorder %s32, 1
      %p270 = scmp.ne.s32.totalorder %s265, %s267
      %p271 = scmp.eq.s32.totalorder %s32, 0
      %p272 = por %p270, %p271
      %p273 = scmp.ne.s32.totalorder %s265, %s267
      %p274 = scmp.eq.s32.totalorder %s37, 1
      %p275 = por %p273, %p274
      %p276 = scmp.ne.s32.totalorder %s267, %s268
      %p277 = scmp.eq.s32.totalorder %s37, 0
      %p278 = por %p276, %p277
      %p279 = scmp.ne.s32.totalorder %s267, %s268
      %p280 = scmp.eq.s32.totalorder %s38, 1
      %p281 = por %p279, %p280
      %p283 = scmp.ne.s32.totalorder %s268, %s282
      %p284 = scmp.eq.s32.totalorder %s38, 0
      %p285 = por %p283, %p284
      %s287 = sadd.s32 %s286, 1
      %p290 = scmp.eq.s32.totalorder %s32, 1
      %p291 = scmp.ne.s32.totalorder %s286, %s288
      %p292 = scmp.eq.s32.totalorder %s32, 0
      %p293 = por %p291, %p292
      %p294 = scmp.ne.s32.totalorder %s286, %s288
      %p295 = scmp.eq.s32.totalorder %s37, 1
      %p296 = por %p294, %p295
      %p297 = scmp.ne.s32.totalorder %s288, %s289
      %p298 = scmp.eq.s32.totalorder %s37, 0
      %p299 = por %p297, %p298
      %p300 = scmp.ne.s32.totalorder %s288, %s289
      %p301 = scmp.eq.s32.totalorder %s38, 1
      %p302 = por %p300, %p301
      %p304 = scmp.ne.s32.totalorder %s289, %s303
      %p305 = scmp.eq.s32.totalorder %s38, 0
      %p306 = por %p304, %p305
      %s308 = sadd.s32 %s307, 1
      %p311 = scmp.eq.s32.totalorder %s32, 1
      %p312 = scmp.ne.s32.totalorder %s307, %s309
      %p313 = scmp.eq.s32.totalorder %s32, 0
      %p314 = por %p312, %p313
      %p315 = scmp.ne.s32.totalorder %s307, %s309
      %p316 = scmp.eq.s32.totalorder %s37, 1
      %p317 = por %p315, %p316
      %p318 = scmp.ne.s32.totalorder %s309, %s310
      %p319 = scmp.eq.s32.totalorder %s37, 0
      %p320 = por %p318, %p319
      %p321 = scmp.ne.s32.totalorder %s309, %s310
      %p322 = scmp.eq.s32.totalorder %s38, 1
      %p323 = por %p321, %p322
      %p325 = scmp.ne.s32.totalorder %s310, %s324
      %p326 = scmp.eq.s32.totalorder %s38, 0
      %p327 = por %p325, %p326
      %s329 = sadd.s32 %s328, 1
      %p332 = scmp.eq.s32.totalorder %s32, 1
      %p333 = scmp.ne.s32.totalorder %s328, %s330
      %p334 = scmp.eq.s32.totalorder %s32, 0
      %p335 = por %p333, %p334
      %p336 = scmp.ne.s32.totalorder %s328, %s330
      %p337 = scmp.eq.s32.totalorder %s37, 1
      %p338 = por %p336, %p337
      %p339 = scmp.ne.s32.totalorder %s330, %s331
      %p340 = scmp.eq.s32.totalorder %s37, 0
      %p341 = por %p339, %p340
      %p342 = scmp.ne.s32.totalorder %s330, %s331
      %p343 = scmp.eq.s32.totalorder %s38, 1
      %p344 = por %p342, %p343
      %p346 = scmp.ne.s32.totalorder %s331, %s345
      %p347 = scmp.eq.s32.totalorder %s38, 0
      %p348 = por %p346, %p347
      %s350 = sadd.s32 %s349, 1
      %p353 = scmp.eq.s32.totalorder %s32, 1
      %p354 = scmp.ne.s32.totalorder %s349, %s351
      %p355 = scmp.eq.s32.totalorder %s32, 0
      %p356 = por %p354, %p355
      %p357 = scmp.ne.s32.totalorder %s349, %s351
      %p358 = scmp.eq.s32.totalorder %s37, 1
      %p359 = por %p357, %p358
      %p360 = scmp.ne.s32.totalorder %s351, %s352
      %p361 = scmp.eq.s32.totalorder %s37, 0
      %p362 = por %p360, %p361
      %p363 = scmp.ne.s32.totalorder %s351, %s352
      %p364 = scmp.eq.s32.totalorder %s38, 1
      %p365 = por %p363, %p364
      %p367 = scmp.ne.s32.totalorder %s352, %s366
      %p368 = scmp.eq.s32.totalorder %s38, 0
      %p369 = por %p367, %p368
      %s370 = ssub.s32 %s32, %s39
      %p371 = scmp.eq.s32.totalorder %s370, 0
      %s373 = sadd.s32 %s372, 1
      %s374 = scalar_select %p371, %s372, %s373
      %p377 = pneg %p371
      %p378 = scmp.eq.s32.totalorder %s32, 1
      %p379 = por %p377, %p378
      %p380 = scmp.ne.s32.totalorder %s372, %s375
      %p381 = scmp.eq.s32.totalorder %s32, 0
      %p382 = por %p380, %p381
      %p383 = scmp.ne.s32.totalorder %s372, %s375
      %p384 = scmp.eq.s32.totalorder %s37, 1
      %p385 = por %p383, %p384
      %p386 = scmp.ne.s32.totalorder %s375, %s376
      %p387 = scmp.eq.s32.totalorder %s37, 0
      %p388 = por %p386, %p387
      %p389 = scmp.ne.s32.totalorder %s375, %s376
      %p390 = scmp.eq.s32.totalorder %s38, 1
      %p391 = por %p389, %p390
      %p393 = scmp.ne.s32.totalorder %s376, %s392
      %p394 = scmp.eq.s32.totalorder %s38, 0
      %p395 = por %p393, %p394
      %s396 = ssub.s32 %s32, %s39
      %p397 = scmp.eq.s32.totalorder %s396, 0
      %s399 = sadd.s32 %s398, 1
      %s400 = scalar_select %p397, %s398, %s399
      %p403 = pneg %p397
      %p404 = scmp.eq.s32.totalorder %s32, 1
      %p405 = por %p403, %p404
      %p406 = scmp.ne.s32.totalorder %s398, %s401
      %p407 = scmp.eq.s32.totalorder %s32, 0
      %p408 = por %p406, %p407
      %p409 = scmp.ne.s32.totalorder %s398, %s401
      %p410 = scmp.eq.s32.totalorder %s37, 1
      %p411 = por %p409, %p410
      %p412 = scmp.ne.s32.totalorder %s401, %s402
      %p413 = scmp.eq.s32.totalorder %s37, 0
      %p414 = por %p412, %p413
      %p415 = scmp.ne.s32.totalorder %s401, %s402
      %p416 = scmp.eq.s32.totalorder %s38, 1
      %p417 = por %p415, %p416
      %p419 = scmp.ne.s32.totalorder %s402, %s418
      %p420 = scmp.eq.s32.totalorder %s38, 0
      %p421 = por %p419, %p420
      %s422 = ssub.s32 %s32, %s39
      %p423 = scmp.eq.s32.totalorder %s422, 0
      %s425 = sadd.s32 %s424, 1
      %s426 = scalar_select %p423, %s424, %s425
      %p429 = pneg %p423
      %p430 = scmp.eq.s32.totalorder %s32, 1
      %p431 = por %p429, %p430
      %p432 = scmp.ne.s32.totalorder %s424, %s427
      %p433 = scmp.eq.s32.totalorder %s32, 0
      %p434 = por %p432, %p433
      %p435 = scmp.ne.s32.totalorder %s424, %s427
      %p436 = scmp.eq.s32.totalorder %s37, 1
      %p437 = por %p435, %p436
      %p438 = scmp.ne.s32.totalorder %s427, %s428
      %p439 = scmp.eq.s32.totalorder %s37, 0
      %p440 = por %p438, %p439
      %p441 = scmp.ne.s32.totalorder %s427, %s428
      %p442 = scmp.eq.s32.totalorder %s38, 1
      %p443 = por %p441, %p442
      %p445 = scmp.ne.s32.totalorder %s428, %s444
      %p446 = scmp.eq.s32.totalorder %s38, 0
      %p447 = por %p445, %p446
      %p448 = scmp.le.s32.totalorder 1, %s32
      %p449 = scmp.lt.s32.totalorder %s32, 3
      %p450 = pnand %p448, %p449
      %p451 = pneg %p450
      // Predicated region
      $region9: #{tpu_custom_call.1} parent=5 // pred_check
        _
      $region10: #{tpu_custom_call.1} parent=5 // pred_check_branch
        %453 = sbr.rel (%p450) target = $region12
      $region11: #{tpu_custom_call.1} parent=5 // pred_region
        %s454 = ssub.s32 %s32, 1
        // Predicated region
        $region13: #{tpu_custom_call.1} parent=11 // pred_check
          %p455 = pneg %p131
        $region14: #{tpu_custom_call.1} parent=11 // pred_check_branch
          %457 = sbr.rel (%p455) target = $region16
        $region15: #{tpu_custom_call.1} parent=11 // pred_region
          _
        $region16: #{tpu_custom_call.1} parent=11 // pred_fallthru
          _
        // Predicated region
        $region17: #{tpu_custom_call.1} parent=11 // pred_check
          %p458 = pneg %p152
        $region18: #{tpu_custom_call.1} parent=11 // pred_check_branch
          %460 = sbr.rel (%p458) target = $region20
        $region19: #{tpu_custom_call.1} parent=11 // pred_region
          _
        $region20: #{tpu_custom_call.1} parent=11 // pred_fallthru
          _
        // Predicated region
        $region21: #{tpu_custom_call.1} parent=11 // pred_check
          %p461 = pneg %p173
        $region22: #{tpu_custom_call.1} parent=11 // pred_check_branch
          %463 = sbr.rel (%p461) target = $region24
        $region23: #{tpu_custom_call.1} parent=11 // pred_region
          _
        $region24: #{tpu_custom_call.1} parent=11 // pred_fallthru
          _
        // Predicated region
        $region25: #{tpu_custom_call.1} parent=11 // pred_check
          %p464 = pneg %p194
        $region26: #{tpu_custom_call.1} parent=11 // pred_check_branch
          %466 = sbr.rel (%p464) target = $region28
        $region27: #{tpu_custom_call.1} parent=11 // pred_region
          _
        $region28: #{tpu_custom_call.1} parent=11 // pred_fallthru
          _
        // Predicated region
        $region29: #{tpu_custom_call.1} parent=11 // pred_check
          %p467 = pneg %p215
        $region30: #{tpu_custom_call.1} parent=11 // pred_check_branch
          %469 = sbr.rel (%p467) target = $region32
        $region31: #{tpu_custom_call.1} parent=11 // pred_region
          _
        $region32: #{tpu_custom_call.1} parent=11 // pred_fallthru
          _
        // Predicated region
        $region33: #{tpu_custom_call.1} parent=11 // pred_check
          %p470 = pneg %p236
        $region34: #{tpu_custom_call.1} parent=11 // pred_check_branch
          %472 = sbr.rel (%p470) target = $region36
        $region35: #{tpu_custom_call.1} parent=11 // pred_region
          _
        $region36: #{tpu_custom_call.1} parent=11 // pred_fallthru
          _
        // Predicated region
        $region37: #{tpu_custom_call.1} parent=11 // pred_check
          %p473 = pneg %p257
        $region38: #{tpu_custom_call.1} parent=11 // pred_check_branch
          %475 = sbr.rel (%p473) target = $region40
        $region39: #{tpu_custom_call.1} parent=11 // pred_region
          %477 = vsyncadd [#allocation6], 0
          %s478 = sshll.u32 %s9, 4
          %s479 = int_to_ptr.hbm [resolvable:$true] %s478
          %s480 = sshll.u32 [#allocation5], 4
          %s481 = int_to_ptr.vmem [resolvable:$true] %s480
          %486 = dma.hbm_to_vmem [thread:$0]  %s479, 3072, %s481, [#allocation6], 128, 128, 8
        $region40: #{tpu_custom_call.1} parent=11 // pred_fallthru
          _
        // Predicated region
        $region41: #{tpu_custom_call.1} parent=11 // pred_check
          %p487 = pneg %p278
        $region42: #{tpu_custom_call.1} parent=11 // pred_check_branch
          %489 = sbr.rel (%p487) target = $region44
        $region43: #{tpu_custom_call.1} parent=11 // pred_region
          _
        $region44: #{tpu_custom_call.1} parent=11 // pred_fallthru
          _
        // Predicated region
        $region45: #{tpu_custom_call.1} parent=11 // pred_check
          %p490 = pneg %p299
        $region46: #{tpu_custom_call.1} parent=11 // pred_check_branch
          %492 = sbr.rel (%p490) target = $region48
        $region47: #{tpu_custom_call.1} parent=11 // pred_region
          %494 = vsyncadd [#allocation9], 0
          %s495 = sshll.u32 %s11, 4
          %s496 = int_to_ptr.hbm [resolvable:$true] %s495
          %s497 = sshll.u32 [#allocation8], 4
          %s498 = int_to_ptr.vmem [resolvable:$true] %s497
          %503 = dma.hbm_to_vmem [thread:$0]  %s496, 3072, %s498, [#allocation9], 128, 128, 8
        $region48: #{tpu_custom_call.1} parent=11 // pred_fallthru
          _
        // Predicated region
        $region49: #{tpu_custom_call.1} parent=11 // pred_check
          %p504 = pneg %p320
        $region50: #{tpu_custom_call.1} parent=11 // pred_check_branch
          %506 = sbr.rel (%p504) target = $region52
        $region51: #{tpu_custom_call.1} parent=11 // pred_region
          _
        $region52: #{tpu_custom_call.1} parent=11 // pred_fallthru
          _
        // Predicated region
        $region53: #{tpu_custom_call.1} parent=11 // pred_check
          %p507 = pneg %p341
        $region54: #{tpu_custom_call.1} parent=11 // pred_check_branch
          %509 = sbr.rel (%p507) target = $region56
        $region55: #{tpu_custom_call.1} parent=11 // pred_region
          _
        $region56: #{tpu_custom_call.1} parent=11 // pred_fallthru
          _
        // Predicated region
        $region57: #{tpu_custom_call.1} parent=11 // pred_check
          %p510 = pneg %p362
        $region58: #{tpu_custom_call.1} parent=11 // pred_check_branch
          %512 = sbr.rel (%p510) target = $region60
        $region59: #{tpu_custom_call.1} parent=11 // pred_region
          _
        $region60: #{tpu_custom_call.1} parent=11 // pred_fallthru
          _
      $region12: #{tpu_custom_call.1} parent=5 // pred_fallthru
        _
      %p513 = scmp.lt.s32.totalorder %s32, 2
      // Predicated region
      $region61: #{tpu_custom_call.1} parent=5 // pred_check
        %p514 = pneg %p513
      $region62: #{tpu_custom_call.1} parent=5 // pred_check_branch
        %516 = sbr.rel (%p514) target = $region64
      $region63: #{tpu_custom_call.1} parent=5 // pred_region
        // Predicated region
        $region65: #{tpu_custom_call.1} parent=63 // pred_check
          %p517 = pneg %p52
        $region66: #{tpu_custom_call.1} parent=63 // pred_check_branch
          %519 = sbr.rel (%p517) target = $region68
        $region67: #{tpu_custom_call.1} parent=63 // pred_region
          %p520 = scmp.lt.s32.totalorder %s32, 1
          %s521 = scalar_select %p520, %s32, 1
          %s522 = smul.addr %s521, 4
          %s523 = smul.addr %s522, 4
          %s524 = scalar_lea.vmem %s0, %s523
        $region68: #{tpu_custom_call.1} parent=63 // pred_fallthru
          _
        // Predicated region
        $region69: #{tpu_custom_call.1} parent=63 // pred_check
          %p525 = pneg %p78
        $region70: #{tpu_custom_call.1} parent=63 // pred_check_branch
          %527 = sbr.rel (%p525) target = $region72
        $region71: #{tpu_custom_call.1} parent=63 // pred_region
          %p528 = scmp.lt.s32.totalorder %s32, 1
          %s529 = scalar_select %p528, %s32, 1
          %s530 = smul.addr %s529, 4
          %s531 = smul.addr %s530, 4
          %s532 = scalar_lea.vmem %s1, %s531
        $region72: #{tpu_custom_call.1} parent=63 // pred_fallthru
          _
        // Predicated region
        $region73: #{tpu_custom_call.1} parent=63 // pred_check
          %p533 = pneg %p104
        $region74: #{tpu_custom_call.1} parent=63 // pred_check_branch
          %535 = sbr.rel (%p533) target = $region76
        $region75: #{tpu_custom_call.1} parent=63 // pred_region
          %p536 = scmp.lt.s32.totalorder %s32, 1
          %s537 = scalar_select %p536, %s32, 1
          %s538 = smul.addr %s537, 8
          %s539 = smul.addr %s538, 4
          %s540 = scalar_lea.vmem %s2, %s539
        $region76: #{tpu_custom_call.1} parent=63 // pred_fallthru
          _
      $region64: #{tpu_custom_call.1} parent=5 // pred_fallthru
        _
      %p541 = scmp.le.s32.totalorder 1, %s32
      %p542 = scmp.lt.s32.totalorder %s32, 3
      %p543 = pnand %p541, %p542
      %p544 = pneg %p543
      // Predicated region
      $region77: #{tpu_custom_call.1} parent=5 // pred_check
        _
      $region78: #{tpu_custom_call.1} parent=5 // pred_check_branch
        %546 = sbr.rel (%p543) target = $region80
      $region79: #{tpu_custom_call.1} parent=5 // pred_region
        %s547 = ssub.s32 %s32, 1
        // Predicated region
        $region81: #{tpu_custom_call.1} parent=79 // pred_check
          %p548 = pneg %p257
        $region82: #{tpu_custom_call.1} parent=79 // pred_check_branch
          %550 = sbr.rel (%p548) target = $region84
        $region83: #{tpu_custom_call.1} parent=79 // pred_region
          %552 = dma.done [#allocation6], 3072
        $region84: #{tpu_custom_call.1} parent=79 // pred_fallthru
          _
        // Predicated region
        $region85: #{tpu_custom_call.1} parent=79 // pred_check
          %p553 = pneg %p299
        $region86: #{tpu_custom_call.1} parent=79 // pred_check_branch
          %555 = sbr.rel (%p553) target = $region88
        $region87: #{tpu_custom_call.1} parent=79 // pred_region
          %557 = dma.done [#allocation9], 3072
        $region88: #{tpu_custom_call.1} parent=79 // pred_fallthru
          _
        %p558 = scmp.lt.s32.totalorder %s37, 1
        %s559 = scalar_select %p558, %s37, 1
        %s560 = smul.addr %s559, 4
        %s561 = smul.addr %s560, 4
        %s562 = scalar_lea.vmem %s0, %s561
        %p563 = pneg %p58
        %p564 = pneg %p55
        %p565 = scmp.lt.s32.totalorder %s37, 1
        %s566 = scalar_select %p565, %s37, 1
        %s567 = smul.addr %s566, 4
        %s568 = smul.addr %s567, 4
        %s569 = scalar_lea.vmem %s1, %s568
        %p570 = pneg %p84
        %p571 = pneg %p81
        %p572 = scmp.lt.s32.totalorder %s37, 1
        %s573 = scalar_select %p572, %s37, 1
        %s574 = smul.addr %s573, 8
        %s575 = smul.addr %s574, 4
        %s576 = scalar_lea.vmem %s2, %s575
        %p577 = pneg %p110
        %p578 = pneg %p107
        %p579 = pneg %p131
        %p580 = pneg %p128
        %p581 = pneg %p152
        %p582 = pneg %p149
        %p583 = pneg %p173
        %p584 = pneg %p170
        %p585 = pneg %p194
        %p586 = pneg %p191
        %p587 = pneg %p215
        %p588 = pneg %p212
        %p589 = pneg %p236
        %p590 = pneg %p233
        %p591 = pneg %p257
        %p592 = pneg %p254
        %p593 = pneg %p278
        %p594 = pneg %p275
        %p595 = pneg %p299
        %p596 = pneg %p296
        %p597 = pneg %p320
        %p598 = pneg %p317
        %p599 = pneg %p341
        %p600 = pneg %p338
        %p601 = pneg %p362
        %p602 = pneg %p359
        %p603 = pneg %p388
        %p604 = pneg %p385
        %s605 = sand.u32 %s375, 1
        %s606 = scalar_lea.sflag [#allocation7], %s605
        %s607 = sand.u32 %s375, 1
        %s608 = smul.addr %s607, 128
        %s609 = scalar_lea.vmem [#allocation10], %s608
        %p610 = pneg %p414
        %p611 = pneg %p411
        %s612 = sand.u32 %s401, 1
        %s613 = scalar_lea.sflag [#allocation12], %s612
        %s614 = sand.u32 %s401, 1
        %s615 = smul.addr %s614, 64
        %s616 = scalar_lea.vmem [#allocation11], %s615
        %p617 = pneg %p440
        %p618 = pneg %p437
        %p619 = scmp.lt.s32.totalorder %s37, 1
        %s620 = scalar_select %p619, %s37, 1
        %s621 = smul.addr %s620, 8
        %s622 = smul.addr %s621, 8
        %s623 = scalar_lea.vmem %s17, %s622
        %p624 = scmp.lt.s32.totalorder %s37, 1
        %s625 = scalar_select %p624, %s37, 1
        %s626 = smul.addr %s625, 4
        %s627 = smul.addr %s626, 4
        %s628 = scalar_lea.vmem %s0, %s627
        %p629 = scmp.lt.s32.totalorder %s37, 1
        %s630 = scalar_select %p629, %s37, 1
        %s631 = smul.addr %s630, 4
        %s632 = smul.addr %s631, 4
        %s633 = scalar_lea.vmem %s1, %s632
        %p634 = scmp.lt.s32.totalorder %s37, 1
        %s635 = scalar_select %p634, %s37, 1
        %s636 = smul.addr %s635, 8
        %s637 = smul.addr %s636, 4
        %s638 = scalar_lea.vmem %s2, %s637
        %p639 = scmp.lt.s32.totalorder %s37, 1
        %s640 = scalar_select %p639, %s37, 1
        %s641 = smul.addr %s640, 8
        %s642 = smul.addr %s641, 8
        %s643 = scalar_lea.vmem %s17, %s642
        %v645 = vld [vmem:[%s7] sm:$0xf]
        %v646 = vld [vmem:[%s7 + $0x4] sm:$0xf]
        %v647 = vld [vmem:[%s7 + $0x8] sm:$0xf]
        %v648 = vld [vmem:[%s7 + $0xc] sm:$0xf]
        %v649 = vld [vmem:[%s7 + $0x10] sm:$0xf]
        %v650 = vld [vmem:[%s7 + $0x14] sm:$0xf]
        %v651 = vld [vmem:[%s7 + $0x18] sm:$0xf]
        %v652 = vld [vmem:[%s7 + $0x1c] sm:$0xf]
        %v653 = vld [vmem:[%s638] sm:$0xf]
        %v654 = vld [vmem:[%s638 + $0x4] sm:$0xf]
        %v655 = vld [vmem:[%s638 + $0x8] sm:$0xf]
        %v656 = vld [vmem:[%s638 + $0xc] sm:$0xf]
        %v657 = vld [vmem:[%s638 + $0x10] sm:$0xf]
        %v658 = vld [vmem:[%s638 + $0x14] sm:$0xf]
        %v659 = vld [vmem:[%s638 + $0x18] sm:$0xf]
        %v660 = vld [vmem:[%s638 + $0x1c] sm:$0xf]
        %v661 = vld [vmem:[%s8] sm:$0xff]
        %v662 = vld [vmem:[%s8 + $0x8] sm:$0xff]
        %v663 = vld [vmem:[%s8 + $0x10] sm:$0xff]
        %v664 = vld [vmem:[%s8 + $0x18] sm:$0xff]
        %v665 = vld [vmem:[%s8 + $0x20] sm:$0xff]
        %v666 = vld [vmem:[%s8 + $0x28] sm:$0xff]
        %v667 = vld [vmem:[%s8 + $0x30] sm:$0xff]
        %v668 = vld [vmem:[%s8 + $0x38] sm:$0xff]
        %670 = vset.pattern.permute.xlu0 0
        %671 = vperm.xlu0 %670, %v661
        %v672 = vpop.permute.xlu0 %671
        %675 = vset.pattern.permute.xlu0 0
        %676 = vperm.xlu0 %675, %v662
        %v677 = vpop.permute.xlu0 %676
        %680 = vset.pattern.permute.xlu0 0
        %681 = vperm.xlu0 %680, %v663
        %v682 = vpop.permute.xlu0 %681
        %685 = vset.pattern.permute.xlu0 0
        %686 = vperm.xlu0 %685, %v664
        %v687 = vpop.permute.xlu0 %686
        %690 = vset.pattern.permute.xlu0 0
        %691 = vperm.xlu0 %690, %v665
        %v692 = vpop.permute.xlu0 %691
        %695 = vset.pattern.permute.xlu0 0
        %696 = vperm.xlu0 %695, %v666
        %v697 = vpop.permute.xlu0 %696
        %700 = vset.pattern.permute.xlu0 0
        %701 = vperm.xlu0 %700, %v667
        %v702 = vpop.permute.xlu0 %701
        %705 = vset.pattern.permute.xlu0 0
        %706 = vperm.xlu0 %705, %v668
        %v707 = vpop.permute.xlu0 %706
        %v717 = vunpack.c.l.b16 %v645
        %v718 = vunpack.c.l.b16 %v646
        %v719 = vunpack.c.l.b16 %v647
        %v720 = vunpack.c.l.b16 %v648
        %v721 = vunpack.c.l.b16 %v649
        %v722 = vunpack.c.l.b16 %v650
        %v723 = vunpack.c.l.b16 %v651
        %v724 = vunpack.c.l.b16 %v652
        %v725 = vpack.c.b16 %v718, %v717
        %v726 = vpack.c.b16 %v720, %v719
        %v727 = vpack.c.b16 %v722, %v721
        %v728 = vpack.c.b16 %v724, %v723
        %v737 = vunpack.c.l.b16 %v653
        %v738 = vunpack.c.l.b16 %v654
        %v739 = vunpack.c.l.b16 %v655
        %v740 = vunpack.c.l.b16 %v656
        %v741 = vunpack.c.l.b16 %v657
        %v742 = vunpack.c.l.b16 %v658
        %v743 = vunpack.c.l.b16 %v659
        %v744 = vunpack.c.l.b16 %v660
        %v745 = vpack.c.b16 %v738, %v737
        %v746 = vpack.c.b16 %v740, %v739
        %v747 = vpack.c.b16 %v742, %v741
        %v748 = vpack.c.b16 %v744, %v743
        %vm753 = vcmask 523264
        %v755 = vsel %vm753, %v725, 0
        %v758 = vsel %vm753, %v726, 0
        %v761 = vsel %vm753, %v727, 0
        %v764 = vsel %vm753, %v728, 0
        %766 = vmatpush.bf16.msra.mxu0 0
        %767 = vmatpush.bf16.msra.mxu0 0
        %768 = vmatpush.bf16.msra.mxu0 0
        %769 = vmatpush.bf16.msra.mxu0 0
        %770 = vmatpush.bf16.msra.mxu0 %v748
        %771 = vmatpush.bf16.msra.mxu0 %v747
        %772 = vmatpush.bf16.msra.mxu0 %v746
        %773 = vmatpush.bf16.msra.mxu0 %v745
        %774 = vmatmul.bf16.gmra.mxu0 %v755
        %v775 = vpop.f32.mrf.mxu0
        %v776 = vadd.f32 %v672, %v775
        %v777 = vpop.f32.mrf.mxu0
        %v778 = vadd.f32 %v677, %v777
        %779 = vmatmul.bf16.gmra.mxu0 %v758
        %v780 = vpop.f32.mrf.mxu0
        %v781 = vadd.f32 %v682, %v780
        %v782 = vpop.f32.mrf.mxu0
        %v783 = vadd.f32 %v687, %v782
        %784 = vmatmul.bf16.gmra.mxu0 %v761
        %v785 = vpop.f32.mrf.mxu0
        %v786 = vadd.f32 %v692, %v785
        %v787 = vpop.f32.mrf.mxu0
        %v788 = vadd.f32 %v697, %v787
        %789 = vmatmul.bf16.gmra.mxu0 %v764
        %v790 = vpop.f32.mrf.mxu0
        %v791 = vadd.f32 %v702, %v790
        %v792 = vpop.f32.mrf.mxu0
        %v793 = vadd.f32 %v707, %v792
        %794 = vdwg.mxu0
        %vm795 = vcmp.ge.f32.partialorder %v776, 0.0
        %vm796 = vcmp.ge.f32.partialorder %v778, 0.0
        %vm797 = vcmp.ge.f32.partialorder %v781, 0.0
        %vm798 = vcmp.ge.f32.partialorder %v783, 0.0
        %vm799 = vcmp.ge.f32.partialorder %v786, 0.0
        %vm800 = vcmp.ge.f32.partialorder %v788, 0.0
        %vm801 = vcmp.ge.f32.partialorder %v791, 0.0
        %vm802 = vcmp.ge.f32.partialorder %v793, 0.0
        %v803 = vmul.f32 %v776, 0.1
        %v804 = vmul.f32 %v778, 0.1
        %v805 = vmul.f32 %v781, 0.1
        %v806 = vmul.f32 %v783, 0.1
        %v807 = vmul.f32 %v786, 0.1
        %v808 = vmul.f32 %v788, 0.1
        %v809 = vmul.f32 %v791, 0.1
        %v810 = vmul.f32 %v793, 0.1
        %v811 = vsel %vm795, %v776, %v803
        %v812 = vsel %vm796, %v778, %v804
        %v813 = vsel %vm797, %v781, %v805
        %v814 = vsel %vm798, %v783, %v806
        %v815 = vsel %vm799, %v786, %v807
        %v816 = vsel %vm800, %v788, %v808
        %v817 = vsel %vm801, %v791, %v809
        %v818 = vsel %vm802, %v793, %v810
        %vm819 = vcmask 130048
        %820 = vst.msk [vmem:[%s643] sm:$0xff] %vm819, %v811
        %821 = vst.msk [vmem:[%s643 + $0x8] sm:$0xff] %vm819, %v812
        %822 = vst.msk [vmem:[%s643 + $0x10] sm:$0xff] %vm819, %v813
        %823 = vst.msk [vmem:[%s643 + $0x18] sm:$0xff] %vm819, %v814
        %824 = vst.msk [vmem:[%s643 + $0x20] sm:$0xff] %vm819, %v815
        %825 = vst.msk [vmem:[%s643 + $0x28] sm:$0xff] %vm819, %v816
        %826 = vst.msk [vmem:[%s643 + $0x30] sm:$0xff] %vm819, %v817
        %827 = vst.msk [vmem:[%s643 + $0x38] sm:$0xff] %vm819, %v818
        %v828 = vpack.c.bf16 %v811, %v811
        %v829 = vpack.c.bf16 %v812, %v812
        %v830 = vpack.c.bf16 %v813, %v813
        %v831 = vpack.c.bf16 %v814, %v814
        %v832 = vpack.c.bf16 %v815, %v815
        %v833 = vpack.c.bf16 %v816, %v816
        %v834 = vpack.c.bf16 %v817, %v817
        %v835 = vpack.c.bf16 %v818, %v818
        %vm836 = vcmask 125952
        %837 = vst.msk [vmem:[#allocation3] sm:$0xf] %vm836, %v828
        %838 = vst.msk [vmem:[#allocation3 + $0x4] sm:$0xf] %vm836, %v829
        %839 = vst.msk [vmem:[#allocation3 + $0x8] sm:$0xf] %vm836, %v830
        %840 = vst.msk [vmem:[#allocation3 + $0xc] sm:$0xf] %vm836, %v831
        %841 = vst.msk [vmem:[#allocation3 + $0x10] sm:$0xf] %vm836, %v832
        %842 = vst.msk [vmem:[#allocation3 + $0x14] sm:$0xf] %vm836, %v833
        %843 = vst.msk [vmem:[#allocation3 + $0x18] sm:$0xf] %vm836, %v834
        %844 = vst.msk [vmem:[#allocation3 + $0x1c] sm:$0xf] %vm836, %v835
        %vm845 = vcmask 68608
        %846 = vst.msk [vmem:[#allocation2] sm:$0xf] %vm845, 0
        %847 = vst.msk [vmem:[#allocation2 + $0xc] sm:$0xf] %vm845, 0
        %848 = vst.msk [vmem:[#allocation2 + $0x18] sm:$0xf] %vm845, 0
        %849 = vst.msk [vmem:[#allocation2 + $0x24] sm:$0xf] %vm845, 0
        %850 = vst.msk [vmem:[#allocation2 + $0x30] sm:$0xf] %vm845, 0
        %851 = vst.msk [vmem:[#allocation2 + $0x3c] sm:$0xf] %vm845, 0
        %852 = vst.msk [vmem:[#allocation2 + $0x48] sm:$0xf] %vm845, 0
        %853 = vst.msk [vmem:[#allocation2 + $0x54] sm:$0xf] %vm845, 0
        %854 = vst.msk [vmem:[#allocation2 + $0x60] sm:$0xf] %vm845, 0
        %855 = vst.msk [vmem:[#allocation2 + $0x6c] sm:$0xf] %vm845, 0
        %856 = vst.msk [vmem:[#allocation2 + $0x78] sm:$0xf] %vm845, 0
        %857 = vst.msk [vmem:[#allocation2 + $0x84] sm:$0xf] %vm845, 0
        %858 = vst.msk [vmem:[#allocation2 + $0x90] sm:$0xf] %vm845, 0
        %859 = vst.msk [vmem:[#allocation2 + $0x9c] sm:$0xf] %vm845, 0
        %860 = vst.msk [vmem:[#allocation2 + $0xa8] sm:$0xf] %vm845, 0
        %861 = vst.msk [vmem:[#allocation2 + $0xb4] sm:$0xf] %vm845, 0
        %862 = vst.msk [vmem:[#allocation2 + $0xc0] sm:$0xf] %vm845, 0
        %863 = vst.msk [vmem:[#allocation2 + $0xcc] sm:$0xf] %vm845, 0
        %864 = vst.msk [vmem:[#allocation2 + $0xd8] sm:$0xf] %vm845, 0
        %865 = vst.msk [vmem:[#allocation2 + $0xe4] sm:$0xf] %vm845, 0
        %866 = vst.msk [vmem:[#allocation2 + $0xf0] sm:$0xf] %vm845, 0
        %867 = vst.msk [vmem:[#allocation2 + $0xfc] sm:$0xf] %vm845, 0
        %868 = vst.msk [vmem:[#allocation2 + $0x108] sm:$0xf] %vm845, 0
        %869 = vst.msk [vmem:[#allocation2 + $0x114] sm:$0xf] %vm845, 0
        %vm870 = vcmask 650808
        %871 = vst.msk [vmem:[#allocation2] sm:$0xf] %vm870, 0
        %872 = vst.msk [vmem:[#allocation2 + $0xc] sm:$0xf] %vm870, 0
        %873 = vst.msk [vmem:[#allocation2 + $0x18] sm:$0xf] %vm870, 0
        %874 = vst.msk [vmem:[#allocation2 + $0x24] sm:$0xf] %vm870, 0
        %875 = vst.msk [vmem:[#allocation2 + $0x30] sm:$0xf] %vm870, 0
        %876 = vst.msk [vmem:[#allocation2 + $0x3c] sm:$0xf] %vm870, 0
        %877 = vst.msk [vmem:[#allocation2 + $0x48] sm:$0xf] %vm870, 0
        %878 = vst.msk [vmem:[#allocation2 + $0x54] sm:$0xf] %vm870, 0
        %879 = vst.msk [vmem:[#allocation2 + $0x60] sm:$0xf] %vm870, 0
        %880 = vst.msk [vmem:[#allocation2 + $0x6c] sm:$0xf] %vm870, 0
        %881 = vst.msk [vmem:[#allocation2 + $0x78] sm:$0xf] %vm870, 0
        %882 = vst.msk [vmem:[#allocation2 + $0x84] sm:$0xf] %vm870, 0
        %883 = vst.msk [vmem:[#allocation2 + $0x90] sm:$0xf] %vm870, 0
        %884 = vst.msk [vmem:[#allocation2 + $0x9c] sm:$0xf] %vm870, 0
        %885 = vst.msk [vmem:[#allocation2 + $0xa8] sm:$0xf] %vm870, 0
        %886 = vst.msk [vmem:[#allocation2 + $0xb4] sm:$0xf] %vm870, 0
        %887 = vst.msk [vmem:[#allocation2 + $0xc0] sm:$0xf] %vm870, 0
        %888 = vst.msk [vmem:[#allocation2 + $0xcc] sm:$0xf] %vm870, 0
        %889 = vst.msk [vmem:[#allocation2 + $0xd8] sm:$0xf] %vm870, 0
        %890 = vst.msk [vmem:[#allocation2 + $0xe4] sm:$0xf] %vm870, 0
        %891 = vst.msk [vmem:[#allocation2 + $0xf0] sm:$0xf] %vm870, 0
        %892 = vst.msk [vmem:[#allocation2 + $0xfc] sm:$0xf] %vm870, 0
        %893 = vst.msk [vmem:[#allocation2 + $0x108] sm:$0xf] %vm870, 0
        %894 = vst.msk [vmem:[#allocation2 + $0x114] sm:$0xf] %vm870, 0
        %v895 = vld [vmem:[%s5] sm:$0xf]
        %v896 = vld [vmem:[%s5 + $0x4] sm:$0xf]
        %v897 = vld [vmem:[%s5 + $0x8] sm:$0xf]
        %v898 = vld [vmem:[%s5 + $0xc] sm:$0xf]
        %v899 = vld [vmem:[%s5 + $0x10] sm:$0xf]
        %v900 = vld [vmem:[%s5 + $0x14] sm:$0xf]
        %v901 = vld [vmem:[%s5 + $0x18] sm:$0xf]
        %v902 = vld [vmem:[%s5 + $0x1c] sm:$0xf]
        %v903 = vld [vmem:[%s6] sm:$0xff]
        %v904 = vld [vmem:[%s6 + $0x8] sm:$0xff]
        %v905 = vld [vmem:[%s6 + $0x10] sm:$0xff]
        %v906 = vld [vmem:[%s6 + $0x18] sm:$0xff]
        %v907 = vld [vmem:[%s6 + $0x20] sm:$0xff]
        %v908 = vld [vmem:[%s6 + $0x28] sm:$0xff]
        %v909 = vld [vmem:[%s6 + $0x30] sm:$0xff]
        %v910 = vld [vmem:[%s6 + $0x38] sm:$0xff]
        %v911 = vld [vmem:[%s13] sm:$0xf]
        %v912 = vld [vmem:[%s13 + $0x4] sm:$0xf]
        %v913 = vlaneseq
        %v914 = vand.u32 %v913, 127
        %vm915 = vcmp.lt.s32.totalorder %v914, 0
        %v916 = vsub.s32 0, %v914
        %v917 = vsel %vm915, %v916, %v914
        %v918 = vshrl.u32 %v917, 3
        %v919 = vand.u32 %v917, 7
        %v920 = vsub.s32 0, %v919
        %v921 = vsel %vm915, %v920, %v919
        %vm922 = vcmp.ne.s32.totalorder %v921, 0
        %vm923 = vcmp.lt.s32.totalorder %v921, 0
        %vm924 = vmand %vm923, %vm922
        %v925 = vadd.s32 %v921, 8
        %v926 = vsel %vm924, %v925, %v921
        %v927 = vld [vmem:[%s633] sm:$0xf]
        %v928 = vld [vmem:[%s633 + $0x4] sm:$0xf]
        %v929 = vld [vmem:[%s633 + $0x8] sm:$0xf]
        %v930 = vld [vmem:[%s633 + $0xc] sm:$0xf]
        %932 = vset.pattern.permute.xlu0 0
        %933 = vperm.xlu0 %932, %v903
        %v934 = vpop.permute.xlu0 %933
        %937 = vset.pattern.permute.xlu0 0
        %938 = vperm.xlu0 %937, %v904
        %v939 = vpop.permute.xlu0 %938
        %942 = vset.pattern.permute.xlu0 0
        %943 = vperm.xlu0 %942, %v905
        %v944 = vpop.permute.xlu0 %943
        %947 = vset.pattern.permute.xlu0 0
        %948 = vperm.xlu0 %947, %v906
        %v949 = vpop.permute.xlu0 %948
        %952 = vset.pattern.permute.xlu0 0
        %953 = vperm.xlu0 %952, %v907
        %v954 = vpop.permute.xlu0 %953
        %957 = vset.pattern.permute.xlu0 0
        %958 = vperm.xlu0 %957, %v908
        %v959 = vpop.permute.xlu0 %958
        %962 = vset.pattern.permute.xlu0 0
        %963 = vperm.xlu0 %962, %v909
        %v964 = vpop.permute.xlu0 %963
        %967 = vset.pattern.permute.xlu0 0
        %968 = vperm.xlu0 %967, %v910
        %v969 = vpop.permute.xlu0 %968
        %v979 = vunpack.c.l.b16 %v895
        %v980 = vunpack.c.l.b16 %v896
        %v981 = vunpack.c.l.b16 %v897
        %v982 = vunpack.c.l.b16 %v898
        %v983 = vunpack.c.l.b16 %v899
        %v984 = vunpack.c.l.b16 %v900
        %v985 = vunpack.c.l.b16 %v901
        %v986 = vunpack.c.l.b16 %v902
        %v987 = vpack.c.b16 %v980, %v979
        %v988 = vpack.c.b16 %v982, %v981
        %v989 = vpack.c.b16 %v984, %v983
        %v990 = vpack.c.b16 %v986, %v985
        %v995 = vunpack.c.l.b16 %v927
        %v996 = vunpack.c.l.b16 %v928
        %v997 = vunpack.c.l.b16 %v929
        %v998 = vunpack.c.l.b16 %v930
        %v999 = vpack.c.b16 %v996, %v995
        %v1000 = vpack.c.b16 %v998, %v997
        %vm1003 = vcmask 261120
        %v1005 = vsel %vm1003, %v987, 0
        %v1008 = vsel %vm1003, %v988, 0
        %v1011 = vsel %vm1003, %v989, 0
        %v1014 = vsel %vm1003, %v990, 0
        %1016 = vmatpush.bf16.msra.mxu0 0
        %1017 = vmatpush.bf16.msra.mxu0 0
        %1018 = vmatpush.bf16.msra.mxu0 0
        %1019 = vmatpush.bf16.msra.mxu0 0
        %1020 = vmatpush.bf16.msra.mxu0 0
        %1021 = vmatpush.bf16.msra.mxu0 0
        %1022 = vmatpush.bf16.msra.mxu0 %v1000
        %1023 = vmatpush.bf16.msra.mxu0 %v999
        %1024 = vmatmul.bf16.gmra.mxu0 %v1005
        %v1025 = vpop.f32.mrf.mxu0
        %v1026 = vadd.f32 %v934, %v1025
        %v1027 = vpop.f32.mrf.mxu0
        %v1028 = vadd.f32 %v939, %v1027
        %1029 = vmatmul.bf16.gmra.mxu0 %v1008
        %v1030 = vpop.f32.mrf.mxu0
        %v1031 = vadd.f32 %v944, %v1030
        %v1032 = vpop.f32.mrf.mxu0
        %v1033 = vadd.f32 %v949, %v1032
        %1034 = vmatmul.bf16.gmra.mxu0 %v1011
        %v1035 = vpop.f32.mrf.mxu0
        %v1036 = vadd.f32 %v954, %v1035
        %v1037 = vpop.f32.mrf.mxu0
        %v1038 = vadd.f32 %v959, %v1037
        %1039 = vmatmul.bf16.gmra.mxu0 %v1014
        %v1040 = vpop.f32.mrf.mxu0
        %v1041 = vadd.f32 %v964, %v1040
        %v1042 = vpop.f32.mrf.mxu0
        %v1043 = vadd.f32 %v969, %v1042
        %1044 = vdwg.mxu0
        %vm1045 = vcmp.ge.f32.partialorder %v1026, 0.0
        %vm1046 = vcmp.ge.f32.partialorder %v1028, 0.0
        %vm1047 = vcmp.ge.f32.partialorder %v1031, 0.0
        %vm1048 = vcmp.ge.f32.partialorder %v1033, 0.0
        %vm1049 = vcmp.ge.f32.partialorder %v1036, 0.0
        %vm1050 = vcmp.ge.f32.partialorder %v1038, 0.0
        %vm1051 = vcmp.ge.f32.partialorder %v1041, 0.0
        %vm1052 = vcmp.ge.f32.partialorder %v1043, 0.0
        %v1053 = vmul.f32 %v1026, 0.1
        %v1054 = vmul.f32 %v1028, 0.1
        %v1055 = vmul.f32 %v1031, 0.1
        %v1056 = vmul.f32 %v1033, 0.1
        %v1057 = vmul.f32 %v1036, 0.1
        %v1058 = vmul.f32 %v1038, 0.1
        %v1059 = vmul.f32 %v1041, 0.1
        %v1060 = vmul.f32 %v1043, 0.1
        %v1061 = vsel %vm1045, %v1026, %v1053
        %v1062 = vsel %vm1046, %v1028, %v1054
        %v1063 = vsel %vm1047, %v1031, %v1055
        %v1064 = vsel %vm1048, %v1033, %v1056
        %v1065 = vsel %vm1049, %v1036, %v1057
        %v1066 = vsel %vm1050, %v1038, %v1058
        %v1067 = vsel %vm1051, %v1041, %v1059
        %v1068 = vsel %vm1052, %v1043, %v1060
        %v1069 = vld [vmem:[#allocation3] sm:$0xf]
        %v1070 = vld [vmem:[#allocation3 + $0x4] sm:$0xf]
        %v1071 = vld [vmem:[#allocation3 + $0x8] sm:$0xf]
        %v1072 = vld [vmem:[#allocation3 + $0xc] sm:$0xf]
        %v1073 = vld [vmem:[#allocation3 + $0x10] sm:$0xf]
        %v1074 = vld [vmem:[#allocation3 + $0x14] sm:$0xf]
        %v1075 = vld [vmem:[#allocation3 + $0x18] sm:$0xf]
        %v1076 = vld [vmem:[#allocation3 + $0x1c] sm:$0xf]
        %v1085 = vunpack.c.l.b16 %v1069
        %v1086 = vunpack.c.l.b16 %v1070
        %v1087 = vunpack.c.l.b16 %v1071
        %v1088 = vunpack.c.l.b16 %v1072
        %v1089 = vunpack.c.l.b16 %v1073
        %v1090 = vunpack.c.l.b16 %v1074
        %v1091 = vunpack.c.l.b16 %v1075
        %v1092 = vunpack.c.l.b16 %v1076
        %v1093 = vpack.c.b16 %v1086, %v1085
        %v1094 = vpack.c.b16 %v1088, %v1087
        %v1095 = vpack.c.b16 %v1090, %v1089
        %v1096 = vpack.c.b16 %v1092, %v1091
        %v1099 = vunpack.c.l.b16 %v911
        %v1100 = vunpack.c.l.b16 %v912
        %v1101 = vpack.c.b16 %v1100, %v1099
        %v1104 = vsel %vm819, %v1093, 0
        %v1107 = vsel %vm819, %v1094, 0
        %v1110 = vsel %vm819, %v1095, 0
        %v1113 = vsel %vm819, %v1096, 0
        %1115 = vmatpush.bf16.msra.mxu0 0
        %1116 = vmatpush.bf16.msra.mxu0 0
        %1117 = vmatpush.bf16.msra.mxu0 0
        %1118 = vmatpush.bf16.msra.mxu0 0
        %1119 = vmatpush.bf16.msra.mxu0 0
        %1120 = vmatpush.bf16.msra.mxu0 0
        %1121 = vmatpush.bf16.msra.mxu0 0
        %1122 = vmatpush.bf16.msra.mxu0 %v1101
        %1123 = vmatmul.bf16.gmra.mxu0 %v1104
        %v1124 = vpop.f32.mrf.mxu0
        %v1125 = vadd.f32 0.0, %v1124
        %v1126 = vpop.f32.mrf.mxu0
        %v1127 = vadd.f32 0.0, %v1126
        %1128 = vmatmul.bf16.gmra.mxu0 %v1107
        %v1129 = vpop.f32.mrf.mxu0
        %v1130 = vadd.f32 0.0, %v1129
        %v1131 = vpop.f32.mrf.mxu0
        %v1132 = vadd.f32 0.0, %v1131
        %1133 = vmatmul.bf16.gmra.mxu0 %v1110
        %v1134 = vpop.f32.mrf.mxu0
        %v1135 = vadd.f32 0.0, %v1134
        %v1136 = vpop.f32.mrf.mxu0
        %v1137 = vadd.f32 0.0, %v1136
        %1138 = vmatmul.bf16.gmra.mxu0 %v1113
        %v1139 = vpop.f32.mrf.mxu0
        %v1140 = vadd.f32 0.0, %v1139
        %v1141 = vpop.f32.mrf.mxu0
        %v1142 = vadd.f32 0.0, %v1141
        %1143 = vdwg.mxu0
        %v1144 = vadd.f32 %v1061, %v1125
        %v1145 = vadd.f32 %v1062, %v1127
        %v1146 = vadd.f32 %v1063, %v1130
        %v1147 = vadd.f32 %v1064, %v1132
        %v1148 = vadd.f32 %v1065, %v1135
        %v1149 = vadd.f32 %v1066, %v1137
        %v1150 = vadd.f32 %v1067, %v1140
        %v1151 = vadd.f32 %v1068, %v1142
        %v1152 = vpack.c.bf16 %v1144, %v1144
        %v1153 = vpack.c.bf16 %v1145, %v1145
        %v1154 = vpack.c.bf16 %v1146, %v1146
        %v1155 = vpack.c.bf16 %v1147, %v1147
        %v1156 = vpack.c.bf16 %v1148, %v1148
        %v1157 = vpack.c.bf16 %v1149, %v1149
        %v1158 = vpack.c.bf16 %v1150, %v1150
        %v1159 = vpack.c.bf16 %v1151, %v1151
        %1168 = vrot.lane.b32.xlu0 %v1152, 8
        %v1169 = vpop.permute.xlu0 %1168
        %1170 = vrot.lane.b32.xlu0 %v1153, 8
        %v1171 = vpop.permute.xlu0 %1170
        %1172 = vrot.lane.b32.xlu0 %v1154, 8
        %v1173 = vpop.permute.xlu0 %1172
        %1174 = vrot.lane.b32.xlu0 %v1155, 8
        %v1175 = vpop.permute.xlu0 %1174
        %1176 = vrot.lane.b32.xlu0 %v1156, 8
        %v1177 = vpop.permute.xlu0 %1176
        %1178 = vrot.lane.b32.xlu0 %v1157, 8
        %v1179 = vpop.permute.xlu0 %1178
        %1180 = vrot.lane.b32.xlu0 %v1158, 8
        %v1181 = vpop.permute.xlu0 %1180
        %1182 = vrot.lane.b32.xlu0 %v1159, 8
        %v1183 = vpop.permute.xlu0 %1182
        %vm1192 = vcmask 584768
        %1193 = vst.msk [vmem:[#allocation2 + $0x60] sm:$0xf] %vm1192, %v1169
        %1194 = vst.msk [vmem:[#allocation2 + $0x6c] sm:$0xf] %vm1192, %v1171
        %1195 = vst.msk [vmem:[#allocation2 + $0x78] sm:$0xf] %vm1192, %v1173
        %1196 = vst.msk [vmem:[#allocation2 + $0x84] sm:$0xf] %vm1192, %v1175
        %1197 = vst.msk [vmem:[#allocation2 + $0x90] sm:$0xf] %vm1192, %v1177
        %1198 = vst.msk [vmem:[#allocation2 + $0x9c] sm:$0xf] %vm1192, %v1179
        %1199 = vst.msk [vmem:[#allocation2 + $0xa8] sm:$0xf] %vm1192, %v1181
        %1200 = vst.msk [vmem:[#allocation2 + $0xb4] sm:$0xf] %vm1192, %v1183
        %vm1201 = vcmp.eq.s32.totalorder %v926, 7
        %v1202 = vsel %vm1201, 1, 0
        %vm1203 = vcmp.eq.s32.totalorder %v1202, 1
        %vm1204 = vmpackc.low %vm1203, %vm1203
        %v1205 = vsel %vm1204, 0, %v1152
        %v1206 = vsel %vm1204, 0, %v1153
        %v1207 = vsel %vm1204, 0, %v1154
        %v1208 = vsel %vm1204, 0, %v1155
        %v1209 = vsel %vm1204, 0, %v1156
        %v1210 = vsel %vm1204, 0, %v1157
        %v1211 = vsel %vm1204, 0, %v1158
        %v1212 = vsel %vm1204, 0, %v1159
        %1221 = vrot.lane.b32.xlu0 %v1205, 9
        %v1222 = vpop.permute.xlu0 %1221
        %1223 = vrot.lane.b32.xlu0 %v1206, 9
        %v1224 = vpop.permute.xlu0 %1223
        %1225 = vrot.lane.b32.xlu0 %v1207, 9
        %v1226 = vpop.permute.xlu0 %1225
        %1227 = vrot.lane.b32.xlu0 %v1208, 9
        %v1228 = vpop.permute.xlu0 %1227
        %1229 = vrot.lane.b32.xlu0 %v1209, 9
        %v1230 = vpop.permute.xlu0 %1229
        %1231 = vrot.lane.b32.xlu0 %v1210, 9
        %v1232 = vpop.permute.xlu0 %1231
        %1233 = vrot.lane.b32.xlu0 %v1211, 9
        %v1234 = vpop.permute.xlu0 %1233
        %1235 = vrot.lane.b32.xlu0 %v1212, 9
        %v1236 = vpop.permute.xlu0 %1235
        %vm1245 = vcmask 592968
        %1246 = vst.msk [vmem:[#allocation2] sm:$0xf] %vm1245, %v1222
        %1247 = vst.msk [vmem:[#allocation2 + $0xc] sm:$0xf] %vm1245, %v1224
        %1248 = vst.msk [vmem:[#allocation2 + $0x18] sm:$0xf] %vm1245, %v1226
        %1249 = vst.msk [vmem:[#allocation2 + $0x24] sm:$0xf] %vm1245, %v1228
        %1250 = vst.msk [vmem:[#allocation2 + $0x30] sm:$0xf] %vm1245, %v1230
        %1251 = vst.msk [vmem:[#allocation2 + $0x3c] sm:$0xf] %vm1245, %v1232
        %1252 = vst.msk [vmem:[#allocation2 + $0x48] sm:$0xf] %vm1245, %v1234
        %1253 = vst.msk [vmem:[#allocation2 + $0x54] sm:$0xf] %vm1245, %v1236
        %vm1254 = vcmp.eq.s32.totalorder %v926, 0
        %v1255 = vsel %vm1254, 1, 0
        %vm1256 = vcmp.eq.s32.totalorder %v1255, 1
        %vm1257 = vmpackc.low %vm1256, %vm1256
        %v1258 = vsel %vm1257, 0, %v1152
        %v1259 = vsel %vm1257, 0, %v1153
        %v1260 = vsel %vm1257, 0, %v1154
        %v1261 = vsel %vm1257, 0, %v1155
        %v1262 = vsel %vm1257, 0, %v1156
        %v1263 = vsel %vm1257, 0, %v1157
        %v1264 = vsel %vm1257, 0, %v1158
        %v1265 = vsel %vm1257, 0, %v1159
        %1274 = vrot.lane.b32.xlu0 %v1258, 7
        %v1275 = vpop.permute.xlu0 %1274
        %1276 = vrot.lane.b32.xlu0 %v1259, 7
        %v1277 = vpop.permute.xlu0 %1276
        %1278 = vrot.lane.b32.xlu0 %v1260, 7
        %v1279 = vpop.permute.xlu0 %1278
        %1280 = vrot.lane.b32.xlu0 %v1261, 7
        %v1281 = vpop.permute.xlu0 %1280
        %1282 = vrot.lane.b32.xlu0 %v1262, 7
        %v1283 = vpop.permute.xlu0 %1282
        %1284 = vrot.lane.b32.xlu0 %v1263, 7
        %v1285 = vpop.permute.xlu0 %1284
        %1286 = vrot.lane.b32.xlu0 %v1264, 7
        %v1287 = vpop.permute.xlu0 %1286
        %1288 = vrot.lane.b32.xlu0 %v1265, 7
        %v1289 = vpop.permute.xlu0 %1288
        %vm1298 = vcmask 576568
        %1299 = vst.msk [vmem:[#allocation2 + $0xc0] sm:$0xf] %vm1298, %v1275
        %1300 = vst.msk [vmem:[#allocation2 + $0xcc] sm:$0xf] %vm1298, %v1277
        %1301 = vst.msk [vmem:[#allocation2 + $0xd8] sm:$0xf] %vm1298, %v1279
        %1302 = vst.msk [vmem:[#allocation2 + $0xe4] sm:$0xf] %vm1298, %v1281
        %1303 = vst.msk [vmem:[#allocation2 + $0xf0] sm:$0xf] %vm1298, %v1283
        %1304 = vst.msk [vmem:[#allocation2 + $0xfc] sm:$0xf] %vm1298, %v1285
        %1305 = vst.msk [vmem:[#allocation2 + $0x108] sm:$0xf] %vm1298, %v1287
        %1306 = vst.msk [vmem:[#allocation2 + $0x114] sm:$0xf] %vm1298, %v1289
        %v1307 = vld [vmem:[#allocation5] sm:$0xff]
        %v1308 = vld [vmem:[#allocation5 + $0x8] sm:$0xff]
        %v1309 = vld [vmem:[#allocation5 + $0x10] sm:$0xff]
        %v1310 = vld [vmem:[#allocation5 + $0x18] sm:$0xff]
        %v1311 = vld [vmem:[#allocation5 + $0x20] sm:$0xff]
        %v1312 = vld [vmem:[#allocation5 + $0x28] sm:$0xff]
        %v1313 = vld [vmem:[#allocation5 + $0x30] sm:$0xff]
        %v1314 = vld [vmem:[#allocation5 + $0x38] sm:$0xff]
        %s1315 = scalar_lea.vmem [#allocation5], 64
        %v1316 = vld [vmem:[%s1315] sm:$0xff]
        %v1317 = vld [vmem:[%s1315 + $0x8] sm:$0xff]
        %v1318 = vld [vmem:[%s1315 + $0x10] sm:$0xff]
        %v1319 = vld [vmem:[%s1315 + $0x18] sm:$0xff]
        %v1320 = vld [vmem:[%s1315 + $0x20] sm:$0xff]
        %v1321 = vld [vmem:[%s1315 + $0x28] sm:$0xff]
        %v1322 = vld [vmem:[%s1315 + $0x30] sm:$0xff]
        %v1323 = vld [vmem:[%s1315 + $0x38] sm:$0xff]
        %s1324 = scalar_lea.vmem [#allocation5], 128
        %v1325 = vld [vmem:[%s1324] sm:$0xff]
        %v1326 = vld [vmem:[%s1324 + $0x8] sm:$0xff]
        %v1327 = vld [vmem:[%s1324 + $0x10] sm:$0xff]
        %v1328 = vld [vmem:[%s1324 + $0x18] sm:$0xff]
        %v1329 = vld [vmem:[%s1324 + $0x20] sm:$0xff]
        %v1330 = vld [vmem:[%s1324 + $0x28] sm:$0xff]
        %v1331 = vld [vmem:[%s1324 + $0x30] sm:$0xff]
        %v1332 = vld [vmem:[%s1324 + $0x38] sm:$0xff]
        %v1333 = vld [vmem:[%s10] sm:$0xff]
        %v1334 = vld [vmem:[%s10 + $0x8] sm:$0xff]
        %v1335 = vld [vmem:[%s10 + $0x10] sm:$0xff]
        %v1336 = vld [vmem:[%s10 + $0x18] sm:$0xff]
        %v1337 = vld [vmem:[%s10 + $0x20] sm:$0xff]
        %v1338 = vld [vmem:[%s10 + $0x28] sm:$0xff]
        %v1339 = vld [vmem:[%s10 + $0x30] sm:$0xff]
        %v1340 = vld [vmem:[%s10 + $0x38] sm:$0xff]
        %v1341 = vld [vmem:[#allocation2] sm:$0xf]
        %v1342 = vld [vmem:[#allocation2 + $0xc] sm:$0xf]
        %v1343 = vld [vmem:[#allocation2 + $0x18] sm:$0xf]
        %v1344 = vld [vmem:[#allocation2 + $0x24] sm:$0xf]
        %v1345 = vld [vmem:[#allocation2 + $0x30] sm:$0xf]
        %v1346 = vld [vmem:[#allocation2 + $0x3c] sm:$0xf]
        %v1347 = vld [vmem:[#allocation2 + $0x48] sm:$0xf]
        %v1348 = vld [vmem:[#allocation2 + $0x54] sm:$0xf]
        %v1349 = vld [vmem:[#allocation2 + $0x60] sm:$0xf]
        %v1350 = vld [vmem:[#allocation2 + $0x6c] sm:$0xf]
        %v1351 = vld [vmem:[#allocation2 + $0x78] sm:$0xf]
        %v1352 = vld [vmem:[#allocation2 + $0x84] sm:$0xf]
        %v1353 = vld [vmem:[#allocation2 + $0x90] sm:$0xf]
        %v1354 = vld [vmem:[#allocation2 + $0x9c] sm:$0xf]
        %v1355 = vld [vmem:[#allocation2 + $0xa8] sm:$0xf]
        %v1356 = vld [vmem:[#allocation2 + $0xb4] sm:$0xf]
        %v1357 = vld [vmem:[#allocation2 + $0xc0] sm:$0xf]
        %v1358 = vld [vmem:[#allocation2 + $0xcc] sm:$0xf]
        %v1359 = vld [vmem:[#allocation2 + $0xd8] sm:$0xf]
        %v1360 = vld [vmem:[#allocation2 + $0xe4] sm:$0xf]
        %v1361 = vld [vmem:[#allocation2 + $0xf0] sm:$0xf]
        %v1362 = vld [vmem:[#allocation2 + $0xfc] sm:$0xf]
        %v1363 = vld [vmem:[#allocation2 + $0x108] sm:$0xf]
        %v1364 = vld [vmem:[#allocation2 + $0x114] sm:$0xf]
        %v1373 = vunpack.c.l.b16 %v1316
        %v1374 = vunpack.c.h.b16 %v1316
        %v1375 = vunpack.c.l.b16 %v1317
        %v1376 = vunpack.c.h.b16 %v1317
        %v1377 = vunpack.c.l.b16 %v1318
        %v1378 = vunpack.c.h.b16 %v1318
        %v1379 = vunpack.c.l.b16 %v1319
        %v1380 = vunpack.c.h.b16 %v1319
        %v1381 = vunpack.c.l.b16 %v1320
        %v1382 = vunpack.c.h.b16 %v1320
        %v1383 = vunpack.c.l.b16 %v1321
        %v1384 = vunpack.c.h.b16 %v1321
        %v1385 = vunpack.c.l.b16 %v1322
        %v1386 = vunpack.c.h.b16 %v1322
        %v1387 = vunpack.c.l.b16 %v1323
        %v1388 = vunpack.c.h.b16 %v1323
        %v1389 = vpack.c.b16 %v1375, %v1373
        %v1390 = vpack.c.b16 %v1376, %v1374
        %v1391 = vpack.c.b16 %v1379, %v1377
        %v1392 = vpack.c.b16 %v1380, %v1378
        %v1393 = vpack.c.b16 %v1383, %v1381
        %v1394 = vpack.c.b16 %v1384, %v1382
        %v1395 = vpack.c.b16 %v1387, %v1385
        %v1396 = vpack.c.b16 %v1388, %v1386
        %v1425 = vunpack.c.l.b16 %v1341
        %v1426 = vunpack.c.l.b16 %v1342
        %v1427 = vunpack.c.l.b16 %v1343
        %v1428 = vunpack.c.l.b16 %v1344
        %v1429 = vunpack.c.l.b16 %v1345
        %v1430 = vunpack.c.l.b16 %v1346
        %v1431 = vunpack.c.l.b16 %v1347
        %v1432 = vunpack.c.l.b16 %v1348
        %v1433 = vunpack.c.l.b16 %v1349
        %v1434 = vunpack.c.l.b16 %v1350
        %v1435 = vunpack.c.l.b16 %v1351
        %v1436 = vunpack.c.l.b16 %v1352
        %v1437 = vunpack.c.l.b16 %v1353
        %v1438 = vunpack.c.l.b16 %v1354
        %v1439 = vunpack.c.l.b16 %v1355
        %v1440 = vunpack.c.l.b16 %v1356
        %v1441 = vunpack.c.l.b16 %v1357
        %v1442 = vunpack.c.l.b16 %v1358
        %v1443 = vunpack.c.l.b16 %v1359
        %v1444 = vunpack.c.l.b16 %v1360
        %v1445 = vunpack.c.l.b16 %v1361
        %v1446 = vunpack.c.l.b16 %v1362
        %v1447 = vunpack.c.l.b16 %v1363
        %v1448 = vunpack.c.l.b16 %v1364
        %v1449 = vpack.c.b16 %v1426, %v1425
        %v1450 = vpack.c.b16 %v1428, %v1427
        %v1451 = vpack.c.b16 %v1430, %v1429
        %v1452 = vpack.c.b16 %v1432, %v1431
        %v1453 = vpack.c.b16 %v1434, %v1433
        %v1454 = vpack.c.b16 %v1436, %v1435
        %v1455 = vpack.c.b16 %v1438, %v1437
        %v1456 = vpack.c.b16 %v1440, %v1439
        %v1457 = vpack.c.b16 %v1442, %v1441
        %v1458 = vpack.c.b16 %v1444, %v1443
        %v1459 = vpack.c.b16 %v1446, %v1445
        %v1460 = vpack.c.b16 %v1448, %v1447
        %1461 = vrot.lane.b32.xlu0 %v1449, 120
        %v1462 = vpop.permute.xlu0 %1461
        %1463 = vrot.lane.b32.xlu0 %v1450, 120
        %v1464 = vpop.permute.xlu0 %1463
        %1465 = vrot.lane.b32.xlu0 %v1451, 120
        %v1466 = vpop.permute.xlu0 %1465
        %1467 = vrot.lane.b32.xlu0 %v1452, 120
        %v1468 = vpop.permute.xlu0 %1467
        %1469 = vrot.lane.b32.xlu0 %v1453, 120
        %v1470 = vpop.permute.xlu0 %1469
        %1471 = vrot.lane.b32.xlu0 %v1454, 120
        %v1472 = vpop.permute.xlu0 %1471
        %1473 = vrot.lane.b32.xlu0 %v1455, 120
        %v1474 = vpop.permute.xlu0 %1473
        %1475 = vrot.lane.b32.xlu0 %v1456, 120
        %v1476 = vpop.permute.xlu0 %1475
        %1477 = vrot.lane.b32.xlu0 %v1457, 120
        %v1478 = vpop.permute.xlu0 %1477
        %1479 = vrot.lane.b32.xlu0 %v1458, 120
        %v1480 = vpop.permute.xlu0 %1479
        %1481 = vrot.lane.b32.xlu0 %v1459, 120
        %v1482 = vpop.permute.xlu0 %1481
        %1483 = vrot.lane.b32.xlu0 %v1460, 120
        %v1484 = vpop.permute.xlu0 %1483
        %v1498 = vsel %vm753, %v1390, 0
        %v1501 = vsel %vm753, %v1392, 0
        %v1504 = vsel %vm753, %v1394, 0
        %v1507 = vsel %vm753, %v1396, 0
        %1509 = vmatpush.bf16.msra.mxu0 %v1476
        %1510 = vmatpush.bf16.msra.mxu0 %v1474
        %1511 = vmatpush.bf16.msra.mxu0 %v1472
        %1512 = vmatpush.bf16.msra.mxu0 %v1470
        %1513 = vmatpush.bf16.msra.mxu0 %v1468
        %1514 = vmatpush.bf16.msra.mxu0 %v1466
        %1515 = vmatpush.bf16.msra.mxu0 %v1464
        %1516 = vmatpush.bf16.msra.mxu0 %v1462
        %1517 = vmatmul.bf16.gmra.mxu0 %v1389
        %v1518 = vpop.f32.mrf.mxu0
        %v1519 = vadd.f32 0.0, %v1518
        %v1520 = vpop.f32.mrf.mxu0
        %v1521 = vadd.f32 0.0, %v1520
        %1522 = vmatmul.bf16.gmra.mxu0 %v1391
        %v1523 = vpop.f32.mrf.mxu0
        %v1524 = vadd.f32 0.0, %v1523
        %v1525 = vpop.f32.mrf.mxu0
        %v1526 = vadd.f32 0.0, %v1525
        %1527 = vmatmul.bf16.gmra.mxu0 %v1393
        %v1528 = vpop.f32.mrf.mxu0
        %v1529 = vadd.f32 0.0, %v1528
        %v1530 = vpop.f32.mrf.mxu0
        %v1531 = vadd.f32 0.0, %v1530
        %1532 = vmatmul.bf16.gmra.mxu0 %v1395
        %v1533 = vpop.f32.mrf.mxu0
        %v1534 = vadd.f32 0.0, %v1533
        %v1535 = vpop.f32.mrf.mxu0
        %v1536 = vadd.f32 0.0, %v1535
        %1537 = vdwg.mxu0
        %1538 = vmatpush.bf16.msra.mxu0 0
        %1539 = vmatpush.bf16.msra.mxu0 0
        %1540 = vmatpush.bf16.msra.mxu0 0
        %1541 = vmatpush.bf16.msra.mxu0 0
        %1542 = vmatpush.bf16.msra.mxu0 %v1484
        %1543 = vmatpush.bf16.msra.mxu0 %v1482
        %1544 = vmatpush.bf16.msra.mxu0 %v1480
        %1545 = vmatpush.bf16.msra.mxu0 %v1478
        %1546 = vmatmul.bf16.gmra.mxu0 %v1498
        %v1547 = vpop.f32.mrf.mxu0
        %v1548 = vadd.f32 %v1519, %v1547
        %v1549 = vpop.f32.mrf.mxu0
        %v1550 = vadd.f32 %v1521, %v1549
        %1551 = vmatmul.bf16.gmra.mxu0 %v1501
        %v1552 = vpop.f32.mrf.mxu0
        %v1553 = vadd.f32 %v1524, %v1552
        %v1554 = vpop.f32.mrf.mxu0
        %v1555 = vadd.f32 %v1526, %v1554
        %1556 = vmatmul.bf16.gmra.mxu0 %v1504
        %v1557 = vpop.f32.mrf.mxu0
        %v1558 = vadd.f32 %v1529, %v1557
        %v1559 = vpop.f32.mrf.mxu0
        %v1560 = vadd.f32 %v1531, %v1559
        %1561 = vmatmul.bf16.gmra.mxu0 %v1507
        %v1562 = vpop.f32.mrf.mxu0
        %v1563 = vadd.f32 %v1534, %v1562
        %v1564 = vpop.f32.mrf.mxu0
        %v1565 = vadd.f32 %v1536, %v1564
        %1566 = vdwg.mxu0
        %v1575 = vunpack.c.l.b16 %v1307
        %v1576 = vunpack.c.h.b16 %v1307
        %v1577 = vunpack.c.l.b16 %v1308
        %v1578 = vunpack.c.h.b16 %v1308
        %v1579 = vunpack.c.l.b16 %v1309
        %v1580 = vunpack.c.h.b16 %v1309
        %v1581 = vunpack.c.l.b16 %v1310
        %v1582 = vunpack.c.h.b16 %v1310
        %v1583 = vunpack.c.l.b16 %v1311
        %v1584 = vunpack.c.h.b16 %v1311
        %v1585 = vunpack.c.l.b16 %v1312
        %v1586 = vunpack.c.h.b16 %v1312
        %v1587 = vunpack.c.l.b16 %v1313
        %v1588 = vunpack.c.h.b16 %v1313
        %v1589 = vunpack.c.l.b16 %v1314
        %v1590 = vunpack.c.h.b16 %v1314
        %v1591 = vpack.c.b16 %v1577, %v1575
        %v1592 = vpack.c.b16 %v1578, %v1576
        %v1593 = vpack.c.b16 %v1581, %v1579
        %v1594 = vpack.c.b16 %v1582, %v1580
        %v1595 = vpack.c.b16 %v1585, %v1583
        %v1596 = vpack.c.b16 %v1586, %v1584
        %v1597 = vpack.c.b16 %v1589, %v1587
        %v1598 = vpack.c.b16 %v1590, %v1588
        %v1616 = vsel %vm753, %v1592, 0
        %v1619 = vsel %vm753, %v1594, 0
        %v1622 = vsel %vm753, %v1596, 0
        %v1625 = vsel %vm753, %v1598, 0
        %1627 = vmatpush.bf16.msra.mxu0 %v1456
        %1628 = vmatpush.bf16.msra.mxu0 %v1455
        %1629 = vmatpush.bf16.msra.mxu0 %v1454
        %1630 = vmatpush.bf16.msra.mxu0 %v1453
        %1631 = vmatpush.bf16.msra.mxu0 %v1452
        %1632 = vmatpush.bf16.msra.mxu0 %v1451
        %1633 = vmatpush.bf16.msra.mxu0 %v1450
        %1634 = vmatpush.bf16.msra.mxu0 %v1449
        %1635 = vmatmul.bf16.gmra.mxu0 %v1591
        %v1636 = vpop.f32.mrf.mxu0
        %v1637 = vadd.f32 %v1548, %v1636
        %v1638 = vpop.f32.mrf.mxu0
        %v1639 = vadd.f32 %v1550, %v1638
        %1640 = vmatmul.bf16.gmra.mxu0 %v1593
        %v1641 = vpop.f32.mrf.mxu0
        %v1642 = vadd.f32 %v1553, %v1641
        %v1643 = vpop.f32.mrf.mxu0
        %v1644 = vadd.f32 %v1555, %v1643
        %1645 = vmatmul.bf16.gmra.mxu0 %v1595
        %v1646 = vpop.f32.mrf.mxu0
        %v1647 = vadd.f32 %v1558, %v1646
        %v1648 = vpop.f32.mrf.mxu0
        %v1649 = vadd.f32 %v1560, %v1648
        %1650 = vmatmul.bf16.gmra.mxu0 %v1597
        %v1651 = vpop.f32.mrf.mxu0
        %v1652 = vadd.f32 %v1563, %v1651
        %v1653 = vpop.f32.mrf.mxu0
        %v1654 = vadd.f32 %v1565, %v1653
        %1655 = vdwg.mxu0
        %1656 = vmatpush.bf16.msra.mxu0 0
        %1657 = vmatpush.bf16.msra.mxu0 0
        %1658 = vmatpush.bf16.msra.mxu0 0
        %1659 = vmatpush.bf16.msra.mxu0 0
        %1660 = vmatpush.bf16.msra.mxu0 %v1460
        %1661 = vmatpush.bf16.msra.mxu0 %v1459
        %1662 = vmatpush.bf16.msra.mxu0 %v1458
        %1663 = vmatpush.bf16.msra.mxu0 %v1457
        %1664 = vmatmul.bf16.gmra.mxu0 %v1616
        %v1665 = vpop.f32.mrf.mxu0
        %v1666 = vadd.f32 %v1637, %v1665
        %v1667 = vpop.f32.mrf.mxu0
        %v1668 = vadd.f32 %v1639, %v1667
        %1669 = vmatmul.bf16.gmra.mxu0 %v1619
        %v1670 = vpop.f32.mrf.mxu0
        %v1671 = vadd.f32 %v1642, %v1670
        %v1672 = vpop.f32.mrf.mxu0
        %v1673 = vadd.f32 %v1644, %v1672
        %1674 = vmatmul.bf16.gmra.mxu0 %v1622
        %v1675 = vpop.f32.mrf.mxu0
        %v1676 = vadd.f32 %v1647, %v1675
        %v1677 = vpop.f32.mrf.mxu0
        %v1678 = vadd.f32 %v1649, %v1677
        %1679 = vmatmul.bf16.gmra.mxu0 %v1625
        %v1680 = vpop.f32.mrf.mxu0
        %v1681 = vadd.f32 %v1652, %v1680
        %v1682 = vpop.f32.mrf.mxu0
        %v1683 = vadd.f32 %v1654, %v1682
        %1684 = vdwg.mxu0
        %v1693 = vunpack.c.l.b16 %v1325
        %v1694 = vunpack.c.h.b16 %v1325
        %v1695 = vunpack.c.l.b16 %v1326
        %v1696 = vunpack.c.h.b16 %v1326
        %v1697 = vunpack.c.l.b16 %v1327
        %v1698 = vunpack.c.h.b16 %v1327
        %v1699 = vunpack.c.l.b16 %v1328
        %v1700 = vunpack.c.h.b16 %v1328
        %v1701 = vunpack.c.l.b16 %v1329
        %v1702 = vunpack.c.h.b16 %v1329
        %v1703 = vunpack.c.l.b16 %v1330
        %v1704 = vunpack.c.h.b16 %v1330
        %v1705 = vunpack.c.l.b16 %v1331
        %v1706 = vunpack.c.h.b16 %v1331
        %v1707 = vunpack.c.l.b16 %v1332
        %v1708 = vunpack.c.h.b16 %v1332
        %v1709 = vpack.c.b16 %v1695, %v1693
        %v1710 = vpack.c.b16 %v1696, %v1694
        %v1711 = vpack.c.b16 %v1699, %v1697
        %v1712 = vpack.c.b16 %v1700, %v1698
        %v1713 = vpack.c.b16 %v1703, %v1701
        %v1714 = vpack.c.b16 %v1704, %v1702
        %v1715 = vpack.c.b16 %v1707, %v1705
        %v1716 = vpack.c.b16 %v1708, %v1706
        %1721 = vrot.lane.b32.xlu0 %v1449, 112
        %v1722 = vpop.permute.xlu0 %1721
        %1723 = vrot.lane.b32.xlu0 %v1450, 112
        %v1724 = vpop.permute.xlu0 %1723
        %1725 = vrot.lane.b32.xlu0 %v1451, 112
        %v1726 = vpop.permute.xlu0 %1725
        %1727 = vrot.lane.b32.xlu0 %v1452, 112
        %v1728 = vpop.permute.xlu0 %1727
        %1729 = vrot.lane.b32.xlu0 %v1453, 112
        %v1730 = vpop.permute.xlu0 %1729
        %1731 = vrot.lane.b32.xlu0 %v1454, 112
        %v1732 = vpop.permute.xlu0 %1731
        %1733 = vrot.lane.b32.xlu0 %v1455, 112
        %v1734 = vpop.permute.xlu0 %1733
        %1735 = vrot.lane.b32.xlu0 %v1456, 112
        %v1736 = vpop.permute.xlu0 %1735
        %1737 = vrot.lane.b32.xlu0 %v1457, 112
        %v1738 = vpop.permute.xlu0 %1737
        %1739 = vrot.lane.b32.xlu0 %v1458, 112
        %v1740 = vpop.permute.xlu0 %1739
        %1741 = vrot.lane.b32.xlu0 %v1459, 112
        %v1742 = vpop.permute.xlu0 %1741
        %1743 = vrot.lane.b32.xlu0 %v1460, 112
        %v1744 = vpop.permute.xlu0 %1743
        %v1758 = vsel %vm753, %v1710, 0
        %v1761 = vsel %vm753, %v1712, 0
        %v1764 = vsel %vm753, %v1714, 0
        %v1767 = vsel %vm753, %v1716, 0
        %1769 = vmatpush.bf16.msra.mxu0 %v1736
        %1770 = vmatpush.bf16.msra.mxu0 %v1734
        %1771 = vmatpush.bf16.msra.mxu0 %v1732
        %1772 = vmatpush.bf16.msra.mxu0 %v1730
        %1773 = vmatpush.bf16.msra.mxu0 %v1728
        %1774 = vmatpush.bf16.msra.mxu0 %v1726
        %1775 = vmatpush.bf16.msra.mxu0 %v1724
        %1776 = vmatpush.bf16.msra.mxu0 %v1722
        %1777 = vmatmul.bf16.gmra.mxu0 %v1709
        %v1778 = vpop.f32.mrf.mxu0
        %v1779 = vadd.f32 0.0, %v1778
        %v1780 = vpop.f32.mrf.mxu0
        %v1781 = vadd.f32 0.0, %v1780
        %1782 = vmatmul.bf16.gmra.mxu0 %v1711
        %v1783 = vpop.f32.mrf.mxu0
        %v1784 = vadd.f32 0.0, %v1783
        %v1785 = vpop.f32.mrf.mxu0
        %v1786 = vadd.f32 0.0, %v1785
        %1787 = vmatmul.bf16.gmra.mxu0 %v1713
        %v1788 = vpop.f32.mrf.mxu0
        %v1789 = vadd.f32 0.0, %v1788
        %v1790 = vpop.f32.mrf.mxu0
        %v1791 = vadd.f32 0.0, %v1790
        %1792 = vmatmul.bf16.gmra.mxu0 %v1715
        %v1793 = vpop.f32.mrf.mxu0
        %v1794 = vadd.f32 0.0, %v1793
        %v1795 = vpop.f32.mrf.mxu0
        %v1796 = vadd.f32 0.0, %v1795
        %1797 = vdwg.mxu0
        %1798 = vmatpush.bf16.msra.mxu0 0
        %1799 = vmatpush.bf16.msra.mxu0 0
        %1800 = vmatpush.bf16.msra.mxu0 0
        %1801 = vmatpush.bf16.msra.mxu0 0
        %1802 = vmatpush.bf16.msra.mxu0 %v1744
        %1803 = vmatpush.bf16.msra.mxu0 %v1742
        %1804 = vmatpush.bf16.msra.mxu0 %v1740
        %1805 = vmatpush.bf16.msra.mxu0 %v1738
        %1806 = vmatmul.bf16.gmra.mxu0 %v1758
        %v1807 = vpop.f32.mrf.mxu0
        %v1808 = vadd.f32 %v1779, %v1807
        %v1809 = vpop.f32.mrf.mxu0
        %v1810 = vadd.f32 %v1781, %v1809
        %1811 = vmatmul.bf16.gmra.mxu0 %v1761
        %v1812 = vpop.f32.mrf.mxu0
        %v1813 = vadd.f32 %v1784, %v1812
        %v1814 = vpop.f32.mrf.mxu0
        %v1815 = vadd.f32 %v1786, %v1814
        %1816 = vmatmul.bf16.gmra.mxu0 %v1764
        %v1817 = vpop.f32.mrf.mxu0
        %v1818 = vadd.f32 %v1789, %v1817
        %v1819 = vpop.f32.mrf.mxu0
        %v1820 = vadd.f32 %v1791, %v1819
        %1821 = vmatmul.bf16.gmra.mxu0 %v1767
        %v1822 = vpop.f32.mrf.mxu0
        %v1823 = vadd.f32 %v1794, %v1822
        %v1824 = vpop.f32.mrf.mxu0
        %v1825 = vadd.f32 %v1796, %v1824
        %1826 = vdwg.mxu0
        %v1827 = vadd.f32 %v1666, %v1808
        %v1828 = vadd.f32 %v1668, %v1810
        %v1829 = vadd.f32 %v1671, %v1813
        %v1830 = vadd.f32 %v1673, %v1815
        %v1831 = vadd.f32 %v1676, %v1818
        %v1832 = vadd.f32 %v1678, %v1820
        %v1833 = vadd.f32 %v1681, %v1823
        %v1834 = vadd.f32 %v1683, %v1825
        %1836 = vset.pattern.permute.xlu0 0
        %1837 = vperm.xlu0 %1836, %v1333
        %v1838 = vpop.permute.xlu0 %1837
        %1841 = vset.pattern.permute.xlu0 0
        %1842 = vperm.xlu0 %1841, %v1334
        %v1843 = vpop.permute.xlu0 %1842
        %1846 = vset.pattern.permute.xlu0 0
        %1847 = vperm.xlu0 %1846, %v1335
        %v1848 = vpop.permute.xlu0 %1847
        %1851 = vset.pattern.permute.xlu0 0
        %1852 = vperm.xlu0 %1851, %v1336
        %v1853 = vpop.permute.xlu0 %1852
        %1856 = vset.pattern.permute.xlu0 0
        %1857 = vperm.xlu0 %1856, %v1337
        %v1858 = vpop.permute.xlu0 %1857
        %1861 = vset.pattern.permute.xlu0 0
        %1862 = vperm.xlu0 %1861, %v1338
        %v1863 = vpop.permute.xlu0 %1862
        %1866 = vset.pattern.permute.xlu0 0
        %1867 = vperm.xlu0 %1866, %v1339
        %v1868 = vpop.permute.xlu0 %1867
        %1871 = vset.pattern.permute.xlu0 0
        %1872 = vperm.xlu0 %1871, %v1340
        %v1873 = vpop.permute.xlu0 %1872
        %v1875 = vadd.f32 %v1827, %v1838
        %v1876 = vadd.f32 %v1828, %v1843
        %v1877 = vadd.f32 %v1829, %v1848
        %v1878 = vadd.f32 %v1830, %v1853
        %v1879 = vadd.f32 %v1831, %v1858
        %v1880 = vadd.f32 %v1832, %v1863
        %v1881 = vadd.f32 %v1833, %v1868
        %v1882 = vadd.f32 %v1834, %v1873
        %vm1883 = vcmp.ge.f32.partialorder %v1875, 0.0
        %vm1884 = vcmp.ge.f32.partialorder %v1876, 0.0
        %vm1885 = vcmp.ge.f32.partialorder %v1877, 0.0
        %vm1886 = vcmp.ge.f32.partialorder %v1878, 0.0
        %vm1887 = vcmp.ge.f32.partialorder %v1879, 0.0
        %vm1888 = vcmp.ge.f32.partialorder %v1880, 0.0
        %vm1889 = vcmp.ge.f32.partialorder %v1881, 0.0
        %vm1890 = vcmp.ge.f32.partialorder %v1882, 0.0
        %v1891 = vmul.f32 %v1875, 0.1
        %v1892 = vmul.f32 %v1876, 0.1
        %v1893 = vmul.f32 %v1877, 0.1
        %v1894 = vmul.f32 %v1878, 0.1
        %v1895 = vmul.f32 %v1879, 0.1
        %v1896 = vmul.f32 %v1880, 0.1
        %v1897 = vmul.f32 %v1881, 0.1
        %v1898 = vmul.f32 %v1882, 0.1
        %v1899 = vsel %vm1883, %v1875, %v1891
        %v1900 = vsel %vm1884, %v1876, %v1892
        %v1901 = vsel %vm1885, %v1877, %v1893
        %v1902 = vsel %vm1886, %v1878, %v1894
        %v1903 = vsel %vm1887, %v1879, %v1895
        %v1904 = vsel %vm1888, %v1880, %v1896
        %v1905 = vsel %vm1889, %v1881, %v1897
        %v1906 = vsel %vm1890, %v1882, %v1898
        %1907 = vst.msk [vmem:[%s616] sm:$0xff] %vm753, %v1899
        %1908 = vst.msk [vmem:[%s616 + $0x8] sm:$0xff] %vm753, %v1900
        %1909 = vst.msk [vmem:[%s616 + $0x10] sm:$0xff] %vm753, %v1901
        %1910 = vst.msk [vmem:[%s616 + $0x18] sm:$0xff] %vm753, %v1902
        %1911 = vst.msk [vmem:[%s616 + $0x20] sm:$0xff] %vm753, %v1903
        %1912 = vst.msk [vmem:[%s616 + $0x28] sm:$0xff] %vm753, %v1904
        %1913 = vst.msk [vmem:[%s616 + $0x30] sm:$0xff] %vm753, %v1905
        %1914 = vst.msk [vmem:[%s616 + $0x38] sm:$0xff] %vm753, %v1906
        %v1915 = vpack.c.bf16 %v1899, %v1899
        %v1916 = vpack.c.bf16 %v1900, %v1900
        %v1917 = vpack.c.bf16 %v1901, %v1901
        %v1918 = vpack.c.bf16 %v1902, %v1902
        %v1919 = vpack.c.bf16 %v1903, %v1903
        %v1920 = vpack.c.bf16 %v1904, %v1904
        %v1921 = vpack.c.bf16 %v1905, %v1905
        %v1922 = vpack.c.bf16 %v1906, %v1906
        %vm1923 = vcmask 519168
        %1924 = vst.msk [vmem:[#allocation4] sm:$0xf] %vm1923, %v1915
        %1925 = vst.msk [vmem:[#allocation4 + $0x4] sm:$0xf] %vm1923, %v1916
        %1926 = vst.msk [vmem:[#allocation4 + $0x8] sm:$0xf] %vm1923, %v1917
        %1927 = vst.msk [vmem:[#allocation4 + $0xc] sm:$0xf] %vm1923, %v1918
        %1928 = vst.msk [vmem:[#allocation4 + $0x10] sm:$0xf] %vm1923, %v1919
        %1929 = vst.msk [vmem:[#allocation4 + $0x14] sm:$0xf] %vm1923, %v1920
        %1930 = vst.msk [vmem:[#allocation4 + $0x18] sm:$0xf] %vm1923, %v1921
        %1931 = vst.msk [vmem:[#allocation4 + $0x1c] sm:$0xf] %vm1923, %v1922
        %vm1932 = vcmask 134144
        %1933 = vst.msk [vmem:[#allocation2] sm:$0xf] %vm1932, 0
        %1934 = vst.msk [vmem:[#allocation2 + $0xc] sm:$0xf] %vm1932, 0
        %1935 = vst.msk [vmem:[#allocation2 + $0x18] sm:$0xf] %vm1932, 0
        %1936 = vst.msk [vmem:[#allocation2 + $0x24] sm:$0xf] %vm1932, 0
        %1937 = vst.msk [vmem:[#allocation2 + $0x30] sm:$0xf] %vm1932, 0
        %1938 = vst.msk [vmem:[#allocation2 + $0x3c] sm:$0xf] %vm1932, 0
        %1939 = vst.msk [vmem:[#allocation2 + $0x48] sm:$0xf] %vm1932, 0
        %1940 = vst.msk [vmem:[#allocation2 + $0x54] sm:$0xf] %vm1932, 0
        %1941 = vst.msk [vmem:[#allocation2 + $0x60] sm:$0xf] %vm1932, 0
        %1942 = vst.msk [vmem:[#allocation2 + $0x6c] sm:$0xf] %vm1932, 0
        %1943 = vst.msk [vmem:[#allocation2 + $0x78] sm:$0xf] %vm1932, 0
        %1944 = vst.msk [vmem:[#allocation2 + $0x84] sm:$0xf] %vm1932, 0
        %1945 = vst.msk [vmem:[#allocation2 + $0x90] sm:$0xf] %vm1932, 0
        %1946 = vst.msk [vmem:[#allocation2 + $0x9c] sm:$0xf] %vm1932, 0
        %1947 = vst.msk [vmem:[#allocation2 + $0xa8] sm:$0xf] %vm1932, 0
        %1948 = vst.msk [vmem:[#allocation2 + $0xb4] sm:$0xf] %vm1932, 0
        %1949 = vst.msk [vmem:[#allocation2 + $0xc0] sm:$0xf] %vm1932, 0
        %1950 = vst.msk [vmem:[#allocation2 + $0xcc] sm:$0xf] %vm1932, 0
        %1951 = vst.msk [vmem:[#allocation2 + $0xd8] sm:$0xf] %vm1932, 0
        %1952 = vst.msk [vmem:[#allocation2 + $0xe4] sm:$0xf] %vm1932, 0
        %1953 = vst.msk [vmem:[#allocation2 + $0xf0] sm:$0xf] %vm1932, 0
        %1954 = vst.msk [vmem:[#allocation2 + $0xfc] sm:$0xf] %vm1932, 0
        %1955 = vst.msk [vmem:[#allocation2 + $0x108] sm:$0xf] %vm1932, 0
        %1956 = vst.msk [vmem:[#allocation2 + $0x114] sm:$0xf] %vm1932, 0
        %vm1957 = vcmask 257144
        %1958 = vst.msk [vmem:[#allocation2 + $0x8] sm:$0xf] %vm1957, 0
        %1959 = vst.msk [vmem:[#allocation2 + $0x14] sm:$0xf] %vm1957, 0
        %1960 = vst.msk [vmem:[#allocation2 + $0x20] sm:$0xf] %vm1957, 0
        %1961 = vst.msk [vmem:[#allocation2 + $0x2c] sm:$0xf] %vm1957, 0
        %1962 = vst.msk [vmem:[#allocation2 + $0x38] sm:$0xf] %vm1957, 0
        %1963 = vst.msk [vmem:[#allocation2 + $0x44] sm:$0xf] %vm1957, 0
        %1964 = vst.msk [vmem:[#allocation2 + $0x50] sm:$0xf] %vm1957, 0
        %1965 = vst.msk [vmem:[#allocation2 + $0x5c] sm:$0xf] %vm1957, 0
        %1966 = vst.msk [vmem:[#allocation2 + $0x68] sm:$0xf] %vm1957, 0
        %1967 = vst.msk [vmem:[#allocation2 + $0x74] sm:$0xf] %vm1957, 0
        %1968 = vst.msk [vmem:[#allocation2 + $0x80] sm:$0xf] %vm1957, 0
        %1969 = vst.msk [vmem:[#allocation2 + $0x8c] sm:$0xf] %vm1957, 0
        %1970 = vst.msk [vmem:[#allocation2 + $0x98] sm:$0xf] %vm1957, 0
        %1971 = vst.msk [vmem:[#allocation2 + $0xa4] sm:$0xf] %vm1957, 0
        %1972 = vst.msk [vmem:[#allocation2 + $0xb0] sm:$0xf] %vm1957, 0
        %1973 = vst.msk [vmem:[#allocation2 + $0xbc] sm:$0xf] %vm1957, 0
        %1974 = vst.msk [vmem:[#allocation2 + $0xc8] sm:$0xf] %vm1957, 0
        %1975 = vst.msk [vmem:[#allocation2 + $0xd4] sm:$0xf] %vm1957, 0
        %1976 = vst.msk [vmem:[#allocation2 + $0xe0] sm:$0xf] %vm1957, 0
        %1977 = vst.msk [vmem:[#allocation2 + $0xec] sm:$0xf] %vm1957, 0
        %1978 = vst.msk [vmem:[#allocation2 + $0xf8] sm:$0xf] %vm1957, 0
        %1979 = vst.msk [vmem:[#allocation2 + $0x104] sm:$0xf] %vm1957, 0
        %1980 = vst.msk [vmem:[#allocation2 + $0x110] sm:$0xf] %vm1957, 0
        %1981 = vst.msk [vmem:[#allocation2 + $0x11c] sm:$0xf] %vm1957, 0
        %v1982 = vld [vmem:[%s3] sm:$0xf]
        %v1983 = vld [vmem:[%s3 + $0x4] sm:$0xf]
        %v1984 = vld [vmem:[%s3 + $0x8] sm:$0xf]
        %v1985 = vld [vmem:[%s3 + $0xc] sm:$0xf]
        %v1986 = vld [vmem:[%s3 + $0x10] sm:$0xf]
        %v1987 = vld [vmem:[%s3 + $0x14] sm:$0xf]
        %v1988 = vld [vmem:[%s3 + $0x18] sm:$0xf]
        %v1989 = vld [vmem:[%s3 + $0x1c] sm:$0xf]
        %v1990 = vld [vmem:[%s4] sm:$0xff]
        %v1991 = vld [vmem:[%s4 + $0x8] sm:$0xff]
        %v1992 = vld [vmem:[%s4 + $0x10] sm:$0xff]
        %v1993 = vld [vmem:[%s4 + $0x18] sm:$0xff]
        %v1994 = vld [vmem:[%s4 + $0x20] sm:$0xff]
        %v1995 = vld [vmem:[%s4 + $0x28] sm:$0xff]
        %v1996 = vld [vmem:[%s4 + $0x30] sm:$0xff]
        %v1997 = vld [vmem:[%s4 + $0x38] sm:$0xff]
        %v1998 = vld [vmem:[%s14] sm:$0xf]
        %v1999 = vld [vmem:[%s14 + $0x4] sm:$0xf]
        %v2000 = vld [vmem:[%s14 + $0x8] sm:$0xf]
        %v2001 = vld [vmem:[%s14 + $0xc] sm:$0xf]
        %vm2002 = vcmp.lt.s32.totalorder %v914, 0
        %v2003 = vsub.s32 0, %v914
        %v2004 = vsel %vm2002, %v2003, %v914
        %v2005 = vshrl.u32 %v2004, 4
        %v2006 = vand.u32 %v2004, 15
        %v2007 = vsub.s32 0, %v2006
        %v2008 = vsel %vm2002, %v2007, %v2006
        %vm2009 = vcmp.ne.s32.totalorder %v2008, 0
        %vm2010 = vcmp.lt.s32.totalorder %v2008, 0
        %vm2011 = vmand %vm2010, %vm2009
        %v2012 = vadd.s32 %v2008, 16
        %v2013 = vsel %vm2011, %v2012, %v2008
        %v2014 = vld [vmem:[%s628] sm:$0xf]
        %v2015 = vld [vmem:[%s628 + $0x8] sm:$0xf]
        %2017 = vset.pattern.permute.xlu0 0
        %2018 = vperm.xlu0 %2017, %v1990
        %v2019 = vpop.permute.xlu0 %2018
        %2022 = vset.pattern.permute.xlu0 0
        %2023 = vperm.xlu0 %2022, %v1991
        %v2024 = vpop.permute.xlu0 %2023
        %2027 = vset.pattern.permute.xlu0 0
        %2028 = vperm.xlu0 %2027, %v1992
        %v2029 = vpop.permute.xlu0 %2028
        %2032 = vset.pattern.permute.xlu0 0
        %2033 = vperm.xlu0 %2032, %v1993
        %v2034 = vpop.permute.xlu0 %2033
        %2037 = vset.pattern.permute.xlu0 0
        %2038 = vperm.xlu0 %2037, %v1994
        %v2039 = vpop.permute.xlu0 %2038
        %2042 = vset.pattern.permute.xlu0 0
        %2043 = vperm.xlu0 %2042, %v1995
        %v2044 = vpop.permute.xlu0 %2043
        %2047 = vset.pattern.permute.xlu0 0
        %2048 = vperm.xlu0 %2047, %v1996
        %v2049 = vpop.permute.xlu0 %2048
        %2052 = vset.pattern.permute.xlu0 0
        %2053 = vperm.xlu0 %2052, %v1997
        %v2054 = vpop.permute.xlu0 %2053
        %v2064 = vunpack.c.l.b16 %v1982
        %v2065 = vunpack.c.l.b16 %v1983
        %v2066 = vunpack.c.l.b16 %v1984
        %v2067 = vunpack.c.l.b16 %v1985
        %v2068 = vunpack.c.l.b16 %v1986
        %v2069 = vunpack.c.l.b16 %v1987
        %v2070 = vunpack.c.l.b16 %v1988
        %v2071 = vunpack.c.l.b16 %v1989
        %v2072 = vpack.c.b16 %v2065, %v2064
        %v2073 = vpack.c.b16 %v2067, %v2066
        %v2074 = vpack.c.b16 %v2069, %v2068
        %v2075 = vpack.c.b16 %v2071, %v2070
        %v2078 = vunpack.c.l.b16 %v2014
        %v2079 = vunpack.c.l.b16 %v2015
        %v2080 = vpack.c.b16 %v2079, %v2078
        %v2083 = vsel %vm819, %v2072, 0
        %v2086 = vsel %vm819, %v2073, 0
        %v2089 = vsel %vm819, %v2074, 0
        %v2092 = vsel %vm819, %v2075, 0
        %2094 = vmatpush.bf16.msra.mxu0 0
        %2095 = vmatpush.bf16.msra.mxu0 0
        %2096 = vmatpush.bf16.msra.mxu0 0
        %2097 = vmatpush.bf16.msra.mxu0 0
        %2098 = vmatpush.bf16.msra.mxu0 0
        %2099 = vmatpush.bf16.msra.mxu0 0
        %2100 = vmatpush.bf16.msra.mxu0 0
        %2101 = vmatpush.bf16.msra.mxu0 %v2080
        %2102 = vmatmul.bf16.gmra.mxu0 %v2083
        %v2103 = vpop.f32.mrf.mxu0
        %v2104 = vadd.f32 %v2019, %v2103
        %v2105 = vpop.f32.mrf.mxu0
        %v2106 = vadd.f32 %v2024, %v2105
        %2107 = vmatmul.bf16.gmra.mxu0 %v2086
        %v2108 = vpop.f32.mrf.mxu0
        %v2109 = vadd.f32 %v2029, %v2108
        %v2110 = vpop.f32.mrf.mxu0
        %v2111 = vadd.f32 %v2034, %v2110
        %2112 = vmatmul.bf16.gmra.mxu0 %v2089
        %v2113 = vpop.f32.mrf.mxu0
        %v2114 = vadd.f32 %v2039, %v2113
        %v2115 = vpop.f32.mrf.mxu0
        %v2116 = vadd.f32 %v2044, %v2115
        %2117 = vmatmul.bf16.gmra.mxu0 %v2092
        %v2118 = vpop.f32.mrf.mxu0
        %v2119 = vadd.f32 %v2049, %v2118
        %v2120 = vpop.f32.mrf.mxu0
        %v2121 = vadd.f32 %v2054, %v2120
        %2122 = vdwg.mxu0
        %vm2123 = vcmp.ge.f32.partialorder %v2104, 0.0
        %vm2124 = vcmp.ge.f32.partialorder %v2106, 0.0
        %vm2125 = vcmp.ge.f32.partialorder %v2109, 0.0
        %vm2126 = vcmp.ge.f32.partialorder %v2111, 0.0
        %vm2127 = vcmp.ge.f32.partialorder %v2114, 0.0
        %vm2128 = vcmp.ge.f32.partialorder %v2116, 0.0
        %vm2129 = vcmp.ge.f32.partialorder %v2119, 0.0
        %vm2130 = vcmp.ge.f32.partialorder %v2121, 0.0
        %v2131 = vmul.f32 %v2104, 0.1
        %v2132 = vmul.f32 %v2106, 0.1
        %v2133 = vmul.f32 %v2109, 0.1
        %v2134 = vmul.f32 %v2111, 0.1
        %v2135 = vmul.f32 %v2114, 0.1
        %v2136 = vmul.f32 %v2116, 0.1
        %v2137 = vmul.f32 %v2119, 0.1
        %v2138 = vmul.f32 %v2121, 0.1
        %v2139 = vsel %vm2123, %v2104, %v2131
        %v2140 = vsel %vm2124, %v2106, %v2132
        %v2141 = vsel %vm2125, %v2109, %v2133
        %v2142 = vsel %vm2126, %v2111, %v2134
        %v2143 = vsel %vm2127, %v2114, %v2135
        %v2144 = vsel %vm2128, %v2116, %v2136
        %v2145 = vsel %vm2129, %v2119, %v2137
        %v2146 = vsel %vm2130, %v2121, %v2138
        %v2147 = vld [vmem:[#allocation4] sm:$0xf]
        %v2148 = vld [vmem:[#allocation4 + $0x4] sm:$0xf]
        %v2149 = vld [vmem:[#allocation4 + $0x8] sm:$0xf]
        %v2150 = vld [vmem:[#allocation4 + $0xc] sm:$0xf]
        %v2151 = vld [vmem:[#allocation4 + $0x10] sm:$0xf]
        %v2152 = vld [vmem:[#allocation4 + $0x14] sm:$0xf]
        %v2153 = vld [vmem:[#allocation4 + $0x18] sm:$0xf]
        %v2154 = vld [vmem:[#allocation4 + $0x1c] sm:$0xf]
        %v2163 = vunpack.c.l.b16 %v2147
        %v2164 = vunpack.c.l.b16 %v2148
        %v2165 = vunpack.c.l.b16 %v2149
        %v2166 = vunpack.c.l.b16 %v2150
        %v2167 = vunpack.c.l.b16 %v2151
        %v2168 = vunpack.c.l.b16 %v2152
        %v2169 = vunpack.c.l.b16 %v2153
        %v2170 = vunpack.c.l.b16 %v2154
        %v2171 = vpack.c.b16 %v2164, %v2163
        %v2172 = vpack.c.b16 %v2166, %v2165
        %v2173 = vpack.c.b16 %v2168, %v2167
        %v2174 = vpack.c.b16 %v2170, %v2169
        %v2179 = vunpack.c.l.b16 %v1998
        %v2180 = vunpack.c.l.b16 %v1999
        %v2181 = vunpack.c.l.b16 %v2000
        %v2182 = vunpack.c.l.b16 %v2001
        %v2183 = vpack.c.b16 %v2180, %v2179
        %v2184 = vpack.c.b16 %v2182, %v2181
        %v2188 = vsel %vm1003, %v2171, 0
        %v2191 = vsel %vm1003, %v2172, 0
        %v2194 = vsel %vm1003, %v2173, 0
        %v2197 = vsel %vm1003, %v2174, 0
        %2199 = vmatpush.bf16.msra.mxu0 0
        %2200 = vmatpush.bf16.msra.mxu0 0
        %2201 = vmatpush.bf16.msra.mxu0 0
        %2202 = vmatpush.bf16.msra.mxu0 0
        %2203 = vmatpush.bf16.msra.mxu0 0
        %2204 = vmatpush.bf16.msra.mxu0 0
        %2205 = vmatpush.bf16.msra.mxu0 %v2184
        %2206 = vmatpush.bf16.msra.mxu0 %v2183
        %2207 = vmatmul.bf16.gmra.mxu0 %v2188
        %v2208 = vpop.f32.mrf.mxu0
        %v2209 = vadd.f32 0.0, %v2208
        %v2210 = vpop.f32.mrf.mxu0
        %v2211 = vadd.f32 0.0, %v2210
        %2212 = vmatmul.bf16.gmra.mxu0 %v2191
        %v2213 = vpop.f32.mrf.mxu0
        %v2214 = vadd.f32 0.0, %v2213
        %v2215 = vpop.f32.mrf.mxu0
        %v2216 = vadd.f32 0.0, %v2215
        %2217 = vmatmul.bf16.gmra.mxu0 %v2194
        %v2218 = vpop.f32.mrf.mxu0
        %v2219 = vadd.f32 0.0, %v2218
        %v2220 = vpop.f32.mrf.mxu0
        %v2221 = vadd.f32 0.0, %v2220
        %2222 = vmatmul.bf16.gmra.mxu0 %v2197
        %v2223 = vpop.f32.mrf.mxu0
        %v2224 = vadd.f32 0.0, %v2223
        %v2225 = vpop.f32.mrf.mxu0
        %v2226 = vadd.f32 0.0, %v2225
        %2227 = vdwg.mxu0
        %v2228 = vadd.f32 %v2139, %v2209
        %v2229 = vadd.f32 %v2140, %v2211
        %v2230 = vadd.f32 %v2141, %v2214
        %v2231 = vadd.f32 %v2142, %v2216
        %v2232 = vadd.f32 %v2143, %v2219
        %v2233 = vadd.f32 %v2144, %v2221
        %v2234 = vadd.f32 %v2145, %v2224
        %v2235 = vadd.f32 %v2146, %v2226
        %v2236 = vpack.c.bf16 %v2228, %v2228
        %v2237 = vpack.c.bf16 %v2229, %v2229
        %v2238 = vpack.c.bf16 %v2230, %v2230
        %v2239 = vpack.c.bf16 %v2231, %v2231
        %v2240 = vpack.c.bf16 %v2232, %v2232
        %v2241 = vpack.c.bf16 %v2233, %v2233
        %v2242 = vpack.c.bf16 %v2234, %v2234
        %v2243 = vpack.c.bf16 %v2235, %v2235
        %2252 = vrot.lane.b32.xlu0 %v2236, 16
        %v2253 = vpop.permute.xlu0 %2252
        %2254 = vrot.lane.b32.xlu0 %v2237, 16
        %v2255 = vpop.permute.xlu0 %2254
        %2256 = vrot.lane.b32.xlu0 %v2238, 16
        %v2257 = vpop.permute.xlu0 %2256
        %2258 = vrot.lane.b32.xlu0 %v2239, 16
        %v2259 = vpop.permute.xlu0 %2258
        %2260 = vrot.lane.b32.xlu0 %v2240, 16
        %v2261 = vpop.permute.xlu0 %2260
        %2262 = vrot.lane.b32.xlu0 %v2241, 16
        %v2263 = vpop.permute.xlu0 %2262
        %2264 = vrot.lane.b32.xlu0 %v2242, 16
        %v2265 = vpop.permute.xlu0 %2264
        %2266 = vrot.lane.b32.xlu0 %v2243, 16
        %v2267 = vpop.permute.xlu0 %2266
        %v2268 = vrot.slane %v2253, 4
        %v2269 = vrot.slane %v2255, 4
        %v2270 = vrot.slane %v2257, 4
        %v2271 = vrot.slane %v2259, 4
        %v2272 = vrot.slane %v2261, 4
        %v2273 = vrot.slane %v2263, 4
        %v2274 = vrot.slane %v2265, 4
        %v2275 = vrot.slane %v2267, 4
        %vm2276 = vcmask 130048
        %v2277 = vsel %vm2276, %v2268, %v2253
        %v2278 = vsel %vm2276, %v2269, %v2255
        %v2279 = vsel %vm2276, %v2270, %v2257
        %v2280 = vsel %vm2276, %v2271, %v2259
        %v2281 = vsel %vm2276, %v2272, %v2261
        %v2282 = vsel %vm2276, %v2273, %v2263
        %v2283 = vsel %vm2276, %v2274, %v2265
        %v2284 = vsel %vm2276, %v2275, %v2267
        %vm2293 = vcmask 1043584
        %vm2294 = vcmask 130052
        %vm2295 = vmor %vm2294, %vm2293
        %2296 = vst.msk [vmem:[#allocation2 + $0x60] sm:$0xff] %vm2295, %v2277
        %2297 = vst.msk [vmem:[#allocation2 + $0x6c] sm:$0xff] %vm2295, %v2278
        %2298 = vst.msk [vmem:[#allocation2 + $0x78] sm:$0xff] %vm2295, %v2279
        %2299 = vst.msk [vmem:[#allocation2 + $0x84] sm:$0xff] %vm2295, %v2280
        %2300 = vst.msk [vmem:[#allocation2 + $0x90] sm:$0xff] %vm2295, %v2281
        %2301 = vst.msk [vmem:[#allocation2 + $0x9c] sm:$0xff] %vm2295, %v2282
        %2302 = vst.msk [vmem:[#allocation2 + $0xa8] sm:$0xff] %vm2295, %v2283
        %2303 = vst.msk [vmem:[#allocation2 + $0xb4] sm:$0xff] %vm2295, %v2284
        %vm2304 = vcmp.eq.s32.totalorder %v2013, 15
        %v2305 = vsel %vm2304, 1, 0
        %vm2306 = vcmp.eq.s32.totalorder %v2305, 1
        %vm2307 = vmpackc.low %vm2306, %vm2306
        %v2308 = vsel %vm2307, 0, %v2236
        %v2309 = vsel %vm2307, 0, %v2237
        %v2310 = vsel %vm2307, 0, %v2238
        %v2311 = vsel %vm2307, 0, %v2239
        %v2312 = vsel %vm2307, 0, %v2240
        %v2313 = vsel %vm2307, 0, %v2241
        %v2314 = vsel %vm2307, 0, %v2242
        %v2315 = vsel %vm2307, 0, %v2243
        %2324 = vrot.lane.b32.xlu0 %v2308, 17
        %v2325 = vpop.permute.xlu0 %2324
        %2326 = vrot.lane.b32.xlu0 %v2309, 17
        %v2327 = vpop.permute.xlu0 %2326
        %2328 = vrot.lane.b32.xlu0 %v2310, 17
        %v2329 = vpop.permute.xlu0 %2328
        %2330 = vrot.lane.b32.xlu0 %v2311, 17
        %v2331 = vpop.permute.xlu0 %2330
        %2332 = vrot.lane.b32.xlu0 %v2312, 17
        %v2333 = vpop.permute.xlu0 %2332
        %2334 = vrot.lane.b32.xlu0 %v2313, 17
        %v2335 = vpop.permute.xlu0 %2334
        %2336 = vrot.lane.b32.xlu0 %v2314, 17
        %v2337 = vpop.permute.xlu0 %2336
        %2338 = vrot.lane.b32.xlu0 %v2315, 17
        %v2339 = vpop.permute.xlu0 %2338
        %v2340 = vrot.slane %v2325, 4
        %v2341 = vrot.slane %v2327, 4
        %v2342 = vrot.slane %v2329, 4
        %v2343 = vrot.slane %v2331, 4
        %v2344 = vrot.slane %v2333, 4
        %v2345 = vrot.slane %v2335, 4
        %v2346 = vrot.slane %v2337, 4
        %v2347 = vrot.slane %v2339, 4
        %vm2348 = vcmask 138240
        %v2349 = vsel %vm2348, %v2340, %v2325
        %v2350 = vsel %vm2348, %v2341, %v2327
        %v2351 = vsel %vm2348, %v2342, %v2329
        %v2352 = vsel %vm2348, %v2343, %v2331
        %v2353 = vsel %vm2348, %v2344, %v2333
        %v2354 = vsel %vm2348, %v2345, %v2335
        %v2355 = vsel %vm2348, %v2346, %v2337
        %v2356 = vsel %vm2348, %v2347, %v2339
        %vm2365 = vcmask 1043592
        %vm2366 = vcmask 138244
        %vm2367 = vmor %vm2366, %vm2365
        %2368 = vst.msk [vmem:[#allocation2] sm:$0xff] %vm2367, %v2349
        %2369 = vst.msk [vmem:[#allocation2 + $0xc] sm:$0xff] %vm2367, %v2350
        %2370 = vst.msk [vmem:[#allocation2 + $0x18] sm:$0xff] %vm2367, %v2351
        %2371 = vst.msk [vmem:[#allocation2 + $0x24] sm:$0xff] %vm2367, %v2352
        %2372 = vst.msk [vmem:[#allocation2 + $0x30] sm:$0xff] %vm2367, %v2353
        %2373 = vst.msk [vmem:[#allocation2 + $0x3c] sm:$0xff] %vm2367, %v2354
        %2374 = vst.msk [vmem:[#allocation2 + $0x48] sm:$0xff] %vm2367, %v2355
        %2375 = vst.msk [vmem:[#allocation2 + $0x54] sm:$0xff] %vm2367, %v2356
        %vm2376 = vcmp.eq.s32.totalorder %v2013, 0
        %v2377 = vsel %vm2376, 1, 0
        %vm2378 = vcmp.eq.s32.totalorder %v2377, 1
        %vm2379 = vmpackc.low %vm2378, %vm2378
        %v2380 = vsel %vm2379, 0, %v2236
        %v2381 = vsel %vm2379, 0, %v2237
        %v2382 = vsel %vm2379, 0, %v2238
        %v2383 = vsel %vm2379, 0, %v2239
        %v2384 = vsel %vm2379, 0, %v2240
        %v2385 = vsel %vm2379, 0, %v2241
        %v2386 = vsel %vm2379, 0, %v2242
        %v2387 = vsel %vm2379, 0, %v2243
        %2396 = vrot.lane.b32.xlu0 %v2380, 15
        %v2397 = vpop.permute.xlu0 %2396
        %2398 = vrot.lane.b32.xlu0 %v2381, 15
        %v2399 = vpop.permute.xlu0 %2398
        %2400 = vrot.lane.b32.xlu0 %v2382, 15
        %v2401 = vpop.permute.xlu0 %2400
        %2402 = vrot.lane.b32.xlu0 %v2383, 15
        %v2403 = vpop.permute.xlu0 %2402
        %2404 = vrot.lane.b32.xlu0 %v2384, 15
        %v2405 = vpop.permute.xlu0 %2404
        %2406 = vrot.lane.b32.xlu0 %v2385, 15
        %v2407 = vpop.permute.xlu0 %2406
        %2408 = vrot.lane.b32.xlu0 %v2386, 15
        %v2409 = vpop.permute.xlu0 %2408
        %2410 = vrot.lane.b32.xlu0 %v2387, 15
        %v2411 = vpop.permute.xlu0 %2410
        %v2412 = vrot.slane %v2397, 4
        %v2413 = vrot.slane %v2399, 4
        %v2414 = vrot.slane %v2401, 4
        %v2415 = vrot.slane %v2403, 4
        %v2416 = vrot.slane %v2405, 4
        %v2417 = vrot.slane %v2407, 4
        %v2418 = vrot.slane %v2409, 4
        %v2419 = vrot.slane %v2411, 4
        %vm2420 = vcmask 121856
        %v2421 = vsel %vm2420, %v2412, %v2397
        %v2422 = vsel %vm2420, %v2413, %v2399
        %v2423 = vsel %vm2420, %v2414, %v2401
        %v2424 = vsel %vm2420, %v2415, %v2403
        %v2425 = vsel %vm2420, %v2416, %v2405
        %v2426 = vsel %vm2420, %v2417, %v2407
        %v2427 = vsel %vm2420, %v2418, %v2409
        %v2428 = vsel %vm2420, %v2419, %v2411
        %vm2437 = vcmask 1043576
        %vm2438 = vcmask 121860
        %vm2439 = vmor %vm2438, %vm2437
        %2440 = vst.msk [vmem:[#allocation2 + $0xc0] sm:$0xff] %vm2439, %v2421
        %2441 = vst.msk [vmem:[#allocation2 + $0xcc] sm:$0xff] %vm2439, %v2422
        %2442 = vst.msk [vmem:[#allocation2 + $0xd8] sm:$0xff] %vm2439, %v2423
        %2443 = vst.msk [vmem:[#allocation2 + $0xe4] sm:$0xff] %vm2439, %v2424
        %2444 = vst.msk [vmem:[#allocation2 + $0xf0] sm:$0xff] %vm2439, %v2425
        %2445 = vst.msk [vmem:[#allocation2 + $0xfc] sm:$0xff] %vm2439, %v2426
        %2446 = vst.msk [vmem:[#allocation2 + $0x108] sm:$0xff] %vm2439, %v2427
        %2447 = vst.msk [vmem:[#allocation2 + $0x114] sm:$0xff] %vm2439, %v2428
        %v2448 = vld [vmem:[%s628 + $0x4] sm:$0xf]
        %v2449 = vld [vmem:[%s628 + $0xc] sm:$0xf]
        %v2452 = vunpack.c.l.b16 %v2448
        %v2453 = vunpack.c.l.b16 %v2449
        %v2454 = vpack.c.b16 %v2453, %v2452
        %2456 = vmatpush.bf16.msra.mxu0 0
        %2457 = vmatpush.bf16.msra.mxu0 0
        %2458 = vmatpush.bf16.msra.mxu0 0
        %2459 = vmatpush.bf16.msra.mxu0 0
        %2460 = vmatpush.bf16.msra.mxu0 0
        %2461 = vmatpush.bf16.msra.mxu0 0
        %2462 = vmatpush.bf16.msra.mxu0 0
        %2463 = vmatpush.bf16.msra.mxu0 %v2454
        %2464 = vmatmul.bf16.gmra.mxu0 %v2083
        %v2465 = vpop.f32.mrf.mxu0
        %v2466 = vadd.f32 %v2019, %v2465
        %v2467 = vpop.f32.mrf.mxu0
        %v2468 = vadd.f32 %v2024, %v2467
        %2469 = vmatmul.bf16.gmra.mxu0 %v2086
        %v2470 = vpop.f32.mrf.mxu0
        %v2471 = vadd.f32 %v2029, %v2470
        %v2472 = vpop.f32.mrf.mxu0
        %v2473 = vadd.f32 %v2034, %v2472
        %2474 = vmatmul.bf16.gmra.mxu0 %v2089
        %v2475 = vpop.f32.mrf.mxu0
        %v2476 = vadd.f32 %v2039, %v2475
        %v2477 = vpop.f32.mrf.mxu0
        %v2478 = vadd.f32 %v2044, %v2477
        %2479 = vmatmul.bf16.gmra.mxu0 %v2092
        %v2480 = vpop.f32.mrf.mxu0
        %v2481 = vadd.f32 %v2049, %v2480
        %v2482 = vpop.f32.mrf.mxu0
        %v2483 = vadd.f32 %v2054, %v2482
        %2484 = vdwg.mxu0
        %vm2485 = vcmp.ge.f32.partialorder %v2466, 0.0
        %vm2486 = vcmp.ge.f32.partialorder %v2468, 0.0
        %vm2487 = vcmp.ge.f32.partialorder %v2471, 0.0
        %vm2488 = vcmp.ge.f32.partialorder %v2473, 0.0
        %vm2489 = vcmp.ge.f32.partialorder %v2476, 0.0
        %vm2490 = vcmp.ge.f32.partialorder %v2478, 0.0
        %vm2491 = vcmp.ge.f32.partialorder %v2481, 0.0
        %vm2492 = vcmp.ge.f32.partialorder %v2483, 0.0
        %v2493 = vmul.f32 %v2466, 0.1
        %v2494 = vmul.f32 %v2468, 0.1
        %v2495 = vmul.f32 %v2471, 0.1
        %v2496 = vmul.f32 %v2473, 0.1
        %v2497 = vmul.f32 %v2476, 0.1
        %v2498 = vmul.f32 %v2478, 0.1
        %v2499 = vmul.f32 %v2481, 0.1
        %v2500 = vmul.f32 %v2483, 0.1
        %v2501 = vsel %vm2485, %v2466, %v2493
        %v2502 = vsel %vm2486, %v2468, %v2494
        %v2503 = vsel %vm2487, %v2471, %v2495
        %v2504 = vsel %vm2488, %v2473, %v2496
        %v2505 = vsel %vm2489, %v2476, %v2497
        %v2506 = vsel %vm2490, %v2478, %v2498
        %v2507 = vsel %vm2491, %v2481, %v2499
        %v2508 = vsel %vm2492, %v2483, %v2500
        %v2509 = vld [vmem:[#allocation4] sm:$0xf]
        %v2510 = vld [vmem:[#allocation4 + $0x4] sm:$0xf]
        %v2511 = vld [vmem:[#allocation4 + $0x8] sm:$0xf]
        %v2512 = vld [vmem:[#allocation4 + $0xc] sm:$0xf]
        %v2513 = vld [vmem:[#allocation4 + $0x10] sm:$0xf]
        %v2514 = vld [vmem:[#allocation4 + $0x14] sm:$0xf]
        %v2515 = vld [vmem:[#allocation4 + $0x18] sm:$0xf]
        %v2516 = vld [vmem:[#allocation4 + $0x1c] sm:$0xf]
        %v2525 = vunpack.c.l.b16 %v2509
        %v2526 = vunpack.c.l.b16 %v2510
        %v2527 = vunpack.c.l.b16 %v2511
        %v2528 = vunpack.c.l.b16 %v2512
        %v2529 = vunpack.c.l.b16 %v2513
        %v2530 = vunpack.c.l.b16 %v2514
        %v2531 = vunpack.c.l.b16 %v2515
        %v2532 = vunpack.c.l.b16 %v2516
        %v2533 = vpack.c.b16 %v2526, %v2525
        %v2534 = vpack.c.b16 %v2528, %v2527
        %v2535 = vpack.c.b16 %v2530, %v2529
        %v2536 = vpack.c.b16 %v2532, %v2531
        %2537 = vrot.lane.b32.xlu0 %v2533, 96
        %v2538 = vpop.permute.xlu0 %2537
        %2539 = vrot.lane.b32.xlu0 %v2534, 96
        %v2540 = vpop.permute.xlu0 %2539
        %2541 = vrot.lane.b32.xlu0 %v2535, 96
        %v2542 = vpop.permute.xlu0 %2541
        %2543 = vrot.lane.b32.xlu0 %v2536, 96
        %v2544 = vpop.permute.xlu0 %2543
        %v2546 = vsel %vm1003, %v2538, 0
        %v2549 = vsel %vm1003, %v2540, 0
        %v2552 = vsel %vm1003, %v2542, 0
        %v2555 = vsel %vm1003, %v2544, 0
        %2557 = vmatpush.bf16.msra.mxu0 0
        %2558 = vmatpush.bf16.msra.mxu0 0
        %2559 = vmatpush.bf16.msra.mxu0 0
        %2560 = vmatpush.bf16.msra.mxu0 0
        %2561 = vmatpush.bf16.msra.mxu0 0
        %2562 = vmatpush.bf16.msra.mxu0 0
        %2563 = vmatpush.bf16.msra.mxu0 %v2184
        %2564 = vmatpush.bf16.msra.mxu0 %v2183
        %2565 = vmatmul.bf16.gmra.mxu0 %v2546
        %v2566 = vpop.f32.mrf.mxu0
        %v2567 = vadd.f32 0.0, %v2566
        %v2568 = vpop.f32.mrf.mxu0
        %v2569 = vadd.f32 0.0, %v2568
        %2570 = vmatmul.bf16.gmra.mxu0 %v2549
        %v2571 = vpop.f32.mrf.mxu0
        %v2572 = vadd.f32 0.0, %v2571
        %v2573 = vpop.f32.mrf.mxu0
        %v2574 = vadd.f32 0.0, %v2573
        %2575 = vmatmul.bf16.gmra.mxu0 %v2552
        %v2576 = vpop.f32.mrf.mxu0
        %v2577 = vadd.f32 0.0, %v2576
        %v2578 = vpop.f32.mrf.mxu0
        %v2579 = vadd.f32 0.0, %v2578
        %2580 = vmatmul.bf16.gmra.mxu0 %v2555
        %v2581 = vpop.f32.mrf.mxu0
        %v2582 = vadd.f32 0.0, %v2581
        %v2583 = vpop.f32.mrf.mxu0
        %v2584 = vadd.f32 0.0, %v2583
        %2585 = vdwg.mxu0
        %v2586 = vadd.f32 %v2501, %v2567
        %v2587 = vadd.f32 %v2502, %v2569
        %v2588 = vadd.f32 %v2503, %v2572
        %v2589 = vadd.f32 %v2504, %v2574
        %v2590 = vadd.f32 %v2505, %v2577
        %v2591 = vadd.f32 %v2506, %v2579
        %v2592 = vadd.f32 %v2507, %v2582
        %v2593 = vadd.f32 %v2508, %v2584
        %v2594 = vpack.c.bf16 %v2586, %v2586
        %v2595 = vpack.c.bf16 %v2587, %v2587
        %v2596 = vpack.c.bf16 %v2588, %v2588
        %v2597 = vpack.c.bf16 %v2589, %v2589
        %v2598 = vpack.c.bf16 %v2590, %v2590
        %v2599 = vpack.c.bf16 %v2591, %v2591
        %v2600 = vpack.c.bf16 %v2592, %v2592
        %v2601 = vpack.c.bf16 %v2593, %v2593
        %2610 = vrot.lane.b32.xlu0 %v2594, 16
        %v2611 = vpop.permute.xlu0 %2610
        %2612 = vrot.lane.b32.xlu0 %v2595, 16
        %v2613 = vpop.permute.xlu0 %2612
        %2614 = vrot.lane.b32.xlu0 %v2596, 16
        %v2615 = vpop.permute.xlu0 %2614
        %2616 = vrot.lane.b32.xlu0 %v2597, 16
        %v2617 = vpop.permute.xlu0 %2616
        %2618 = vrot.lane.b32.xlu0 %v2598, 16
        %v2619 = vpop.permute.xlu0 %2618
        %2620 = vrot.lane.b32.xlu0 %v2599, 16
        %v2621 = vpop.permute.xlu0 %2620
        %2622 = vrot.lane.b32.xlu0 %v2600, 16
        %v2623 = vpop.permute.xlu0 %2622
        %2624 = vrot.lane.b32.xlu0 %v2601, 16
        %v2625 = vpop.permute.xlu0 %2624
        %v2626 = vrot.slane %v2611, 4
        %v2627 = vrot.slane %v2613, 4
        %v2628 = vrot.slane %v2615, 4
        %v2629 = vrot.slane %v2617, 4
        %v2630 = vrot.slane %v2619, 4
        %v2631 = vrot.slane %v2621, 4
        %v2632 = vrot.slane %v2623, 4
        %v2633 = vrot.slane %v2625, 4
        %v2634 = vsel %vm2276, %v2626, %v2611
        %v2635 = vsel %vm2276, %v2627, %v2613
        %v2636 = vsel %vm2276, %v2628, %v2615
        %v2637 = vsel %vm2276, %v2629, %v2617
        %v2638 = vsel %vm2276, %v2630, %v2619
        %v2639 = vsel %vm2276, %v2631, %v2621
        %v2640 = vsel %vm2276, %v2632, %v2623
        %v2641 = vsel %vm2276, %v2633, %v2625
        %2650 = vst.msk [vmem:[#allocation2 + $0x64] sm:$0xff] %vm2295, %v2634
        %2651 = vst.msk [vmem:[#allocation2 + $0x70] sm:$0xff] %vm2295, %v2635
        %2652 = vst.msk [vmem:[#allocation2 + $0x7c] sm:$0xff] %vm2295, %v2636
        %2653 = vst.msk [vmem:[#allocation2 + $0x88] sm:$0xff] %vm2295, %v2637
        %2654 = vst.msk [vmem:[#allocation2 + $0x94] sm:$0xff] %vm2295, %v2638
        %2655 = vst.msk [vmem:[#allocation2 + $0xa0] sm:$0xff] %vm2295, %v2639
        %2656 = vst.msk [vmem:[#allocation2 + $0xac] sm:$0xff] %vm2295, %v2640
        %2657 = vst.msk [vmem:[#allocation2 + $0xb8] sm:$0xff] %vm2295, %v2641
        %v2658 = vsel %vm2307, 0, %v2594
        %v2659 = vsel %vm2307, 0, %v2595
        %v2660 = vsel %vm2307, 0, %v2596
        %v2661 = vsel %vm2307, 0, %v2597
        %v2662 = vsel %vm2307, 0, %v2598
        %v2663 = vsel %vm2307, 0, %v2599
        %v2664 = vsel %vm2307, 0, %v2600
        %v2665 = vsel %vm2307, 0, %v2601
        %2674 = vrot.lane.b32.xlu0 %v2658, 17
        %v2675 = vpop.permute.xlu0 %2674
        %2676 = vrot.lane.b32.xlu0 %v2659, 17
        %v2677 = vpop.permute.xlu0 %2676
        %2678 = vrot.lane.b32.xlu0 %v2660, 17
        %v2679 = vpop.permute.xlu0 %2678
        %2680 = vrot.lane.b32.xlu0 %v2661, 17
        %v2681 = vpop.permute.xlu0 %2680
        %2682 = vrot.lane.b32.xlu0 %v2662, 17
        %v2683 = vpop.permute.xlu0 %2682
        %2684 = vrot.lane.b32.xlu0 %v2663, 17
        %v2685 = vpop.permute.xlu0 %2684
        %2686 = vrot.lane.b32.xlu0 %v2664, 17
        %v2687 = vpop.permute.xlu0 %2686
        %2688 = vrot.lane.b32.xlu0 %v2665, 17
        %v2689 = vpop.permute.xlu0 %2688
        %v2690 = vrot.slane %v2675, 4
        %v2691 = vrot.slane %v2677, 4
        %v2692 = vrot.slane %v2679, 4
        %v2693 = vrot.slane %v2681, 4
        %v2694 = vrot.slane %v2683, 4
        %v2695 = vrot.slane %v2685, 4
        %v2696 = vrot.slane %v2687, 4
        %v2697 = vrot.slane %v2689, 4
        %v2698 = vsel %vm2348, %v2690, %v2675
        %v2699 = vsel %vm2348, %v2691, %v2677
        %v2700 = vsel %vm2348, %v2692, %v2679
        %v2701 = vsel %vm2348, %v2693, %v2681
        %v2702 = vsel %vm2348, %v2694, %v2683
        %v2703 = vsel %vm2348, %v2695, %v2685
        %v2704 = vsel %vm2348, %v2696, %v2687
        %v2705 = vsel %vm2348, %v2697, %v2689
        %2714 = vst.msk [vmem:[#allocation2 + $0x4] sm:$0xff] %vm2367, %v2698
        %2715 = vst.msk [vmem:[#allocation2 + $0x10] sm:$0xff] %vm2367, %v2699
        %2716 = vst.msk [vmem:[#allocation2 + $0x1c] sm:$0xff] %vm2367, %v2700
        %2717 = vst.msk [vmem:[#allocation2 + $0x28] sm:$0xff] %vm2367, %v2701
        %2718 = vst.msk [vmem:[#allocation2 + $0x34] sm:$0xff] %vm2367, %v2702
        %2719 = vst.msk [vmem:[#allocation2 + $0x40] sm:$0xff] %vm2367, %v2703
        %2720 = vst.msk [vmem:[#allocation2 + $0x4c] sm:$0xff] %vm2367, %v2704
        %2721 = vst.msk [vmem:[#allocation2 + $0x58] sm:$0xff] %vm2367, %v2705
        %v2722 = vsel %vm2379, 0, %v2594
        %v2723 = vsel %vm2379, 0, %v2595
        %v2724 = vsel %vm2379, 0, %v2596
        %v2725 = vsel %vm2379, 0, %v2597
        %v2726 = vsel %vm2379, 0, %v2598
        %v2727 = vsel %vm2379, 0, %v2599
        %v2728 = vsel %vm2379, 0, %v2600
        %v2729 = vsel %vm2379, 0, %v2601
        %2738 = vrot.lane.b32.xlu0 %v2722, 15
        %v2739 = vpop.permute.xlu0 %2738
        %2740 = vrot.lane.b32.xlu0 %v2723, 15
        %v2741 = vpop.permute.xlu0 %2740
        %2742 = vrot.lane.b32.xlu0 %v2724, 15
        %v2743 = vpop.permute.xlu0 %2742
        %2744 = vrot.lane.b32.xlu0 %v2725, 15
        %v2745 = vpop.permute.xlu0 %2744
        %2746 = vrot.lane.b32.xlu0 %v2726, 15
        %v2747 = vpop.permute.xlu0 %2746
        %2748 = vrot.lane.b32.xlu0 %v2727, 15
        %v2749 = vpop.permute.xlu0 %2748
        %2750 = vrot.lane.b32.xlu0 %v2728, 15
        %v2751 = vpop.permute.xlu0 %2750
        %2752 = vrot.lane.b32.xlu0 %v2729, 15
        %v2753 = vpop.permute.xlu0 %2752
        %v2754 = vrot.slane %v2739, 4
        %v2755 = vrot.slane %v2741, 4
        %v2756 = vrot.slane %v2743, 4
        %v2757 = vrot.slane %v2745, 4
        %v2758 = vrot.slane %v2747, 4
        %v2759 = vrot.slane %v2749, 4
        %v2760 = vrot.slane %v2751, 4
        %v2761 = vrot.slane %v2753, 4
        %v2762 = vsel %vm2420, %v2754, %v2739
        %v2763 = vsel %vm2420, %v2755, %v2741
        %v2764 = vsel %vm2420, %v2756, %v2743
        %v2765 = vsel %vm2420, %v2757, %v2745
        %v2766 = vsel %vm2420, %v2758, %v2747
        %v2767 = vsel %vm2420, %v2759, %v2749
        %v2768 = vsel %vm2420, %v2760, %v2751
        %v2769 = vsel %vm2420, %v2761, %v2753
        %2778 = vst.msk [vmem:[#allocation2 + $0xc4] sm:$0xff] %vm2439, %v2762
        %2779 = vst.msk [vmem:[#allocation2 + $0xd0] sm:$0xff] %vm2439, %v2763
        %2780 = vst.msk [vmem:[#allocation2 + $0xdc] sm:$0xff] %vm2439, %v2764
        %2781 = vst.msk [vmem:[#allocation2 + $0xe8] sm:$0xff] %vm2439, %v2765
        %2782 = vst.msk [vmem:[#allocation2 + $0xf4] sm:$0xff] %vm2439, %v2766
        %2783 = vst.msk [vmem:[#allocation2 + $0x100] sm:$0xff] %vm2439, %v2767
        %2784 = vst.msk [vmem:[#allocation2 + $0x10c] sm:$0xff] %vm2439, %v2768
        %2785 = vst.msk [vmem:[#allocation2 + $0x118] sm:$0xff] %vm2439, %v2769
        %v2786 = vld [vmem:[#allocation8] sm:$0xff]
        %v2787 = vld [vmem:[#allocation8 + $0x8] sm:$0xff]
        %v2788 = vld [vmem:[#allocation8 + $0x10] sm:$0xff]
        %v2789 = vld [vmem:[#allocation8 + $0x18] sm:$0xff]
        %v2790 = vld [vmem:[#allocation8 + $0x20] sm:$0xff]
        %v2791 = vld [vmem:[#allocation8 + $0x28] sm:$0xff]
        %v2792 = vld [vmem:[#allocation8 + $0x30] sm:$0xff]
        %v2793 = vld [vmem:[#allocation8 + $0x38] sm:$0xff]
        %s2794 = scalar_lea.vmem [#allocation8], 64
        %v2795 = vld [vmem:[%s2794] sm:$0xff]
        %v2796 = vld [vmem:[%s2794 + $0x8] sm:$0xff]
        %v2797 = vld [vmem:[%s2794 + $0x10] sm:$0xff]
        %v2798 = vld [vmem:[%s2794 + $0x18] sm:$0xff]
        %v2799 = vld [vmem:[%s2794 + $0x20] sm:$0xff]
        %v2800 = vld [vmem:[%s2794 + $0x28] sm:$0xff]
        %v2801 = vld [vmem:[%s2794 + $0x30] sm:$0xff]
        %v2802 = vld [vmem:[%s2794 + $0x38] sm:$0xff]
        %s2803 = scalar_lea.vmem [#allocation8], 128
        %v2804 = vld [vmem:[%s2803] sm:$0xff]
        %v2805 = vld [vmem:[%s2803 + $0x8] sm:$0xff]
        %v2806 = vld [vmem:[%s2803 + $0x10] sm:$0xff]
        %v2807 = vld [vmem:[%s2803 + $0x18] sm:$0xff]
        %v2808 = vld [vmem:[%s2803 + $0x20] sm:$0xff]
        %v2809 = vld [vmem:[%s2803 + $0x28] sm:$0xff]
        %v2810 = vld [vmem:[%s2803 + $0x30] sm:$0xff]
        %v2811 = vld [vmem:[%s2803 + $0x38] sm:$0xff]
        %v2812 = vld [vmem:[%s12] sm:$0xff]
        %v2813 = vld [vmem:[%s12 + $0x8] sm:$0xff]
        %v2814 = vld [vmem:[%s12 + $0x10] sm:$0xff]
        %v2815 = vld [vmem:[%s12 + $0x18] sm:$0xff]
        %v2816 = vld [vmem:[%s12 + $0x20] sm:$0xff]
        %v2817 = vld [vmem:[%s12 + $0x28] sm:$0xff]
        %v2818 = vld [vmem:[%s12 + $0x30] sm:$0xff]
        %v2819 = vld [vmem:[%s12 + $0x38] sm:$0xff]
        %v2820 = vld [vmem:[#allocation2] sm:$0xf]
        %v2821 = vld [vmem:[#allocation2 + $0xc] sm:$0xf]
        %v2822 = vld [vmem:[#allocation2 + $0x18] sm:$0xf]
        %v2823 = vld [vmem:[#allocation2 + $0x24] sm:$0xf]
        %v2824 = vld [vmem:[#allocation2 + $0x30] sm:$0xf]
        %v2825 = vld [vmem:[#allocation2 + $0x3c] sm:$0xf]
        %v2826 = vld [vmem:[#allocation2 + $0x48] sm:$0xf]
        %v2827 = vld [vmem:[#allocation2 + $0x54] sm:$0xf]
        %v2828 = vld [vmem:[#allocation2 + $0x60] sm:$0xf]
        %v2829 = vld [vmem:[#allocation2 + $0x6c] sm:$0xf]
        %v2830 = vld [vmem:[#allocation2 + $0x78] sm:$0xf]
        %v2831 = vld [vmem:[#allocation2 + $0x84] sm:$0xf]
        %v2832 = vld [vmem:[#allocation2 + $0x90] sm:$0xf]
        %v2833 = vld [vmem:[#allocation2 + $0x9c] sm:$0xf]
        %v2834 = vld [vmem:[#allocation2 + $0xa8] sm:$0xf]
        %v2835 = vld [vmem:[#allocation2 + $0xb4] sm:$0xf]
        %v2836 = vld [vmem:[#allocation2 + $0xc0] sm:$0xf]
        %v2837 = vld [vmem:[#allocation2 + $0xcc] sm:$0xf]
        %v2838 = vld [vmem:[#allocation2 + $0xd8] sm:$0xf]
        %v2839 = vld [vmem:[#allocation2 + $0xe4] sm:$0xf]
        %v2840 = vld [vmem:[#allocation2 + $0xf0] sm:$0xf]
        %v2841 = vld [vmem:[#allocation2 + $0xfc] sm:$0xf]
        %v2842 = vld [vmem:[#allocation2 + $0x108] sm:$0xf]
        %v2843 = vld [vmem:[#allocation2 + $0x114] sm:$0xf]
        %v2844 = vld [vmem:[#allocation2] sm:$0xff]
        %v2845 = vld [vmem:[#allocation2 + $0xc] sm:$0xff]
        %v2846 = vld [vmem:[#allocation2 + $0x18] sm:$0xff]
        %v2847 = vld [vmem:[#allocation2 + $0x24] sm:$0xff]
        %v2848 = vld [vmem:[#allocation2 + $0x30] sm:$0xff]
        %v2849 = vld [vmem:[#allocation2 + $0x3c] sm:$0xff]
        %v2850 = vld [vmem:[#allocation2 + $0x48] sm:$0xff]
        %v2851 = vld [vmem:[#allocation2 + $0x54] sm:$0xff]
        %v2852 = vld [vmem:[#allocation2 + $0x60] sm:$0xff]
        %v2853 = vld [vmem:[#allocation2 + $0x6c] sm:$0xff]
        %v2854 = vld [vmem:[#allocation2 + $0x78] sm:$0xff]
        %v2855 = vld [vmem:[#allocation2 + $0x84] sm:$0xff]
        %v2856 = vld [vmem:[#allocation2 + $0x90] sm:$0xff]
        %v2857 = vld [vmem:[#allocation2 + $0x9c] sm:$0xff]
        %v2858 = vld [vmem:[#allocation2 + $0xa8] sm:$0xff]
        %v2859 = vld [vmem:[#allocation2 + $0xb4] sm:$0xff]
        %v2860 = vld [vmem:[#allocation2 + $0xc0] sm:$0xff]
        %v2861 = vld [vmem:[#allocation2 + $0xcc] sm:$0xff]
        %v2862 = vld [vmem:[#allocation2 + $0xd8] sm:$0xff]
        %v2863 = vld [vmem:[#allocation2 + $0xe4] sm:$0xff]
        %v2864 = vld [vmem:[#allocation2 + $0xf0] sm:$0xff]
        %v2865 = vld [vmem:[#allocation2 + $0xfc] sm:$0xff]
        %v2866 = vld [vmem:[#allocation2 + $0x108] sm:$0xff]
        %v2867 = vld [vmem:[#allocation2 + $0x114] sm:$0xff]
        %v2876 = vunpack.c.l.b16 %v2795
        %v2877 = vunpack.c.h.b16 %v2795
        %v2878 = vunpack.c.l.b16 %v2796
        %v2879 = vunpack.c.h.b16 %v2796
        %v2880 = vunpack.c.l.b16 %v2797
        %v2881 = vunpack.c.h.b16 %v2797
        %v2882 = vunpack.c.l.b16 %v2798
        %v2883 = vunpack.c.h.b16 %v2798
        %v2884 = vunpack.c.l.b16 %v2799
        %v2885 = vunpack.c.h.b16 %v2799
        %v2886 = vunpack.c.l.b16 %v2800
        %v2887 = vunpack.c.h.b16 %v2800
        %v2888 = vunpack.c.l.b16 %v2801
        %v2889 = vunpack.c.h.b16 %v2801
        %v2890 = vunpack.c.l.b16 %v2802
        %v2891 = vunpack.c.h.b16 %v2802
        %v2892 = vpack.c.b16 %v2878, %v2876
        %v2893 = vpack.c.b16 %v2879, %v2877
        %v2894 = vpack.c.b16 %v2882, %v2880
        %v2895 = vpack.c.b16 %v2883, %v2881
        %v2896 = vpack.c.b16 %v2886, %v2884
        %v2897 = vpack.c.b16 %v2887, %v2885
        %v2898 = vpack.c.b16 %v2890, %v2888
        %v2899 = vpack.c.b16 %v2891, %v2889
        %v2928 = vunpack.c.l.b16 %v2844
        %v2929 = vunpack.c.h.b16 %v2844
        %v2930 = vunpack.c.l.b16 %v2845
        %v2931 = vunpack.c.h.b16 %v2845
        %v2932 = vunpack.c.l.b16 %v2846
        %v2933 = vunpack.c.h.b16 %v2846
        %v2934 = vunpack.c.l.b16 %v2847
        %v2935 = vunpack.c.h.b16 %v2847
        %v2936 = vunpack.c.l.b16 %v2848
        %v2937 = vunpack.c.h.b16 %v2848
        %v2938 = vunpack.c.l.b16 %v2849
        %v2939 = vunpack.c.h.b16 %v2849
        %v2940 = vunpack.c.l.b16 %v2850
        %v2941 = vunpack.c.h.b16 %v2850
        %v2942 = vunpack.c.l.b16 %v2851
        %v2943 = vunpack.c.h.b16 %v2851
        %v2944 = vunpack.c.l.b16 %v2852
        %v2945 = vunpack.c.h.b16 %v2852
        %v2946 = vunpack.c.l.b16 %v2853
        %v2947 = vunpack.c.h.b16 %v2853
        %v2948 = vunpack.c.l.b16 %v2854
        %v2949 = vunpack.c.h.b16 %v2854
        %v2950 = vunpack.c.l.b16 %v2855
        %v2951 = vunpack.c.h.b16 %v2855
        %v2952 = vunpack.c.l.b16 %v2856
        %v2953 = vunpack.c.h.b16 %v2856
        %v2954 = vunpack.c.l.b16 %v2857
        %v2955 = vunpack.c.h.b16 %v2857
        %v2956 = vunpack.c.l.b16 %v2858
        %v2957 = vunpack.c.h.b16 %v2858
        %v2958 = vunpack.c.l.b16 %v2859
        %v2959 = vunpack.c.h.b16 %v2859
        %v2960 = vunpack.c.l.b16 %v2860
        %v2961 = vunpack.c.h.b16 %v2860
        %v2962 = vunpack.c.l.b16 %v2861
        %v2963 = vunpack.c.h.b16 %v2861
        %v2964 = vunpack.c.l.b16 %v2862
        %v2965 = vunpack.c.h.b16 %v2862
        %v2966 = vunpack.c.l.b16 %v2863
        %v2967 = vunpack.c.h.b16 %v2863
        %v2968 = vunpack.c.l.b16 %v2864
        %v2969 = vunpack.c.h.b16 %v2864
        %v2970 = vunpack.c.l.b16 %v2865
        %v2971 = vunpack.c.h.b16 %v2865
        %v2972 = vunpack.c.l.b16 %v2866
        %v2973 = vunpack.c.h.b16 %v2866
        %v2974 = vunpack.c.l.b16 %v2867
        %v2975 = vunpack.c.h.b16 %v2867
        %v2976 = vpack.c.b16 %v2930, %v2928
        %v2977 = vpack.c.b16 %v2931, %v2929
        %v2978 = vpack.c.b16 %v2934, %v2932
        %v2979 = vpack.c.b16 %v2935, %v2933
        %v2980 = vpack.c.b16 %v2938, %v2936
        %v2981 = vpack.c.b16 %v2939, %v2937
        %v2982 = vpack.c.b16 %v2942, %v2940
        %v2983 = vpack.c.b16 %v2943, %v2941
        %v2984 = vpack.c.b16 %v2946, %v2944
        %v2985 = vpack.c.b16 %v2947, %v2945
        %v2986 = vpack.c.b16 %v2950, %v2948
        %v2987 = vpack.c.b16 %v2951, %v2949
        %v2988 = vpack.c.b16 %v2954, %v2952
        %v2989 = vpack.c.b16 %v2955, %v2953
        %v2990 = vpack.c.b16 %v2958, %v2956
        %v2991 = vpack.c.b16 %v2959, %v2957
        %v2992 = vpack.c.b16 %v2962, %v2960
        %v2993 = vpack.c.b16 %v2963, %v2961
        %v2994 = vpack.c.b16 %v2966, %v2964
        %v2995 = vpack.c.b16 %v2967, %v2965
        %v2996 = vpack.c.b16 %v2970, %v2968
        %v2997 = vpack.c.b16 %v2971, %v2969
        %v2998 = vpack.c.b16 %v2974, %v2972
        %v2999 = vpack.c.b16 %v2975, %v2973
        %3000 = vrot.lane.b32.xlu0 %v2976, 112
        %v3001 = vpop.permute.xlu0 %3000
        %3002 = vrot.lane.b32.xlu0 %v2977, 112
        %v3003 = vpop.permute.xlu0 %3002
        %3004 = vrot.lane.b32.xlu0 %v2978, 112
        %v3005 = vpop.permute.xlu0 %3004
        %3006 = vrot.lane.b32.xlu0 %v2979, 112
        %v3007 = vpop.permute.xlu0 %3006
        %3008 = vrot.lane.b32.xlu0 %v2980, 112
        %v3009 = vpop.permute.xlu0 %3008
        %3010 = vrot.lane.b32.xlu0 %v2981, 112
        %v3011 = vpop.permute.xlu0 %3010
        %3012 = vrot.lane.b32.xlu0 %v2982, 112
        %v3013 = vpop.permute.xlu0 %3012
        %3014 = vrot.lane.b32.xlu0 %v2983, 112
        %v3015 = vpop.permute.xlu0 %3014
        %3016 = vrot.lane.b32.xlu0 %v2984, 112
        %v3017 = vpop.permute.xlu0 %3016
        %3018 = vrot.lane.b32.xlu0 %v2985, 112
        %v3019 = vpop.permute.xlu0 %3018
        %3020 = vrot.lane.b32.xlu0 %v2986, 112
        %v3021 = vpop.permute.xlu0 %3020
        %3022 = vrot.lane.b32.xlu0 %v2987, 112
        %v3023 = vpop.permute.xlu0 %3022
        %3024 = vrot.lane.b32.xlu0 %v2988, 112
        %v3025 = vpop.permute.xlu0 %3024
        %3026 = vrot.lane.b32.xlu0 %v2989, 112
        %v3027 = vpop.permute.xlu0 %3026
        %3028 = vrot.lane.b32.xlu0 %v2990, 112
        %v3029 = vpop.permute.xlu0 %3028
        %3030 = vrot.lane.b32.xlu0 %v2991, 112
        %v3031 = vpop.permute.xlu0 %3030
        %3032 = vrot.lane.b32.xlu0 %v2992, 112
        %v3033 = vpop.permute.xlu0 %3032
        %3034 = vrot.lane.b32.xlu0 %v2993, 112
        %v3035 = vpop.permute.xlu0 %3034
        %3036 = vrot.lane.b32.xlu0 %v2994, 112
        %v3037 = vpop.permute.xlu0 %3036
        %3038 = vrot.lane.b32.xlu0 %v2995, 112
        %v3039 = vpop.permute.xlu0 %3038
        %3040 = vrot.lane.b32.xlu0 %v2996, 112
        %v3041 = vpop.permute.xlu0 %3040
        %3042 = vrot.lane.b32.xlu0 %v2997, 112
        %v3043 = vpop.permute.xlu0 %3042
        %3044 = vrot.lane.b32.xlu0 %v2998, 112
        %v3045 = vpop.permute.xlu0 %3044
        %3046 = vrot.lane.b32.xlu0 %v2999, 112
        %v3047 = vpop.permute.xlu0 %3046
        %vm3048 = vcmask 916480
        %v3049 = vsel %vm3048, %v3001, %v3003
        %v3050 = vsel %vm3048, %v3005, %v3007
        %v3051 = vsel %vm3048, %v3009, %v3011
        %v3052 = vsel %vm3048, %v3013, %v3015
        %v3053 = vsel %vm3048, %v3017, %v3019
        %v3054 = vsel %vm3048, %v3021, %v3023
        %v3055 = vsel %vm3048, %v3025, %v3027
        %v3056 = vsel %vm3048, %v3029, %v3031
        %v3057 = vsel %vm3048, %v3033, %v3035
        %v3058 = vsel %vm3048, %v3037, %v3039
        %v3059 = vsel %vm3048, %v3041, %v3043
        %v3060 = vsel %vm3048, %v3045, %v3047
        %v3074 = vsel %vm753, %v2893, 0
        %v3077 = vsel %vm753, %v2895, 0
        %v3080 = vsel %vm753, %v2897, 0
        %v3083 = vsel %vm753, %v2899, 0
        %3085 = vmatpush.bf16.msra.mxu0 %v3056
        %3086 = vmatpush.bf16.msra.mxu0 %v3055
        %3087 = vmatpush.bf16.msra.mxu0 %v3054
        %3088 = vmatpush.bf16.msra.mxu0 %v3053
        %3089 = vmatpush.bf16.msra.mxu0 %v3052
        %3090 = vmatpush.bf16.msra.mxu0 %v3051
        %3091 = vmatpush.bf16.msra.mxu0 %v3050
        %3092 = vmatpush.bf16.msra.mxu0 %v3049
        %3093 = vmatmul.bf16.gmra.mxu0 %v2892
        %v3094 = vpop.f32.mrf.mxu0
        %v3095 = vadd.f32 0.0, %v3094
        %v3096 = vpop.f32.mrf.mxu0
        %v3097 = vadd.f32 0.0, %v3096
        %3098 = vmatmul.bf16.gmra.mxu0 %v2894
        %v3099 = vpop.f32.mrf.mxu0
        %v3100 = vadd.f32 0.0, %v3099
        %v3101 = vpop.f32.mrf.mxu0
        %v3102 = vadd.f32 0.0, %v3101
        %3103 = vmatmul.bf16.gmra.mxu0 %v2896
        %v3104 = vpop.f32.mrf.mxu0
        %v3105 = vadd.f32 0.0, %v3104
        %v3106 = vpop.f32.mrf.mxu0
        %v3107 = vadd.f32 0.0, %v3106
        %3108 = vmatmul.bf16.gmra.mxu0 %v2898
        %v3109 = vpop.f32.mrf.mxu0
        %v3110 = vadd.f32 0.0, %v3109
        %v3111 = vpop.f32.mrf.mxu0
        %v3112 = vadd.f32 0.0, %v3111
        %3113 = vdwg.mxu0
        %3114 = vmatpush.bf16.msra.mxu0 0
        %3115 = vmatpush.bf16.msra.mxu0 0
        %3116 = vmatpush.bf16.msra.mxu0 0
        %3117 = vmatpush.bf16.msra.mxu0 0
        %3118 = vmatpush.bf16.msra.mxu0 %v3060
        %3119 = vmatpush.bf16.msra.mxu0 %v3059
        %3120 = vmatpush.bf16.msra.mxu0 %v3058
        %3121 = vmatpush.bf16.msra.mxu0 %v3057
        %3122 = vmatmul.bf16.gmra.mxu0 %v3074
        %v3123 = vpop.f32.mrf.mxu0
        %v3124 = vadd.f32 %v3095, %v3123
        %v3125 = vpop.f32.mrf.mxu0
        %v3126 = vadd.f32 %v3097, %v3125
        %3127 = vmatmul.bf16.gmra.mxu0 %v3077
        %v3128 = vpop.f32.mrf.mxu0
        %v3129 = vadd.f32 %v3100, %v3128
        %v3130 = vpop.f32.mrf.mxu0
        %v3131 = vadd.f32 %v3102, %v3130
        %3132 = vmatmul.bf16.gmra.mxu0 %v3080
        %v3133 = vpop.f32.mrf.mxu0
        %v3134 = vadd.f32 %v3105, %v3133
        %v3135 = vpop.f32.mrf.mxu0
        %v3136 = vadd.f32 %v3107, %v3135
        %3137 = vmatmul.bf16.gmra.mxu0 %v3083
        %v3138 = vpop.f32.mrf.mxu0
        %v3139 = vadd.f32 %v3110, %v3138
        %v3140 = vpop.f32.mrf.mxu0
        %v3141 = vadd.f32 %v3112, %v3140
        %3142 = vdwg.mxu0
        %v3151 = vunpack.c.l.b16 %v2786
        %v3152 = vunpack.c.h.b16 %v2786
        %v3153 = vunpack.c.l.b16 %v2787
        %v3154 = vunpack.c.h.b16 %v2787
        %v3155 = vunpack.c.l.b16 %v2788
        %v3156 = vunpack.c.h.b16 %v2788
        %v3157 = vunpack.c.l.b16 %v2789
        %v3158 = vunpack.c.h.b16 %v2789
        %v3159 = vunpack.c.l.b16 %v2790
        %v3160 = vunpack.c.h.b16 %v2790
        %v3161 = vunpack.c.l.b16 %v2791
        %v3162 = vunpack.c.h.b16 %v2791
        %v3163 = vunpack.c.l.b16 %v2792
        %v3164 = vunpack.c.h.b16 %v2792
        %v3165 = vunpack.c.l.b16 %v2793
        %v3166 = vunpack.c.h.b16 %v2793
        %v3167 = vpack.c.b16 %v3153, %v3151
        %v3168 = vpack.c.b16 %v3154, %v3152
        %v3169 = vpack.c.b16 %v3157, %v3155
        %v3170 = vpack.c.b16 %v3158, %v3156
        %v3171 = vpack.c.b16 %v3161, %v3159
        %v3172 = vpack.c.b16 %v3162, %v3160
        %v3173 = vpack.c.b16 %v3165, %v3163
        %v3174 = vpack.c.b16 %v3166, %v3164
        %v3203 = vunpack.c.l.b16 %v2820
        %v3204 = vunpack.c.l.b16 %v2821
        %v3205 = vunpack.c.l.b16 %v2822
        %v3206 = vunpack.c.l.b16 %v2823
        %v3207 = vunpack.c.l.b16 %v2824
        %v3208 = vunpack.c.l.b16 %v2825
        %v3209 = vunpack.c.l.b16 %v2826
        %v3210 = vunpack.c.l.b16 %v2827
        %v3211 = vunpack.c.l.b16 %v2828
        %v3212 = vunpack.c.l.b16 %v2829
        %v3213 = vunpack.c.l.b16 %v2830
        %v3214 = vunpack.c.l.b16 %v2831
        %v3215 = vunpack.c.l.b16 %v2832
        %v3216 = vunpack.c.l.b16 %v2833
        %v3217 = vunpack.c.l.b16 %v2834
        %v3218 = vunpack.c.l.b16 %v2835
        %v3219 = vunpack.c.l.b16 %v2836
        %v3220 = vunpack.c.l.b16 %v2837
        %v3221 = vunpack.c.l.b16 %v2838
        %v3222 = vunpack.c.l.b16 %v2839
        %v3223 = vunpack.c.l.b16 %v2840
        %v3224 = vunpack.c.l.b16 %v2841
        %v3225 = vunpack.c.l.b16 %v2842
        %v3226 = vunpack.c.l.b16 %v2843
        %v3227 = vpack.c.b16 %v3204, %v3203
        %v3228 = vpack.c.b16 %v3206, %v3205
        %v3229 = vpack.c.b16 %v3208, %v3207
        %v3230 = vpack.c.b16 %v3210, %v3209
        %v3231 = vpack.c.b16 %v3212, %v3211
        %v3232 = vpack.c.b16 %v3214, %v3213
        %v3233 = vpack.c.b16 %v3216, %v3215
        %v3234 = vpack.c.b16 %v3218, %v3217
        %v3235 = vpack.c.b16 %v3220, %v3219
        %v3236 = vpack.c.b16 %v3222, %v3221
        %v3237 = vpack.c.b16 %v3224, %v3223
        %v3238 = vpack.c.b16 %v3226, %v3225
        %v3252 = vsel %vm753, %v3168, 0
        %v3255 = vsel %vm753, %v3170, 0
        %v3258 = vsel %vm753, %v3172, 0
        %v3261 = vsel %vm753, %v3174, 0
        %3263 = vmatpush.bf16.msra.mxu0 %v3234
        %3264 = vmatpush.bf16.msra.mxu0 %v3233
        %3265 = vmatpush.bf16.msra.mxu0 %v3232
        %3266 = vmatpush.bf16.msra.mxu0 %v3231
        %3267 = vmatpush.bf16.msra.mxu0 %v3230
        %3268 = vmatpush.bf16.msra.mxu0 %v3229
        %3269 = vmatpush.bf16.msra.mxu0 %v3228
        %3270 = vmatpush.bf16.msra.mxu0 %v3227
        %3271 = vmatmul.bf16.gmra.mxu0 %v3167
        %v3272 = vpop.f32.mrf.mxu0
        %v3273 = vadd.f32 %v3124, %v3272
        %v3274 = vpop.f32.mrf.mxu0
        %v3275 = vadd.f32 %v3126, %v3274
        %3276 = vmatmul.bf16.gmra.mxu0 %v3169
        %v3277 = vpop.f32.mrf.mxu0
        %v3278 = vadd.f32 %v3129, %v3277
        %v3279 = vpop.f32.mrf.mxu0
        %v3280 = vadd.f32 %v3131, %v3279
        %3281 = vmatmul.bf16.gmra.mxu0 %v3171
        %v3282 = vpop.f32.mrf.mxu0
        %v3283 = vadd.f32 %v3134, %v3282
        %v3284 = vpop.f32.mrf.mxu0
        %v3285 = vadd.f32 %v3136, %v3284
        %3286 = vmatmul.bf16.gmra.mxu0 %v3173
        %v3287 = vpop.f32.mrf.mxu0
        %v3288 = vadd.f32 %v3139, %v3287
        %v3289 = vpop.f32.mrf.mxu0
        %v3290 = vadd.f32 %v3141, %v3289
        %3291 = vdwg.mxu0
        %3292 = vmatpush.bf16.msra.mxu0 0
        %3293 = vmatpush.bf16.msra.mxu0 0
        %3294 = vmatpush.bf16.msra.mxu0 0
        %3295 = vmatpush.bf16.msra.mxu0 0
        %3296 = vmatpush.bf16.msra.mxu0 %v3238
        %3297 = vmatpush.bf16.msra.mxu0 %v3237
        %3298 = vmatpush.bf16.msra.mxu0 %v3236
        %3299 = vmatpush.bf16.msra.mxu0 %v3235
        %3300 = vmatmul.bf16.gmra.mxu0 %v3252
        %v3301 = vpop.f32.mrf.mxu0
        %v3302 = vadd.f32 %v3273, %v3301
        %v3303 = vpop.f32.mrf.mxu0
        %v3304 = vadd.f32 %v3275, %v3303
        %3305 = vmatmul.bf16.gmra.mxu0 %v3255
        %v3306 = vpop.f32.mrf.mxu0
        %v3307 = vadd.f32 %v3278, %v3306
        %v3308 = vpop.f32.mrf.mxu0
        %v3309 = vadd.f32 %v3280, %v3308
        %3310 = vmatmul.bf16.gmra.mxu0 %v3258
        %v3311 = vpop.f32.mrf.mxu0
        %v3312 = vadd.f32 %v3283, %v3311
        %v3313 = vpop.f32.mrf.mxu0
        %v3314 = vadd.f32 %v3285, %v3313
        %3315 = vmatmul.bf16.gmra.mxu0 %v3261
        %v3316 = vpop.f32.mrf.mxu0
        %v3317 = vadd.f32 %v3288, %v3316
        %v3318 = vpop.f32.mrf.mxu0
        %v3319 = vadd.f32 %v3290, %v3318
        %3320 = vdwg.mxu0
        %v3329 = vunpack.c.l.b16 %v2804
        %v3330 = vunpack.c.h.b16 %v2804
        %v3331 = vunpack.c.l.b16 %v2805
        %v3332 = vunpack.c.h.b16 %v2805
        %v3333 = vunpack.c.l.b16 %v2806
        %v3334 = vunpack.c.h.b16 %v2806
        %v3335 = vunpack.c.l.b16 %v2807
        %v3336 = vunpack.c.h.b16 %v2807
        %v3337 = vunpack.c.l.b16 %v2808
        %v3338 = vunpack.c.h.b16 %v2808
        %v3339 = vunpack.c.l.b16 %v2809
        %v3340 = vunpack.c.h.b16 %v2809
        %v3341 = vunpack.c.l.b16 %v2810
        %v3342 = vunpack.c.h.b16 %v2810
        %v3343 = vunpack.c.l.b16 %v2811
        %v3344 = vunpack.c.h.b16 %v2811
        %v3345 = vpack.c.b16 %v3331, %v3329
        %v3346 = vpack.c.b16 %v3332, %v3330
        %v3347 = vpack.c.b16 %v3335, %v3333
        %v3348 = vpack.c.b16 %v3336, %v3334
        %v3349 = vpack.c.b16 %v3339, %v3337
        %v3350 = vpack.c.b16 %v3340, %v3338
        %v3351 = vpack.c.b16 %v3343, %v3341
        %v3352 = vpack.c.b16 %v3344, %v3342
        %3357 = vrot.lane.b32.xlu0 %v2976, 96
        %v3358 = vpop.permute.xlu0 %3357
        %3359 = vrot.lane.b32.xlu0 %v2977, 96
        %v3360 = vpop.permute.xlu0 %3359
        %3361 = vrot.lane.b32.xlu0 %v2978, 96
        %v3362 = vpop.permute.xlu0 %3361
        %3363 = vrot.lane.b32.xlu0 %v2979, 96
        %v3364 = vpop.permute.xlu0 %3363
        %3365 = vrot.lane.b32.xlu0 %v2980, 96
        %v3366 = vpop.permute.xlu0 %3365
        %3367 = vrot.lane.b32.xlu0 %v2981, 96
        %v3368 = vpop.permute.xlu0 %3367
        %3369 = vrot.lane.b32.xlu0 %v2982, 96
        %v3370 = vpop.permute.xlu0 %3369
        %3371 = vrot.lane.b32.xlu0 %v2983, 96
        %v3372 = vpop.permute.xlu0 %3371
        %3373 = vrot.lane.b32.xlu0 %v2984, 96
        %v3374 = vpop.permute.xlu0 %3373
        %3375 = vrot.lane.b32.xlu0 %v2985, 96
        %v3376 = vpop.permute.xlu0 %3375
        %3377 = vrot.lane.b32.xlu0 %v2986, 96
        %v3378 = vpop.permute.xlu0 %3377
        %3379 = vrot.lane.b32.xlu0 %v2987, 96
        %v3380 = vpop.permute.xlu0 %3379
        %3381 = vrot.lane.b32.xlu0 %v2988, 96
        %v3382 = vpop.permute.xlu0 %3381
        %3383 = vrot.lane.b32.xlu0 %v2989, 96
        %v3384 = vpop.permute.xlu0 %3383
        %3385 = vrot.lane.b32.xlu0 %v2990, 96
        %v3386 = vpop.permute.xlu0 %3385
        %3387 = vrot.lane.b32.xlu0 %v2991, 96
        %v3388 = vpop.permute.xlu0 %3387
        %3389 = vrot.lane.b32.xlu0 %v2992, 96
        %v3390 = vpop.permute.xlu0 %3389
        %3391 = vrot.lane.b32.xlu0 %v2993, 96
        %v3392 = vpop.permute.xlu0 %3391
        %3393 = vrot.lane.b32.xlu0 %v2994, 96
        %v3394 = vpop.permute.xlu0 %3393
        %3395 = vrot.lane.b32.xlu0 %v2995, 96
        %v3396 = vpop.permute.xlu0 %3395
        %3397 = vrot.lane.b32.xlu0 %v2996, 96
        %v3398 = vpop.permute.xlu0 %3397
        %3399 = vrot.lane.b32.xlu0 %v2997, 96
        %v3400 = vpop.permute.xlu0 %3399
        %3401 = vrot.lane.b32.xlu0 %v2998, 96
        %v3402 = vpop.permute.xlu0 %3401
        %3403 = vrot.lane.b32.xlu0 %v2999, 96
        %v3404 = vpop.permute.xlu0 %3403
        %vm3405 = vcmask 785408
        %v3406 = vsel %vm3405, %v3358, %v3360
        %v3407 = vsel %vm3405, %v3362, %v3364
        %v3408 = vsel %vm3405, %v3366, %v3368
        %v3409 = vsel %vm3405, %v3370, %v3372
        %v3410 = vsel %vm3405, %v3374, %v3376
        %v3411 = vsel %vm3405, %v3378, %v3380
        %v3412 = vsel %vm3405, %v3382, %v3384
        %v3413 = vsel %vm3405, %v3386, %v3388
        %v3414 = vsel %vm3405, %v3390, %v3392
        %v3415 = vsel %vm3405, %v3394, %v3396
        %v3416 = vsel %vm3405, %v3398, %v3400
        %v3417 = vsel %vm3405, %v3402, %v3404
        %v3431 = vsel %vm753, %v3346, 0
        %v3434 = vsel %vm753, %v3348, 0
        %v3437 = vsel %vm753, %v3350, 0
        %v3440 = vsel %vm753, %v3352, 0
        %3442 = vmatpush.bf16.msra.mxu0 %v3413
        %3443 = vmatpush.bf16.msra.mxu0 %v3412
        %3444 = vmatpush.bf16.msra.mxu0 %v3411
        %3445 = vmatpush.bf16.msra.mxu0 %v3410
        %3446 = vmatpush.bf16.msra.mxu0 %v3409
        %3447 = vmatpush.bf16.msra.mxu0 %v3408
        %3448 = vmatpush.bf16.msra.mxu0 %v3407
        %3449 = vmatpush.bf16.msra.mxu0 %v3406
        %3450 = vmatmul.bf16.gmra.mxu0 %v3345
        %v3451 = vpop.f32.mrf.mxu0
        %v3452 = vadd.f32 0.0, %v3451
        %v3453 = vpop.f32.mrf.mxu0
        %v3454 = vadd.f32 0.0, %v3453
        %3455 = vmatmul.bf16.gmra.mxu0 %v3347
        %v3456 = vpop.f32.mrf.mxu0
        %v3457 = vadd.f32 0.0, %v3456
        %v3458 = vpop.f32.mrf.mxu0
        %v3459 = vadd.f32 0.0, %v3458
        %3460 = vmatmul.bf16.gmra.mxu0 %v3349
        %v3461 = vpop.f32.mrf.mxu0
        %v3462 = vadd.f32 0.0, %v3461
        %v3463 = vpop.f32.mrf.mxu0
        %v3464 = vadd.f32 0.0, %v3463
        %3465 = vmatmul.bf16.gmra.mxu0 %v3351
        %v3466 = vpop.f32.mrf.mxu0
        %v3467 = vadd.f32 0.0, %v3466
        %v3468 = vpop.f32.mrf.mxu0
        %v3469 = vadd.f32 0.0, %v3468
        %3470 = vdwg.mxu0
        %3471 = vmatpush.bf16.msra.mxu0 0
        %3472 = vmatpush.bf16.msra.mxu0 0
        %3473 = vmatpush.bf16.msra.mxu0 0
        %3474 = vmatpush.bf16.msra.mxu0 0
        %3475 = vmatpush.bf16.msra.mxu0 %v3417
        %3476 = vmatpush.bf16.msra.mxu0 %v3416
        %3477 = vmatpush.bf16.msra.mxu0 %v3415
        %3478 = vmatpush.bf16.msra.mxu0 %v3414
        %3479 = vmatmul.bf16.gmra.mxu0 %v3431
        %v3480 = vpop.f32.mrf.mxu0
        %v3481 = vadd.f32 %v3452, %v3480
        %v3482 = vpop.f32.mrf.mxu0
        %v3483 = vadd.f32 %v3454, %v3482
        %3484 = vmatmul.bf16.gmra.mxu0 %v3434
        %v3485 = vpop.f32.mrf.mxu0
        %v3486 = vadd.f32 %v3457, %v3485
        %v3487 = vpop.f32.mrf.mxu0
        %v3488 = vadd.f32 %v3459, %v3487
        %3489 = vmatmul.bf16.gmra.mxu0 %v3437
        %v3490 = vpop.f32.mrf.mxu0
        %v3491 = vadd.f32 %v3462, %v3490
        %v3492 = vpop.f32.mrf.mxu0
        %v3493 = vadd.f32 %v3464, %v3492
        %3494 = vmatmul.bf16.gmra.mxu0 %v3440
        %v3495 = vpop.f32.mrf.mxu0
        %v3496 = vadd.f32 %v3467, %v3495
        %v3497 = vpop.f32.mrf.mxu0
        %v3498 = vadd.f32 %v3469, %v3497
        %3499 = vdwg.mxu0
        %v3500 = vadd.f32 %v3302, %v3481
        %v3501 = vadd.f32 %v3304, %v3483
        %v3502 = vadd.f32 %v3307, %v3486
        %v3503 = vadd.f32 %v3309, %v3488
        %v3504 = vadd.f32 %v3312, %v3491
        %v3505 = vadd.f32 %v3314, %v3493
        %v3506 = vadd.f32 %v3317, %v3496
        %v3507 = vadd.f32 %v3319, %v3498
        %3509 = vset.pattern.permute.xlu0 0
        %3510 = vperm.xlu0 %3509, %v2812
        %v3511 = vpop.permute.xlu0 %3510
        %3514 = vset.pattern.permute.xlu0 0
        %3515 = vperm.xlu0 %3514, %v2813
        %v3516 = vpop.permute.xlu0 %3515
        %3519 = vset.pattern.permute.xlu0 0
        %3520 = vperm.xlu0 %3519, %v2814
        %v3521 = vpop.permute.xlu0 %3520
        %3524 = vset.pattern.permute.xlu0 0
        %3525 = vperm.xlu0 %3524, %v2815
        %v3526 = vpop.permute.xlu0 %3525
        %3529 = vset.pattern.permute.xlu0 0
        %3530 = vperm.xlu0 %3529, %v2816
        %v3531 = vpop.permute.xlu0 %3530
        %3534 = vset.pattern.permute.xlu0 0
        %3535 = vperm.xlu0 %3534, %v2817
        %v3536 = vpop.permute.xlu0 %3535
        %3539 = vset.pattern.permute.xlu0 0
        %3540 = vperm.xlu0 %3539, %v2818
        %v3541 = vpop.permute.xlu0 %3540
        %3544 = vset.pattern.permute.xlu0 0
        %3545 = vperm.xlu0 %3544, %v2819
        %v3546 = vpop.permute.xlu0 %3545
        %v3548 = vadd.f32 %v3500, %v3511
        %v3549 = vadd.f32 %v3501, %v3516
        %v3550 = vadd.f32 %v3502, %v3521
        %v3551 = vadd.f32 %v3503, %v3526
        %v3552 = vadd.f32 %v3504, %v3531
        %v3553 = vadd.f32 %v3505, %v3536
        %v3554 = vadd.f32 %v3506, %v3541
        %v3555 = vadd.f32 %v3507, %v3546
        %vm3556 = vcmp.ge.f32.partialorder %v3548, 0.0
        %vm3557 = vcmp.ge.f32.partialorder %v3549, 0.0
        %vm3558 = vcmp.ge.f32.partialorder %v3550, 0.0
        %vm3559 = vcmp.ge.f32.partialorder %v3551, 0.0
        %vm3560 = vcmp.ge.f32.partialorder %v3552, 0.0
        %vm3561 = vcmp.ge.f32.partialorder %v3553, 0.0
        %vm3562 = vcmp.ge.f32.partialorder %v3554, 0.0
        %vm3563 = vcmp.ge.f32.partialorder %v3555, 0.0
        %v3564 = vmul.f32 %v3548, 0.1
        %v3565 = vmul.f32 %v3549, 0.1
        %v3566 = vmul.f32 %v3550, 0.1
        %v3567 = vmul.f32 %v3551, 0.1
        %v3568 = vmul.f32 %v3552, 0.1
        %v3569 = vmul.f32 %v3553, 0.1
        %v3570 = vmul.f32 %v3554, 0.1
        %v3571 = vmul.f32 %v3555, 0.1
        %v3572 = vsel %vm3556, %v3548, %v3564
        %v3573 = vsel %vm3557, %v3549, %v3565
        %v3574 = vsel %vm3558, %v3550, %v3566
        %v3575 = vsel %vm3559, %v3551, %v3567
        %v3576 = vsel %vm3560, %v3552, %v3568
        %v3577 = vsel %vm3561, %v3553, %v3569
        %v3578 = vsel %vm3562, %v3554, %v3570
        %v3579 = vsel %vm3563, %v3555, %v3571
        %3580 = vst [vmem:[%s609] sm:$0xff] %v3572
        %3581 = vst [vmem:[%s609 + $0x10] sm:$0xff] %v3573
        %3582 = vst [vmem:[%s609 + $0x20] sm:$0xff] %v3574
        %3583 = vst [vmem:[%s609 + $0x30] sm:$0xff] %v3575
        %3584 = vst [vmem:[%s609 + $0x40] sm:$0xff] %v3576
        %3585 = vst [vmem:[%s609 + $0x50] sm:$0xff] %v3577
        %3586 = vst [vmem:[%s609 + $0x60] sm:$0xff] %v3578
        %3587 = vst [vmem:[%s609 + $0x70] sm:$0xff] %v3579
        %v3588 = vld [vmem:[#allocation2 + $0x4] sm:$0xf]
        %v3589 = vld [vmem:[#allocation2 + $0x10] sm:$0xf]
        %v3590 = vld [vmem:[#allocation2 + $0x1c] sm:$0xf]
        %v3591 = vld [vmem:[#allocation2 + $0x28] sm:$0xf]
        %v3592 = vld [vmem:[#allocation2 + $0x34] sm:$0xf]
        %v3593 = vld [vmem:[#allocation2 + $0x40] sm:$0xf]
        %v3594 = vld [vmem:[#allocation2 + $0x4c] sm:$0xf]
        %v3595 = vld [vmem:[#allocation2 + $0x58] sm:$0xf]
        %v3596 = vld [vmem:[#allocation2 + $0x64] sm:$0xf]
        %v3597 = vld [vmem:[#allocation2 + $0x70] sm:$0xf]
        %v3598 = vld [vmem:[#allocation2 + $0x7c] sm:$0xf]
        %v3599 = vld [vmem:[#allocation2 + $0x88] sm:$0xf]
        %v3600 = vld [vmem:[#allocation2 + $0x94] sm:$0xf]
        %v3601 = vld [vmem:[#allocation2 + $0xa0] sm:$0xf]
        %v3602 = vld [vmem:[#allocation2 + $0xac] sm:$0xf]
        %v3603 = vld [vmem:[#allocation2 + $0xb8] sm:$0xf]
        %v3604 = vld [vmem:[#allocation2 + $0xc4] sm:$0xf]
        %v3605 = vld [vmem:[#allocation2 + $0xd0] sm:$0xf]
        %v3606 = vld [vmem:[#allocation2 + $0xdc] sm:$0xf]
        %v3607 = vld [vmem:[#allocation2 + $0xe8] sm:$0xf]
        %v3608 = vld [vmem:[#allocation2 + $0xf4] sm:$0xf]
        %v3609 = vld [vmem:[#allocation2 + $0x100] sm:$0xf]
        %v3610 = vld [vmem:[#allocation2 + $0x10c] sm:$0xf]
        %v3611 = vld [vmem:[#allocation2 + $0x118] sm:$0xf]
        %v3612 = vld [vmem:[#allocation2 + $0x4] sm:$0xff]
        %v3613 = vld [vmem:[#allocation2 + $0x10] sm:$0xff]
        %v3614 = vld [vmem:[#allocation2 + $0x1c] sm:$0xff]
        %v3615 = vld [vmem:[#allocation2 + $0x28] sm:$0xff]
        %v3616 = vld [vmem:[#allocation2 + $0x34] sm:$0xff]
        %v3617 = vld [vmem:[#allocation2 + $0x40] sm:$0xff]
        %v3618 = vld [vmem:[#allocation2 + $0x4c] sm:$0xff]
        %v3619 = vld [vmem:[#allocation2 + $0x58] sm:$0xff]
        %v3620 = vld [vmem:[#allocation2 + $0x64] sm:$0xff]
        %v3621 = vld [vmem:[#allocation2 + $0x70] sm:$0xff]
        %v3622 = vld [vmem:[#allocation2 + $0x7c] sm:$0xff]
        %v3623 = vld [vmem:[#allocation2 + $0x88] sm:$0xff]
        %v3624 = vld [vmem:[#allocation2 + $0x94] sm:$0xff]
        %v3625 = vld [vmem:[#allocation2 + $0xa0] sm:$0xff]
        %v3626 = vld [vmem:[#allocation2 + $0xac] sm:$0xff]
        %v3627 = vld [vmem:[#allocation2 + $0xb8] sm:$0xff]
        %v3628 = vld [vmem:[#allocation2 + $0xc4] sm:$0xff]
        %v3629 = vld [vmem:[#allocation2 + $0xd0] sm:$0xff]
        %v3630 = vld [vmem:[#allocation2 + $0xdc] sm:$0xff]
        %v3631 = vld [vmem:[#allocation2 + $0xe8] sm:$0xff]
        %v3632 = vld [vmem:[#allocation2 + $0xf4] sm:$0xff]
        %v3633 = vld [vmem:[#allocation2 + $0x100] sm:$0xff]
        %v3634 = vld [vmem:[#allocation2 + $0x10c] sm:$0xff]
        %v3635 = vld [vmem:[#allocation2 + $0x118] sm:$0xff]
        %v3660 = vunpack.c.l.b16 %v3612
        %v3661 = vunpack.c.h.b16 %v3612
        %v3662 = vunpack.c.l.b16 %v3613
        %v3663 = vunpack.c.h.b16 %v3613
        %v3664 = vunpack.c.l.b16 %v3614
        %v3665 = vunpack.c.h.b16 %v3614
        %v3666 = vunpack.c.l.b16 %v3615
        %v3667 = vunpack.c.h.b16 %v3615
        %v3668 = vunpack.c.l.b16 %v3616
        %v3669 = vunpack.c.h.b16 %v3616
        %v3670 = vunpack.c.l.b16 %v3617
        %v3671 = vunpack.c.h.b16 %v3617
        %v3672 = vunpack.c.l.b16 %v3618
        %v3673 = vunpack.c.h.b16 %v3618
        %v3674 = vunpack.c.l.b16 %v3619
        %v3675 = vunpack.c.h.b16 %v3619
        %v3676 = vunpack.c.l.b16 %v3620
        %v3677 = vunpack.c.h.b16 %v3620
        %v3678 = vunpack.c.l.b16 %v3621
        %v3679 = vunpack.c.h.b16 %v3621
        %v3680 = vunpack.c.l.b16 %v3622
        %v3681 = vunpack.c.h.b16 %v3622
        %v3682 = vunpack.c.l.b16 %v3623
        %v3683 = vunpack.c.h.b16 %v3623
        %v3684 = vunpack.c.l.b16 %v3624
        %v3685 = vunpack.c.h.b16 %v3624
        %v3686 = vunpack.c.l.b16 %v3625
        %v3687 = vunpack.c.h.b16 %v3625
        %v3688 = vunpack.c.l.b16 %v3626
        %v3689 = vunpack.c.h.b16 %v3626
        %v3690 = vunpack.c.l.b16 %v3627
        %v3691 = vunpack.c.h.b16 %v3627
        %v3692 = vunpack.c.l.b16 %v3628
        %v3693 = vunpack.c.h.b16 %v3628
        %v3694 = vunpack.c.l.b16 %v3629
        %v3695 = vunpack.c.h.b16 %v3629
        %v3696 = vunpack.c.l.b16 %v3630
        %v3697 = vunpack.c.h.b16 %v3630
        %v3698 = vunpack.c.l.b16 %v3631
        %v3699 = vunpack.c.h.b16 %v3631
        %v3700 = vunpack.c.l.b16 %v3632
        %v3701 = vunpack.c.h.b16 %v3632
        %v3702 = vunpack.c.l.b16 %v3633
        %v3703 = vunpack.c.h.b16 %v3633
        %v3704 = vunpack.c.l.b16 %v3634
        %v3705 = vunpack.c.h.b16 %v3634
        %v3706 = vunpack.c.l.b16 %v3635
        %v3707 = vunpack.c.h.b16 %v3635
        %v3708 = vpack.c.b16 %v3662, %v3660
        %v3709 = vpack.c.b16 %v3663, %v3661
        %v3710 = vpack.c.b16 %v3666, %v3664
        %v3711 = vpack.c.b16 %v3667, %v3665
        %v3712 = vpack.c.b16 %v3670, %v3668
        %v3713 = vpack.c.b16 %v3671, %v3669
        %v3714 = vpack.c.b16 %v3674, %v3672
        %v3715 = vpack.c.b16 %v3675, %v3673
        %v3716 = vpack.c.b16 %v3678, %v3676
        %v3717 = vpack.c.b16 %v3679, %v3677
        %v3718 = vpack.c.b16 %v3682, %v3680
        %v3719 = vpack.c.b16 %v3683, %v3681
        %v3720 = vpack.c.b16 %v3686, %v3684
        %v3721 = vpack.c.b16 %v3687, %v3685
        %v3722 = vpack.c.b16 %v3690, %v3688
        %v3723 = vpack.c.b16 %v3691, %v3689
        %v3724 = vpack.c.b16 %v3694, %v3692
        %v3725 = vpack.c.b16 %v3695, %v3693
        %v3726 = vpack.c.b16 %v3698, %v3696
        %v3727 = vpack.c.b16 %v3699, %v3697
        %v3728 = vpack.c.b16 %v3702, %v3700
        %v3729 = vpack.c.b16 %v3703, %v3701
        %v3730 = vpack.c.b16 %v3706, %v3704
        %v3731 = vpack.c.b16 %v3707, %v3705
        %3732 = vrot.lane.b32.xlu0 %v3708, 112
        %v3733 = vpop.permute.xlu0 %3732
        %3734 = vrot.lane.b32.xlu0 %v3709, 112
        %v3735 = vpop.permute.xlu0 %3734
        %3736 = vrot.lane.b32.xlu0 %v3710, 112
        %v3737 = vpop.permute.xlu0 %3736
        %3738 = vrot.lane.b32.xlu0 %v3711, 112
        %v3739 = vpop.permute.xlu0 %3738
        %3740 = vrot.lane.b32.xlu0 %v3712, 112
        %v3741 = vpop.permute.xlu0 %3740
        %3742 = vrot.lane.b32.xlu0 %v3713, 112
        %v3743 = vpop.permute.xlu0 %3742
        %3744 = vrot.lane.b32.xlu0 %v3714, 112
        %v3745 = vpop.permute.xlu0 %3744
        %3746 = vrot.lane.b32.xlu0 %v3715, 112
        %v3747 = vpop.permute.xlu0 %3746
        %3748 = vrot.lane.b32.xlu0 %v3716, 112
        %v3749 = vpop.permute.xlu0 %3748
        %3750 = vrot.lane.b32.xlu0 %v3717, 112
        %v3751 = vpop.permute.xlu0 %3750
        %3752 = vrot.lane.b32.xlu0 %v3718, 112
        %v3753 = vpop.permute.xlu0 %3752
        %3754 = vrot.lane.b32.xlu0 %v3719, 112
        %v3755 = vpop.permute.xlu0 %3754
        %3756 = vrot.lane.b32.xlu0 %v3720, 112
        %v3757 = vpop.permute.xlu0 %3756
        %3758 = vrot.lane.b32.xlu0 %v3721, 112
        %v3759 = vpop.permute.xlu0 %3758
        %3760 = vrot.lane.b32.xlu0 %v3722, 112
        %v3761 = vpop.permute.xlu0 %3760
        %3762 = vrot.lane.b32.xlu0 %v3723, 112
        %v3763 = vpop.permute.xlu0 %3762
        %3764 = vrot.lane.b32.xlu0 %v3724, 112
        %v3765 = vpop.permute.xlu0 %3764
        %3766 = vrot.lane.b32.xlu0 %v3725, 112
        %v3767 = vpop.permute.xlu0 %3766
        %3768 = vrot.lane.b32.xlu0 %v3726, 112
        %v3769 = vpop.permute.xlu0 %3768
        %3770 = vrot.lane.b32.xlu0 %v3727, 112
        %v3771 = vpop.permute.xlu0 %3770
        %3772 = vrot.lane.b32.xlu0 %v3728, 112
        %v3773 = vpop.permute.xlu0 %3772
        %3774 = vrot.lane.b32.xlu0 %v3729, 112
        %v3775 = vpop.permute.xlu0 %3774
        %3776 = vrot.lane.b32.xlu0 %v3730, 112
        %v3777 = vpop.permute.xlu0 %3776
        %3778 = vrot.lane.b32.xlu0 %v3731, 112
        %v3779 = vpop.permute.xlu0 %3778
        %v3780 = vsel %vm3048, %v3733, %v3735
        %v3781 = vsel %vm3048, %v3737, %v3739
        %v3782 = vsel %vm3048, %v3741, %v3743
        %v3783 = vsel %vm3048, %v3745, %v3747
        %v3784 = vsel %vm3048, %v3749, %v3751
        %v3785 = vsel %vm3048, %v3753, %v3755
        %v3786 = vsel %vm3048, %v3757, %v3759
        %v3787 = vsel %vm3048, %v3761, %v3763
        %v3788 = vsel %vm3048, %v3765, %v3767
        %v3789 = vsel %vm3048, %v3769, %v3771
        %v3790 = vsel %vm3048, %v3773, %v3775
        %v3791 = vsel %vm3048, %v3777, %v3779
        %3804 = vmatpush.bf16.msra.mxu0 %v3787
        %3805 = vmatpush.bf16.msra.mxu0 %v3786
        %3806 = vmatpush.bf16.msra.mxu0 %v3785
        %3807 = vmatpush.bf16.msra.mxu0 %v3784
        %3808 = vmatpush.bf16.msra.mxu0 %v3783
        %3809 = vmatpush.bf16.msra.mxu0 %v3782
        %3810 = vmatpush.bf16.msra.mxu0 %v3781
        %3811 = vmatpush.bf16.msra.mxu0 %v3780
        %3812 = vmatmul.bf16.gmra.mxu0 %v2892
        %v3813 = vpop.f32.mrf.mxu0
        %v3814 = vadd.f32 0.0, %v3813
        %v3815 = vpop.f32.mrf.mxu0
        %v3816 = vadd.f32 0.0, %v3815
        %3817 = vmatmul.bf16.gmra.mxu0 %v2894
        %v3818 = vpop.f32.mrf.mxu0
        %v3819 = vadd.f32 0.0, %v3818
        %v3820 = vpop.f32.mrf.mxu0
        %v3821 = vadd.f32 0.0, %v3820
        %3822 = vmatmul.bf16.gmra.mxu0 %v2896
        %v3823 = vpop.f32.mrf.mxu0
        %v3824 = vadd.f32 0.0, %v3823
        %v3825 = vpop.f32.mrf.mxu0
        %v3826 = vadd.f32 0.0, %v3825
        %3827 = vmatmul.bf16.gmra.mxu0 %v2898
        %v3828 = vpop.f32.mrf.mxu0
        %v3829 = vadd.f32 0.0, %v3828
        %v3830 = vpop.f32.mrf.mxu0
        %v3831 = vadd.f32 0.0, %v3830
        %3832 = vdwg.mxu0
        %3833 = vmatpush.bf16.msra.mxu0 0
        %3834 = vmatpush.bf16.msra.mxu0 0
        %3835 = vmatpush.bf16.msra.mxu0 0
        %3836 = vmatpush.bf16.msra.mxu0 0
        %3837 = vmatpush.bf16.msra.mxu0 %v3791
        %3838 = vmatpush.bf16.msra.mxu0 %v3790
        %3839 = vmatpush.bf16.msra.mxu0 %v3789
        %3840 = vmatpush.bf16.msra.mxu0 %v3788
        %3841 = vmatmul.bf16.gmra.mxu0 %v3074
        %v3842 = vpop.f32.mrf.mxu0
        %v3843 = vadd.f32 %v3814, %v3842
        %v3844 = vpop.f32.mrf.mxu0
        %v3845 = vadd.f32 %v3816, %v3844
        %3846 = vmatmul.bf16.gmra.mxu0 %v3077
        %v3847 = vpop.f32.mrf.mxu0
        %v3848 = vadd.f32 %v3819, %v3847
        %v3849 = vpop.f32.mrf.mxu0
        %v3850 = vadd.f32 %v3821, %v3849
        %3851 = vmatmul.bf16.gmra.mxu0 %v3080
        %v3852 = vpop.f32.mrf.mxu0
        %v3853 = vadd.f32 %v3824, %v3852
        %v3854 = vpop.f32.mrf.mxu0
        %v3855 = vadd.f32 %v3826, %v3854
        %3856 = vmatmul.bf16.gmra.mxu0 %v3083
        %v3857 = vpop.f32.mrf.mxu0
        %v3858 = vadd.f32 %v3829, %v3857
        %v3859 = vpop.f32.mrf.mxu0
        %v3860 = vadd.f32 %v3831, %v3859
        %3861 = vdwg.mxu0
        %v3886 = vunpack.c.l.b16 %v3588
        %v3887 = vunpack.c.l.b16 %v3589
        %v3888 = vunpack.c.l.b16 %v3590
        %v3889 = vunpack.c.l.b16 %v3591
        %v3890 = vunpack.c.l.b16 %v3592
        %v3891 = vunpack.c.l.b16 %v3593
        %v3892 = vunpack.c.l.b16 %v3594
        %v3893 = vunpack.c.l.b16 %v3595
        %v3894 = vunpack.c.l.b16 %v3596
        %v3895 = vunpack.c.l.b16 %v3597
        %v3896 = vunpack.c.l.b16 %v3598
        %v3897 = vunpack.c.l.b16 %v3599
        %v3898 = vunpack.c.l.b16 %v3600
        %v3899 = vunpack.c.l.b16 %v3601
        %v3900 = vunpack.c.l.b16 %v3602
        %v3901 = vunpack.c.l.b16 %v3603
        %v3902 = vunpack.c.l.b16 %v3604
        %v3903 = vunpack.c.l.b16 %v3605
        %v3904 = vunpack.c.l.b16 %v3606
        %v3905 = vunpack.c.l.b16 %v3607
        %v3906 = vunpack.c.l.b16 %v3608
        %v3907 = vunpack.c.l.b16 %v3609
        %v3908 = vunpack.c.l.b16 %v3610
        %v3909 = vunpack.c.l.b16 %v3611
        %v3910 = vpack.c.b16 %v3887, %v3886
        %v3911 = vpack.c.b16 %v3889, %v3888
        %v3912 = vpack.c.b16 %v3891, %v3890
        %v3913 = vpack.c.b16 %v3893, %v3892
        %v3914 = vpack.c.b16 %v3895, %v3894
        %v3915 = vpack.c.b16 %v3897, %v3896
        %v3916 = vpack.c.b16 %v3899, %v3898
        %v3917 = vpack.c.b16 %v3901, %v3900
        %v3918 = vpack.c.b16 %v3903, %v3902
        %v3919 = vpack.c.b16 %v3905, %v3904
        %v3920 = vpack.c.b16 %v3907, %v3906
        %v3921 = vpack.c.b16 %v3909, %v3908
        %3934 = vmatpush.bf16.msra.mxu0 %v3917
        %3935 = vmatpush.bf16.msra.mxu0 %v3916
        %3936 = vmatpush.bf16.msra.mxu0 %v3915
        %3937 = vmatpush.bf16.msra.mxu0 %v3914
        %3938 = vmatpush.bf16.msra.mxu0 %v3913
        %3939 = vmatpush.bf16.msra.mxu0 %v3912
        %3940 = vmatpush.bf16.msra.mxu0 %v3911
        %3941 = vmatpush.bf16.msra.mxu0 %v3910
        %3942 = vmatmul.bf16.gmra.mxu0 %v3167
        %v3943 = vpop.f32.mrf.mxu0
        %v3944 = vadd.f32 %v3843, %v3943
        %v3945 = vpop.f32.mrf.mxu0
        %v3946 = vadd.f32 %v3845, %v3945
        %3947 = vmatmul.bf16.gmra.mxu0 %v3169
        %v3948 = vpop.f32.mrf.mxu0
        %v3949 = vadd.f32 %v3848, %v3948
        %v3950 = vpop.f32.mrf.mxu0
        %v3951 = vadd.f32 %v3850, %v3950
        %3952 = vmatmul.bf16.gmra.mxu0 %v3171
        %v3953 = vpop.f32.mrf.mxu0
        %v3954 = vadd.f32 %v3853, %v3953
        %v3955 = vpop.f32.mrf.mxu0
        %v3956 = vadd.f32 %v3855, %v3955
        %3957 = vmatmul.bf16.gmra.mxu0 %v3173
        %v3958 = vpop.f32.mrf.mxu0
        %v3959 = vadd.f32 %v3858, %v3958
        %v3960 = vpop.f32.mrf.mxu0
        %v3961 = vadd.f32 %v3860, %v3960
        %3962 = vdwg.mxu0
        %3963 = vmatpush.bf16.msra.mxu0 0
        %3964 = vmatpush.bf16.msra.mxu0 0
        %3965 = vmatpush.bf16.msra.mxu0 0
        %3966 = vmatpush.bf16.msra.mxu0 0
        %3967 = vmatpush.bf16.msra.mxu0 %v3921
        %3968 = vmatpush.bf16.msra.mxu0 %v3920
        %3969 = vmatpush.bf16.msra.mxu0 %v3919
        %3970 = vmatpush.bf16.msra.mxu0 %v3918
        %3971 = vmatmul.bf16.gmra.mxu0 %v3252
        %v3972 = vpop.f32.mrf.mxu0
        %v3973 = vadd.f32 %v3944, %v3972
        %v3974 = vpop.f32.mrf.mxu0
        %v3975 = vadd.f32 %v3946, %v3974
        %3976 = vmatmul.bf16.gmra.mxu0 %v3255
        %v3977 = vpop.f32.mrf.mxu0
        %v3978 = vadd.f32 %v3949, %v3977
        %v3979 = vpop.f32.mrf.mxu0
        %v3980 = vadd.f32 %v3951, %v3979
        %3981 = vmatmul.bf16.gmra.mxu0 %v3258
        %v3982 = vpop.f32.mrf.mxu0
        %v3983 = vadd.f32 %v3954, %v3982
        %v3984 = vpop.f32.mrf.mxu0
        %v3985 = vadd.f32 %v3956, %v3984
        %3986 = vmatmul.bf16.gmra.mxu0 %v3261
        %v3987 = vpop.f32.mrf.mxu0
        %v3988 = vadd.f32 %v3959, %v3987
        %v3989 = vpop.f32.mrf.mxu0
        %v3990 = vadd.f32 %v3961, %v3989
        %3991 = vdwg.mxu0
        %3992 = vrot.lane.b32.xlu0 %v3708, 96
        %v3993 = vpop.permute.xlu0 %3992
        %3994 = vrot.lane.b32.xlu0 %v3709, 96
        %v3995 = vpop.permute.xlu0 %3994
        %3996 = vrot.lane.b32.xlu0 %v3710, 96
        %v3997 = vpop.permute.xlu0 %3996
        %3998 = vrot.lane.b32.xlu0 %v3711, 96
        %v3999 = vpop.permute.xlu0 %3998
        %4000 = vrot.lane.b32.xlu0 %v3712, 96
        %v4001 = vpop.permute.xlu0 %4000
        %4002 = vrot.lane.b32.xlu0 %v3713, 96
        %v4003 = vpop.permute.xlu0 %4002
        %4004 = vrot.lane.b32.xlu0 %v3714, 96
        %v4005 = vpop.permute.xlu0 %4004
        %4006 = vrot.lane.b32.xlu0 %v3715, 96
        %v4007 = vpop.permute.xlu0 %4006
        %4008 = vrot.lane.b32.xlu0 %v3716, 96
        %v4009 = vpop.permute.xlu0 %4008
        %4010 = vrot.lane.b32.xlu0 %v3717, 96
        %v4011 = vpop.permute.xlu0 %4010
        %4012 = vrot.lane.b32.xlu0 %v3718, 96
        %v4013 = vpop.permute.xlu0 %4012
        %4014 = vrot.lane.b32.xlu0 %v3719, 96
        %v4015 = vpop.permute.xlu0 %4014
        %4016 = vrot.lane.b32.xlu0 %v3720, 96
        %v4017 = vpop.permute.xlu0 %4016
        %4018 = vrot.lane.b32.xlu0 %v3721, 96
        %v4019 = vpop.permute.xlu0 %4018
        %4020 = vrot.lane.b32.xlu0 %v3722, 96
        %v4021 = vpop.permute.xlu0 %4020
        %4022 = vrot.lane.b32.xlu0 %v3723, 96
        %v4023 = vpop.permute.xlu0 %4022
        %4024 = vrot.lane.b32.xlu0 %v3724, 96
        %v4025 = vpop.permute.xlu0 %4024
        %4026 = vrot.lane.b32.xlu0 %v3725, 96
        %v4027 = vpop.permute.xlu0 %4026
        %4028 = vrot.lane.b32.xlu0 %v3726, 96
        %v4029 = vpop.permute.xlu0 %4028
        %4030 = vrot.lane.b32.xlu0 %v3727, 96
        %v4031 = vpop.permute.xlu0 %4030
        %4032 = vrot.lane.b32.xlu0 %v3728, 96
        %v4033 = vpop.permute.xlu0 %4032
        %4034 = vrot.lane.b32.xlu0 %v3729, 96
        %v4035 = vpop.permute.xlu0 %4034
        %4036 = vrot.lane.b32.xlu0 %v3730, 96
        %v4037 = vpop.permute.xlu0 %4036
        %4038 = vrot.lane.b32.xlu0 %v3731, 96
        %v4039 = vpop.permute.xlu0 %4038
        %v4040 = vsel %vm3405, %v3993, %v3995
        %v4041 = vsel %vm3405, %v3997, %v3999
        %v4042 = vsel %vm3405, %v4001, %v4003
        %v4043 = vsel %vm3405, %v4005, %v4007
        %v4044 = vsel %vm3405, %v4009, %v4011
        %v4045 = vsel %vm3405, %v4013, %v4015
        %v4046 = vsel %vm3405, %v4017, %v4019
        %v4047 = vsel %vm3405, %v4021, %v4023
        %v4048 = vsel %vm3405, %v4025, %v4027
        %v4049 = vsel %vm3405, %v4029, %v4031
        %v4050 = vsel %vm3405, %v4033, %v4035
        %v4051 = vsel %vm3405, %v4037, %v4039
        %4064 = vmatpush.bf16.msra.mxu0 %v4047
        %4065 = vmatpush.bf16.msra.mxu0 %v4046
        %4066 = vmatpush.bf16.msra.mxu0 %v4045
        %4067 = vmatpush.bf16.msra.mxu0 %v4044
        %4068 = vmatpush.bf16.msra.mxu0 %v4043
        %4069 = vmatpush.bf16.msra.mxu0 %v4042
        %4070 = vmatpush.bf16.msra.mxu0 %v4041
        %4071 = vmatpush.bf16.msra.mxu0 %v4040
        %4072 = vmatmul.bf16.gmra.mxu0 %v3345
        %v4073 = vpop.f32.mrf.mxu0
        %v4074 = vadd.f32 0.0, %v4073
        %v4075 = vpop.f32.mrf.mxu0
        %v4076 = vadd.f32 0.0, %v4075
        %4077 = vmatmul.bf16.gmra.mxu0 %v3347
        %v4078 = vpop.f32.mrf.mxu0
        %v4079 = vadd.f32 0.0, %v4078
        %v4080 = vpop.f32.mrf.mxu0
        %v4081 = vadd.f32 0.0, %v4080
        %4082 = vmatmul.bf16.gmra.mxu0 %v3349
        %v4083 = vpop.f32.mrf.mxu0
        %v4084 = vadd.f32 0.0, %v4083
        %v4085 = vpop.f32.mrf.mxu0
        %v4086 = vadd.f32 0.0, %v4085
        %4087 = vmatmul.bf16.gmra.mxu0 %v3351
        %v4088 = vpop.f32.mrf.mxu0
        %v4089 = vadd.f32 0.0, %v4088
        %v4090 = vpop.f32.mrf.mxu0
        %v4091 = vadd.f32 0.0, %v4090
        %4092 = vdwg.mxu0
        %4093 = vmatpush.bf16.msra.mxu0 0
        %4094 = vmatpush.bf16.msra.mxu0 0
        %4095 = vmatpush.bf16.msra.mxu0 0
        %4096 = vmatpush.bf16.msra.mxu0 0
        %4097 = vmatpush.bf16.msra.mxu0 %v4051
        %4098 = vmatpush.bf16.msra.mxu0 %v4050
        %4099 = vmatpush.bf16.msra.mxu0 %v4049
        %4100 = vmatpush.bf16.msra.mxu0 %v4048
        %4101 = vmatmul.bf16.gmra.mxu0 %v3431
        %v4102 = vpop.f32.mrf.mxu0
        %v4103 = vadd.f32 %v4074, %v4102
        %v4104 = vpop.f32.mrf.mxu0
        %v4105 = vadd.f32 %v4076, %v4104
        %4106 = vmatmul.bf16.gmra.mxu0 %v3434
        %v4107 = vpop.f32.mrf.mxu0
        %v4108 = vadd.f32 %v4079, %v4107
        %v4109 = vpop.f32.mrf.mxu0
        %v4110 = vadd.f32 %v4081, %v4109
        %4111 = vmatmul.bf16.gmra.mxu0 %v3437
        %v4112 = vpop.f32.mrf.mxu0
        %v4113 = vadd.f32 %v4084, %v4112
        %v4114 = vpop.f32.mrf.mxu0
        %v4115 = vadd.f32 %v4086, %v4114
        %4116 = vmatmul.bf16.gmra.mxu0 %v3440
        %v4117 = vpop.f32.mrf.mxu0
        %v4118 = vadd.f32 %v4089, %v4117
        %v4119 = vpop.f32.mrf.mxu0
        %v4120 = vadd.f32 %v4091, %v4119
        %4121 = vdwg.mxu0
        %v4122 = vadd.f32 %v3973, %v4103
        %v4123 = vadd.f32 %v3975, %v4105
        %v4124 = vadd.f32 %v3978, %v4108
        %v4125 = vadd.f32 %v3980, %v4110
        %v4126 = vadd.f32 %v3983, %v4113
        %v4127 = vadd.f32 %v3985, %v4115
        %v4128 = vadd.f32 %v3988, %v4118
        %v4129 = vadd.f32 %v3990, %v4120
        %v4130 = vadd.f32 %v4122, %v3511
        %v4131 = vadd.f32 %v4123, %v3516
        %v4132 = vadd.f32 %v4124, %v3521
        %v4133 = vadd.f32 %v4125, %v3526
        %v4134 = vadd.f32 %v4126, %v3531
        %v4135 = vadd.f32 %v4127, %v3536
        %v4136 = vadd.f32 %v4128, %v3541
        %v4137 = vadd.f32 %v4129, %v3546
        %vm4138 = vcmp.ge.f32.partialorder %v4130, 0.0
        %vm4139 = vcmp.ge.f32.partialorder %v4131, 0.0
        %vm4140 = vcmp.ge.f32.partialorder %v4132, 0.0
        %vm4141 = vcmp.ge.f32.partialorder %v4133, 0.0
        %vm4142 = vcmp.ge.f32.partialorder %v4134, 0.0
        %vm4143 = vcmp.ge.f32.partialorder %v4135, 0.0
        %vm4144 = vcmp.ge.f32.partialorder %v4136, 0.0
        %vm4145 = vcmp.ge.f32.partialorder %v4137, 0.0
        %v4146 = vmul.f32 %v4130, 0.1
        %v4147 = vmul.f32 %v4131, 0.1
        %v4148 = vmul.f32 %v4132, 0.1
        %v4149 = vmul.f32 %v4133, 0.1
        %v4150 = vmul.f32 %v4134, 0.1
        %v4151 = vmul.f32 %v4135, 0.1
        %v4152 = vmul.f32 %v4136, 0.1
        %v4153 = vmul.f32 %v4137, 0.1
        %v4154 = vsel %vm4138, %v4130, %v4146
        %v4155 = vsel %vm4139, %v4131, %v4147
        %v4156 = vsel %vm4140, %v4132, %v4148
        %v4157 = vsel %vm4141, %v4133, %v4149
        %v4158 = vsel %vm4142, %v4134, %v4150
        %v4159 = vsel %vm4143, %v4135, %v4151
        %v4160 = vsel %vm4144, %v4136, %v4152
        %v4161 = vsel %vm4145, %v4137, %v4153
        %4162 = vst [vmem:[%s609 + $0x8] sm:$0xff] %v4154
        %4163 = vst [vmem:[%s609 + $0x18] sm:$0xff] %v4155
        %4164 = vst [vmem:[%s609 + $0x28] sm:$0xff] %v4156
        %4165 = vst [vmem:[%s609 + $0x38] sm:$0xff] %v4157
        %4166 = vst [vmem:[%s609 + $0x48] sm:$0xff] %v4158
        %4167 = vst [vmem:[%s609 + $0x58] sm:$0xff] %v4159
        %4168 = vst [vmem:[%s609 + $0x68] sm:$0xff] %v4160
        %4169 = vst [vmem:[%s609 + $0x78] sm:$0xff] %v4161
        %s4170 = sand.u32 %s375, 1
        %s4171 = scalar_lea.sflag [#allocation7], %s4170
        %s4172 = sand.u32 %s375, 1
        %s4173 = smul.addr %s4172, 128
        %s4174 = scalar_lea.vmem [#allocation10], %s4173
        %s4175 = sand.u32 %s401, 1
        %s4176 = scalar_lea.sflag [#allocation12], %s4175
        %s4177 = sand.u32 %s401, 1
        %s4178 = smul.addr %s4177, 64
        %s4179 = scalar_lea.vmem [#allocation11], %s4178
        %p4180 = scmp.lt.s32.totalorder %s37, 1
        %s4181 = scalar_select %p4180, %s37, 1
        %s4182 = smul.addr %s4181, 8
        %s4183 = smul.addr %s4182, 8
        %s4184 = scalar_lea.vmem %s17, %s4183
        // Predicated region
        $region89: #{tpu_custom_call.1} parent=79 // pred_check
          %p4185 = pneg %p385
        $region90: #{tpu_custom_call.1} parent=79 // pred_check_branch
          %4187 = sbr.rel (%p4185) target = $region92
        $region91: #{tpu_custom_call.1} parent=79 // pred_region
          %4189 = vsyncadd %s4171, 0
          %s4190 = smul.addr %s37, 16
          %s4191 = smul.addr %s4190, 8
          %s4192 = scalar_lea.hbm %s15, %s4191
          %s4193 = sshll.u32 %s4174, 4
          %s4194 = int_to_ptr.vmem [resolvable:$true] %s4193
          %s4195 = sshll.u32 %s4192, 4
          %s4196 = int_to_ptr.hbm [resolvable:$true] %s4195
          %4201 = dma.vmem_to_hbm [thread:$0]  %s4194, 2048, %s4196, %s4171, 256, 256, 16
        $region92: #{tpu_custom_call.1} parent=79 // pred_fallthru
          _
        // Predicated region
        $region93: #{tpu_custom_call.1} parent=79 // pred_check
          %p4202 = pneg %p411
        $region94: #{tpu_custom_call.1} parent=79 // pred_check_branch
          %4204 = sbr.rel (%p4202) target = $region96
        $region95: #{tpu_custom_call.1} parent=79 // pred_region
          %4206 = vsyncadd %s4176, 0
          %s4207 = smul.addr %s37, 8
          %s4208 = smul.addr %s4207, 8
          %s4209 = scalar_lea.hbm %s16, %s4208
          %s4210 = sshll.u32 %s4179, 4
          %s4211 = int_to_ptr.vmem [resolvable:$true] %s4210
          %s4212 = sshll.u32 %s4209, 4
          %s4213 = int_to_ptr.hbm [resolvable:$true] %s4212
          %4218 = dma.vmem_to_hbm [thread:$0]  %s4211, 1024, %s4213, %s4176, 128, 128, 8
        $region96: #{tpu_custom_call.1} parent=79 // pred_fallthru
          _
        // Predicated region
        $region97: #{tpu_custom_call.1} parent=79 // pred_check
          %p4219 = pneg %p437
        $region98: #{tpu_custom_call.1} parent=79 // pred_check_branch
          %4221 = sbr.rel (%p4219) target = $region100
        $region99: #{tpu_custom_call.1} parent=79 // pred_region
          _
        $region100: #{tpu_custom_call.1} parent=79 // pred_fallthru
          _
      $region80: #{tpu_custom_call.1} parent=5 // pred_fallthru
        _
      %p4222 = scmp.le.s32.totalorder 2, %s32
      // Predicated region
      $region101: #{tpu_custom_call.1} parent=5 // pred_check
        %p4223 = pneg %p4222
      $region102: #{tpu_custom_call.1} parent=5 // pred_check_branch
        %4225 = sbr.rel (%p4223) target = $region104
      $region103: #{tpu_custom_call.1} parent=5 // pred_region
        %s4226 = ssub.s32 %s32, 2
        // Predicated region
        $region105: #{tpu_custom_call.1} parent=103 // pred_check
          %p4227 = pneg %p391
        $region106: #{tpu_custom_call.1} parent=103 // pred_check_branch
          %4229 = sbr.rel (%p4227) target = $region108
        $region107: #{tpu_custom_call.1} parent=103 // pred_region
          %s4230 = sand.u32 %s376, 1
          %s4231 = scalar_lea.sflag [#allocation7], %s4230
          %s4232 = sand.u32 %s376, 1
          %s4233 = smul.addr %s4232, 128
          %s4234 = scalar_lea.vmem [#allocation10], %s4233
          %4236 = dma.done %s4231, 2048
        $region108: #{tpu_custom_call.1} parent=103 // pred_fallthru
          _
        // Predicated region
        $region109: #{tpu_custom_call.1} parent=103 // pred_check
          %p4237 = pneg %p417
        $region110: #{tpu_custom_call.1} parent=103 // pred_check_branch
          %4239 = sbr.rel (%p4237) target = $region112
        $region111: #{tpu_custom_call.1} parent=103 // pred_region
          %s4240 = sand.u32 %s402, 1
          %s4241 = scalar_lea.sflag [#allocation12], %s4240
          %s4242 = sand.u32 %s402, 1
          %s4243 = smul.addr %s4242, 64
          %s4244 = scalar_lea.vmem [#allocation11], %s4243
          %4246 = dma.done %s4241, 1024
        $region112: #{tpu_custom_call.1} parent=103 // pred_fallthru
          _
        // Predicated region
        $region113: #{tpu_custom_call.1} parent=103 // pred_check
          %p4247 = pneg %p443
        $region114: #{tpu_custom_call.1} parent=103 // pred_check_branch
          %4249 = sbr.rel (%p4247) target = $region116
        $region115: #{tpu_custom_call.1} parent=103 // pred_region
          %p4250 = scmp.lt.s32.totalorder %s38, 1
          %s4251 = scalar_select %p4250, %s38, 1
          %s4252 = smul.addr %s4251, 8
          %s4253 = smul.addr %s4252, 8
          %s4254 = scalar_lea.vmem %s17, %s4253
        $region116: #{tpu_custom_call.1} parent=103 // pred_fallthru
          _
      $region104: #{tpu_custom_call.1} parent=5 // pred_fallthru
        _
    $region6: #{tpu_custom_call.1} parent=1 // loop_footer
      %s36 = sadd.s32 1, %s32
    $region7: #{tpu_custom_call.1} parent=1 // loop_footer_branch
      %31 = sbr.rel target = $region3
    $region8: #{tpu_custom_call.1} parent=1 // loop_exit
      _
    %4255 = vsyncpa [#allocation6], 1
    %s4256 = scalar_lea.sflag [#allocation6], 1
    %4257 = vsyncpa %s4256, 1
    %4258 = vsyncpa [#allocation9], 1
    %4259 = vsyncpa [#allocation7], 1
    %s4260 = scalar_lea.sflag [#allocation7], 1
    %4261 = vsyncpa %s4260, 1
    %4262 = vsyncpa [#allocation12], 1
    %s4263 = scalar_lea.sflag [#allocation12], 1
    %4264 = vsyncpa %s4263, 1

// kernel: tpu_custom_call.1
$region0: #{tpu_custom_call.1}
  #allocation0 [shape = 'u32[]', space=smem, size = 0x4, offset = 0x4, fixed_abs, tag = 'smem constant byte address 0x4 - core index']
  #allocation1 [shape = 'u32[72,128]{1,0:T(1,128)}', space=vmem, size = 0x9000, scoped, tag = 'internal scratch']
  #allocation2 [shape = 'bf16[192,288]{1,0:T(8,128)(2,1)}', space=vmem, size = 0x24000, scoped, tag = 'scratch operand']
  #allocation3 [shape = 'bf16[64,16]{1,0:T(8,128)(2,1)}', space=vmem, size = 0x4000, scoped, tag = 'scratch operand']
  #allocation4 [shape = 'bf16[64,64]{1,0:T(8,128)(2,1)}', space=vmem, size = 0x4000, scoped, tag = 'scratch operand']
  %s0 = inlined_call_operand.vmem [shape: bf16[2,16,256], index: 0, kind: input, shape index: {}]
  %s1 = inlined_call_operand.vmem [shape: bf16[2,32,64], index: 1, kind: input, shape index: {}]
  %s2 = inlined_call_operand.vmem [shape: bf16[2,64,16], index: 2, kind: input, shape index: {}]
  %s3 = inlined_call_operand.vmem [shape: bf16[64,16], index: 3, kind: input, shape index: {}]
  %s4 = inlined_call_operand.vmem [shape: f32[64,1], index: 4, kind: input, shape index: {}]
  %s5 = inlined_call_operand.vmem [shape: bf16[64,32], index: 5, kind: input, shape index: {}]
  %s6 = inlined_call_operand.vmem [shape: f32[64,1], index: 6, kind: input, shape index: {}]
  %s7 = inlined_call_operand.vmem [shape: bf16[64,64], index: 7, kind: input, shape index: {}]
  %s8 = inlined_call_operand.vmem [shape: f32[64,1], index: 8, kind: input, shape index: {}]
  %s9 = inlined_call_operand.hbm [shape: bf16[3,64,192], index: 9, kind: input, shape index: {}]
  %s10 = inlined_call_operand.vmem [shape: f32[64,1], index: 10, kind: input, shape index: {}]
  %s11 = inlined_call_operand.hbm [shape: bf16[3,64,192], index: 11, kind: input, shape index: {}]
  %s12 = inlined_call_operand.vmem [shape: f32[64,1], index: 12, kind: input, shape index: {}]
  %s13 = inlined_call_operand.vmem [shape: bf16[16,64], index: 13, kind: input, shape index: {}]
  %s14 = inlined_call_operand.vmem [shape: bf16[32,128], index: 14, kind: input, shape index: {}]
  %s15 = inlined_call_operand.hbm [shape: f32[2,64,256], index: 15, kind: output, shape index: {0}]
  %s16 = inlined_call_operand.hbm [shape: f32[2,64,64], index: 16, kind: output, shape index: {1}]
  %s17 = inlined_call_operand.vmem [shape: f32[2,64,16], index: 17, kind: output, shape index: {2}]
  %18 = xla_tuple %s15, %s16, %s17
  %s19 = sld [smem:[#allocation0]]
  $region117: #{tpu_custom_call.1} parent=0
    _
  %s21 = ssub.s32 1, %s19
  %s22 = scalar_select 0, %s21, %s19
  $region1: #{tpu_custom_call.1} parent=0
    #allocation5 [shape = 'u8[98304]{0}', space=vmem, size = 0x18000, scoped, tag = 'input window, operand 9, single buffered']
    #allocation6 [shape = 's32[2]{0}', space=sflag, size = 0x8, scoped, tag = 'scoped memory for tpu_custom_call.1']
    #allocation7 [shape = 's32[2]{0}', space=sflag, size = 0x8, scoped, tag = 'scoped memory for tpu_custom_call.1']
    #allocation8 [shape = 'u8[98304]{0}', space=vmem, size = 0x18000, scoped, tag = 'input window, operand 11, single buffered']
    #allocation9 [shape = 's32[1]{0}', space=sflag, size = 0x4, scoped, tag = 'scoped memory for tpu_custom_call.1']
    #allocation10 [shape = 'u8[131072]{0}', space=vmem, size = 0x20000, scoped, tag = 'output window, operand 0']
    #allocation11 [shape = 'u8[65536]{0}', space=vmem, size = 0x10000, scoped, tag = 'output window, operand 1']
    #allocation12 [shape = 's32[2]{0}', space=sflag, size = 0x8, scoped, tag = 'scoped memory for tpu_custom_call.1']
    %23 = vsyncpa [#allocation6], 0
    %24 = vsyncpa [#allocation9], 0
    %25 = vsyncpa [#allocation7], 0
    %s26 = scalar_lea.sflag [#allocation7], 1
    %27 = vsyncpa %s26, 0
    %28 = vsyncpa [#allocation12], 0
    %s29 = scalar_lea.sflag [#allocation12], 1
    %30 = vsyncpa %s29, 0
    loop: start=0, step=1, limit=4
    $region2: #{tpu_custom_call.1} parent=1 // loop_pre_header
      _
    $region3: #{tpu_custom_call.1} parent=1 // loop_header
      %s32 = sphi 0, %s36
      %p33 = scmp.ge.s32.totalorder %s32, 4
      %s42 = sphi 0, %s44
      %s45 = sphi 0, %s42
      %s46 = sphi 0, %s45
      %s62 = sphi 0, %s46
      %s68 = sphi 0, %s70
      %s71 = sphi 0, %s68
      %s72 = sphi 0, %s71
      %s88 = sphi 0, %s72
      %s94 = sphi 0, %s96
      %s97 = sphi 0, %s94
      %s98 = sphi 0, %s97
      %s114 = sphi 0, %s98
      %s118 = sphi 0, %s118
      %s120 = sphi 0, %s118
      %s121 = sphi 0, %s120
      %s135 = sphi 0, %s121
      %s139 = sphi 0, %s139
      %s141 = sphi 0, %s139
      %s142 = sphi 0, %s141
      %s156 = sphi 0, %s142
      %s160 = sphi 0, %s160
      %s162 = sphi 0, %s160
      %s163 = sphi 0, %s162
      %s177 = sphi 0, %s163
      %s181 = sphi 0, %s181
      %s183 = sphi 0, %s181
      %s184 = sphi 0, %s183
      %s198 = sphi 0, %s184
      %s202 = sphi 0, %s202
      %s204 = sphi 0, %s202
      %s205 = sphi 0, %s204
      %s219 = sphi 0, %s205
      %s223 = sphi 0, %s223
      %s225 = sphi 0, %s223
      %s226 = sphi 0, %s225
      %s240 = sphi 0, %s226
      %s244 = sphi 0, %s244
      %s246 = sphi 0, %s244
      %s247 = sphi 0, %s246
      %s261 = sphi 0, %s247
      %s265 = sphi 0, %s265
      %s267 = sphi 0, %s265
      %s268 = sphi 0, %s267
      %s282 = sphi 0, %s268
      %s286 = sphi 0, %s286
      %s288 = sphi 0, %s286
      %s289 = sphi 0, %s288
      %s303 = sphi 0, %s289
      %s307 = sphi 0, %s307
      %s309 = sphi 0, %s307
      %s310 = sphi 0, %s309
      %s324 = sphi 0, %s310
      %s328 = sphi 0, %s328
      %s330 = sphi 0, %s328
      %s331 = sphi 0, %s330
      %s345 = sphi 0, %s331
      %s349 = sphi 0, %s349
      %s351 = sphi 0, %s349
      %s352 = sphi 0, %s351
      %s366 = sphi 0, %s352
      %s372 = sphi 0, %s374
      %s375 = sphi 0, %s372
      %s376 = sphi 0, %s375
      %s392 = sphi 0, %s376
      %s398 = sphi 0, %s400
      %s401 = sphi 0, %s398
      %s402 = sphi 0, %s401
      %s418 = sphi 0, %s402
      %s424 = sphi 0, %s426
      %s427 = sphi 0, %s424
      %s428 = sphi 0, %s427
      %s444 = sphi 0, %s428
    $region4: #{tpu_custom_call.1} parent=1 // loop_header_branch
      %35 = sbr.rel (%p33) target = $region8
    $region5: #{tpu_custom_call.1} parent=1 // loop_body
      %s37 = ssub.s32 %s32, 1
      %s38 = ssub.s32 %s32, 2
      %s39 = sadd.s32 %s32, 1
      %s40 = ssub.s32 %s32, %s39
      %p41 = scmp.eq.s32.totalorder %s40, 0
      %s43 = sadd.s32 %s42, 1
      %s44 = scalar_select %p41, %s42, %s43
      %p47 = pneg %p41
      %p48 = scmp.eq.s32.totalorder %s32, 1
      %p49 = por %p47, %p48
      %p50 = scmp.ne.s32.totalorder %s42, %s45
      %p51 = scmp.eq.s32.totalorder %s32, 0
      %p52 = por %p50, %p51
      %p53 = scmp.ne.s32.totalorder %s42, %s45
      %p54 = scmp.eq.s32.totalorder %s37, 1
      %p55 = por %p53, %p54
      %p56 = scmp.ne.s32.totalorder %s45, %s46
      %p57 = scmp.eq.s32.totalorder %s37, 0
      %p58 = por %p56, %p57
      %p59 = scmp.ne.s32.totalorder %s45, %s46
      %p60 = scmp.eq.s32.totalorder %s38, 1
      %p61 = por %p59, %p60
      %p63 = scmp.ne.s32.totalorder %s46, %s62
      %p64 = scmp.eq.s32.totalorder %s38, 0
      %p65 = por %p63, %p64
      %s66 = ssub.s32 %s32, %s39
      %p67 = scmp.eq.s32.totalorder %s66, 0
      %s69 = sadd.s32 %s68, 1
      %s70 = scalar_select %p67, %s68, %s69
      %p73 = pneg %p67
      %p74 = scmp.eq.s32.totalorder %s32, 1
      %p75 = por %p73, %p74
      %p76 = scmp.ne.s32.totalorder %s68, %s71
      %p77 = scmp.eq.s32.totalorder %s32, 0
      %p78 = por %p76, %p77
      %p79 = scmp.ne.s32.totalorder %s68, %s71
      %p80 = scmp.eq.s32.totalorder %s37, 1
      %p81 = por %p79, %p80
      %p82 = scmp.ne.s32.totalorder %s71, %s72
      %p83 = scmp.eq.s32.totalorder %s37, 0
      %p84 = por %p82, %p83
      %p85 = scmp.ne.s32.totalorder %s71, %s72
      %p86 = scmp.eq.s32.totalorder %s38, 1
      %p87 = por %p85, %p86
      %p89 = scmp.ne.s32.totalorder %s72, %s88
      %p90 = scmp.eq.s32.totalorder %s38, 0
      %p91 = por %p89, %p90
      %s92 = ssub.s32 %s32, %s39
      %p93 = scmp.eq.s32.totalorder %s92, 0
      %s95 = sadd.s32 %s94, 1
      %s96 = scalar_select %p93, %s94, %s95
      %p99 = pneg %p93
      %p100 = scmp.eq.s32.totalorder %s32, 1
      %p101 = por %p99, %p100
      %p102 = scmp.ne.s32.totalorder %s94, %s97
      %p103 = scmp.eq.s32.totalorder %s32, 0
      %p104 = por %p102, %p103
      %p105 = scmp.ne.s32.totalorder %s94, %s97
      %p106 = scmp.eq.s32.totalorder %s37, 1
      %p107 = por %p105, %p106
      %p108 = scmp.ne.s32.totalorder %s97, %s98
      %p109 = scmp.eq.s32.totalorder %s37, 0
      %p110 = por %p108, %p109
      %p111 = scmp.ne.s32.totalorder %s97, %s98
      %p112 = scmp.eq.s32.totalorder %s38, 1
      %p113 = por %p111, %p112
      %p115 = scmp.ne.s32.totalorder %s98, %s114
      %p116 = scmp.eq.s32.totalorder %s38, 0
      %p117 = por %p115, %p116
      %s119 = sadd.s32 %s118, 1
      %p122 = scmp.eq.s32.totalorder %s32, 1
      %p123 = scmp.ne.s32.totalorder %s118, %s120
      %p124 = scmp.eq.s32.totalorder %s32, 0
      %p125 = por %p123, %p124
      %p126 = scmp.ne.s32.totalorder %s118, %s120
      %p127 = scmp.eq.s32.totalorder %s37, 1
      %p128 = por %p126, %p127
      %p129 = scmp.ne.s32.totalorder %s120, %s121
      %p130 = scmp.eq.s32.totalorder %s37, 0
      %p131 = por %p129, %p130
      %p132 = scmp.ne.s32.totalorder %s120, %s121
      %p133 = scmp.eq.s32.totalorder %s38, 1
      %p134 = por %p132, %p133
      %p136 = scmp.ne.s32.totalorder %s121, %s135
      %p137 = scmp.eq.s32.totalorder %s38, 0
      %p138 = por %p136, %p137
      %s140 = sadd.s32 %s139, 1
      %p143 = scmp.eq.s32.totalorder %s32, 1
      %p144 = scmp.ne.s32.totalorder %s139, %s141
      %p145 = scmp.eq.s32.totalorder %s32, 0
      %p146 = por %p144, %p145
      %p147 = scmp.ne.s32.totalorder %s139, %s141
      %p148 = scmp.eq.s32.totalorder %s37, 1
      %p149 = por %p147, %p148
      %p150 = scmp.ne.s32.totalorder %s141, %s142
      %p151 = scmp.eq.s32.totalorder %s37, 0
      %p152 = por %p150, %p151
      %p153 = scmp.ne.s32.totalorder %s141, %s142
      %p154 = scmp.eq.s32.totalorder %s38, 1
      %p155 = por %p153, %p154
      %p157 = scmp.ne.s32.totalorder %s142, %s156
      %p158 = scmp.eq.s32.totalorder %s38, 0
      %p159 = por %p157, %p158
      %s161 = sadd.s32 %s160, 1
      %p164 = scmp.eq.s32.totalorder %s32, 1
      %p165 = scmp.ne.s32.totalorder %s160, %s162
      %p166 = scmp.eq.s32.totalorder %s32, 0
      %p167 = por %p165, %p166
      %p168 = scmp.ne.s32.totalorder %s160, %s162
      %p169 = scmp.eq.s32.totalorder %s37, 1
      %p170 = por %p168, %p169
      %p171 = scmp.ne.s32.totalorder %s162, %s163
      %p172 = scmp.eq.s32.totalorder %s37, 0
      %p173 = por %p171, %p172
      %p174 = scmp.ne.s32.totalorder %s162, %s163
      %p175 = scmp.eq.s32.totalorder %s38, 1
      %p176 = por %p174, %p175
      %p178 = scmp.ne.s32.totalorder %s163, %s177
      %p179 = scmp.eq.s32.totalorder %s38, 0
      %p180 = por %p178, %p179
      %s182 = sadd.s32 %s181, 1
      %p185 = scmp.eq.s32.totalorder %s32, 1
      %p186 = scmp.ne.s32.totalorder %s181, %s183
      %p187 = scmp.eq.s32.totalorder %s32, 0
      %p188 = por %p186, %p187
      %p189 = scmp.ne.s32.totalorder %s181, %s183
      %p190 = scmp.eq.s32.totalorder %s37, 1
      %p191 = por %p189, %p190
      %p192 = scmp.ne.s32.totalorder %s183, %s184
      %p193 = scmp.eq.s32.totalorder %s37, 0
      %p194 = por %p192, %p193
      %p195 = scmp.ne.s32.totalorder %s183, %s184
      %p196 = scmp.eq.s32.totalorder %s38, 1
      %p197 = por %p195, %p196
      %p199 = scmp.ne.s32.totalorder %s184, %s198
      %p200 = scmp.eq.s32.totalorder %s38, 0
      %p201 = por %p199, %p200
      %s203 = sadd.s32 %s202, 1
      %p206 = scmp.eq.s32.totalorder %s32, 1
      %p207 = scmp.ne.s32.totalorder %s202, %s204
      %p208 = scmp.eq.s32.totalorder %s32, 0
      %p209 = por %p207, %p208
      %p210 = scmp.ne.s32.totalorder %s202, %s204
      %p211 = scmp.eq.s32.totalorder %s37, 1
      %p212 = por %p210, %p211
      %p213 = scmp.ne.s32.totalorder %s204, %s205
      %p214 = scmp.eq.s32.totalorder %s37, 0
      %p215 = por %p213, %p214
      %p216 = scmp.ne.s32.totalorder %s204, %s205
      %p217 = scmp.eq.s32.totalorder %s38, 1
      %p218 = por %p216, %p217
      %p220 = scmp.ne.s32.totalorder %s205, %s219
      %p221 = scmp.eq.s32.totalorder %s38, 0
      %p222 = por %p220, %p221
      %s224 = sadd.s32 %s223, 1
      %p227 = scmp.eq.s32.totalorder %s32, 1
      %p228 = scmp.ne.s32.totalorder %s223, %s225
      %p229 = scmp.eq.s32.totalorder %s32, 0
      %p230 = por %p228, %p229
      %p231 = scmp.ne.s32.totalorder %s223, %s225
      %p232 = scmp.eq.s32.totalorder %s37, 1
      %p233 = por %p231, %p232
      %p234 = scmp.ne.s32.totalorder %s225, %s226
      %p235 = scmp.eq.s32.totalorder %s37, 0
      %p236 = por %p234, %p235
      %p237 = scmp.ne.s32.totalorder %s225, %s226
      %p238 = scmp.eq.s32.totalorder %s38, 1
      %p239 = por %p237, %p238
      %p241 = scmp.ne.s32.totalorder %s226, %s240
      %p242 = scmp.eq.s32.totalorder %s38, 0
      %p243 = por %p241, %p242
      %s245 = sadd.s32 %s244, 1
      %p248 = scmp.eq.s32.totalorder %s32, 1
      %p249 = scmp.ne.s32.totalorder %s244, %s246
      %p250 = scmp.eq.s32.totalorder %s32, 0
      %p251 = por %p249, %p250
      %p252 = scmp.ne.s32.totalorder %s244, %s246
      %p253 = scmp.eq.s32.totalorder %s37, 1
      %p254 = por %p252, %p253
      %p255 = scmp.ne.s32.totalorder %s246, %s247
      %p256 = scmp.eq.s32.totalorder %s37, 0
      %p257 = por %p255, %p256
      %p258 = scmp.ne.s32.totalorder %s246, %s247
      %p259 = scmp.eq.s32.totalorder %s38, 1
      %p260 = por %p258, %p259
      %p262 = scmp.ne.s32.totalorder %s247, %s261
      %p263 = scmp.eq.s32.totalorder %s38, 0
      %p264 = por %p262, %p263
      %s266 = sadd.s32 %s265, 1
      %p269 = scmp.eq.s32.totalorder %s32, 1
      %p270 = scmp.ne.s32.totalorder %s265, %s267
      %p271 = scmp.eq.s32.totalorder %s32, 0
      %p272 = por %p270, %p271
      %p273 = scmp.ne.s32.totalorder %s265, %s267
      %p274 = scmp.eq.s32.totalorder %s37, 1
      %p275 = por %p273, %p274
      %p276 = scmp.ne.s32.totalorder %s267, %s268
      %p277 = scmp.eq.s32.totalorder %s37, 0
      %p278 = por %p276, %p277
      %p279 = scmp.ne.s32.totalorder %s267, %s268
      %p280 = scmp.eq.s32.totalorder %s38, 1
      %p281 = por %p279, %p280
      %p283 = scmp.ne.s32.totalorder %s268, %s282
      %p284 = scmp.eq.s32.totalorder %s38, 0
      %p285 = por %p283, %p284
      %s287 = sadd.s32 %s286, 1
      %p290 = scmp.eq.s32.totalorder %s32, 1
      %p291 = scmp.ne.s32.totalorder %s286, %s288
      %p292 = scmp.eq.s32.totalorder %s32, 0
      %p293 = por %p291, %p292
      %p294 = scmp.ne.s32.totalorder %s286, %s288
      %p295 = scmp.eq.s32.totalorder %s37, 1
      %p296 = por %p294, %p295
      %p297 = scmp.ne.s32.totalorder %s288, %s289
      %p298 = scmp.eq.s32.totalorder %s37, 0
      %p299 = por %p297, %p298
      %p300 = scmp.ne.s32.totalorder %s288, %s289
      %p301 = scmp.eq.s32.totalorder %s38, 1
      %p302 = por %p300, %p301
      %p304 = scmp.ne.s32.totalorder %s289, %s303
      %p305 = scmp.eq.s32.totalorder %s38, 0
      %p306 = por %p304, %p305
      %s308 = sadd.s32 %s307, 1
      %p311 = scmp.eq.s32.totalorder %s32, 1
      %p312 = scmp.ne.s32.totalorder %s307, %s309
      %p313 = scmp.eq.s32.totalorder %s32, 0
      %p314 = por %p312, %p313
      %p315 = scmp.ne.s32.totalorder %s307, %s309
      %p316 = scmp.eq.s32.totalorder %s37, 1
      %p317 = por %p315, %p316
      %p318 = scmp.ne.s32.totalorder %s309, %s310
      %p319 = scmp.eq.s32.totalorder %s37, 0
      %p320 = por %p318, %p319
      %p321 = scmp.ne.s32.totalorder %s309, %s310
      %p322 = scmp.eq.s32.totalorder %s38, 1
      %p323 = por %p321, %p322
      %p325 = scmp.ne.s32.totalorder %s310, %s324
      %p326 = scmp.eq.s32.totalorder %s38, 0
      %p327 = por %p325, %p326
      %s329 = sadd.s32 %s328, 1
      %p332 = scmp.eq.s32.totalorder %s32, 1
      %p333 = scmp.ne.s32.totalorder %s328, %s330
      %p334 = scmp.eq.s32.totalorder %s32, 0
      %p335 = por %p333, %p334
      %p336 = scmp.ne.s32.totalorder %s328, %s330
      %p337 = scmp.eq.s32.totalorder %s37, 1
      %p338 = por %p336, %p337
      %p339 = scmp.ne.s32.totalorder %s330, %s331
      %p340 = scmp.eq.s32.totalorder %s37, 0
      %p341 = por %p339, %p340
      %p342 = scmp.ne.s32.totalorder %s330, %s331
      %p343 = scmp.eq.s32.totalorder %s38, 1
      %p344 = por %p342, %p343
      %p346 = scmp.ne.s32.totalorder %s331, %s345
      %p347 = scmp.eq.s32.totalorder %s38, 0
      %p348 = por %p346, %p347
      %s350 = sadd.s32 %s349, 1
      %p353 = scmp.eq.s32.totalorder %s32, 1
      %p354 = scmp.ne.s32.totalorder %s349, %s351
      %p355 = scmp.eq.s32.totalorder %s32, 0
      %p356 = por %p354, %p355
      %p357 = scmp.ne.s32.totalorder %s349, %s351
      %p358 = scmp.eq.s32.totalorder %s37, 1
      %p359 = por %p357, %p358
      %p360 = scmp.ne.s32.totalorder %s351, %s352
      %p361 = scmp.eq.s32.totalorder %s37, 0
      %p362 = por %p360, %p361
      %p363 = scmp.ne.s32.totalorder %s351, %s352
      %p364 = scmp.eq.s32.totalorder %s38, 1
      %p365 = por %p363, %p364
      %p367 = scmp.ne.s32.totalorder %s352, %s366
      %p368 = scmp.eq.s32.totalorder %s38, 0
      %p369 = por %p367, %p368
      %s370 = ssub.s32 %s32, %s39
      %p371 = scmp.eq.s32.totalorder %s370, 0
      %s373 = sadd.s32 %s372, 1
      %s374 = scalar_select %p371, %s372, %s373
      %p377 = pneg %p371
      %p378 = scmp.eq.s32.totalorder %s32, 1
      %p379 = por %p377, %p378
      %p380 = scmp.ne.s32.totalorder %s372, %s375
      %p381 = scmp.eq.s32.totalorder %s32, 0
      %p382 = por %p380, %p381
      %p383 = scmp.ne.s32.totalorder %s372, %s375
      %p384 = scmp.eq.s32.totalorder %s37, 1
      %p385 = por %p383, %p384
      %p386 = scmp.ne.s32.totalorder %s375, %s376
      %p387 = scmp.eq.s32.totalorder %s37, 0
      %p388 = por %p386, %p387
      %p389 = scmp.ne.s32.totalorder %s375, %s376
      %p390 = scmp.eq.s32.totalorder %s38, 1
      %p391 = por %p389, %p390
      %p393 = scmp.ne.s32.totalorder %s376, %s392
      %p394 = scmp.eq.s32.totalorder %s38, 0
      %p395 = por %p393, %p394
      %s396 = ssub.s32 %s32, %s39
      %p397 = scmp.eq.s32.totalorder %s396, 0
      %s399 = sadd.s32 %s398, 1
      %s400 = scalar_select %p397, %s398, %s399
      %p403 = pneg %p397
      %p404 = scmp.eq.s32.totalorder %s32, 1
      %p405 = por %p403, %p404
      %p406 = scmp.ne.s32.totalorder %s398, %s401
      %p407 = scmp.eq.s32.totalorder %s32, 0
      %p408 = por %p406, %p407
      %p409 = scmp.ne.s32.totalorder %s398, %s401
      %p410 = scmp.eq.s32.totalorder %s37, 1
      %p411 = por %p409, %p410
      %p412 = scmp.ne.s32.totalorder %s401, %s402
      %p413 = scmp.eq.s32.totalorder %s37, 0
      %p414 = por %p412, %p413
      %p415 = scmp.ne.s32.totalorder %s401, %s402
      %p416 = scmp.eq.s32.totalorder %s38, 1
      %p417 = por %p415, %p416
      %p419 = scmp.ne.s32.totalorder %s402, %s418
      %p420 = scmp.eq.s32.totalorder %s38, 0
      %p421 = por %p419, %p420
      %s422 = ssub.s32 %s32, %s39
      %p423 = scmp.eq.s32.totalorder %s422, 0
      %s425 = sadd.s32 %s424, 1
      %s426 = scalar_select %p423, %s424, %s425
      %p429 = pneg %p423
      %p430 = scmp.eq.s32.totalorder %s32, 1
      %p431 = por %p429, %p430
      %p432 = scmp.ne.s32.totalorder %s424, %s427
      %p433 = scmp.eq.s32.totalorder %s32, 0
      %p434 = por %p432, %p433
      %p435 = scmp.ne.s32.totalorder %s424, %s427
      %p436 = scmp.eq.s32.totalorder %s37, 1
      %p437 = por %p435, %p436
      %p438 = scmp.ne.s32.totalorder %s427, %s428
      %p439 = scmp.eq.s32.totalorder %s37, 0
      %p440 = por %p438, %p439
      %p441 = scmp.ne.s32.totalorder %s427, %s428
      %p442 = scmp.eq.s32.totalorder %s38, 1
      %p443 = por %p441, %p442
      %p445 = scmp.ne.s32.totalorder %s428, %s444
      %p446 = scmp.eq.s32.totalorder %s38, 0
      %p447 = por %p445, %p446
      %p448 = scmp.le.s32.totalorder 1, %s32
      %p449 = scmp.lt.s32.totalorder %s32, 3
      %p450 = pnand %p448, %p449
      %p451 = pneg %p450
      // Predicated region
      $region9: #{tpu_custom_call.1} parent=5 // pred_check
        _
      $region10: #{tpu_custom_call.1} parent=5 // pred_check_branch
        %453 = sbr.rel (%p450) target = $region12
      $region11: #{tpu_custom_call.1} parent=5 // pred_region
        %s454 = ssub.s32 %s32, 1
        // Predicated region
        $region13: #{tpu_custom_call.1} parent=11 // pred_check
          %p455 = pneg %p131
        $region14: #{tpu_custom_call.1} parent=11 // pred_check_branch
          %457 = sbr.rel (%p455) target = $region16
        $region15: #{tpu_custom_call.1} parent=11 // pred_region
          _
        $region16: #{tpu_custom_call.1} parent=11 // pred_fallthru
          _
        // Predicated region
        $region17: #{tpu_custom_call.1} parent=11 // pred_check
          %p458 = pneg %p152
        $region18: #{tpu_custom_call.1} parent=11 // pred_check_branch
          %460 = sbr.rel (%p458) target = $region20
        $region19: #{tpu_custom_call.1} parent=11 // pred_region
          _
        $region20: #{tpu_custom_call.1} parent=11 // pred_fallthru
          _
        // Predicated region
        $region21: #{tpu_custom_call.1} parent=11 // pred_check
          %p461 = pneg %p173
        $region22: #{tpu_custom_call.1} parent=11 // pred_check_branch
          %463 = sbr.rel (%p461) target = $region24
        $region23: #{tpu_custom_call.1} parent=11 // pred_region
          _
        $region24: #{tpu_custom_call.1} parent=11 // pred_fallthru
          _
        // Predicated region
        $region25: #{tpu_custom_call.1} parent=11 // pred_check
          %p464 = pneg %p194
        $region26: #{tpu_custom_call.1} parent=11 // pred_check_branch
          %466 = sbr.rel (%p464) target = $region28
        $region27: #{tpu_custom_call.1} parent=11 // pred_region
          _
        $region28: #{tpu_custom_call.1} parent=11 // pred_fallthru
          _
        // Predicated region
        $region29: #{tpu_custom_call.1} parent=11 // pred_check
          %p467 = pneg %p215
        $region30: #{tpu_custom_call.1} parent=11 // pred_check_branch
          %469 = sbr.rel (%p467) target = $region32
        $region31: #{tpu_custom_call.1} parent=11 // pred_region
          _
        $region32: #{tpu_custom_call.1} parent=11 // pred_fallthru
          _
        // Predicated region
        $region33: #{tpu_custom_call.1} parent=11 // pred_check
          %p470 = pneg %p236
        $region34: #{tpu_custom_call.1} parent=11 // pred_check_branch
          %472 = sbr.rel (%p470) target = $region36
        $region35: #{tpu_custom_call.1} parent=11 // pred_region
          _
        $region36: #{tpu_custom_call.1} parent=11 // pred_fallthru
          _
        // Predicated region
        $region37: #{tpu_custom_call.1} parent=11 // pred_check
          %p473 = pneg %p257
        $region38: #{tpu_custom_call.1} parent=11 // pred_check_branch
          %475 = sbr.rel (%p473) target = $region40
        $region39: #{tpu_custom_call.1} parent=11 // pred_region
          %477 = vsyncadd [#allocation6], 0
          %s478 = sshll.u32 %s9, 4
          %s479 = int_to_ptr.hbm [resolvable:$true] %s478
          %s480 = sshll.u32 [#allocation5], 4
          %s481 = int_to_ptr.vmem [resolvable:$true] %s480
          %486 = dma.hbm_to_vmem [thread:$0]  %s479, 3072, %s481, [#allocation6], 128, 128, 8
        $region40: #{tpu_custom_call.1} parent=11 // pred_fallthru
          _
        // Predicated region
        $region41: #{tpu_custom_call.1} parent=11 // pred_check
          %p487 = pneg %p278
        $region42: #{tpu_custom_call.1} parent=11 // pred_check_branch
          %489 = sbr.rel (%p487) target = $region44
        $region43: #{tpu_custom_call.1} parent=11 // pred_region
          _
        $region44: #{tpu_custom_call.1} parent=11 // pred_fallthru
          _
        // Predicated region
        $region45: #{tpu_custom_call.1} parent=11 // pred_check
          %p490 = pneg %p299
        $region46: #{tpu_custom_call.1} parent=11 // pred_check_branch
          %492 = sbr.rel (%p490) target = $region48
        $region47: #{tpu_custom_call.1} parent=11 // pred_region
          %494 = vsyncadd [#allocation9], 0
          %s495 = sshll.u32 %s11, 4
          %s496 = int_to_ptr.hbm [resolvable:$true] %s495
          %s497 = sshll.u32 [#allocation8], 4
          %s498 = int_to_ptr.vmem [resolvable:$true] %s497
          %503 = dma.hbm_to_vmem [thread:$0]  %s496, 3072, %s498, [#allocation9], 128, 128, 8
        $region48: #{tpu_custom_call.1} parent=11 // pred_fallthru
          _
        // Predicated region
        $region49: #{tpu_custom_call.1} parent=11 // pred_check
          %p504 = pneg %p320
        $region50: #{tpu_custom_call.1} parent=11 // pred_check_branch
          %506 = sbr.rel (%p504) target = $region52
        $region51: #{tpu_custom_call.1} parent=11 // pred_region
          _
        $region52: #{tpu_custom_call.1} parent=11 // pred_fallthru
          _
        // Predicated region
        $region53: #{tpu_custom_call.1} parent=11 // pred_check
          %p507 = pneg %p341
        $region54: #{tpu_custom_call.1} parent=11 // pred_check_branch
          %509 = sbr.rel (%p507) target = $region56
        $region55: #{tpu_custom_call.1} parent=11 // pred_region
          _
        $region56: #{tpu_custom_call.1} parent=11 // pred_fallthru
          _
        // Predicated region
        $region57: #{tpu_custom_call.1} parent=11 // pred_check
          %p510 = pneg %p362
        $region58: #{tpu_custom_call.1} parent=11 // pred_check_branch
          %512 = sbr.rel (%p510) target = $region60
        $region59: #{tpu_custom_call.1} parent=11 // pred_region
          _
        $region60: #{tpu_custom_call.1} parent=11 // pred_fallthru
          _
      $region12: #{tpu_custom_call.1} parent=5 // pred_fallthru
        _
      %p513 = scmp.lt.s32.totalorder %s32, 2
      // Predicated region
      $region61: #{tpu_custom_call.1} parent=5 // pred_check
        %p514 = pneg %p513
      $region62: #{tpu_custom_call.1} parent=5 // pred_check_branch
        %516 = sbr.rel (%p514) target = $region64
      $region63: #{tpu_custom_call.1} parent=5 // pred_region
        // Predicated region
        $region65: #{tpu_custom_call.1} parent=63 // pred_check
          %p517 = pneg %p52
        $region66: #{tpu_custom_call.1} parent=63 // pred_check_branch
          %519 = sbr.rel (%p517) target = $region68
        $region67: #{tpu_custom_call.1} parent=63 // pred_region
          %p520 = scmp.lt.s32.totalorder %s32, 1
          %s521 = scalar_select %p520, %s32, 1
          %s522 = smul.addr %s521, 4
          %s523 = smul.addr %s522, 4
          %s524 = scalar_lea.vmem %s0, %s523
        $region68: #{tpu_custom_call.1} parent=63 // pred_fallthru
          _
        // Predicated region
        $region69: #{tpu_custom_call.1} parent=63 // pred_check
          %p525 = pneg %p78
        $region70: #{tpu_custom_call.1} parent=63 // pred_check_branch
          %527 = sbr.rel (%p525) target = $region72
        $region71: #{tpu_custom_call.1} parent=63 // pred_region
          %p528 = scmp.lt.s32.totalorder %s32, 1
          %s529 = scalar_select %p528, %s32, 1
          %s530 = smul.addr %s529, 4
          %s531 = smul.addr %s530, 4
          %s532 = scalar_lea.vmem %s1, %s531
        $region72: #{tpu_custom_call.1} parent=63 // pred_fallthru
          _
        // Predicated region
        $region73: #{tpu_custom_call.1} parent=63 // pred_check
          %p533 = pneg %p104
        $region74: #{tpu_custom_call.1} parent=63 // pred_check_branch
          %535 = sbr.rel (%p533) target = $region76
        $region75: #{tpu_custom_call.1} parent=63 // pred_region
          %p536 = scmp.lt.s32.totalorder %s32, 1
          %s537 = scalar_select %p536, %s32, 1
          %s538 = smul.addr %s537, 8
          %s539 = smul.addr %s538, 4
          %s540 = scalar_lea.vmem %s2, %s539
        $region76: #{tpu_custom_call.1} parent=63 // pred_fallthru
          _
      $region64: #{tpu_custom_call.1} parent=5 // pred_fallthru
        _
      %p541 = scmp.le.s32.totalorder 1, %s32
      %p542 = scmp.lt.s32.totalorder %s32, 3
      %p543 = pnand %p541, %p542
      %p544 = pneg %p543
      // Predicated region
      $region77: #{tpu_custom_call.1} parent=5 // pred_check
        _
      $region78: #{tpu_custom_call.1} parent=5 // pred_check_branch
        %546 = sbr.rel (%p543) target = $region80
      $region79: #{tpu_custom_call.1} parent=5 // pred_region
        %s547 = ssub.s32 %s32, 1
        // Predicated region
        $region81: #{tpu_custom_call.1} parent=79 // pred_check
          %p548 = pneg %p257
        $region82: #{tpu_custom_call.1} parent=79 // pred_check_branch
          %550 = sbr.rel (%p548) target = $region84
        $region83: #{tpu_custom_call.1} parent=79 // pred_region
          %552 = dma.done [#allocation6], 3072
        $region84: #{tpu_custom_call.1} parent=79 // pred_fallthru
          _
        // Predicated region
        $region85: #{tpu_custom_call.1} parent=79 // pred_check
          %p553 = pneg %p299
        $region86: #{tpu_custom_call.1} parent=79 // pred_check_branch
          %555 = sbr.rel (%p553) target = $region88
        $region87: #{tpu_custom_call.1} parent=79 // pred_region
          %557 = dma.done [#allocation9], 3072
        $region88: #{tpu_custom_call.1} parent=79 // pred_fallthru
          _
        %p558 = scmp.lt.s32.totalorder %s37, 1
        %s559 = scalar_select %p558, %s37, 1
        %s560 = smul.addr %s559, 4
        %s561 = smul.addr %s560, 4
        %s562 = scalar_lea.vmem %s0, %s561
        %p563 = pneg %p58
        %p564 = pneg %p55
        %p565 = scmp.lt.s32.totalorder %s37, 1
        %s566 = scalar_select %p565, %s37, 1
        %s567 = smul.addr %s566, 4
        %s568 = smul.addr %s567, 4
        %s569 = scalar_lea.vmem %s1, %s568
        %p570 = pneg %p84
        %p571 = pneg %p81
        %p572 = scmp.lt.s32.totalorder %s37, 1
        %s573 = scalar_select %p572, %s37, 1
        %s574 = smul.addr %s573, 8
        %s575 = smul.addr %s574, 4
        %s576 = scalar_lea.vmem %s2, %s575
        %p577 = pneg %p110
        %p578 = pneg %p107
        %p579 = pneg %p131
        %p580 = pneg %p128
        %p581 = pneg %p152
        %p582 = pneg %p149
        %p583 = pneg %p173
        %p584 = pneg %p170
        %p585 = pneg %p194
        %p586 = pneg %p191
        %p587 = pneg %p215
        %p588 = pneg %p212
        %p589 = pneg %p236
        %p590 = pneg %p233
        %p591 = pneg %p257
        %p592 = pneg %p254
        %p593 = pneg %p278
        %p594 = pneg %p275
        %p595 = pneg %p299
        %p596 = pneg %p296
        %p597 = pneg %p320
        %p598 = pneg %p317
        %p599 = pneg %p341
        %p600 = pneg %p338
        %p601 = pneg %p362
        %p602 = pneg %p359
        %p603 = pneg %p388
        %p604 = pneg %p385
        %s605 = sand.u32 %s375, 1
        %s606 = scalar_lea.sflag [#allocation7], %s605
        %s607 = sand.u32 %s375, 1
        %s608 = smul.addr %s607, 128
        %s609 = scalar_lea.vmem [#allocation10], %s608
        %p610 = pneg %p414
        %p611 = pneg %p411
        %s612 = sand.u32 %s401, 1
        %s613 = scalar_lea.sflag [#allocation12], %s612
        %s614 = sand.u32 %s401, 1
        %s615 = smul.addr %s614, 64
        %s616 = scalar_lea.vmem [#allocation11], %s615
        %p617 = pneg %p440
        %p618 = pneg %p437
        %p619 = scmp.lt.s32.totalorder %s37, 1
        %s620 = scalar_select %p619, %s37, 1
        %s621 = smul.addr %s620, 8
        %s622 = smul.addr %s621, 8
        %s623 = scalar_lea.vmem %s17, %s622
        %p624 = scmp.lt.s32.totalorder %s37, 1
        %s625 = scalar_select %p624, %s37, 1
        %s626 = smul.addr %s625, 4
        %s627 = smul.addr %s626, 4
        %s628 = scalar_lea.vmem %s0, %s627
        %p629 = scmp.lt.s32.totalorder %s37, 1
        %s630 = scalar_select %p629, %s37, 1
        %s631 = smul.addr %s630, 4
        %s632 = smul.addr %s631, 4
        %s633 = scalar_lea.vmem %s1, %s632
        %p634 = scmp.lt.s32.totalorder %s37, 1
        %s635 = scalar_select %p634, %s37, 1
        %s636 = smul.addr %s635, 8
        %s637 = smul.addr %s636, 4
        %s638 = scalar_lea.vmem %s2, %s637
        %p639 = scmp.lt.s32.totalorder %s37, 1
        %s640 = scalar_select %p639, %s37, 1
        %s641 = smul.addr %s640, 8
        %s642 = smul.addr %s641, 8
        %s643 = scalar_lea.vmem %s17, %s642
        %v645 = vld [vmem:[%s7] sm:$0xf]
        %v646 = vld [vmem:[%s7 + $0x4] sm:$0xf]
        %v647 = vld [vmem:[%s7 + $0x8] sm:$0xf]
        %v648 = vld [vmem:[%s7 + $0xc] sm:$0xf]
        %v649 = vld [vmem:[%s7 + $0x10] sm:$0xf]
        %v650 = vld [vmem:[%s7 + $0x14] sm:$0xf]
        %v651 = vld [vmem:[%s7 + $0x18] sm:$0xf]
        %v652 = vld [vmem:[%s7 + $0x1c] sm:$0xf]
        %v653 = vld [vmem:[%s638] sm:$0xf]
        %v654 = vld [vmem:[%s638 + $0x4] sm:$0xf]
        %v655 = vld [vmem:[%s638 + $0x8] sm:$0xf]
        %v656 = vld [vmem:[%s638 + $0xc] sm:$0xf]
        %v657 = vld [vmem:[%s638 + $0x10] sm:$0xf]
        %v658 = vld [vmem:[%s638 + $0x14] sm:$0xf]
        %v659 = vld [vmem:[%s638 + $0x18] sm:$0xf]
        %v660 = vld [vmem:[%s638 + $0x1c] sm:$0xf]
        %v661 = vld [vmem:[%s8] sm:$0xff]
        %v662 = vld [vmem:[%s8 + $0x8] sm:$0xff]
        %v663 = vld [vmem:[%s8 + $0x10] sm:$0xff]
        %v664 = vld [vmem:[%s8 + $0x18] sm:$0xff]
        %v665 = vld [vmem:[%s8 + $0x20] sm:$0xff]
        %v666 = vld [vmem:[%s8 + $0x28] sm:$0xff]
        %v667 = vld [vmem:[%s8 + $0x30] sm:$0xff]
        %v668 = vld [vmem:[%s8 + $0x38] sm:$0xff]
        %670 = vset.pattern.permute.xlu0 0
        %671 = vperm.xlu0 %670, %v661
        %v672 = vpop.permute.xlu0 %671
        %675 = vset.pattern.permute.xlu0 0
        %676 = vperm.xlu0 %675, %v662
        %v677 = vpop.permute.xlu0 %676
        %680 = vset.pattern.permute.xlu0 0
        %681 = vperm.xlu0 %680, %v663
        %v682 = vpop.permute.xlu0 %681
        %685 = vset.pattern.permute.xlu0 0
        %686 = vperm.xlu0 %685, %v664
        %v687 = vpop.permute.xlu0 %686
        %690 = vset.pattern.permute.xlu0 0
        %691 = vperm.xlu0 %690, %v665
        %v692 = vpop.permute.xlu0 %691
        %695 = vset.pattern.permute.xlu0 0
        %696 = vperm.xlu0 %695, %v666
        %v697 = vpop.permute.xlu0 %696
        %700 = vset.pattern.permute.xlu0 0
        %701 = vperm.xlu0 %700, %v667
        %v702 = vpop.permute.xlu0 %701
        %705 = vset.pattern.permute.xlu0 0
        %706 = vperm.xlu0 %705, %v668
        %v707 = vpop.permute.xlu0 %706
        %v717 = vunpack.c.l.b16 %v645
        %v718 = vunpack.c.l.b16 %v646
        %v719 = vunpack.c.l.b16 %v647
        %v720 = vunpack.c.l.b16 %v648
        %v721 = vunpack.c.l.b16 %v649
        %v722 = vunpack.c.l.b16 %v650
        %v723 = vunpack.c.l.b16 %v651
        %v724 = vunpack.c.l.b16 %v652
        %v725 = vpack.c.b16 %v718, %v717
        %v726 = vpack.c.b16 %v720, %v719
        %v727 = vpack.c.b16 %v722, %v721
        %v728 = vpack.c.b16 %v724, %v723
        %v737 = vunpack.c.l.b16 %v653
        %v738 = vunpack.c.l.b16 %v654
        %v739 = vunpack.c.l.b16 %v655
        %v740 = vunpack.c.l.b16 %v656
        %v741 = vunpack.c.l.b16 %v657
        %v742 = vunpack.c.l.b16 %v658
        %v743 = vunpack.c.l.b16 %v659
        %v744 = vunpack.c.l.b16 %v660
        %v745 = vpack.c.b16 %v738, %v737
        %v746 = vpack.c.b16 %v740, %v739
        %v747 = vpack.c.b16 %v742, %v741
        %v748 = vpack.c.b16 %v744, %v743
        %vm753 = vcmask 523264
        %v755 = vsel %vm753, %v725, 0
        %v758 = vsel %vm753, %v726, 0
        %v761 = vsel %vm753, %v727, 0
        %v764 = vsel %vm753, %v728, 0
        %766 = vmatpush.bf16.msra.mxu0 0
        %767 = vmatpush.bf16.msra.mxu0 0
        %768 = vmatpush.bf16.msra.mxu0 0
        %769 = vmatpush.bf16.msra.mxu0 0
        %770 = vmatpush.bf16.msra.mxu0 %v748
        %771 = vmatpush.bf16.msra.mxu0 %v747
        %772 = vmatpush.bf16.msra.mxu0 %v746
        %773 = vmatpush.bf16.msra.mxu0 %v745
        %774 = vmatmul.bf16.gmra.mxu0 %v755
        %v775 = vpop.f32.mrf.mxu0
        %v776 = vadd.f32 %v672, %v775
        %v777 = vpop.f32.mrf.mxu0
        %v778 = vadd.f32 %v677, %v777
        %779 = vmatmul.bf16.gmra.mxu0 %v758
        %v780 = vpop.f32.mrf.mxu0
        %v781 = vadd.f32 %v682, %v780
        %v782 = vpop.f32.mrf.mxu0
        %v783 = vadd.f32 %v687, %v782
        %784 = vmatmul.bf16.gmra.mxu0 %v761
        %v785 = vpop.f32.mrf.mxu0
        %v786 = vadd.f32 %v692, %v785
        %v787 = vpop.f32.mrf.mxu0
        %v788 = vadd.f32 %v697, %v787
        %789 = vmatmul.bf16.gmra.mxu0 %v764
        %v790 = vpop.f32.mrf.mxu0
        %v791 = vadd.f32 %v702, %v790
        %v792 = vpop.f32.mrf.mxu0
        %v793 = vadd.f32 %v707, %v792
        %794 = vdwg.mxu0
        %vm795 = vcmp.ge.f32.partialorder %v776, 0.0
        %vm796 = vcmp.ge.f32.partialorder %v778, 0.0
        %vm797 = vcmp.ge.f32.partialorder %v781, 0.0
        %vm798 = vcmp.ge.f32.partialorder %v783, 0.0
        %vm799 = vcmp.ge.f32.partialorder %v786, 0.0
        %vm800 = vcmp.ge.f32.partialorder %v788, 0.0
        %vm801 = vcmp.ge.f32.partialorder %v791, 0.0
        %vm802 = vcmp.ge.f32.partialorder %v793, 0.0
        %v803 = vmul.f32 %v776, 0.1
        %v804 = vmul.f32 %v778, 0.1
        %v805 = vmul.f32 %v781, 0.1
        %v806 = vmul.f32 %v783, 0.1
        %v807 = vmul.f32 %v786, 0.1
        %v808 = vmul.f32 %v788, 0.1
        %v809 = vmul.f32 %v791, 0.1
        %v810 = vmul.f32 %v793, 0.1
        %v811 = vsel %vm795, %v776, %v803
        %v812 = vsel %vm796, %v778, %v804
        %v813 = vsel %vm797, %v781, %v805
        %v814 = vsel %vm798, %v783, %v806
        %v815 = vsel %vm799, %v786, %v807
        %v816 = vsel %vm800, %v788, %v808
        %v817 = vsel %vm801, %v791, %v809
        %v818 = vsel %vm802, %v793, %v810
        %vm819 = vcmask 130048
        %820 = vst.msk [vmem:[%s643] sm:$0xff] %vm819, %v811
        %821 = vst.msk [vmem:[%s643 + $0x8] sm:$0xff] %vm819, %v812
        %822 = vst.msk [vmem:[%s643 + $0x10] sm:$0xff] %vm819, %v813
        %823 = vst.msk [vmem:[%s643 + $0x18] sm:$0xff] %vm819, %v814
        %824 = vst.msk [vmem:[%s643 + $0x20] sm:$0xff] %vm819, %v815
        %825 = vst.msk [vmem:[%s643 + $0x28] sm:$0xff] %vm819, %v816
        %826 = vst.msk [vmem:[%s643 + $0x30] sm:$0xff] %vm819, %v817
        %827 = vst.msk [vmem:[%s643 + $0x38] sm:$0xff] %vm819, %v818
        %v828 = vpack.c.bf16 %v811, %v811
        %v829 = vpack.c.bf16 %v812, %v812
        %v830 = vpack.c.bf16 %v813, %v813
        %v831 = vpack.c.bf16 %v814, %v814
        %v832 = vpack.c.bf16 %v815, %v815
        %v833 = vpack.c.bf16 %v816, %v816
        %v834 = vpack.c.bf16 %v817, %v817
        %v835 = vpack.c.bf16 %v818, %v818
        %vm836 = vcmask 125952
        %837 = vst.msk [vmem:[#allocation3] sm:$0xf] %vm836, %v828
        %838 = vst.msk [vmem:[#allocation3 + $0x4] sm:$0xf] %vm836, %v829
        %839 = vst.msk [vmem:[#allocation3 + $0x8] sm:$0xf] %vm836, %v830
        %840 = vst.msk [vmem:[#allocation3 + $0xc] sm:$0xf] %vm836, %v831
        %841 = vst.msk [vmem:[#allocation3 + $0x10] sm:$0xf] %vm836, %v832
        %842 = vst.msk [vmem:[#allocation3 + $0x14] sm:$0xf] %vm836, %v833
        %843 = vst.msk [vmem:[#allocation3 + $0x18] sm:$0xf] %vm836, %v834
        %844 = vst.msk [vmem:[#allocation3 + $0x1c] sm:$0xf] %vm836, %v835
        %vm845 = vcmask 68608
        %846 = vst.msk [vmem:[#allocation2] sm:$0xf] %vm845, 0
        %847 = vst.msk [vmem:[#allocation2 + $0xc] sm:$0xf] %vm845, 0
        %848 = vst.msk [vmem:[#allocation2 + $0x18] sm:$0xf] %vm845, 0
        %849 = vst.msk [vmem:[#allocation2 + $0x24] sm:$0xf] %vm845, 0
        %850 = vst.msk [vmem:[#allocation2 + $0x30] sm:$0xf] %vm845, 0
        %851 = vst.msk [vmem:[#allocation2 + $0x3c] sm:$0xf] %vm845, 0
        %852 = vst.msk [vmem:[#allocation2 + $0x48] sm:$0xf] %vm845, 0
        %853 = vst.msk [vmem:[#allocation2 + $0x54] sm:$0xf] %vm845, 0
        %854 = vst.msk [vmem:[#allocation2 + $0x60] sm:$0xf] %vm845, 0
        %855 = vst.msk [vmem:[#allocation2 + $0x6c] sm:$0xf] %vm845, 0
        %856 = vst.msk [vmem:[#allocation2 + $0x78] sm:$0xf] %vm845, 0
        %857 = vst.msk [vmem:[#allocation2 + $0x84] sm:$0xf] %vm845, 0
        %858 = vst.msk [vmem:[#allocation2 + $0x90] sm:$0xf] %vm845, 0
        %859 = vst.msk [vmem:[#allocation2 + $0x9c] sm:$0xf] %vm845, 0
        %860 = vst.msk [vmem:[#allocation2 + $0xa8] sm:$0xf] %vm845, 0
        %861 = vst.msk [vmem:[#allocation2 + $0xb4] sm:$0xf] %vm845, 0
        %862 = vst.msk [vmem:[#allocation2 + $0xc0] sm:$0xf] %vm845, 0
        %863 = vst.msk [vmem:[#allocation2 + $0xcc] sm:$0xf] %vm845, 0
        %864 = vst.msk [vmem:[#allocation2 + $0xd8] sm:$0xf] %vm845, 0
        %865 = vst.msk [vmem:[#allocation2 + $0xe4] sm:$0xf] %vm845, 0
        %866 = vst.msk [vmem:[#allocation2 + $0xf0] sm:$0xf] %vm845, 0
        %867 = vst.msk [vmem:[#allocation2 + $0xfc] sm:$0xf] %vm845, 0
        %868 = vst.msk [vmem:[#allocation2 + $0x108] sm:$0xf] %vm845, 0
        %869 = vst.msk [vmem:[#allocation2 + $0x114] sm:$0xf] %vm845, 0
        %vm870 = vcmask 650808
        %871 = vst.msk [vmem:[#allocation2] sm:$0xf] %vm870, 0
        %872 = vst.msk [vmem:[#allocation2 + $0xc] sm:$0xf] %vm870, 0
        %873 = vst.msk [vmem:[#allocation2 + $0x18] sm:$0xf] %vm870, 0
        %874 = vst.msk [vmem:[#allocation2 + $0x24] sm:$0xf] %vm870, 0
        %875 = vst.msk [vmem:[#allocation2 + $0x30] sm:$0xf] %vm870, 0
        %876 = vst.msk [vmem:[#allocation2 + $0x3c] sm:$0xf] %vm870, 0
        %877 = vst.msk [vmem:[#allocation2 + $0x48] sm:$0xf] %vm870, 0
        %878 = vst.msk [vmem:[#allocation2 + $0x54] sm:$0xf] %vm870, 0
        %879 = vst.msk [vmem:[#allocation2 + $0x60] sm:$0xf] %vm870, 0
        %880 = vst.msk [vmem:[#allocation2 + $0x6c] sm:$0xf] %vm870, 0
        %881 = vst.msk [vmem:[#allocation2 + $0x78] sm:$0xf] %vm870, 0
        %882 = vst.msk [vmem:[#allocation2 + $0x84] sm:$0xf] %vm870, 0
        %883 = vst.msk [vmem:[#allocation2 + $0x90] sm:$0xf] %vm870, 0
        %884 = vst.msk [vmem:[#allocation2 + $0x9c] sm:$0xf] %vm870, 0
        %885 = vst.msk [vmem:[#allocation2 + $0xa8] sm:$0xf] %vm870, 0
        %886 = vst.msk [vmem:[#allocation2 + $0xb4] sm:$0xf] %vm870, 0
        %887 = vst.msk [vmem:[#allocation2 + $0xc0] sm:$0xf] %vm870, 0
        %888 = vst.msk [vmem:[#allocation2 + $0xcc] sm:$0xf] %vm870, 0
        %889 = vst.msk [vmem:[#allocation2 + $0xd8] sm:$0xf] %vm870, 0
        %890 = vst.msk [vmem:[#allocation2 + $0xe4] sm:$0xf] %vm870, 0
        %891 = vst.msk [vmem:[#allocation2 + $0xf0] sm:$0xf] %vm870, 0
        %892 = vst.msk [vmem:[#allocation2 + $0xfc] sm:$0xf] %vm870, 0
        %893 = vst.msk [vmem:[#allocation2 + $0x108] sm:$0xf] %vm870, 0
        %894 = vst.msk [vmem:[#allocation2 + $0x114] sm:$0xf] %vm870, 0
        %v895 = vld [vmem:[%s5] sm:$0xf]
        %v896 = vld [vmem:[%s5 + $0x4] sm:$0xf]
        %v897 = vld [vmem:[%s5 + $0x8] sm:$0xf]
        %v898 = vld [vmem:[%s5 + $0xc] sm:$0xf]
        %v899 = vld [vmem:[%s5 + $0x10] sm:$0xf]
        %v900 = vld [vmem:[%s5 + $0x14] sm:$0xf]
        %v901 = vld [vmem:[%s5 + $0x18] sm:$0xf]
        %v902 = vld [vmem:[%s5 + $0x1c] sm:$0xf]
        %v903 = vld [vmem:[%s6] sm:$0xff]
        %v904 = vld [vmem:[%s6 + $0x8] sm:$0xff]
        %v905 = vld [vmem:[%s6 + $0x10] sm:$0xff]
        %v906 = vld [vmem:[%s6 + $0x18] sm:$0xff]
        %v907 = vld [vmem:[%s6 + $0x20] sm:$0xff]
        %v908 = vld [vmem:[%s6 + $0x28] sm:$0xff]
        %v909 = vld [vmem:[%s6 + $0x30] sm:$0xff]
        %v910 = vld [vmem:[%s6 + $0x38] sm:$0xff]
        %v911 = vld [vmem:[%s13] sm:$0xf]
        %v912 = vld [vmem:[%s13 + $0x4] sm:$0xf]
        %v913 = vlaneseq
        %v914 = vand.u32 %v913, 127
        %vm915 = vcmp.lt.s32.totalorder %v914, 0
        %v916 = vsub.s32 0, %v914
        %v917 = vsel %vm915, %v916, %v914
        %v918 = vshrl.u32 %v917, 3
        %v919 = vand.u32 %v917, 7
        %v920 = vsub.s32 0, %v919
        %v921 = vsel %vm915, %v920, %v919
        %vm922 = vcmp.ne.s32.totalorder %v921, 0
        %vm923 = vcmp.lt.s32.totalorder %v921, 0
        %vm924 = vmand %vm923, %vm922
        %v925 = vadd.s32 %v921, 8
        %v926 = vsel %vm924, %v925, %v921
        %v927 = vld [vmem:[%s633] sm:$0xf]
        %v928 = vld [vmem:[%s633 + $0x4] sm:$0xf]
        %v929 = vld [vmem:[%s633 + $0x8] sm:$0xf]
        %v930 = vld [vmem:[%s633 + $0xc] sm:$0xf]
        %932 = vset.pattern.permute.xlu0 0
        %933 = vperm.xlu0 %932, %v903
        %v934 = vpop.permute.xlu0 %933
        %937 = vset.pattern.permute.xlu0 0
        %938 = vperm.xlu0 %937, %v904
        %v939 = vpop.permute.xlu0 %938
        %942 = vset.pattern.permute.xlu0 0
        %943 = vperm.xlu0 %942, %v905
        %v944 = vpop.permute.xlu0 %943
        %947 = vset.pattern.permute.xlu0 0
        %948 = vperm.xlu0 %947, %v906
        %v949 = vpop.permute.xlu0 %948
        %952 = vset.pattern.permute.xlu0 0
        %953 = vperm.xlu0 %952, %v907
        %v954 = vpop.permute.xlu0 %953
        %957 = vset.pattern.permute.xlu0 0
        %958 = vperm.xlu0 %957, %v908
        %v959 = vpop.permute.xlu0 %958
        %962 = vset.pattern.permute.xlu0 0
        %963 = vperm.xlu0 %962, %v909
        %v964 = vpop.permute.xlu0 %963
        %967 = vset.pattern.permute.xlu0 0
        %968 = vperm.xlu0 %967, %v910
        %v969 = vpop.permute.xlu0 %968
        %v979 = vunpack.c.l.b16 %v895
        %v980 = vunpack.c.l.b16 %v896
        %v981 = vunpack.c.l.b16 %v897
        %v982 = vunpack.c.l.b16 %v898
        %v983 = vunpack.c.l.b16 %v899
        %v984 = vunpack.c.l.b16 %v900
        %v985 = vunpack.c.l.b16 %v901
        %v986 = vunpack.c.l.b16 %v902
        %v987 = vpack.c.b16 %v980, %v979
        %v988 = vpack.c.b16 %v982, %v981
        %v989 = vpack.c.b16 %v984, %v983
        %v990 = vpack.c.b16 %v986, %v985
        %v995 = vunpack.c.l.b16 %v927
        %v996 = vunpack.c.l.b16 %v928
        %v997 = vunpack.c.l.b16 %v929
        %v998 = vunpack.c.l.b16 %v930
        %v999 = vpack.c.b16 %v996, %v995
        %v1000 = vpack.c.b16 %v998, %v997
        %vm1003 = vcmask 261120
        %v1005 = vsel %vm1003, %v987, 0
        %v1008 = vsel %vm1003, %v988, 0
        %v1011 = vsel %vm1003, %v989, 0
        %v1014 = vsel %vm1003, %v990, 0
        %1016 = vmatpush.bf16.msra.mxu0 0
        %1017 = vmatpush.bf16.msra.mxu0 0
        %1018 = vmatpush.bf16.msra.mxu0 0
        %1019 = vmatpush.bf16.msra.mxu0 0
        %1020 = vmatpush.bf16.msra.mxu0 0
        %1021 = vmatpush.bf16.msra.mxu0 0
        %1022 = vmatpush.bf16.msra.mxu0 %v1000
        %1023 = vmatpush.bf16.msra.mxu0 %v999
        %1024 = vmatmul.bf16.gmra.mxu0 %v1005
        %v1025 = vpop.f32.mrf.mxu0
        %v1026 = vadd.f32 %v934, %v1025
        %v1027 = vpop.f32.mrf.mxu0
        %v1028 = vadd.f32 %v939, %v1027
        %1029 = vmatmul.bf16.gmra.mxu0 %v1008
        %v1030 = vpop.f32.mrf.mxu0
        %v1031 = vadd.f32 %v944, %v1030
        %v1032 = vpop.f32.mrf.mxu0
        %v1033 = vadd.f32 %v949, %v1032
        %1034 = vmatmul.bf16.gmra.mxu0 %v1011
        %v1035 = vpop.f32.mrf.mxu0
        %v1036 = vadd.f32 %v954, %v1035
        %v1037 = vpop.f32.mrf.mxu0
        %v1038 = vadd.f32 %v959, %v1037
        %1039 = vmatmul.bf16.gmra.mxu0 %v1014
        %v1040 = vpop.f32.mrf.mxu0
        %v1041 = vadd.f32 %v964, %v1040
        %v1042 = vpop.f32.mrf.mxu0
        %v1043 = vadd.f32 %v969, %v1042
        %1044 = vdwg.mxu0
        %vm1045 = vcmp.ge.f32.partialorder %v1026, 0.0
        %vm1046 = vcmp.ge.f32.partialorder %v1028, 0.0
        %vm1047 = vcmp.ge.f32.partialorder %v1031, 0.0
        %vm1048 = vcmp.ge.f32.partialorder %v1033, 0.0
        %vm1049 = vcmp.ge.f32.partialorder %v1036, 0.0
        %vm1050 = vcmp.ge.f32.partialorder %v1038, 0.0
        %vm1051 = vcmp.ge.f32.partialorder %v1041, 0.0
        %vm1052 = vcmp.ge.f32.partialorder %v1043, 0.0
        %v1053 = vmul.f32 %v1026, 0.1
        %v1054 = vmul.f32 %v1028, 0.1
        %v1055 = vmul.f32 %v1031, 0.1
        %v1056 = vmul.f32 %v1033, 0.1
        %v1057 = vmul.f32 %v1036, 0.1
        %v1058 = vmul.f32 %v1038, 0.1
        %v1059 = vmul.f32 %v1041, 0.1
        %v1060 = vmul.f32 %v1043, 0.1
        %v1061 = vsel %vm1045, %v1026, %v1053
        %v1062 = vsel %vm1046, %v1028, %v1054
        %v1063 = vsel %vm1047, %v1031, %v1055
        %v1064 = vsel %vm1048, %v1033, %v1056
        %v1065 = vsel %vm1049, %v1036, %v1057
        %v1066 = vsel %vm1050, %v1038, %v1058
        %v1067 = vsel %vm1051, %v1041, %v1059
        %v1068 = vsel %vm1052, %v1043, %v1060
        %v1069 = vld [vmem:[#allocation3] sm:$0xf]
        %v1070 = vld [vmem:[#allocation3 + $0x4] sm:$0xf]
        %v1071 = vld [vmem:[#allocation3 + $0x8] sm:$0xf]
        %v1072 = vld [vmem:[#allocation3 + $0xc] sm:$0xf]
        %v1073 = vld [vmem:[#allocation3 + $0x10] sm:$0xf]
        %v1074 = vld [vmem:[#allocation3 + $0x14] sm:$0xf]
        %v1075 = vld [vmem:[#allocation3 + $0x18] sm:$0xf]
        %v1076 = vld [vmem:[#allocation3 + $0x1c] sm:$0xf]
        %v1085 = vunpack.c.l.b16 %v1069
        %v1086 = vunpack.c.l.b16 %v1070
        %v1087 = vunpack.c.l.b16 %v1071
        %v1088 = vunpack.c.l.b16 %v1072
        %v1089 = vunpack.c.l.b16 %v1073
        %v1090 = vunpack.c.l.b16 %v1074
        %v1091 = vunpack.c.l.b16 %v1075
        %v1092 = vunpack.c.l.b16 %v1076
        %v1093 = vpack.c.b16 %v1086, %v1085
        %v1094 = vpack.c.b16 %v1088, %v1087
        %v1095 = vpack.c.b16 %v1090, %v1089
        %v1096 = vpack.c.b16 %v1092, %v1091
        %v1099 = vunpack.c.l.b16 %v911
        %v1100 = vunpack.c.l.b16 %v912
        %v1101 = vpack.c.b16 %v1100, %v1099
        %v1104 = vsel %vm819, %v1093, 0
        %v1107 = vsel %vm819, %v1094, 0
        %v1110 = vsel %vm819, %v1095, 0
        %v1113 = vsel %vm819, %v1096, 0
        %1115 = vmatpush.bf16.msra.mxu0 0
        %1116 = vmatpush.bf16.msra.mxu0 0
        %1117 = vmatpush.bf16.msra.mxu0 0
        %1118 = vmatpush.bf16.msra.mxu0 0
        %1119 = vmatpush.bf16.msra.mxu0 0
        %1120 = vmatpush.bf16.msra.mxu0 0
        %1121 = vmatpush.bf16.msra.mxu0 0
        %1122 = vmatpush.bf16.msra.mxu0 %v1101
        %1123 = vmatmul.bf16.gmra.mxu0 %v1104
        %v1124 = vpop.f32.mrf.mxu0
        %v1125 = vadd.f32 0.0, %v1124
        %v1126 = vpop.f32.mrf.mxu0
        %v1127 = vadd.f32 0.0, %v1126
        %1128 = vmatmul.bf16.gmra.mxu0 %v1107
        %v1129 = vpop.f32.mrf.mxu0
        %v1130 = vadd.f32 0.0, %v1129
        %v1131 = vpop.f32.mrf.mxu0
        %v1132 = vadd.f32 0.0, %v1131
        %1133 = vmatmul.bf16.gmra.mxu0 %v1110
        %v1134 = vpop.f32.mrf.mxu0
        %v1135 = vadd.f32 0.0, %v1134
        %v1136 = vpop.f32.mrf.mxu0
        %v1137 = vadd.f32 0.0, %v1136
        %1138 = vmatmul.bf16.gmra.mxu0 %v1113
        %v1139 = vpop.f32.mrf.mxu0
        %v1140 = vadd.f32 0.0, %v1139
        %v1141 = vpop.f32.mrf.mxu0
        %v1142 = vadd.f32 0.0, %v1141
        %1143 = vdwg.mxu0
        %v1144 = vadd.f32 %v1061, %v1125
        %v1145 = vadd.f32 %v1062, %v1127
        %v1146 = vadd.f32 %v1063, %v1130
        %v1147 = vadd.f32 %v1064, %v1132
        %v1148 = vadd.f32 %v1065, %v1135
        %v1149 = vadd.f32 %v1066, %v1137
        %v1150 = vadd.f32 %v1067, %v1140
        %v1151 = vadd.f32 %v1068, %v1142
        %v1152 = vpack.c.bf16 %v1144, %v1144
        %v1153 = vpack.c.bf16 %v1145, %v1145
        %v1154 = vpack.c.bf16 %v1146, %v1146
        %v1155 = vpack.c.bf16 %v1147, %v1147
        %v1156 = vpack.c.bf16 %v1148, %v1148
        %v1157 = vpack.c.bf16 %v1149, %v1149
        %v1158 = vpack.c.bf16 %v1150, %v1150
        %v1159 = vpack.c.bf16 %v1151, %v1151
        %1168 = vrot.lane.b32.xlu0 %v1152, 8
        %v1169 = vpop.permute.xlu0 %1168
        %1170 = vrot.lane.b32.xlu0 %v1153, 8
        %v1171 = vpop.permute.xlu0 %1170
        %1172 = vrot.lane.b32.xlu0 %v1154, 8
        %v1173 = vpop.permute.xlu0 %1172
        %1174 = vrot.lane.b32.xlu0 %v1155, 8
        %v1175 = vpop.permute.xlu0 %1174
        %1176 = vrot.lane.b32.xlu0 %v1156, 8
        %v1177 = vpop.permute.xlu0 %1176
        %1178 = vrot.lane.b32.xlu0 %v1157, 8
        %v1179 = vpop.permute.xlu0 %1178
        %1180 = vrot.lane.b32.xlu0 %v1158, 8
        %v1181 = vpop.permute.xlu0 %1180
        %1182 = vrot.lane.b32.xlu0 %v1159, 8
        %v1183 = vpop.permute.xlu0 %1182
        %vm1192 = vcmask 584768
        %1193 = vst.msk [vmem:[#allocation2 + $0x60] sm:$0xf] %vm1192, %v1169
        %1194 = vst.msk [vmem:[#allocation2 + $0x6c] sm:$0xf] %vm1192, %v1171
        %1195 = vst.msk [vmem:[#allocation2 + $0x78] sm:$0xf] %vm1192, %v1173
        %1196 = vst.msk [vmem:[#allocation2 + $0x84] sm:$0xf] %vm1192, %v1175
        %1197 = vst.msk [vmem:[#allocation2 + $0x90] sm:$0xf] %vm1192, %v1177
        %1198 = vst.msk [vmem:[#allocation2 + $0x9c] sm:$0xf] %vm1192, %v1179
        %1199 = vst.msk [vmem:[#allocation2 + $0xa8] sm:$0xf] %vm1192, %v1181
        %1200 = vst.msk [vmem:[#allocation2 + $0xb4] sm:$0xf] %vm1192, %v1183
        %vm1201 = vcmp.eq.s32.totalorder %v926, 7
        %v1202 = vsel %vm1201, 1, 0
        %vm1203 = vcmp.eq.s32.totalorder %v1202, 1
        %vm1204 = vmpackc.low %vm1203, %vm1203
        %v1205 = vsel %vm1204, 0, %v1152
        %v1206 = vsel %vm1204, 0, %v1153
        %v1207 = vsel %vm1204, 0, %v1154
        %v1208 = vsel %vm1204, 0, %v1155
        %v1209 = vsel %vm1204, 0, %v1156
        %v1210 = vsel %vm1204, 0, %v1157
        %v1211 = vsel %vm1204, 0, %v1158
        %v1212 = vsel %vm1204, 0, %v1159
        %1221 = vrot.lane.b32.xlu0 %v1205, 9
        %v1222 = vpop.permute.xlu0 %1221
        %1223 = vrot.lane.b32.xlu0 %v1206, 9
        %v1224 = vpop.permute.xlu0 %1223
        %1225 = vrot.lane.b32.xlu0 %v1207, 9
        %v1226 = vpop.permute.xlu0 %1225
        %1227 = vrot.lane.b32.xlu0 %v1208, 9
        %v1228 = vpop.permute.xlu0 %1227
        %1229 = vrot.lane.b32.xlu0 %v1209, 9
        %v1230 = vpop.permute.xlu0 %1229
        %1231 = vrot.lane.b32.xlu0 %v1210, 9
        %v1232 = vpop.permute.xlu0 %1231
        %1233 = vrot.lane.b32.xlu0 %v1211, 9
        %v1234 = vpop.permute.xlu0 %1233
        %1235 = vrot.lane.b32.xlu0 %v1212, 9
        %v1236 = vpop.permute.xlu0 %1235
        %vm1245 = vcmask 592968
        %1246 = vst.msk [vmem:[#allocation2] sm:$0xf] %vm1245, %v1222
        %1247 = vst.msk [vmem:[#allocation2 + $0xc] sm:$0xf] %vm1245, %v1224
        %1248 = vst.msk [vmem:[#allocation2 + $0x18] sm:$0xf] %vm1245, %v1226
        %1249 = vst.msk [vmem:[#allocation2 + $0x24] sm:$0xf] %vm1245, %v1228
        %1250 = vst.msk [vmem:[#allocation2 + $0x30] sm:$0xf] %vm1245, %v1230
        %1251 = vst.msk [vmem:[#allocation2 + $0x3c] sm:$0xf] %vm1245, %v1232
        %1252 = vst.msk [vmem:[#allocation2 + $0x48] sm:$0xf] %vm1245, %v1234
        %1253 = vst.msk [vmem:[#allocation2 + $0x54] sm:$0xf] %vm1245, %v1236
        %vm1254 = vcmp.eq.s32.totalorder %v926, 0
        %v1255 = vsel %vm1254, 1, 0
        %vm1256 = vcmp.eq.s32.totalorder %v1255, 1
        %vm1257 = vmpackc.low %vm1256, %vm1256
        %v1258 = vsel %vm1257, 0, %v1152
        %v1259 = vsel %vm1257, 0, %v1153
        %v1260 = vsel %vm1257, 0, %v1154
        %v1261 = vsel %vm1257, 0, %v1155
        %v1262 = vsel %vm1257, 0, %v1156
        %v1263 = vsel %vm1257, 0, %v1157
        %v1264 = vsel %vm1257, 0, %v1158
        %v1265 = vsel %vm1257, 0, %v1159
        %1274 = vrot.lane.b32.xlu0 %v1258, 7
        %v1275 = vpop.permute.xlu0 %1274
        %1276 = vrot.lane.b32.xlu0 %v1259, 7
        %v1277 = vpop.permute.xlu0 %1276
        %1278 = vrot.lane.b32.xlu0 %v1260, 7
        %v1279 = vpop.permute.xlu0 %1278
        %1280 = vrot.lane.b32.xlu0 %v1261, 7
        %v1281 = vpop.permute.xlu0 %1280
        %1282 = vrot.lane.b32.xlu0 %v1262, 7
        %v1283 = vpop.permute.xlu0 %1282
        %1284 = vrot.lane.b32.xlu0 %v1263, 7
        %v1285 = vpop.permute.xlu0 %1284
        %1286 = vrot.lane.b32.xlu0 %v1264, 7
        %v1287 = vpop.permute.xlu0 %1286
        %1288 = vrot.lane.b32.xlu0 %v1265, 7
        %v1289 = vpop.permute.xlu0 %1288
        %vm1298 = vcmask 576568
        %1299 = vst.msk [vmem:[#allocation2 + $0xc0] sm:$0xf] %vm1298, %v1275
        %1300 = vst.msk [vmem:[#allocation2 + $0xcc] sm:$0xf] %vm1298, %v1277
        %1301 = vst.msk [vmem:[#allocation2 + $0xd8] sm:$0xf] %vm1298, %v1279
        %1302 = vst.msk [vmem:[#allocation2 + $0xe4] sm:$0xf] %vm1298, %v1281
        %1303 = vst.msk [vmem:[#allocation2 + $0xf0] sm:$0xf] %vm1298, %v1283
        %1304 = vst.msk [vmem:[#allocation2 + $0xfc] sm:$0xf] %vm1298, %v1285
        %1305 = vst.msk [vmem:[#allocation2 + $0x108] sm:$0xf] %vm1298, %v1287
        %1306 = vst.msk [vmem:[#allocation2 + $0x114] sm:$0xf] %vm1298, %v1289
        %v1307 = vld [vmem:[#allocation5] sm:$0xff]
        %v1308 = vld [vmem:[#allocation5 + $0x8] sm:$0xff]
        %v1309 = vld [vmem:[#allocation5 + $0x10] sm:$0xff]
        %v1310 = vld [vmem:[#allocation5 + $0x18] sm:$0xff]
        %v1311 = vld [vmem:[#allocation5 + $0x20] sm:$0xff]
        %v1312 = vld [vmem:[#allocation5 + $0x28] sm:$0xff]
        %v1313 = vld [vmem:[#allocation5 + $0x30] sm:$0xff]
        %v1314 = vld [vmem:[#allocation5 + $0x38] sm:$0xff]
        %s1315 = scalar_lea.vmem [#allocation5], 64
        %v1316 = vld [vmem:[%s1315] sm:$0xff]
        %v1317 = vld [vmem:[%s1315 + $0x8] sm:$0xff]
        %v1318 = vld [vmem:[%s1315 + $0x10] sm:$0xff]
        %v1319 = vld [vmem:[%s1315 + $0x18] sm:$0xff]
        %v1320 = vld [vmem:[%s1315 + $0x20] sm:$0xff]
        %v1321 = vld [vmem:[%s1315 + $0x28] sm:$0xff]
        %v1322 = vld [vmem:[%s1315 + $0x30] sm:$0xff]
        %v1323 = vld [vmem:[%s1315 + $0x38] sm:$0xff]
        %s1324 = scalar_lea.vmem [#allocation5], 128
        %v1325 = vld [vmem:[%s1324] sm:$0xff]
        %v1326 = vld [vmem:[%s1324 + $0x8] sm:$0xff]
        %v1327 = vld [vmem:[%s1324 + $0x10] sm:$0xff]
        %v1328 = vld [vmem:[%s1324 + $0x18] sm:$0xff]
        %v1329 = vld [vmem:[%s1324 + $0x20] sm:$0xff]
        %v1330 = vld [vmem:[%s1324 + $0x28] sm:$0xff]
        %v1331 = vld [vmem:[%s1324 + $0x30] sm:$0xff]
        %v1332 = vld [vmem:[%s1324 + $0x38] sm:$0xff]
        %v1333 = vld [vmem:[%s10] sm:$0xff]
        %v1334 = vld [vmem:[%s10 + $0x8] sm:$0xff]
        %v1335 = vld [vmem:[%s10 + $0x10] sm:$0xff]
        %v1336 = vld [vmem:[%s10 + $0x18] sm:$0xff]
        %v1337 = vld [vmem:[%s10 + $0x20] sm:$0xff]
        %v1338 = vld [vmem:[%s10 + $0x28] sm:$0xff]
        %v1339 = vld [vmem:[%s10 + $0x30] sm:$0xff]
        %v1340 = vld [vmem:[%s10 + $0x38] sm:$0xff]
        %v1341 = vld [vmem:[#allocation2] sm:$0xf]
        %v1342 = vld [vmem:[#allocation2 + $0xc] sm:$0xf]
        %v1343 = vld [vmem:[#allocation2 + $0x18] sm:$0xf]
        %v1344 = vld [vmem:[#allocation2 + $0x24] sm:$0xf]
        %v1345 = vld [vmem:[#allocation2 + $0x30] sm:$0xf]
        %v1346 = vld [vmem:[#allocation2 + $0x3c] sm:$0xf]
        %v1347 = vld [vmem:[#allocation2 + $0x48] sm:$0xf]
        %v1348 = vld [vmem:[#allocation2 + $0x54] sm:$0xf]
        %v1349 = vld [vmem:[#allocation2 + $0x60] sm:$0xf]
        %v1350 = vld [vmem:[#allocation2 + $0x6c] sm:$0xf]
        %v1351 = vld [vmem:[#allocation2 + $0x78] sm:$0xf]
        %v1352 = vld [vmem:[#allocation2 + $0x84] sm:$0xf]
        %v1353 = vld [vmem:[#allocation2 + $0x90] sm:$0xf]
        %v1354 = vld [vmem:[#allocation2 + $0x9c] sm:$0xf]
        %v1355 = vld [vmem:[#allocation2 + $0xa8] sm:$0xf]
        %v1356 = vld [vmem:[#allocation2 + $0xb4] sm:$0xf]
        %v1357 = vld [vmem:[#allocation2 + $0xc0] sm:$0xf]
        %v1358 = vld [vmem:[#allocation2 + $0xcc] sm:$0xf]
        %v1359 = vld [vmem:[#allocation2 + $0xd8] sm:$0xf]
        %v1360 = vld [vmem:[#allocation2 + $0xe4] sm:$0xf]
        %v1361 = vld [vmem:[#allocation2 + $0xf0] sm:$0xf]
        %v1362 = vld [vmem:[#allocation2 + $0xfc] sm:$0xf]
        %v1363 = vld [vmem:[#allocation2 + $0x108] sm:$0xf]
        %v1364 = vld [vmem:[#allocation2 + $0x114] sm:$0xf]
        %v1373 = vunpack.c.l.b16 %v1316
        %v1374 = vunpack.c.h.b16 %v1316
        %v1375 = vunpack.c.l.b16 %v1317
        %v1376 = vunpack.c.h.b16 %v1317
        %v1377 = vunpack.c.l.b16 %v1318
        %v1378 = vunpack.c.h.b16 %v1318
        %v1379 = vunpack.c.l.b16 %v1319
        %v1380 = vunpack.c.h.b16 %v1319
        %v1381 = vunpack.c.l.b16 %v1320
        %v1382 = vunpack.c.h.b16 %v1320
        %v1383 = vunpack.c.l.b16 %v1321
        %v1384 = vunpack.c.h.b16 %v1321
        %v1385 = vunpack.c.l.b16 %v1322
        %v1386 = vunpack.c.h.b16 %v1322
        %v1387 = vunpack.c.l.b16 %v1323
        %v1388 = vunpack.c.h.b16 %v1323
        %v1389 = vpack.c.b16 %v1375, %v1373
        %v1390 = vpack.c.b16 %v1376, %v1374
        %v1391 = vpack.c.b16 %v1379, %v1377
        %v1392 = vpack.c.b16 %v1380, %v1378
        %v1393 = vpack.c.b16 %v1383, %v1381
        %v1394 = vpack.c.b16 %v1384, %v1382
        %v1395 = vpack.c.b16 %v1387, %v1385
        %v1396 = vpack.c.b16 %v1388, %v1386
        %v1425 = vunpack.c.l.b16 %v1341
        %v1426 = vunpack.c.l.b16 %v1342
        %v1427 = vunpack.c.l.b16 %v1343
        %v1428 = vunpack.c.l.b16 %v1344
        %v1429 = vunpack.c.l.b16 %v1345
        %v1430 = vunpack.c.l.b16 %v1346
        %v1431 = vunpack.c.l.b16 %v1347
        %v1432 = vunpack.c.l.b16 %v1348
        %v1433 = vunpack.c.l.b16 %v1349
        %v1434 = vunpack.c.l.b16 %v1350
        %v1435 = vunpack.c.l.b16 %v1351
        %v1436 = vunpack.c.l.b16 %v1352
        %v1437 = vunpack.c.l.b16 %v1353
        %v1438 = vunpack.c.l.b16 %v1354
        %v1439 = vunpack.c.l.b16 %v1355
        %v1440 = vunpack.c.l.b16 %v1356
        %v1441 = vunpack.c.l.b16 %v1357
        %v1442 = vunpack.c.l.b16 %v1358
        %v1443 = vunpack.c.l.b16 %v1359
        %v1444 = vunpack.c.l.b16 %v1360
        %v1445 = vunpack.c.l.b16 %v1361
        %v1446 = vunpack.c.l.b16 %v1362
        %v1447 = vunpack.c.l.b16 %v1363
        %v1448 = vunpack.c.l.b16 %v1364
        %v1449 = vpack.c.b16 %v1426, %v1425
        %v1450 = vpack.c.b16 %v1428, %v1427
        %v1451 = vpack.c.b16 %v1430, %v1429
        %v1452 = vpack.c.b16 %v1432, %v1431
        %v1453 = vpack.c.b16 %v1434, %v1433
        %v1454 = vpack.c.b16 %v1436, %v1435
        %v1455 = vpack.c.b16 %v1438, %v1437
        %v1456 = vpack.c.b16 %v1440, %v1439
        %v1457 = vpack.c.b16 %v1442, %v1441
        %v1458 = vpack.c.b16 %v1444, %v1443
        %v1459 = vpack.c.b16 %v1446, %v1445
        %v1460 = vpack.c.b16 %v1448, %v1447
        %1461 = vrot.lane.b32.xlu0 %v1449, 120
        %v1462 = vpop.permute.xlu0 %1461
        %1463 = vrot.lane.b32.xlu0 %v1450, 120
        %v1464 = vpop.permute.xlu0 %1463
        %1465 = vrot.lane.b32.xlu0 %v1451, 120
        %v1466 = vpop.permute.xlu0 %1465
        %1467 = vrot.lane.b32.xlu0 %v1452, 120
        %v1468 = vpop.permute.xlu0 %1467
        %1469 = vrot.lane.b32.xlu0 %v1453, 120
        %v1470 = vpop.permute.xlu0 %1469
        %1471 = vrot.lane.b32.xlu0 %v1454, 120
        %v1472 = vpop.permute.xlu0 %1471
        %1473 = vrot.lane.b32.xlu0 %v1455, 120
        %v1474 = vpop.permute.xlu0 %1473
        %1475 = vrot.lane.b32.xlu0 %v1456, 120
        %v1476 = vpop.permute.xlu0 %1475
        %1477 = vrot.lane.b32.xlu0 %v1457, 120
        %v1478 = vpop.permute.xlu0 %1477
        %1479 = vrot.lane.b32.xlu0 %v1458, 120
        %v1480 = vpop.permute.xlu0 %1479
        %1481 = vrot.lane.b32.xlu0 %v1459, 120
        %v1482 = vpop.permute.xlu0 %1481
        %1483 = vrot.lane.b32.xlu0 %v1460, 120
        %v1484 = vpop.permute.xlu0 %1483
        %v1498 = vsel %vm753, %v1390, 0
        %v1501 = vsel %vm753, %v1392, 0
        %v1504 = vsel %vm753, %v1394, 0
        %v1507 = vsel %vm753, %v1396, 0
        %1509 = vmatpush.bf16.msra.mxu0 %v1476
        %1510 = vmatpush.bf16.msra.mxu0 %v1474
        %1511 = vmatpush.bf16.msra.mxu0 %v1472
        %1512 = vmatpush.bf16.msra.mxu0 %v1470
        %1513 = vmatpush.bf16.msra.mxu0 %v1468
        %1514 = vmatpush.bf16.msra.mxu0 %v1466
        %1515 = vmatpush.bf16.msra.mxu0 %v1464
        %1516 = vmatpush.bf16.msra.mxu0 %v1462
        %1517 = vmatmul.bf16.gmra.mxu0 %v1389
        %v1518 = vpop.f32.mrf.mxu0
        %v1519 = vadd.f32 0.0, %v1518
        %v1520 = vpop.f32.mrf.mxu0
        %v1521 = vadd.f32 0.0, %v1520
        %1522 = vmatmul.bf16.gmra.mxu0 %v1391
        %v1523 = vpop.f32.mrf.mxu0
        %v1524 = vadd.f32 0.0, %v1523
        %v1525 = vpop.f32.mrf.mxu0
        %v1526 = vadd.f32 0.0, %v1525
        %1527 = vmatmul.bf16.gmra.mxu0 %v1393
        %v1528 = vpop.f32.mrf.mxu0
        %v1529 = vadd.f32 0.0, %v1528
        %v1530 = vpop.f32.mrf.mxu0
        %v1531 = vadd.f32 0.0, %v1530
        %1532 = vmatmul.bf16.gmra.mxu0 %v1395
        %v1533 = vpop.f32.mrf.mxu0
        %v1534 = vadd.f32 0.0, %v1533
        %v1535 = vpop.f32.mrf.mxu0
        %v1536 = vadd.f32 0.0, %v1535
        %1537 = vdwg.mxu0
        %1538 = vmatpush.bf16.msra.mxu0 0
        %1539 = vmatpush.bf16.msra.mxu0 0
        %1540 = vmatpush.bf16.msra.mxu0 0
        %1541 = vmatpush.bf16.msra.mxu0 0
        %1542 = vmatpush.bf16.msra.mxu0 %v1484
        %1543 = vmatpush.bf16.msra.mxu0 %v1482
        %1544 = vmatpush.bf16.msra.mxu0 %v1480
        %1545 = vmatpush.bf16.msra.mxu0 %v1478
        %1546 = vmatmul.bf16.gmra.mxu0 %v1498
        %v1547 = vpop.f32.mrf.mxu0
        %v1548 = vadd.f32 %v1519, %v1547
        %v1549 = vpop.f32.mrf.mxu0
        %v1550 = vadd.f32 %v1521, %v1549
        %1551 = vmatmul.bf16.gmra.mxu0 %v1501
        %v1552 = vpop.f32.mrf.mxu0
        %v1553 = vadd.f32 %v1524, %v1552
        %v1554 = vpop.f32.mrf.mxu0
        %v1555 = vadd.f32 %v1526, %v1554
        %1556 = vmatmul.bf16.gmra.mxu0 %v1504
        %v1557 = vpop.f32.mrf.mxu0
        %v1558 = vadd.f32 %v1529, %v1557
        %v1559 = vpop.f32.mrf.mxu0
        %v1560 = vadd.f32 %v1531, %v1559
        %1561 = vmatmul.bf16.gmra.mxu0 %v1507
        %v1562 = vpop.f32.mrf.mxu0
        %v1563 = vadd.f32 %v1534, %v1562
        %v1564 = vpop.f32.mrf.mxu0
        %v1565 = vadd.f32 %v1536, %v1564
        %1566 = vdwg.mxu0
        %v1575 = vunpack.c.l.b16 %v1307
        %v1576 = vunpack.c.h.b16 %v1307
        %v1577 = vunpack.c.l.b16 %v1308
        %v1578 = vunpack.c.h.b16 %v1308
        %v1579 = vunpack.c.l.b16 %v1309
        %v1580 = vunpack.c.h.b16 %v1309
        %v1581 = vunpack.c.l.b16 %v1310
        %v1582 = vunpack.c.h.b16 %v1310
        %v1583 = vunpack.c.l.b16 %v1311
        %v1584 = vunpack.c.h.b16 %v1311
        %v1585 = vunpack.c.l.b16 %v1312
        %v1586 = vunpack.c.h.b16 %v1312
        %v1587 = vunpack.c.l.b16 %v1313
        %v1588 = vunpack.c.h.b16 %v1313
        %v1589 = vunpack.c.l.b16 %v1314
        %v1590 = vunpack.c.h.b16 %v1314
        %v1591 = vpack.c.b16 %v1577, %v1575
        %v1592 = vpack.c.b16 %v1578, %v1576
        %v1593 = vpack.c.b16 %v1581, %v1579
        %v1594 = vpack.c.b16 %v1582, %v1580
        %v1595 = vpack.c.b16 %v1585, %v1583
        %v1596 = vpack.c.b16 %v1586, %v1584
        %v1597 = vpack.c.b16 %v1589, %v1587
        %v1598 = vpack.c.b16 %v1590, %v1588
        %v1616 = vsel %vm753, %v1592, 0
        %v1619 = vsel %vm753, %v1594, 0
        %v1622 = vsel %vm753, %v1596, 0
        %v1625 = vsel %vm753, %v1598, 0
        %1627 = vmatpush.bf16.msra.mxu0 %v1456
        %1628 = vmatpush.bf16.msra.mxu0 %v1455
        %1629 = vmatpush.bf16.msra.mxu0 %v1454
        %1630 = vmatpush.bf16.msra.mxu0 %v1453
        %1631 = vmatpush.bf16.msra.mxu0 %v1452
        %1632 = vmatpush.bf16.msra.mxu0 %v1451
        %1633 = vmatpush.bf16.msra.mxu0 %v1450
        %1634 = vmatpush.bf16.msra.mxu0 %v1449
        %1635 = vmatmul.bf16.gmra.mxu0 %v1591
        %v1636 = vpop.f32.mrf.mxu0
        %v1637 = vadd.f32 %v1548, %v1636
        %v1638 = vpop.f32.mrf.mxu0
        %v1639 = vadd.f32 %v1550, %v1638
        %1640 = vmatmul.bf16.gmra.mxu0 %v1593
        %v1641 = vpop.f32.mrf.mxu0
        %v1642 = vadd.f32 %v1553, %v1641
        %v1643 = vpop.f32.mrf.mxu0
        %v1644 = vadd.f32 %v1555, %v1643
        %1645 = vmatmul.bf16.gmra.mxu0 %v1595
        %v1646 = vpop.f32.mrf.mxu0
        %v1647 = vadd.f32 %v1558, %v1646
        %v1648 = vpop.f32.mrf.mxu0
        %v1649 = vadd.f32 %v1560, %v1648
        %1650 = vmatmul.bf16.gmra.mxu0 %v1597
        %v1651 = vpop.f32.mrf.mxu0
        %v1652 = vadd.f32 %v1563, %v1651
        %v1653 = vpop.f32.mrf.mxu0
        %v1654 = vadd.f32 %v1565, %v1653
        %1655 = vdwg.mxu0
        %1656 = vmatpush.bf16.msra.mxu0 0
        %1657 = vmatpush.bf16.msra.mxu0 0
        %1658 = vmatpush.bf16.msra.mxu0 0
        %1659 = vmatpush.bf16.msra.mxu0 0
        %1660 = vmatpush.bf16.msra.mxu0 %v1460
        %1661 = vmatpush.bf16.msra.mxu0 %v1459
        %1662 = vmatpush.bf16.msra.mxu0 %v1458
        %1663 = vmatpush.bf16.msra.mxu0 %v1457
        %1664 = vmatmul.bf16.gmra.mxu0 %v1616
        %v1665 = vpop.f32.mrf.mxu0
        %v1666 = vadd.f32 %v1637, %v1665
        %v1667 = vpop.f32.mrf.mxu0
        %v1668 = vadd.f32 %v1639, %v1667
        %1669 = vmatmul.bf16.gmra.mxu0 %v1619
        %v1670 = vpop.f32.mrf.mxu0
        %v1671 = vadd.f32 %v1642, %v1670
        %v1672 = vpop.f32.mrf.mxu0
        %v1673 = vadd.f32 %v1644, %v1672
        %1674 = vmatmul.bf16.gmra.mxu0 %v1622
        %v1675 = vpop.f32.mrf.mxu0
        %v1676 = vadd.f32 %v1647, %v1675
        %v1677 = vpop.f32.mrf.mxu0
        %v1678 = vadd.f32 %v1649, %v1677
        %1679 = vmatmul.bf16.gmra.mxu0 %v1625
        %v1680 = vpop.f32.mrf.mxu0
        %v1681 = vadd.f32 %v1652, %v1680
        %v1682 = vpop.f32.mrf.mxu0
        %v1683 = vadd.f32 %v1654, %v1682
        %1684 = vdwg.mxu0
        %v1693 = vunpack.c.l.b16 %v1325
        %v1694 = vunpack.c.h.b16 %v1325
        %v1695 = vunpack.c.l.b16 %v1326
        %v1696 = vunpack.c.h.b16 %v1326
        %v1697 = vunpack.c.l.b16 %v1327
        %v1698 = vunpack.c.h.b16 %v1327
        %v1699 = vunpack.c.l.b16 %v1328
        %v1700 = vunpack.c.h.b16 %v1328
        %v1701 = vunpack.c.l.b16 %v1329
        %v1702 = vunpack.c.h.b16 %v1329
        %v1703 = vunpack.c.l.b16 %v1330
        %v1704 = vunpack.c.h.b16 %v1330
        %v1705 = vunpack.c.l.b16 %v1331
        %v1706 = vunpack.c.h.b16 %v1331
        %v1707 = vunpack.c.l.b16 %v1332
        %v1708 = vunpack.c.h.b16 %v1332
        %v1709 = vpack.c.b16 %v1695, %v1693
        %v1710 = vpack.c.b16 %v1696, %v1694
        %v1711 = vpack.c.b16 %v1699, %v1697
        %v1712 = vpack.c.b16 %v1700, %v1698
        %v1713 = vpack.c.b16 %v1703, %v1701
        %v1714 = vpack.c.b16 %v1704, %v1702
        %v1715 = vpack.c.b16 %v1707, %v1705
        %v1716 = vpack.c.b16 %v1708, %v1706
        %1721 = vrot.lane.b32.xlu0 %v1449, 112
        %v1722 = vpop.permute.xlu0 %1721
        %1723 = vrot.lane.b32.xlu0 %v1450, 112
        %v1724 = vpop.permute.xlu0 %1723
        %1725 = vrot.lane.b32.xlu0 %v1451, 112
        %v1726 = vpop.permute.xlu0 %1725
        %1727 = vrot.lane.b32.xlu0 %v1452, 112
        %v1728 = vpop.permute.xlu0 %1727
        %1729 = vrot.lane.b32.xlu0 %v1453, 112
        %v1730 = vpop.permute.xlu0 %1729
        %1731 = vrot.lane.b32.xlu0 %v1454, 112
        %v1732 = vpop.permute.xlu0 %1731
        %1733 = vrot.lane.b32.xlu0 %v1455, 112
        %v1734 = vpop.permute.xlu0 %1733
        %1735 = vrot.lane.b32.xlu0 %v1456, 112
        %v1736 = vpop.permute.xlu0 %1735
        %1737 = vrot.lane.b32.xlu0 %v1457, 112
        %v1738 = vpop.permute.xlu0 %1737
        %1739 = vrot.lane.b32.xlu0 %v1458, 112
        %v1740 = vpop.permute.xlu0 %1739
        %1741 = vrot.lane.b32.xlu0 %v1459, 112
        %v1742 = vpop.permute.xlu0 %1741
        %1743 = vrot.lane.b32.xlu0 %v1460, 112
        %v1744 = vpop.permute.xlu0 %1743
        %v1758 = vsel %vm753, %v1710, 0
        %v1761 = vsel %vm753, %v1712, 0
        %v1764 = vsel %vm753, %v1714, 0
        %v1767 = vsel %vm753, %v1716, 0
        %1769 = vmatpush.bf16.msra.mxu0 %v1736
        %1770 = vmatpush.bf16.msra.mxu0 %v1734
        %1771 = vmatpush.bf16.msra.mxu0 %v1732
        %1772 = vmatpush.bf16.msra.mxu0 %v1730
        %1773 = vmatpush.bf16.msra.mxu0 %v1728
        %1774 = vmatpush.bf16.msra.mxu0 %v1726
        %1775 = vmatpush.bf16.msra.mxu0 %v1724
        %1776 = vmatpush.bf16.msra.mxu0 %v1722
        %1777 = vmatmul.bf16.gmra.mxu0 %v1709
        %v1778 = vpop.f32.mrf.mxu0
        %v1779 = vadd.f32 0.0, %v1778
        %v1780 = vpop.f32.mrf.mxu0
        %v1781 = vadd.f32 0.0, %v1780
        %1782 = vmatmul.bf16.gmra.mxu0 %v1711
        %v1783 = vpop.f32.mrf.mxu0
        %v1784 = vadd.f32 0.0, %v1783
        %v1785 = vpop.f32.mrf.mxu0
        %v1786 = vadd.f32 0.0, %v1785
        %1787 = vmatmul.bf16.gmra.mxu0 %v1713
        %v1788 = vpop.f32.mrf.mxu0
        %v1789 = vadd.f32 0.0, %v1788
        %v1790 = vpop.f32.mrf.mxu0
        %v1791 = vadd.f32 0.0, %v1790
        %1792 = vmatmul.bf16.gmra.mxu0 %v1715
        %v1793 = vpop.f32.mrf.mxu0
        %v1794 = vadd.f32 0.0, %v1793
        %v1795 = vpop.f32.mrf.mxu0
        %v1796 = vadd.f32 0.0, %v1795
        %1797 = vdwg.mxu0
        %1798 = vmatpush.bf16.msra.mxu0 0
        %1799 = vmatpush.bf16.msra.mxu0 0
        %1800 = vmatpush.bf16.msra.mxu0 0
        %1801 = vmatpush.bf16.msra.mxu0 0
        %1802 = vmatpush.bf16.msra.mxu0 %v1744
        %1803 = vmatpush.bf16.msra.mxu0 %v1742
        %1804 = vmatpush.bf16.msra.mxu0 %v1740
        %1805 = vmatpush.bf16.msra.mxu0 %v1738
        %1806 = vmatmul.bf16.gmra.mxu0 %v1758
        %v1807 = vpop.f32.mrf.mxu0
        %v1808 = vadd.f32 %v1779, %v1807
        %v1809 = vpop.f32.mrf.mxu0
        %v1810 = vadd.f32 %v1781, %v1809
        %1811 = vmatmul.bf16.gmra.mxu0 %v1761
        %v1812 = vpop.f32.mrf.mxu0
        %v1813 = vadd.f32 %v1784, %v1812
        %v1814 = vpop.f32.mrf.mxu0
        %v1815 = vadd.f32 %v1786, %v1814
        %1816 = vmatmul.bf16.gmra.mxu0 %v1764
        %v1817 = vpop.f32.mrf.mxu0
        %v1818 = vadd.f32 %v1789, %v1817
        %v1819 = vpop.f32.mrf.mxu0
        %v1820 = vadd.f32 %v1791, %v1819
        %1821 = vmatmul.bf16.gmra.mxu0 %v1767
        %v1822 = vpop.f32.mrf.mxu0
        %v1823 = vadd.f32 %v1794, %v1822
        %v1824 = vpop.f32.mrf.mxu0
        %v1825 = vadd.f32 %v1796, %v1824
        %1826 = vdwg.mxu0
        %v1827 = vadd.f32 %v1666, %v1808
        %v1828 = vadd.f32 %v1668, %v1810
        %v1829 = vadd.f32 %v1671, %v1813
        %v1830 = vadd.f32 %v1673, %v1815
        %v1831 = vadd.f32 %v1676, %v1818
        %v1832 = vadd.f32 %v1678, %v1820
        %v1833 = vadd.f32 %v1681, %v1823
        %v1834 = vadd.f32 %v1683, %v1825
        %1836 = vset.pattern.permute.xlu0 0
        %1837 = vperm.xlu0 %1836, %v1333
        %v1838 = vpop.permute.xlu0 %1837
        %1841 = vset.pattern.permute.xlu0 0
        %1842 = vperm.xlu0 %1841, %v1334
        %v1843 = vpop.permute.xlu0 %1842
        %1846 = vset.pattern.permute.xlu0 0
        %1847 = vperm.xlu0 %1846, %v1335
        %v1848 = vpop.permute.xlu0 %1847
        %1851 = vset.pattern.permute.xlu0 0
        %1852 = vperm.xlu0 %1851, %v1336
        %v1853 = vpop.permute.xlu0 %1852
        %1856 = vset.pattern.permute.xlu0 0
        %1857 = vperm.xlu0 %1856, %v1337
        %v1858 = vpop.permute.xlu0 %1857
        %1861 = vset.pattern.permute.xlu0 0
        %1862 = vperm.xlu0 %1861, %v1338
        %v1863 = vpop.permute.xlu0 %1862
        %1866 = vset.pattern.permute.xlu0 0
        %1867 = vperm.xlu0 %1866, %v1339
        %v1868 = vpop.permute.xlu0 %1867
        %1871 = vset.pattern.permute.xlu0 0
        %1872 = vperm.xlu0 %1871, %v1340
        %v1873 = vpop.permute.xlu0 %1872
        %v1875 = vadd.f32 %v1827, %v1838
        %v1876 = vadd.f32 %v1828, %v1843
        %v1877 = vadd.f32 %v1829, %v1848
        %v1878 = vadd.f32 %v1830, %v1853
        %v1879 = vadd.f32 %v1831, %v1858
        %v1880 = vadd.f32 %v1832, %v1863
        %v1881 = vadd.f32 %v1833, %v1868
        %v1882 = vadd.f32 %v1834, %v1873
        %vm1883 = vcmp.ge.f32.partialorder %v1875, 0.0
        %vm1884 = vcmp.ge.f32.partialorder %v1876, 0.0
        %vm1885 = vcmp.ge.f32.partialorder %v1877, 0.0
        %vm1886 = vcmp.ge.f32.partialorder %v1878, 0.0
        %vm1887 = vcmp.ge.f32.partialorder %v1879, 0.0
        %vm1888 = vcmp.ge.f32.partialorder %v1880, 0.0
        %vm1889 = vcmp.ge.f32.partialorder %v1881, 0.0
        %vm1890 = vcmp.ge.f32.partialorder %v1882, 0.0
        %v1891 = vmul.f32 %v1875, 0.1
        %v1892 = vmul.f32 %v1876, 0.1
        %v1893 = vmul.f32 %v1877, 0.1
        %v1894 = vmul.f32 %v1878, 0.1
        %v1895 = vmul.f32 %v1879, 0.1
        %v1896 = vmul.f32 %v1880, 0.1
        %v1897 = vmul.f32 %v1881, 0.1
        %v1898 = vmul.f32 %v1882, 0.1
        %v1899 = vsel %vm1883, %v1875, %v1891
        %v1900 = vsel %vm1884, %v1876, %v1892
        %v1901 = vsel %vm1885, %v1877, %v1893
        %v1902 = vsel %vm1886, %v1878, %v1894
        %v1903 = vsel %vm1887, %v1879, %v1895
        %v1904 = vsel %vm1888, %v1880, %v1896
        %v1905 = vsel %vm1889, %v1881, %v1897
        %v1906 = vsel %vm1890, %v1882, %v1898
        %1907 = vst.msk [vmem:[%s616] sm:$0xff] %vm753, %v1899
        %1908 = vst.msk [vmem:[%s616 + $0x8] sm:$0xff] %vm753, %v1900
        %1909 = vst.msk [vmem:[%s616 + $0x10] sm:$0xff] %vm753, %v1901
        %1910 = vst.msk [vmem:[%s616 + $0x18] sm:$0xff] %vm753, %v1902
        %1911 = vst.msk [vmem:[%s616 + $0x20] sm:$0xff] %vm753, %v1903
        %1912 = vst.msk [vmem:[%s616 + $0x28] sm:$0xff] %vm753, %v1904
        %1913 = vst.msk [vmem:[%s616 + $0x30] sm:$0xff] %vm753, %v1905
        %1914 = vst.msk [vmem:[%s616 + $0x38] sm:$0xff] %vm753, %v1906
        %v1915 = vpack.c.bf16 %v1899, %v1899
        %v1916 = vpack.c.bf16 %v1900, %v1900
        %v1917 = vpack.c.bf16 %v1901, %v1901
        %v1918 = vpack.c.bf16 %v1902, %v1902
        %v1919 = vpack.c.bf16 %v1903, %v1903
        %v1920 = vpack.c.bf16 %v1904, %v1904
        %v1921 = vpack.c.bf16 %v1905, %v1905
        %v1922 = vpack.c.bf16 %v1906, %v1906
        %vm1923 = vcmask 519168
        %1924 = vst.msk [vmem:[#allocation4] sm:$0xf] %vm1923, %v1915
        %1925 = vst.msk [vmem:[#allocation4 + $0x4] sm:$0xf] %vm1923, %v1916
        %1926 = vst.msk [vmem:[#allocation4 + $0x8] sm:$0xf] %vm1923, %v1917
        %1927 = vst.msk [vmem:[#allocation4 + $0xc] sm:$0xf] %vm1923, %v1918
        %1928 = vst.msk [vmem:[#allocation4 + $0x10] sm:$0xf] %vm1923, %v1919
        %1929 = vst.msk [vmem:[#allocation4 + $0x14] sm:$0xf] %vm1923, %v1920
        %1930 = vst.msk [vmem:[#allocation4 + $0x18] sm:$0xf] %vm1923, %v1921
        %1931 = vst.msk [vmem:[#allocation4 + $0x1c] sm:$0xf] %vm1923, %v1922
        %vm1932 = vcmask 134144
        %1933 = vst.msk [vmem:[#allocation2] sm:$0xf] %vm1932, 0
        %1934 = vst.msk [vmem:[#allocation2 + $0xc] sm:$0xf] %vm1932, 0
        %1935 = vst.msk [vmem:[#allocation2 + $0x18] sm:$0xf] %vm1932, 0
        %1936 = vst.msk [vmem:[#allocation2 + $0x24] sm:$0xf] %vm1932, 0
        %1937 = vst.msk [vmem:[#allocation2 + $0x30] sm:$0xf] %vm1932, 0
        %1938 = vst.msk [vmem:[#allocation2 + $0x3c] sm:$0xf] %vm1932, 0
        %1939 = vst.msk [vmem:[#allocation2 + $0x48] sm:$0xf] %vm1932, 0
        %1940 = vst.msk [vmem:[#allocation2 + $0x54] sm:$0xf] %vm1932, 0
        %1941 = vst.msk [vmem:[#allocation2 + $0x60] sm:$0xf] %vm1932, 0
        %1942 = vst.msk [vmem:[#allocation2 + $0x6c] sm:$0xf] %vm1932, 0
        %1943 = vst.msk [vmem:[#allocation2 + $0x78] sm:$0xf] %vm1932, 0
        %1944 = vst.msk [vmem:[#allocation2 + $0x84] sm:$0xf] %vm1932, 0
        %1945 = vst.msk [vmem:[#allocation2 + $0x90] sm:$0xf] %vm1932, 0
        %1946 = vst.msk [vmem:[#allocation2 + $0x9c] sm:$0xf] %vm1932, 0
        %1947 = vst.msk [vmem:[#allocation2 + $0xa8] sm:$0xf] %vm1932, 0
        %1948 = vst.msk [vmem:[#allocation2 + $0xb4] sm:$0xf] %vm1932, 0
        %1949 = vst.msk [vmem:[#allocation2 + $0xc0] sm:$0xf] %vm1932, 0
        %1950 = vst.msk [vmem:[#allocation2 + $0xcc] sm:$0xf] %vm1932, 0
        %1951 = vst.msk [vmem:[#allocation2 + $0xd8] sm:$0xf] %vm1932, 0
        %1952 = vst.msk [vmem:[#allocation2 + $0xe4] sm:$0xf] %vm1932, 0
        %1953 = vst.msk [vmem:[#allocation2 + $0xf0] sm:$0xf] %vm1932, 0
        %1954 = vst.msk [vmem:[#allocation2 + $0xfc] sm:$0xf] %vm1932, 0
        %1955 = vst.msk [vmem:[#allocation2 + $0x108] sm:$0xf] %vm1932, 0
        %1956 = vst.msk [vmem:[#allocation2 + $0x114] sm:$0xf] %vm1932, 0
        %vm1957 = vcmask 257144
        %1958 = vst.msk [vmem:[#allocation2 + $0x8] sm:$0xf] %vm1957, 0
        %1959 = vst.msk [vmem:[#allocation2 + $0x14] sm:$0xf] %vm1957, 0
        %1960 = vst.msk [vmem:[#allocation2 + $0x20] sm:$0xf] %vm1957, 0
        %1961 = vst.msk [vmem:[#allocation2 + $0x2c] sm:$0xf] %vm1957, 0
        %1962 = vst.msk [vmem:[#allocation2 + $0x38] sm:$0xf] %vm1957, 0
        %1963 = vst.msk [vmem:[#allocation2 + $0x44] sm:$0xf] %vm1957, 0
        %1964 = vst.msk [vmem:[#allocation2 + $0x50] sm:$0xf] %vm1957, 0
        %1965 = vst.msk [vmem:[#allocation2 + $0x5c] sm:$0xf] %vm1957, 0
        %1966 = vst.msk [vmem:[#allocation2 + $0x68] sm:$0xf] %vm1957, 0
        %1967 = vst.msk [vmem:[#allocation2 + $0x74] sm:$0xf] %vm1957, 0
        %1968 = vst.msk [vmem:[#allocation2 + $0x80] sm:$0xf] %vm1957, 0
        %1969 = vst.msk [vmem:[#allocation2 + $0x8c] sm:$0xf] %vm1957, 0
        %1970 = vst.msk [vmem:[#allocation2 + $0x98] sm:$0xf] %vm1957, 0
        %1971 = vst.msk [vmem:[#allocation2 + $0xa4] sm:$0xf] %vm1957, 0
        %1972 = vst.msk [vmem:[#allocation2 + $0xb0] sm:$0xf] %vm1957, 0
        %1973 = vst.msk [vmem:[#allocation2 + $0xbc] sm:$0xf] %vm1957, 0
        %1974 = vst.msk [vmem:[#allocation2 + $0xc8] sm:$0xf] %vm1957, 0
        %1975 = vst.msk [vmem:[#allocation2 + $0xd4] sm:$0xf] %vm1957, 0
        %1976 = vst.msk [vmem:[#allocation2 + $0xe0] sm:$0xf] %vm1957, 0
        %1977 = vst.msk [vmem:[#allocation2 + $0xec] sm:$0xf] %vm1957, 0
        %1978 = vst.msk [vmem:[#allocation2 + $0xf8] sm:$0xf] %vm1957, 0
        %1979 = vst.msk [vmem:[#allocation2 + $0x104] sm:$0xf] %vm1957, 0
        %1980 = vst.msk [vmem:[#allocation2 + $0x110] sm:$0xf] %vm1957, 0
        %1981 = vst.msk [vmem:[#allocation2 + $0x11c] sm:$0xf] %vm1957, 0
        %v1982 = vld [vmem:[%s3] sm:$0xf]
        %v1983 = vld [vmem:[%s3 + $0x4] sm:$0xf]
        %v1984 = vld [vmem:[%s3 + $0x8] sm:$0xf]
        %v1985 = vld [vmem:[%s3 + $0xc] sm:$0xf]
        %v1986 = vld [vmem:[%s3 + $0x10] sm:$0xf]
        %v1987 = vld [vmem:[%s3 + $0x14] sm:$0xf]
        %v1988 = vld [vmem:[%s3 + $0x18] sm:$0xf]
        %v1989 = vld [vmem:[%s3 + $0x1c] sm:$0xf]
        %v1990 = vld [vmem:[%s4] sm:$0xff]
        %v1991 = vld [vmem:[%s4 + $0x8] sm:$0xff]
        %v1992 = vld [vmem:[%s4 + $0x10] sm:$0xff]
        %v1993 = vld [vmem:[%s4 + $0x18] sm:$0xff]
        %v1994 = vld [vmem:[%s4 + $0x20] sm:$0xff]
        %v1995 = vld [vmem:[%s4 + $0x28] sm:$0xff]
        %v1996 = vld [vmem:[%s4 + $0x30] sm:$0xff]
        %v1997 = vld [vmem:[%s4 + $0x38] sm:$0xff]
        %v1998 = vld [vmem:[%s14] sm:$0xf]
        %v1999 = vld [vmem:[%s14 + $0x4] sm:$0xf]
        %v2000 = vld [vmem:[%s14 + $0x8] sm:$0xf]
        %v2001 = vld [vmem:[%s14 + $0xc] sm:$0xf]
        %vm2002 = vcmp.lt.s32.totalorder %v914, 0
        %v2003 = vsub.s32 0, %v914
        %v2004 = vsel %vm2002, %v2003, %v914
        %v2005 = vshrl.u32 %v2004, 4
        %v2006 = vand.u32 %v2004, 15
        %v2007 = vsub.s32 0, %v2006
        %v2008 = vsel %vm2002, %v2007, %v2006
        %vm2009 = vcmp.ne.s32.totalorder %v2008, 0
        %vm2010 = vcmp.lt.s32.totalorder %v2008, 0
        %vm2011 = vmand %vm2010, %vm2009
        %v2012 = vadd.s32 %v2008, 16
        %v2013 = vsel %vm2011, %v2012, %v2008
        %v2014 = vld [vmem:[%s628] sm:$0xf]
        %v2015 = vld [vmem:[%s628 + $0x8] sm:$0xf]
        %2017 = vset.pattern.permute.xlu0 0
        %2018 = vperm.xlu0 %2017, %v1990
        %v2019 = vpop.permute.xlu0 %2018
        %2022 = vset.pattern.permute.xlu0 0
        %2023 = vperm.xlu0 %2022, %v1991
        %v2024 = vpop.permute.xlu0 %2023
        %2027 = vset.pattern.permute.xlu0 0
        %2028 = vperm.xlu0 %2027, %v1992
        %v2029 = vpop.permute.xlu0 %2028
        %2032 = vset.pattern.permute.xlu0 0
        %2033 = vperm.xlu0 %2032, %v1993
        %v2034 = vpop.permute.xlu0 %2033
        %2037 = vset.pattern.permute.xlu0 0
        %2038 = vperm.xlu0 %2037, %v1994
        %v2039 = vpop.permute.xlu0 %2038
        %2042 = vset.pattern.permute.xlu0 0
        %2043 = vperm.xlu0 %2042, %v1995
        %v2044 = vpop.permute.xlu0 %2043
        %2047 = vset.pattern.permute.xlu0 0
        %2048 = vperm.xlu0 %2047, %v1996
        %v2049 = vpop.permute.xlu0 %2048
        %2052 = vset.pattern.permute.xlu0 0
        %2053 = vperm.xlu0 %2052, %v1997
        %v2054 = vpop.permute.xlu0 %2053
        %v2064 = vunpack.c.l.b16 %v1982
        %v2065 = vunpack.c.l.b16 %v1983
        %v2066 = vunpack.c.l.b16 %v1984
        %v2067 = vunpack.c.l.b16 %v1985
        %v2068 = vunpack.c.l.b16 %v1986
        %v2069 = vunpack.c.l.b16 %v1987
        %v2070 = vunpack.c.l.b16 %v1988
        %v2071 = vunpack.c.l.b16 %v1989
        %v2072 = vpack.c.b16 %v2065, %v2064
        %v2073 = vpack.c.b16 %v2067, %v2066
        %v2074 = vpack.c.b16 %v2069, %v2068
        %v2075 = vpack.c.b16 %v2071, %v2070
        %v2078 = vunpack.c.l.b16 %v2014
        %v2079 = vunpack.c.l.b16 %v2015
        %v2080 = vpack.c.b16 %v2079, %v2078
        %v2083 = vsel %vm819, %v2072, 0
        %v2086 = vsel %vm819, %v2073, 0
        %v2089 = vsel %vm819, %v2074, 0
        %v2092 = vsel %vm819, %v2075, 0
        %2094 = vmatpush.bf16.msra.mxu0 0
        %2095 = vmatpush.bf16.msra.mxu0 0
        %2096 = vmatpush.bf16.msra.mxu0 0
        %2097 = vmatpush.bf16.msra.mxu0 0
        %2098 = vmatpush.bf16.msra.mxu0 0
        %2099 = vmatpush.bf16.msra.mxu0 0
        %2100 = vmatpush.bf16.msra.mxu0 0
        %2101 = vmatpush.bf16.msra.mxu0 %v2080
        %2102 = vmatmul.bf16.gmra.mxu0 %v2083
        %v2103 = vpop.f32.mrf.mxu0
        %v2104 = vadd.f32 %v2019, %v2103
        %v2105 = vpop.f32.mrf.mxu0
        %v2106 = vadd.f32 %v2024, %v2105
        %2107 = vmatmul.bf16.gmra.mxu0 %v2086
        %v2108 = vpop.f32.mrf.mxu0
        %v2109 = vadd.f32 %v2029, %v2108
        %v2110 = vpop.f32.mrf.mxu0
        %v2111 = vadd.f32 %v2034, %v2110
        %2112 = vmatmul.bf16.gmra.mxu0 %v2089
        %v2113 = vpop.f32.mrf.mxu0
        %v2114 = vadd.f32 %v2039, %v2113
        %v2115 = vpop.f32.mrf.mxu0
        %v2116 = vadd.f32 %v2044, %v2115
        %2117 = vmatmul.bf16.gmra.mxu0 %v2092
        %v2118 = vpop.f32.mrf.mxu0
        %v2119 = vadd.f32 %v2049, %v2118
        %v2120 = vpop.f32.mrf.mxu0
        %v2121 = vadd.f32 %v2054, %v2120
        %2122 = vdwg.mxu0
        %vm2123 = vcmp.ge.f32.partialorder %v2104, 0.0
        %vm2124 = vcmp.ge.f32.partialorder %v2106, 0.0
        %vm2125 = vcmp.ge.f32.partialorder %v2109, 0.0
        %vm2126 = vcmp.ge.f32.partialorder %v2111, 0.0
        %vm2127 = vcmp.ge.f32.partialorder %v2114, 0.0
        %vm2128 = vcmp.ge.f32.partialorder %v2116, 0.0
        %vm2129 = vcmp.ge.f32.partialorder %v2119, 0.0
        %vm2130 = vcmp.ge.f32.partialorder %v2121, 0.0
        %v2131 = vmul.f32 %v2104, 0.1
        %v2132 = vmul.f32 %v2106, 0.1
        %v2133 = vmul.f32 %v2109, 0.1
        %v2134 = vmul.f32 %v2111, 0.1
        %v2135 = vmul.f32 %v2114, 0.1
        %v2136 = vmul.f32 %v2116, 0.1
        %v2137 = vmul.f32 %v2119, 0.1
        %v2138 = vmul.f32 %v2121, 0.1
        %v2139 = vsel %vm2123, %v2104, %v2131
        %v2140 = vsel %vm2124, %v2106, %v2132
        %v2141 = vsel %vm2125, %v2109, %v2133
        %v2142 = vsel %vm2126, %v2111, %v2134
        %v2143 = vsel %vm2127, %v2114, %v2135
        %v2144 = vsel %vm2128, %v2116, %v2136
        %v2145 = vsel %vm2129, %v2119, %v2137
        %v2146 = vsel %vm2130, %v2121, %v2138
        %v2147 = vld [vmem:[#allocation4] sm:$0xf]
        %v2148 = vld [vmem:[#allocation4 + $0x4] sm:$0xf]
        %v2149 = vld [vmem:[#allocation4 + $0x8] sm:$0xf]
        %v2150 = vld [vmem:[#allocation4 + $0xc] sm:$0xf]
        %v2151 = vld [vmem:[#allocation4 + $0x10] sm:$0xf]
        %v2152 = vld [vmem:[#allocation4 + $0x14] sm:$0xf]
        %v2153 = vld [vmem:[#allocation4 + $0x18] sm:$0xf]
        %v2154 = vld [vmem:[#allocation4 + $0x1c] sm:$0xf]
        %v2163 = vunpack.c.l.b16 %v2147
        %v2164 = vunpack.c.l.b16 %v2148
        %v2165 = vunpack.c.l.b16 %v2149
        %v2166 = vunpack.c.l.b16 %v2150
        %v2167 = vunpack.c.l.b16 %v2151
        %v2168 = vunpack.c.l.b16 %v2152
        %v2169 = vunpack.c.l.b16 %v2153
        %v2170 = vunpack.c.l.b16 %v2154
        %v2171 = vpack.c.b16 %v2164, %v2163
        %v2172 = vpack.c.b16 %v2166, %v2165
        %v2173 = vpack.c.b16 %v2168, %v2167
        %v2174 = vpack.c.b16 %v2170, %v2169
        %v2179 = vunpack.c.l.b16 %v1998
        %v2180 = vunpack.c.l.b16 %v1999
        %v2181 = vunpack.c.l.b16 %v2000
        %v2182 = vunpack.c.l.b16 %v2001
        %v2183 = vpack.c.b16 %v2180, %v2179
        %v2184 = vpack.c.b16 %v2182, %v2181
        %v2188 = vsel %vm1003, %v2171, 0
        %v2191 = vsel %vm1003, %v2172, 0
        %v2194 = vsel %vm1003, %v2173, 0
        %v2197 = vsel %vm1003, %v2174, 0
        %2199 = vmatpush.bf16.msra.mxu0 0
        %2200 = vmatpush.bf16.msra.mxu0 0
        %2201 = vmatpush.bf16.msra.mxu0 0
        %2202 = vmatpush.bf16.msra.mxu0 0
        %2203 = vmatpush.bf16.msra.mxu0 0
        %2204 = vmatpush.bf16.msra.mxu0 0
        %2205 = vmatpush.bf16.msra.mxu0 %v2184
        %2206 = vmatpush.bf16.msra.mxu0 %v2183
        %2207 = vmatmul.bf16.gmra.mxu0 %v2188
        %v2208 = vpop.f32.mrf.mxu0
        %v2209 = vadd.f32 0.0, %v2208
        %v2210 = vpop.f32.mrf.mxu0
        %v2211 = vadd.f32 0.0, %v2210
        %2212 = vmatmul.bf16.gmra.mxu0 %v2191
        %v2213 = vpop.f32.mrf.mxu0
        %v2214 = vadd.f32 0.0, %v2213
        %v2215 = vpop.f32.mrf.mxu0
        %v2216 = vadd.f32 0.0, %v2215
        %2217 = vmatmul.bf16.gmra.mxu0 %v2194
        %v2218 = vpop.f32.mrf.mxu0
        %v2219 = vadd.f32 0.0, %v2218
        %v2220 = vpop.f32.mrf.mxu0
        %v2221 = vadd.f32 0.0, %v2220
        %2222 = vmatmul.bf16.gmra.mxu0 %v2197
        %v2223 = vpop.f32.mrf.mxu0
        %v2224 = vadd.f32 0.0, %v2223
        %v2225 = vpop.f32.mrf.mxu0
        %v2226 = vadd.f32 0.0, %v2225
        %2227 = vdwg.mxu0
        %v2228 = vadd.f32 %v2139, %v2209
        %v2229 = vadd.f32 %v2140, %v2211
        %v2230 = vadd.f32 %v2141, %v2214
        %v2231 = vadd.f32 %v2142, %v2216
        %v2232 = vadd.f32 %v2143, %v2219
        %v2233 = vadd.f32 %v2144, %v2221
        %v2234 = vadd.f32 %v2145, %v2224
        %v2235 = vadd.f32 %v2146, %v2226
        %v2236 = vpack.c.bf16 %v2228, %v2228
        %v2237 = vpack.c.bf16 %v2229, %v2229
        %v2238 = vpack.c.bf16 %v2230, %v2230
        %v2239 = vpack.c.bf16 %v2231, %v2231
        %v2240 = vpack.c.bf16 %v2232, %v2232
        %v2241 = vpack.c.bf16 %v2233, %v2233
        %v2242 = vpack.c.bf16 %v2234, %v2234
        %v2243 = vpack.c.bf16 %v2235, %v2235
        %2252 = vrot.lane.b32.xlu0 %v2236, 16
        %v2253 = vpop.permute.xlu0 %2252
        %2254 = vrot.lane.b32.xlu0 %v2237, 16
        %v2255 = vpop.permute.xlu0 %2254
        %2256 = vrot.lane.b32.xlu0 %v2238, 16
        %v2257 = vpop.permute.xlu0 %2256
        %2258 = vrot.lane.b32.xlu0 %v2239, 16
        %v2259 = vpop.permute.xlu0 %2258
        %2260 = vrot.lane.b32.xlu0 %v2240, 16
        %v2261 = vpop.permute.xlu0 %2260
        %2262 = vrot.lane.b32.xlu0 %v2241, 16
        %v2263 = vpop.permute.xlu0 %2262
        %2264 = vrot.lane.b32.xlu0 %v2242, 16
        %v2265 = vpop.permute.xlu0 %2264
        %2266 = vrot.lane.b32.xlu0 %v2243, 16
        %v2267 = vpop.permute.xlu0 %2266
        %v2268 = vrot.slane %v2253, 4
        %v2269 = vrot.slane %v2255, 4
        %v2270 = vrot.slane %v2257, 4
        %v2271 = vrot.slane %v2259, 4
        %v2272 = vrot.slane %v2261, 4
        %v2273 = vrot.slane %v2263, 4
        %v2274 = vrot.slane %v2265, 4
        %v2275 = vrot.slane %v2267, 4
        %vm2276 = vcmask 130048
        %v2277 = vsel %vm2276, %v2268, %v2253
        %v2278 = vsel %vm2276, %v2269, %v2255
        %v2279 = vsel %vm2276, %v2270, %v2257
        %v2280 = vsel %vm2276, %v2271, %v2259
        %v2281 = vsel %vm2276, %v2272, %v2261
        %v2282 = vsel %vm2276, %v2273, %v2263
        %v2283 = vsel %vm2276, %v2274, %v2265
        %v2284 = vsel %vm2276, %v2275, %v2267
        %vm2293 = vcmask 1043584
        %vm2294 = vcmask 130052
        %vm2295 = vmor %vm2294, %vm2293
        %2296 = vst.msk [vmem:[#allocation2 + $0x60] sm:$0xff] %vm2295, %v2277
        %2297 = vst.msk [vmem:[#allocation2 + $0x6c] sm:$0xff] %vm2295, %v2278
        %2298 = vst.msk [vmem:[#allocation2 + $0x78] sm:$0xff] %vm2295, %v2279
        %2299 = vst.msk [vmem:[#allocation2 + $0x84] sm:$0xff] %vm2295, %v2280
        %2300 = vst.msk [vmem:[#allocation2 + $0x90] sm:$0xff] %vm2295, %v2281
        %2301 = vst.msk [vmem:[#allocation2 + $0x9c] sm:$0xff] %vm2295, %v2282
        %2302 = vst.msk [vmem:[#allocation2 + $0xa8] sm:$0xff] %vm2295, %v2283
        %2303 = vst.msk [vmem:[#allocation2 + $0xb4] sm:$0xff] %vm2295, %v2284
        %vm2304 = vcmp.eq.s32.totalorder %v2013, 15
        %v2305 = vsel %vm2304, 1, 0
        %vm2306 = vcmp.eq.s32.totalorder %v2305, 1
        %vm2307 = vmpackc.low %vm2306, %vm2306
        %v2308 = vsel %vm2307, 0, %v2236
        %v2309 = vsel %vm2307, 0, %v2237
        %v2310 = vsel %vm2307, 0, %v2238
        %v2311 = vsel %vm2307, 0, %v2239
        %v2312 = vsel %vm2307, 0, %v2240
        %v2313 = vsel %vm2307, 0, %v2241
        %v2314 = vsel %vm2307, 0, %v2242
        %v2315 = vsel %vm2307, 0, %v2243
        %2324 = vrot.lane.b32.xlu0 %v2308, 17
        %v2325 = vpop.permute.xlu0 %2324
        %2326 = vrot.lane.b32.xlu0 %v2309, 17
        %v2327 = vpop.permute.xlu0 %2326
        %2328 = vrot.lane.b32.xlu0 %v2310, 17
        %v2329 = vpop.permute.xlu0 %2328
        %2330 = vrot.lane.b32.xlu0 %v2311, 17
        %v2331 = vpop.permute.xlu0 %2330
        %2332 = vrot.lane.b32.xlu0 %v2312, 17
        %v2333 = vpop.permute.xlu0 %2332
        %2334 = vrot.lane.b32.xlu0 %v2313, 17
        %v2335 = vpop.permute.xlu0 %2334
        %2336 = vrot.lane.b32.xlu0 %v2314, 17
        %v2337 = vpop.permute.xlu0 %2336
        %2338 = vrot.lane.b32.xlu0 %v2315, 17
        %v2339 = vpop.permute.xlu0 %2338
        %v2340 = vrot.slane %v2325, 4
        %v2341 = vrot.slane %v2327, 4
        %v2342 = vrot.slane %v2329, 4
        %v2343 = vrot.slane %v2331, 4
        %v2344 = vrot.slane %v2333, 4
        %v2345 = vrot.slane %v2335, 4
        %v2346 = vrot.slane %v2337, 4
        %v2347 = vrot.slane %v2339, 4
        %vm2348 = vcmask 138240
        %v2349 = vsel %vm2348, %v2340, %v2325
        %v2350 = vsel %vm2348, %v2341, %v2327
        %v2351 = vsel %vm2348, %v2342, %v2329
        %v2352 = vsel %vm2348, %v2343, %v2331
        %v2353 = vsel %vm2348, %v2344, %v2333
        %v2354 = vsel %vm2348, %v2345, %v2335
        %v2355 = vsel %vm2348, %v2346, %v2337
        %v2356 = vsel %vm2348, %v2347, %v2339
        %vm2365 = vcmask 1043592
        %vm2366 = vcmask 138244
        %vm2367 = vmor %vm2366, %vm2365
        %2368 = vst.msk [vmem:[#allocation2] sm:$0xff] %vm2367, %v2349
        %2369 = vst.msk [vmem:[#allocation2 + $0xc] sm:$0xff] %vm2367, %v2350
        %2370 = vst.msk [vmem:[#allocation2 + $0x18] sm:$0xff] %vm2367, %v2351
        %2371 = vst.msk [vmem:[#allocation2 + $0x24] sm:$0xff] %vm2367, %v2352
        %2372 = vst.msk [vmem:[#allocation2 + $0x30] sm:$0xff] %vm2367, %v2353
        %2373 = vst.msk [vmem:[#allocation2 + $0x3c] sm:$0xff] %vm2367, %v2354
        %2374 = vst.msk [vmem:[#allocation2 + $0x48] sm:$0xff] %vm2367, %v2355
        %2375 = vst.msk [vmem:[#allocation2 + $0x54] sm:$0xff] %vm2367, %v2356
        %vm2376 = vcmp.eq.s32.totalorder %v2013, 0
        %v2377 = vsel %vm2376, 1, 0
        %vm2378 = vcmp.eq.s32.totalorder %v2377, 1
        %vm2379 = vmpackc.low %vm2378, %vm2378
        %v2380 = vsel %vm2379, 0, %v2236
        %v2381 = vsel %vm2379, 0, %v2237
        %v2382 = vsel %vm2379, 0, %v2238
        %v2383 = vsel %vm2379, 0, %v2239
        %v2384 = vsel %vm2379, 0, %v2240
        %v2385 = vsel %vm2379, 0, %v2241
        %v2386 = vsel %vm2379, 0, %v2242
        %v2387 = vsel %vm2379, 0, %v2243
        %2396 = vrot.lane.b32.xlu0 %v2380, 15
        %v2397 = vpop.permute.xlu0 %2396
        %2398 = vrot.lane.b32.xlu0 %v2381, 15
        %v2399 = vpop.permute.xlu0 %2398
        %2400 = vrot.lane.b32.xlu0 %v2382, 15
        %v2401 = vpop.permute.xlu0 %2400
        %2402 = vrot.lane.b32.xlu0 %v2383, 15
        %v2403 = vpop.permute.xlu0 %2402
        %2404 = vrot.lane.b32.xlu0 %v2384, 15
        %v2405 = vpop.permute.xlu0 %2404
        %2406 = vrot.lane.b32.xlu0 %v2385, 15
        %v2407 = vpop.permute.xlu0 %2406
        %2408 = vrot.lane.b32.xlu0 %v2386, 15
        %v2409 = vpop.permute.xlu0 %2408
        %2410 = vrot.lane.b32.xlu0 %v2387, 15
        %v2411 = vpop.permute.xlu0 %2410
        %v2412 = vrot.slane %v2397, 4
        %v2413 = vrot.slane %v2399, 4
        %v2414 = vrot.slane %v2401, 4
        %v2415 = vrot.slane %v2403, 4
        %v2416 = vrot.slane %v2405, 4
        %v2417 = vrot.slane %v2407, 4
        %v2418 = vrot.slane %v2409, 4
        %v2419 = vrot.slane %v2411, 4
        %vm2420 = vcmask 121856
        %v2421 = vsel %vm2420, %v2412, %v2397
        %v2422 = vsel %vm2420, %v2413, %v2399
        %v2423 = vsel %vm2420, %v2414, %v2401
        %v2424 = vsel %vm2420, %v2415, %v2403
        %v2425 = vsel %vm2420, %v2416, %v2405
        %v2426 = vsel %vm2420, %v2417, %v2407
        %v2427 = vsel %vm2420, %v2418, %v2409
        %v2428 = vsel %vm2420, %v2419, %v2411
        %vm2437 = vcmask 1043576
        %vm2438 = vcmask 121860
        %vm2439 = vmor %vm2438, %vm2437
        %2440 = vst.msk [vmem:[#allocation2 + $0xc0] sm:$0xff] %vm2439, %v2421
        %2441 = vst.msk [vmem:[#allocation2 + $0xcc] sm:$0xff] %vm2439, %v2422
        %2442 = vst.msk [vmem:[#allocation2 + $0xd8] sm:$0xff] %vm2439, %v2423
        %2443 = vst.msk [vmem:[#allocation2 + $0xe4] sm:$0xff] %vm2439, %v2424
        %2444 = vst.msk [vmem:[#allocation2 + $0xf0] sm:$0xff] %vm2439, %v2425
        %2445 = vst.msk [vmem:[#allocation2 + $0xfc] sm:$0xff] %vm2439, %v2426
        %2446 = vst.msk [vmem:[#allocation2 + $0x108] sm:$0xff] %vm2439, %v2427
        %2447 = vst.msk [vmem:[#allocation2 + $0x114] sm:$0xff] %vm2439, %v2428
        %v2448 = vld [vmem:[%s628 + $0x4] sm:$0xf]
        %v2449 = vld [vmem:[%s628 + $0xc] sm:$0xf]
        %v2452 = vunpack.c.l.b16 %v2448
        %v2453 = vunpack.c.l.b16 %v2449
        %v2454 = vpack.c.b16 %v2453, %v2452
        %2456 = vmatpush.bf16.msra.mxu0 0
        %2457 = vmatpush.bf16.msra.mxu0 0
        %2458 = vmatpush.bf16.msra.mxu0 0
        %2459 = vmatpush.bf16.msra.mxu0 0
        %2460 = vmatpush.bf16.msra.mxu0 0
        %2461 = vmatpush.bf16.msra.mxu0 0
        %2462 = vmatpush.bf16.msra.mxu0 0
        %2463 = vmatpush.bf16.msra.mxu0 %v2454
        %2464 = vmatmul.bf16.gmra.mxu0 %v2083
        %v2465 = vpop.f32.mrf.mxu0
        %v2466 = vadd.f32 %v2019, %v2465
        %v2467 = vpop.f32.mrf.mxu0
        %v2468 = vadd.f32 %v2024, %v2467
        %2469 = vmatmul.bf16.gmra.mxu0 %v2086
        %v2470 = vpop.f32.mrf.mxu0
        %v2471 = vadd.f32 %v2029, %v2470
        %v2472 = vpop.f32.mrf.mxu0
        %v2473 = vadd.f32 %v2034, %v2472
        %2474 = vmatmul.bf16.gmra.mxu0 %v2089
        %v2475 = vpop.f32.mrf.mxu0
        %v2476 = vadd.f32 %v2039, %v2475
        %v2477 = vpop.f32.mrf.mxu0
        %v2478 = vadd.f32 %v2044, %v2477
        %2479 = vmatmul.bf16.gmra.mxu0 %v2092
        %v2480 = vpop.f32.mrf.mxu0
        %v2481 = vadd.f32 %v2049, %v2480
        %v2482 = vpop.f32.mrf.mxu0
        %v2483 = vadd.f32 %v2054, %v2482
        %2484 = vdwg.mxu0
        %vm2485 = vcmp.ge.f32.partialorder %v2466, 0.0
        %vm2486 = vcmp.ge.f32.partialorder %v2468, 0.0
        %vm2487 = vcmp.ge.f32.partialorder %v2471, 0.0
        %vm2488 = vcmp.ge.f32.partialorder %v2473, 0.0
        %vm2489 = vcmp.ge.f32.partialorder %v2476, 0.0
        %vm2490 = vcmp.ge.f32.partialorder %v2478, 0.0
        %vm2491 = vcmp.ge.f32.partialorder %v2481, 0.0
        %vm2492 = vcmp.ge.f32.partialorder %v2483, 0.0
        %v2493 = vmul.f32 %v2466, 0.1
        %v2494 = vmul.f32 %v2468, 0.1
        %v2495 = vmul.f32 %v2471, 0.1
        %v2496 = vmul.f32 %v2473, 0.1
        %v2497 = vmul.f32 %v2476, 0.1
        %v2498 = vmul.f32 %v2478, 0.1
        %v2499 = vmul.f32 %v2481, 0.1
        %v2500 = vmul.f32 %v2483, 0.1
        %v2501 = vsel %vm2485, %v2466, %v2493
        %v2502 = vsel %vm2486, %v2468, %v2494
        %v2503 = vsel %vm2487, %v2471, %v2495
        %v2504 = vsel %vm2488, %v2473, %v2496
        %v2505 = vsel %vm2489, %v2476, %v2497
        %v2506 = vsel %vm2490, %v2478, %v2498
        %v2507 = vsel %vm2491, %v2481, %v2499
        %v2508 = vsel %vm2492, %v2483, %v2500
        %v2509 = vld [vmem:[#allocation4] sm:$0xf]
        %v2510 = vld [vmem:[#allocation4 + $0x4] sm:$0xf]
        %v2511 = vld [vmem:[#allocation4 + $0x8] sm:$0xf]
        %v2512 = vld [vmem:[#allocation4 + $0xc] sm:$0xf]
        %v2513 = vld [vmem:[#allocation4 + $0x10] sm:$0xf]
        %v2514 = vld [vmem:[#allocation4 + $0x14] sm:$0xf]
        %v2515 = vld [vmem:[#allocation4 + $0x18] sm:$0xf]
        %v2516 = vld [vmem:[#allocation4 + $0x1c] sm:$0xf]
        %v2525 = vunpack.c.l.b16 %v2509
        %v2526 = vunpack.c.l.b16 %v2510
        %v2527 = vunpack.c.l.b16 %v2511
        %v2528 = vunpack.c.l.b16 %v2512
        %v2529 = vunpack.c.l.b16 %v2513
        %v2530 = vunpack.c.l.b16 %v2514
        %v2531 = vunpack.c.l.b16 %v2515
        %v2532 = vunpack.c.l.b16 %v2516
        %v2533 = vpack.c.b16 %v2526, %v2525
        %v2534 = vpack.c.b16 %v2528, %v2527
        %v2535 = vpack.c.b16 %v2530, %v2529
        %v2536 = vpack.c.b16 %v2532, %v2531
        %2537 = vrot.lane.b32.xlu0 %v2533, 96
        %v2538 = vpop.permute.xlu0 %2537
        %2539 = vrot.lane.b32.xlu0 %v2534, 96
        %v2540 = vpop.permute.xlu0 %2539
        %2541 = vrot.lane.b32.xlu0 %v2535, 96
        %v2542 = vpop.permute.xlu0 %2541
        %2543 = vrot.lane.b32.xlu0 %v2536, 96
        %v2544 = vpop.permute.xlu0 %2543
        %v2546 = vsel %vm1003, %v2538, 0
        %v2549 = vsel %vm1003, %v2540, 0
        %v2552 = vsel %vm1003, %v2542, 0
        %v2555 = vsel %vm1003, %v2544, 0
        %2557 = vmatpush.bf16.msra.mxu0 0
        %2558 = vmatpush.bf16.msra.mxu0 0
        %2559 = vmatpush.bf16.msra.mxu0 0
        %2560 = vmatpush.bf16.msra.mxu0 0
        %2561 = vmatpush.bf16.msra.mxu0 0
        %2562 = vmatpush.bf16.msra.mxu0 0
        %2563 = vmatpush.bf16.msra.mxu0 %v2184
        %2564 = vmatpush.bf16.msra.mxu0 %v2183
        %2565 = vmatmul.bf16.gmra.mxu0 %v2546
        %v2566 = vpop.f32.mrf.mxu0
        %v2567 = vadd.f32 0.0, %v2566
        %v2568 = vpop.f32.mrf.mxu0
        %v2569 = vadd.f32 0.0, %v2568
        %2570 = vmatmul.bf16.gmra.mxu0 %v2549
        %v2571 = vpop.f32.mrf.mxu0
        %v2572 = vadd.f32 0.0, %v2571
        %v2573 = vpop.f32.mrf.mxu0
        %v2574 = vadd.f32 0.0, %v2573
        %2575 = vmatmul.bf16.gmra.mxu0 %v2552
        %v2576 = vpop.f32.mrf.mxu0
        %v2577 = vadd.f32 0.0, %v2576
        %v2578 = vpop.f32.mrf.mxu0
        %v2579 = vadd.f32 0.0, %v2578
        %2580 = vmatmul.bf16.gmra.mxu0 %v2555
        %v2581 = vpop.f32.mrf.mxu0
        %v2582 = vadd.f32 0.0, %v2581
        %v2583 = vpop.f32.mrf.mxu0
        %v2584 = vadd.f32 0.0, %v2583
        %2585 = vdwg.mxu0
        %v2586 = vadd.f32 %v2501, %v2567
        %v2587 = vadd.f32 %v2502, %v2569
        %v2588 = vadd.f32 %v2503, %v2572
        %v2589 = vadd.f32 %v2504, %v2574
        %v2590 = vadd.f32 %v2505, %v2577
        %v2591 = vadd.f32 %v2506, %v2579
        %v2592 = vadd.f32 %v2507, %v2582
        %v2593 = vadd.f32 %v2508, %v2584
        %v2594 = vpack.c.bf16 %v2586, %v2586
        %v2595 = vpack.c.bf16 %v2587, %v2587
        %v2596 = vpack.c.bf16 %v2588, %v2588
        %v2597 = vpack.c.bf16 %v2589, %v2589
        %v2598 = vpack.c.bf16 %v2590, %v2590
        %v2599 = vpack.c.bf16 %v2591, %v2591
        %v2600 = vpack.c.bf16 %v2592, %v2592
        %v2601 = vpack.c.bf16 %v2593, %v2593
        %2610 = vrot.lane.b32.xlu0 %v2594, 16
        %v2611 = vpop.permute.xlu0 %2610
        %2612 = vrot.lane.b32.xlu0 %v2595, 16
        %v2613 = vpop.permute.xlu0 %2612
        %2614 = vrot.lane.b32.xlu0 %v2596, 16
        %v2615 = vpop.permute.xlu0 %2614
        %2616 = vrot.lane.b32.xlu0 %v2597, 16
        %v2617 = vpop.permute.xlu0 %2616
        %2618 = vrot.lane.b32.xlu0 %v2598, 16
        %v2619 = vpop.permute.xlu0 %2618
        %2620 = vrot.lane.b32.xlu0 %v2599, 16
        %v2621 = vpop.permute.xlu0 %2620
        %2622 = vrot.lane.b32.xlu0 %v2600, 16
        %v2623 = vpop.permute.xlu0 %2622
        %2624 = vrot.lane.b32.xlu0 %v2601, 16
        %v2625 = vpop.permute.xlu0 %2624
        %v2626 = vrot.slane %v2611, 4
        %v2627 = vrot.slane %v2613, 4
        %v2628 = vrot.slane %v2615, 4
        %v2629 = vrot.slane %v2617, 4
        %v2630 = vrot.slane %v2619, 4
        %v2631 = vrot.slane %v2621, 4
        %v2632 = vrot.slane %v2623, 4
        %v2633 = vrot.slane %v2625, 4
        %v2634 = vsel %vm2276, %v2626, %v2611
        %v2635 = vsel %vm2276, %v2627, %v2613
        %v2636 = vsel %vm2276, %v2628, %v2615
        %v2637 = vsel %vm2276, %v2629, %v2617
        %v2638 = vsel %vm2276, %v2630, %v2619
        %v2639 = vsel %vm2276, %v2631, %v2621
        %v2640 = vsel %vm2276, %v2632, %v2623
        %v2641 = vsel %vm2276, %v2633, %v2625
        %2650 = vst.msk [vmem:[#allocation2 + $0x64] sm:$0xff] %vm2295, %v2634
        %2651 = vst.msk [vmem:[#allocation2 + $0x70] sm:$0xff] %vm2295, %v2635
        %2652 = vst.msk [vmem:[#allocation2 + $0x7c] sm:$0xff] %vm2295, %v2636
        %2653 = vst.msk [vmem:[#allocation2 + $0x88] sm:$0xff] %vm2295, %v2637
        %2654 = vst.msk [vmem:[#allocation2 + $0x94] sm:$0xff] %vm2295, %v2638
        %2655 = vst.msk [vmem:[#allocation2 + $0xa0] sm:$0xff] %vm2295, %v2639
        %2656 = vst.msk [vmem:[#allocation2 + $0xac] sm:$0xff] %vm2295, %v2640
        %2657 = vst.msk [vmem:[#allocation2 + $0xb8] sm:$0xff] %vm2295, %v2641
        %v2658 = vsel %vm2307, 0, %v2594
        %v2659 = vsel %vm2307, 0, %v2595
        %v2660 = vsel %vm2307, 0, %v2596
        %v2661 = vsel %vm2307, 0, %v2597
        %v2662 = vsel %vm2307, 0, %v2598
        %v2663 = vsel %vm2307, 0, %v2599
        %v2664 = vsel %vm2307, 0, %v2600
        %v2665 = vsel %vm2307, 0, %v2601
        %2674 = vrot.lane.b32.xlu0 %v2658, 17
        %v2675 = vpop.permute.xlu0 %2674
        %2676 = vrot.lane.b32.xlu0 %v2659, 17
        %v2677 = vpop.permute.xlu0 %2676
        %2678 = vrot.lane.b32.xlu0 %v2660, 17
        %v2679 = vpop.permute.xlu0 %2678
        %2680 = vrot.lane.b32.xlu0 %v2661, 17
        %v2681 = vpop.permute.xlu0 %2680
        %2682 = vrot.lane.b32.xlu0 %v2662, 17
        %v2683 = vpop.permute.xlu0 %2682
        %2684 = vrot.lane.b32.xlu0 %v2663, 17
        %v2685 = vpop.permute.xlu0 %2684
        %2686 = vrot.lane.b32.xlu0 %v2664, 17
        %v2687 = vpop.permute.xlu0 %2686
        %2688 = vrot.lane.b32.xlu0 %v2665, 17
        %v2689 = vpop.permute.xlu0 %2688
        %v2690 = vrot.slane %v2675, 4
        %v2691 = vrot.slane %v2677, 4
        %v2692 = vrot.slane %v2679, 4
        %v2693 = vrot.slane %v2681, 4
        %v2694 = vrot.slane %v2683, 4
        %v2695 = vrot.slane %v2685, 4
        %v2696 = vrot.slane %v2687, 4
        %v2697 = vrot.slane %v2689, 4
        %v2698 = vsel %vm2348, %v2690, %v2675
        %v2699 = vsel %vm2348, %v2691, %v2677
        %v2700 = vsel %vm2348, %v2692, %v2679
        %v2701 = vsel %vm2348, %v2693, %v2681
        %v2702 = vsel %vm2348, %v2694, %v2683
        %v2703 = vsel %vm2348, %v2695, %v2685
        %v2704 = vsel %vm2348, %v2696, %v2687
        %v2705 = vsel %vm2348, %v2697, %v2689
        %2714 = vst.msk [vmem:[#allocation2 + $0x4] sm:$0xff] %vm2367, %v2698
        %2715 = vst.msk [vmem:[#allocation2 + $0x10] sm:$0xff] %vm2367, %v2699
        %2716 = vst.msk [vmem:[#allocation2 + $0x1c] sm:$0xff] %vm2367, %v2700
        %2717 = vst.msk [vmem:[#allocation2 + $0x28] sm:$0xff] %vm2367, %v2701
        %2718 = vst.msk [vmem:[#allocation2 + $0x34] sm:$0xff] %vm2367, %v2702
        %2719 = vst.msk [vmem:[#allocation2 + $0x40] sm:$0xff] %vm2367, %v2703
        %2720 = vst.msk [vmem:[#allocation2 + $0x4c] sm:$0xff] %vm2367, %v2704
        %2721 = vst.msk [vmem:[#allocation2 + $0x58] sm:$0xff] %vm2367, %v2705
        %v2722 = vsel %vm2379, 0, %v2594
        %v2723 = vsel %vm2379, 0, %v2595
        %v2724 = vsel %vm2379, 0, %v2596
        %v2725 = vsel %vm2379, 0, %v2597
        %v2726 = vsel %vm2379, 0, %v2598
        %v2727 = vsel %vm2379, 0, %v2599
        %v2728 = vsel %vm2379, 0, %v2600
        %v2729 = vsel %vm2379, 0, %v2601
        %2738 = vrot.lane.b32.xlu0 %v2722, 15
        %v2739 = vpop.permute.xlu0 %2738
        %2740 = vrot.lane.b32.xlu0 %v2723, 15
        %v2741 = vpop.permute.xlu0 %2740
        %2742 = vrot.lane.b32.xlu0 %v2724, 15
        %v2743 = vpop.permute.xlu0 %2742
        %2744 = vrot.lane.b32.xlu0 %v2725, 15
        %v2745 = vpop.permute.xlu0 %2744
        %2746 = vrot.lane.b32.xlu0 %v2726, 15
        %v2747 = vpop.permute.xlu0 %2746
        %2748 = vrot.lane.b32.xlu0 %v2727, 15
        %v2749 = vpop.permute.xlu0 %2748
        %2750 = vrot.lane.b32.xlu0 %v2728, 15
        %v2751 = vpop.permute.xlu0 %2750
        %2752 = vrot.lane.b32.xlu0 %v2729, 15
        %v2753 = vpop.permute.xlu0 %2752
        %v2754 = vrot.slane %v2739, 4
        %v2755 = vrot.slane %v2741, 4
        %v2756 = vrot.slane %v2743, 4
        %v2757 = vrot.slane %v2745, 4
        %v2758 = vrot.slane %v2747, 4
        %v2759 = vrot.slane %v2749, 4
        %v2760 = vrot.slane %v2751, 4
        %v2761 = vrot.slane %v2753, 4
        %v2762 = vsel %vm2420, %v2754, %v2739
        %v2763 = vsel %vm2420, %v2755, %v2741
        %v2764 = vsel %vm2420, %v2756, %v2743
        %v2765 = vsel %vm2420, %v2757, %v2745
        %v2766 = vsel %vm2420, %v2758, %v2747
        %v2767 = vsel %vm2420, %v2759, %v2749
        %v2768 = vsel %vm2420, %v2760, %v2751
        %v2769 = vsel %vm2420, %v2761, %v2753
        %2778 = vst.msk [vmem:[#allocation2 + $0xc4] sm:$0xff] %vm2439, %v2762
        %2779 = vst.msk [vmem:[#allocation2 + $0xd0] sm:$0xff] %vm2439, %v2763
        %2780 = vst.msk [vmem:[#allocation2 + $0xdc] sm:$0xff] %vm2439, %v2764
        %2781 = vst.msk [vmem:[#allocation2 + $0xe8] sm:$0xff] %vm2439, %v2765
        %2782 = vst.msk [vmem:[#allocation2 + $0xf4] sm:$0xff] %vm2439, %v2766
        %2783 = vst.msk [vmem:[#allocation2 + $0x100] sm:$0xff] %vm2439, %v2767
        %2784 = vst.msk [vmem:[#allocation2 + $0x10c] sm:$0xff] %vm2439, %v2768
        %2785 = vst.msk [vmem:[#allocation2 + $0x118] sm:$0xff] %vm2439, %v2769
        %v2786 = vld [vmem:[#allocation8] sm:$0xff]
        %v2787 = vld [vmem:[#allocation8 + $0x8] sm:$0xff]
        %v2788 = vld [vmem:[#allocation8 + $0x10] sm:$0xff]
        %v2789 = vld [vmem:[#allocation8 + $0x18] sm:$0xff]
        %v2790 = vld [vmem:[#allocation8 + $0x20] sm:$0xff]
        %v2791 = vld [vmem:[#allocation8 + $0x28] sm:$0xff]
        %v2792 = vld [vmem:[#allocation8 + $0x30] sm:$0xff]
        %v2793 = vld [vmem:[#allocation8 + $0x38] sm:$0xff]
        %s2794 = scalar_lea.vmem [#allocation8], 64
        %v2795 = vld [vmem:[%s2794] sm:$0xff]
        %v2796 = vld [vmem:[%s2794 + $0x8] sm:$0xff]
        %v2797 = vld [vmem:[%s2794 + $0x10] sm:$0xff]
        %v2798 = vld [vmem:[%s2794 + $0x18] sm:$0xff]
        %v2799 = vld [vmem:[%s2794 + $0x20] sm:$0xff]
        %v2800 = vld [vmem:[%s2794 + $0x28] sm:$0xff]
        %v2801 = vld [vmem:[%s2794 + $0x30] sm:$0xff]
        %v2802 = vld [vmem:[%s2794 + $0x38] sm:$0xff]
        %s2803 = scalar_lea.vmem [#allocation8], 128
        %v2804 = vld [vmem:[%s2803] sm:$0xff]
        %v2805 = vld [vmem:[%s2803 + $0x8] sm:$0xff]
        %v2806 = vld [vmem:[%s2803 + $0x10] sm:$0xff]
        %v2807 = vld [vmem:[%s2803 + $0x18] sm:$0xff]
        %v2808 = vld [vmem:[%s2803 + $0x20] sm:$0xff]
        %v2809 = vld [vmem:[%s2803 + $0x28] sm:$0xff]
        %v2810 = vld [vmem:[%s2803 + $0x30] sm:$0xff]
        %v2811 = vld [vmem:[%s2803 + $0x38] sm:$0xff]
        %v2812 = vld [vmem:[%s12] sm:$0xff]
        %v2813 = vld [vmem:[%s12 + $0x8] sm:$0xff]
        %v2814 = vld [vmem:[%s12 + $0x10] sm:$0xff]
        %v2815 = vld [vmem:[%s12 + $0x18] sm:$0xff]
        %v2816 = vld [vmem:[%s12 + $0x20] sm:$0xff]
        %v2817 = vld [vmem:[%s12 + $0x28] sm:$0xff]
        %v2818 = vld [vmem:[%s12 + $0x30] sm:$0xff]
        %v2819 = vld [vmem:[%s12 + $0x38] sm:$0xff]
        %v2820 = vld [vmem:[#allocation2] sm:$0xf]
        %v2821 = vld [vmem:[#allocation2 + $0xc] sm:$0xf]
        %v2822 = vld [vmem:[#allocation2 + $0x18] sm:$0xf]
        %v2823 = vld [vmem:[#allocation2 + $0x24] sm:$0xf]
        %v2824 = vld [vmem:[#allocation2 + $0x30] sm:$0xf]
        %v2825 = vld [vmem:[#allocation2 + $0x3c] sm:$0xf]
        %v2826 = vld [vmem:[#allocation2 + $0x48] sm:$0xf]
        %v2827 = vld [vmem:[#allocation2 + $0x54] sm:$0xf]
        %v2828 = vld [vmem:[#allocation2 + $0x60] sm:$0xf]
        %v2829 = vld [vmem:[#allocation2 + $0x6c] sm:$0xf]
        %v2830 = vld [vmem:[#allocation2 + $0x78] sm:$0xf]
        %v2831 = vld [vmem:[#allocation2 + $0x84] sm:$0xf]
        %v2832 = vld [vmem:[#allocation2 + $0x90] sm:$0xf]
        %v2833 = vld [vmem:[#allocation2 + $0x9c] sm:$0xf]
        %v2834 = vld [vmem:[#allocation2 + $0xa8] sm:$0xf]
        %v2835 = vld [vmem:[#allocation2 + $0xb4] sm:$0xf]
        %v2836 = vld [vmem:[#allocation2 + $0xc0] sm:$0xf]
        %v2837 = vld [vmem:[#allocation2 + $0xcc] sm:$0xf]
        %v2838 = vld [vmem:[#allocation2 + $0xd8] sm:$0xf]
        %v2839 = vld [vmem:[#allocation2 + $0xe4] sm:$0xf]
        %v2840 = vld [vmem:[#allocation2 + $0xf0] sm:$0xf]
        %v2841 = vld [vmem:[#allocation2 + $0xfc] sm:$0xf]
        %v2842 = vld [vmem:[#allocation2 + $0x108] sm:$0xf]
        %v2843 = vld [vmem:[#allocation2 + $0x114] sm:$0xf]
        %v2844 = vld [vmem:[#allocation2] sm:$0xff]
        %v2845 = vld [vmem:[#allocation2 + $0xc] sm:$0xff]
        %v2846 = vld [vmem:[#allocation2 + $0x18] sm:$0xff]
        %v2847 = vld [vmem:[#allocation2 + $0x24] sm:$0xff]
        %v2848 = vld [vmem:[#allocation2 + $0x30] sm:$0xff]
        %v2849 = vld [vmem:[#allocation2 + $0x3c] sm:$0xff]
        %v2850 = vld [vmem:[#allocation2 + $0x48] sm:$0xff]
        %v2851 = vld [vmem:[#allocation2 + $0x54] sm:$0xff]
        %v2852 = vld [vmem:[#allocation2 + $0x60] sm:$0xff]
        %v2853 = vld [vmem:[#allocation2 + $0x6c] sm:$0xff]
        %v2854 = vld [vmem:[#allocation2 + $0x78] sm:$0xff]
        %v2855 = vld [vmem:[#allocation2 + $0x84] sm:$0xff]
        %v2856 = vld [vmem:[#allocation2 + $0x90] sm:$0xff]
        %v2857 = vld [vmem:[#allocation2 + $0x9c] sm:$0xff]
        %v2858 = vld [vmem:[#allocation2 + $0xa8] sm:$0xff]
        %v2859 = vld [vmem:[#allocation2 + $0xb4] sm:$0xff]
        %v2860 = vld [vmem:[#allocation2 + $0xc0] sm:$0xff]
        %v2861 = vld [vmem:[#allocation2 + $0xcc] sm:$0xff]
        %v2862 = vld [vmem:[#allocation2 + $0xd8] sm:$0xff]
        %v2863 = vld [vmem:[#allocation2 + $0xe4] sm:$0xff]
        %v2864 = vld [vmem:[#allocation2 + $0xf0] sm:$0xff]
        %v2865 = vld [vmem:[#allocation2 + $0xfc] sm:$0xff]
        %v2866 = vld [vmem:[#allocation2 + $0x108] sm:$0xff]
        %v2867 = vld [vmem:[#allocation2 + $0x114] sm:$0xff]
        %v2876 = vunpack.c.l.b16 %v2795
        %v2877 = vunpack.c.h.b16 %v2795
        %v2878 = vunpack.c.l.b16 %v2796
        %v2879 = vunpack.c.h.b16 %v2796
        %v2880 = vunpack.c.l.b16 %v2797
        %v2881 = vunpack.c.h.b16 %v2797
        %v2882 = vunpack.c.l.b16 %v2798
        %v2883 = vunpack.c.h.b16 %v2798
        %v2884 = vunpack.c.l.b16 %v2799
        %v2885 = vunpack.c.h.b16 %v2799
        %v2886 = vunpack.c.l.b16 %v2800
        %v2887 = vunpack.c.h.b16 %v2800
        %v2888 = vunpack.c.l.b16 %v2801
        %v2889 = vunpack.c.h.b16 %v2801
        %v2890 = vunpack.c.l.b16 %v2802
        %v2891 = vunpack.c.h.b16 %v2802
        %v2892 = vpack.c.b16 %v2878, %v2876
        %v2893 = vpack.c.b16 %v2879, %v2877
        %v2894 = vpack.c.b16 %v2882, %v2880
        %v2895 = vpack.c.b16 %v2883, %v2881
        %v2896 = vpack.c.b16 %v2886, %v2884
        %v2897 = vpack.c.b16 %v2887, %v2885
        %v2898 = vpack.c.b16 %v2890, %v2888
        %v2899 = vpack.c.b16 %v2891, %v2889
        %v2928 = vunpack.c.l.b16 %v2844
        %v2929 = vunpack.c.h.b16 %v2844
        %v2930 = vunpack.c.l.b16 %v2845
        %v2931 = vunpack.c.h.b16 %v2845
        %v2932 = vunpack.c.l.b16 %v2846
        %v2933 = vunpack.c.h.b16 %v2846
        %v2934 = vunpack.c.l.b16 %v2847
        %v2935 = vunpack.c.h.b16 %v2847
        %v2936 = vunpack.c.l.b16 %v2848
        %v2937 = vunpack.c.h.b16 %v2848
        %v2938 = vunpack.c.l.b16 %v2849
        %v2939 = vunpack.c.h.b16 %v2849
        %v2940 = vunpack.c.l.b16 %v2850
        %v2941 = vunpack.c.h.b16 %v2850
        %v2942 = vunpack.c.l.b16 %v2851
        %v2943 = vunpack.c.h.b16 %v2851
        %v2944 = vunpack.c.l.b16 %v2852
        %v2945 = vunpack.c.h.b16 %v2852
        %v2946 = vunpack.c.l.b16 %v2853
        %v2947 = vunpack.c.h.b16 %v2853
        %v2948 = vunpack.c.l.b16 %v2854
        %v2949 = vunpack.c.h.b16 %v2854
        %v2950 = vunpack.c.l.b16 %v2855
        %v2951 = vunpack.c.h.b16 %v2855
        %v2952 = vunpack.c.l.b16 %v2856
        %v2953 = vunpack.c.h.b16 %v2856
        %v2954 = vunpack.c.l.b16 %v2857
        %v2955 = vunpack.c.h.b16 %v2857
        %v2956 = vunpack.c.l.b16 %v2858
        %v2957 = vunpack.c.h.b16 %v2858
        %v2958 = vunpack.c.l.b16 %v2859
        %v2959 = vunpack.c.h.b16 %v2859
        %v2960 = vunpack.c.l.b16 %v2860
        %v2961 = vunpack.c.h.b16 %v2860
        %v2962 = vunpack.c.l.b16 %v2861
        %v2963 = vunpack.c.h.b16 %v2861
        %v2964 = vunpack.c.l.b16 %v2862
        %v2965 = vunpack.c.h.b16 %v2862
        %v2966 = vunpack.c.l.b16 %v2863
        %v2967 = vunpack.c.h.b16 %v2863
        %v2968 = vunpack.c.l.b16 %v2864
        %v2969 = vunpack.c.h.b16 %v2864
        %v2970 = vunpack.c.l.b16 %v2865
        %v2971 = vunpack.c.h.b16 %v2865
        %v2972 = vunpack.c.l.b16 %v2866
        %v2973 = vunpack.c.h.b16 %v2866
        %v2974 = vunpack.c.l.b16 %v2867
        %v2975 = vunpack.c.h.b16 %v2867
        %v2976 = vpack.c.b16 %v2930, %v2928
        %v2977 = vpack.c.b16 %v2931, %v2929
        %v2978 = vpack.c.b16 %v2934, %v2932
        %v2979 = vpack.c.b16 %v2935, %v2933
        %v2980 = vpack.c.b16 %v2938, %v2936
        %v2981 = vpack.c.b16 %v2939, %v2937
        %v2982 = vpack.c.b16 %v2942, %v2940
        %v2983 = vpack.c.b16 %v2943, %v2941
        %v2984 = vpack.c.b16 %v2946, %v2944
        %v2985 = vpack.c.b16 %v2947, %v2945
        %v2986 = vpack.c.b16 %v2950, %v2948
        %v2987 = vpack.c.b16 %v2951, %v2949
        %v2988 = vpack.c.b16 %v2954, %v2952
        %v2989 = vpack.c.b16 %v2955, %v2953
        %v2990 = vpack.c.b16 %v2958, %v2956
        %v2991 = vpack.c.b16 %v2959, %v2957
        %v2992 = vpack.c.b16 %v2962, %v2960
        %v2993 = vpack.c.b16 %v2963, %v2961
        %v2994 = vpack.c.b16 %v2966, %v2964
        %v2995 = vpack.c.b16 %v2967, %v2965
        %v2996 = vpack.c.b16 %v2970, %v2968
        %v2997 = vpack.c.b16 %v2971, %v2969
        %v2998 = vpack.c.b16 %v2974, %v2972
        %v2999 = vpack.c.b16 %v2975, %v2973
        %3000 = vrot.lane.b32.xlu0 %v2976, 112
        %v3001 = vpop.permute.xlu0 %3000
        %3002 = vrot.lane.b32.xlu0 %v2977, 112
        %v3003 = vpop.permute.xlu0 %3002
        %3004 = vrot.lane.b32.xlu0 %v2978, 112
        %v3005 = vpop.permute.xlu0 %3004
        %3006 = vrot.lane.b32.xlu0 %v2979, 112
        %v3007 = vpop.permute.xlu0 %3006
        %3008 = vrot.lane.b32.xlu0 %v2980, 112
        %v3009 = vpop.permute.xlu0 %3008
        %3010 = vrot.lane.b32.xlu0 %v2981, 112
        %v3011 = vpop.permute.xlu0 %3010
        %3012 = vrot.lane.b32.xlu0 %v2982, 112
        %v3013 = vpop.permute.xlu0 %3012
        %3014 = vrot.lane.b32.xlu0 %v2983, 112
        %v3015 = vpop.permute.xlu0 %3014
        %3016 = vrot.lane.b32.xlu0 %v2984, 112
        %v3017 = vpop.permute.xlu0 %3016
        %3018 = vrot.lane.b32.xlu0 %v2985, 112
        %v3019 = vpop.permute.xlu0 %3018
        %3020 = vrot.lane.b32.xlu0 %v2986, 112
        %v3021 = vpop.permute.xlu0 %3020
        %3022 = vrot.lane.b32.xlu0 %v2987, 112
        %v3023 = vpop.permute.xlu0 %3022
        %3024 = vrot.lane.b32.xlu0 %v2988, 112
        %v3025 = vpop.permute.xlu0 %3024
        %3026 = vrot.lane.b32.xlu0 %v2989, 112
        %v3027 = vpop.permute.xlu0 %3026
        %3028 = vrot.lane.b32.xlu0 %v2990, 112
        %v3029 = vpop.permute.xlu0 %3028
        %3030 = vrot.lane.b32.xlu0 %v2991, 112
        %v3031 = vpop.permute.xlu0 %3030
        %3032 = vrot.lane.b32.xlu0 %v2992, 112
        %v3033 = vpop.permute.xlu0 %3032
        %3034 = vrot.lane.b32.xlu0 %v2993, 112
        %v3035 = vpop.permute.xlu0 %3034
        %3036 = vrot.lane.b32.xlu0 %v2994, 112
        %v3037 = vpop.permute.xlu0 %3036
        %3038 = vrot.lane.b32.xlu0 %v2995, 112
        %v3039 = vpop.permute.xlu0 %3038
        %3040 = vrot.lane.b32.xlu0 %v2996, 112
        %v3041 = vpop.permute.xlu0 %3040
        %3042 = vrot.lane.b32.xlu0 %v2997, 112
        %v3043 = vpop.permute.xlu0 %3042
        %3044 = vrot.lane.b32.xlu0 %v2998, 112
        %v3045 = vpop.permute.xlu0 %3044
        %3046 = vrot.lane.b32.xlu0 %v2999, 112
        %v3047 = vpop.permute.xlu0 %3046
        %vm3048 = vcmask 916480
        %v3049 = vsel %vm3048, %v3001, %v3003
        %v3050 = vsel %vm3048, %v3005, %v3007
        %v3051 = vsel %vm3048, %v3009, %v3011
        %v3052 = vsel %vm3048, %v3013, %v3015
        %v3053 = vsel %vm3048, %v3017, %v3019
        %v3054 = vsel %vm3048, %v3021, %v3023
        %v3055 = vsel %vm3048, %v3025, %v3027
        %v3056 = vsel %vm3048, %v3029, %v3031
        %v3057 = vsel %vm3048, %v3033, %v3035
        %v3058 = vsel %vm3048, %v3037, %v3039
        %v3059 = vsel %vm3048, %v3041, %v3043
        %v3060 = vsel %vm3048, %v3045, %v3047
        %v3074 = vsel %vm753, %v2893, 0
        %v3077 = vsel %vm753, %v2895, 0
        %v3080 = vsel %vm753, %v2897, 0
        %v3083 = vsel %vm753, %v2899, 0
        %3085 = vmatpush.bf16.msra.mxu0 %v3056
        %3086 = vmatpush.bf16.msra.mxu0 %v3055
        %3087 = vmatpush.bf16.msra.mxu0 %v3054
        %3088 = vmatpush.bf16.msra.mxu0 %v3053
        %3089 = vmatpush.bf16.msra.mxu0 %v3052
        %3090 = vmatpush.bf16.msra.mxu0 %v3051
        %3091 = vmatpush.bf16.msra.mxu0 %v3050
        %3092 = vmatpush.bf16.msra.mxu0 %v3049
        %3093 = vmatmul.bf16.gmra.mxu0 %v2892
        %v3094 = vpop.f32.mrf.mxu0
        %v3095 = vadd.f32 0.0, %v3094
        %v3096 = vpop.f32.mrf.mxu0
        %v3097 = vadd.f32 0.0, %v3096
        %3098 = vmatmul.bf16.gmra.mxu0 %v2894
        %v3099 = vpop.f32.mrf.mxu0
        %v3100 = vadd.f32 0.0, %v3099
        %v3101 = vpop.f32.mrf.mxu0
        %v3102 = vadd.f32 0.0, %v3101
        %3103 = vmatmul.bf16.gmra.mxu0 %v2896
        %v3104 = vpop.f32.mrf.mxu0
        %v3105 = vadd.f32 0.0, %v3104
        %v3106 = vpop.f32.mrf.mxu0
        %v3107 = vadd.f32 0.0, %v3106
        %3108 = vmatmul.bf16.gmra.mxu0 %v2898
        %v3109 = vpop.f32.mrf.mxu0
        %v3110 = vadd.f32 0.0, %v3109
        %v3111 = vpop.f32.mrf.mxu0
        %v3112 = vadd.f32 0.0, %v3111
        %3113 = vdwg.mxu0
        %3114 = vmatpush.bf16.msra.mxu0 0
        %3115 = vmatpush.bf16.msra.mxu0 0
        %3116 = vmatpush.bf16.msra.mxu0 0
        %3117 = vmatpush.bf16.msra.mxu0 0
        %3118 = vmatpush.bf16.msra.mxu0 %v3060
        %3119 = vmatpush.bf16.msra.mxu0 %v3059
        %3120 = vmatpush.bf16.msra.mxu0 %v3058
        %3121 = vmatpush.bf16.msra.mxu0 %v3057
        %3122 = vmatmul.bf16.gmra.mxu0 %v3074
        %v3123 = vpop.f32.mrf.mxu0
        %v3124 = vadd.f32 %v3095, %v3123
        %v3125 = vpop.f32.mrf.mxu0
        %v3126 = vadd.f32 %v3097, %v3125
        %3127 = vmatmul.bf16.gmra.mxu0 %v3077
        %v3128 = vpop.f32.mrf.mxu0
        %v3129 = vadd.f32 %v3100, %v3128
        %v3130 = vpop.f32.mrf.mxu0
        %v3131 = vadd.f32 %v3102, %v3130
        %3132 = vmatmul.bf16.gmra.mxu0 %v3080
        %v3133 = vpop.f32.mrf.mxu0
        %v3134 = vadd.f32 %v3105, %v3133
        %v3135 = vpop.f32.mrf.mxu0
        %v3136 = vadd.f32 %v3107, %v3135
        %3137 = vmatmul.bf16.gmra.mxu0 %v3083
        %v3138 = vpop.f32.mrf.mxu0
        %v3139 = vadd.f32 %v3110, %v3138
        %v3140 = vpop.f32.mrf.mxu0
        %v3141 = vadd.f32 %v3112, %v3140
        %3142 = vdwg.mxu0
        %v3151 = vunpack.c.l.b16 %v2786
        %v3152 = vunpack.c.h.b16 %v2786
        %v3153 = vunpack.c.l.b16 %v2787
        %v3154 = vunpack.c.h.b16 %v2787
        %v3155 = vunpack.c.l.b16 %v2788
        %v3156 = vunpack.c.h.b16 %v2788
        %v3157 = vunpack.c.l.b16 %v2789
        %v3158 = vunpack.c.h.b16 %v2789
        %v3159 = vunpack.c.l.b16 %v2790
        %v3160 = vunpack.c.h.b16 %v2790
        %v3161 = vunpack.c.l.b16 %v2791
        %v3162 = vunpack.c.h.b16 %v2791
        %v3163 = vunpack.c.l.b16 %v2792
        %v3164 = vunpack.c.h.b16 %v2792
        %v3165 = vunpack.c.l.b16 %v2793
        %v3166 = vunpack.c.h.b16 %v2793
        %v3167 = vpack.c.b16 %v3153, %v3151
        %v3168 = vpack.c.b16 %v3154, %v3152
        %v3169 = vpack.c.b16 %v3157, %v3155
        %v3170 = vpack.c.b16 %v3158, %v3156
        %v3171 = vpack.c.b16 %v3161, %v3159
        %v3172 = vpack.c.b16 %v3162, %v3160
        %v3173 = vpack.c.b16 %v3165, %v3163
        %v3174 = vpack.c.b16 %v3166, %v3164
        %v3203 = vunpack.c.l.b16 %v2820
        %v3204 = vunpack.c.l.b16 %v2821
        %v3205 = vunpack.c.l.b16 %v2822
        %v3206 = vunpack.c.l.b16 %v2823
        %v3207 = vunpack.c.l.b16 %v2824
        %v3208 = vunpack.c.l.b16 %v2825
        %v3209 = vunpack.c.l.b16 %v2826
        %v3210 = vunpack.c.l.b16 %v2827
        %v3211 = vunpack.c.l.b16 %v2828
        %v3212 = vunpack.c.l.b16 %v2829
        %v3213 = vunpack.c.l.b16 %v2830
        %v3214 = vunpack.c.l.b16 %v2831
        %v3215 = vunpack.c.l.b16 %v2832
        %v3216 = vunpack.c.l.b16 %v2833
        %v3217 = vunpack.c.l.b16 %v2834
        %v3218 = vunpack.c.l.b16 %v2835
        %v3219 = vunpack.c.l.b16 %v2836
        %v3220 = vunpack.c.l.b16 %v2837
        %v3221 = vunpack.c.l.b16 %v2838
        %v3222 = vunpack.c.l.b16 %v2839
        %v3223 = vunpack.c.l.b16 %v2840
        %v3224 = vunpack.c.l.b16 %v2841
        %v3225 = vunpack.c.l.b16 %v2842
        %v3226 = vunpack.c.l.b16 %v2843
        %v3227 = vpack.c.b16 %v3204, %v3203
        %v3228 = vpack.c.b16 %v3206, %v3205
        %v3229 = vpack.c.b16 %v3208, %v3207
        %v3230 = vpack.c.b16 %v3210, %v3209
        %v3231 = vpack.c.b16 %v3212, %v3211
        %v3232 = vpack.c.b16 %v3214, %v3213
        %v3233 = vpack.c.b16 %v3216, %v3215
        %v3234 = vpack.c.b16 %v3218, %v3217
        %v3235 = vpack.c.b16 %v3220, %v3219
        %v3236 = vpack.c.b16 %v3222, %v3221
        %v3237 = vpack.c.b16 %v3224, %v3223
        %v3238 = vpack.c.b16 %v3226, %v3225
        %v3252 = vsel %vm753, %v3168, 0
        %v3255 = vsel %vm753, %v3170, 0
        %v3258 = vsel %vm753, %v3172, 0
        %v3261 = vsel %vm753, %v3174, 0
        %3263 = vmatpush.bf16.msra.mxu0 %v3234
        %3264 = vmatpush.bf16.msra.mxu0 %v3233
        %3265 = vmatpush.bf16.msra.mxu0 %v3232
        %3266 = vmatpush.bf16.msra.mxu0 %v3231
        %3267 = vmatpush.bf16.msra.mxu0 %v3230
        %3268 = vmatpush.bf16.msra.mxu0 %v3229
        %3269 = vmatpush.bf16.msra.mxu0 %v3228
        %3270 = vmatpush.bf16.msra.mxu0 %v3227
        %3271 = vmatmul.bf16.gmra.mxu0 %v3167
        %v3272 = vpop.f32.mrf.mxu0
        %v3273 = vadd.f32 %v3124, %v3272
        %v3274 = vpop.f32.mrf.mxu0
        %v3275 = vadd.f32 %v3126, %v3274
        %3276 = vmatmul.bf16.gmra.mxu0 %v3169
        %v3277 = vpop.f32.mrf.mxu0
        %v3278 = vadd.f32 %v3129, %v3277
        %v3279 = vpop.f32.mrf.mxu0
        %v3280 = vadd.f32 %v3131, %v3279
        %3281 = vmatmul.bf16.gmra.mxu0 %v3171
        %v3282 = vpop.f32.mrf.mxu0
        %v3283 = vadd.f32 %v3134, %v3282
        %v3284 = vpop.f32.mrf.mxu0
        %v3285 = vadd.f32 %v3136, %v3284
        %3286 = vmatmul.bf16.gmra.mxu0 %v3173
        %v3287 = vpop.f32.mrf.mxu0
        %v3288 = vadd.f32 %v3139, %v3287
        %v3289 = vpop.f32.mrf.mxu0
        %v3290 = vadd.f32 %v3141, %v3289
        %3291 = vdwg.mxu0
        %3292 = vmatpush.bf16.msra.mxu0 0
        %3293 = vmatpush.bf16.msra.mxu0 0
        %3294 = vmatpush.bf16.msra.mxu0 0
        %3295 = vmatpush.bf16.msra.mxu0 0
        %3296 = vmatpush.bf16.msra.mxu0 %v3238
        %3297 = vmatpush.bf16.msra.mxu0 %v3237
        %3298 = vmatpush.bf16.msra.mxu0 %v3236
        %3299 = vmatpush.bf16.msra.mxu0 %v3235
        %3300 = vmatmul.bf16.gmra.mxu0 %v3252
        %v3301 = vpop.f32.mrf.mxu0
        %v3302 = vadd.f32 %v3273, %v3301
        %v3303 = vpop.f32.mrf.mxu0
        %v3304 = vadd.f32 %v3275, %v3303
        %3305 = vmatmul.bf16.gmra.mxu0 %v3255
        %v3306 = vpop.f32.mrf.mxu0
        %v3307 = vadd.f32 %v3278, %v3306
        %v3308 = vpop.f32.mrf.mxu0
        %v3309 = vadd.f32 %v3280, %v3308
        %3310 = vmatmul.bf16.gmra.mxu0 %v3258
        %v3311 = vpop.f32.mrf.mxu0
        %v3312 = vadd.f32 %v3283, %v3311
        %v3313 = vpop.f32.mrf.mxu0
        %v3314 = vadd.f32 %v3285, %v3313
        %3315 = vmatmul.bf16.gmra.mxu0 %v3261
        %v3316 = vpop.f32.mrf.mxu0
        %v3317 = vadd.f32 %v3288, %v3316
        %v3318 = vpop.f32.mrf.mxu0
        %v3319 = vadd.f32 %v3290, %v3318
        %3320 = vdwg.mxu0
        %v3329 = vunpack.c.l.b16 %v2804
        %v3330 = vunpack.c.h.b16 %v2804
        %v3331 = vunpack.c.l.b16 %v2805
        %v3332 = vunpack.c.h.b16 %v2805
        %v3333 = vunpack.c.l.b16 %v2806
        %v3334 = vunpack.c.h.b16 %v2806
        %v3335 = vunpack.c.l.b16 %v2807
        %v3336 = vunpack.c.h.b16 %v2807
        %v3337 = vunpack.c.l.b16 %v2808
        %v3338 = vunpack.c.h.b16 %v2808
        %v3339 = vunpack.c.l.b16 %v2809
        %v3340 = vunpack.c.h.b16 %v2809
        %v3341 = vunpack.c.l.b16 %v2810
        %v3342 = vunpack.c.h.b16 %v2810
        %v3343 = vunpack.c.l.b16 %v2811
        %v3344 = vunpack.c.h.b16 %v2811
        %v3345 = vpack.c.b16 %v3331, %v3329
        %v3346 = vpack.c.b16 %v3332, %v3330
        %v3347 = vpack.c.b16 %v3335, %v3333
        %v3348 = vpack.c.b16 %v3336, %v3334
        %v3349 = vpack.c.b16 %v3339, %v3337
        %v3350 = vpack.c.b16 %v3340, %v3338
        %v3351 = vpack.c.b16 %v3343, %v3341
        %v3352 = vpack.c.b16 %v3344, %v3342
        %3357 = vrot.lane.b32.xlu0 %v2976, 96
        %v3358 = vpop.permute.xlu0 %3357
        %3359 = vrot.lane.b32.xlu0 %v2977, 96
        %v3360 = vpop.permute.xlu0 %3359
        %3361 = vrot.lane.b32.xlu0 %v2978, 96
        %v3362 = vpop.permute.xlu0 %3361
        %3363 = vrot.lane.b32.xlu0 %v2979, 96
        %v3364 = vpop.permute.xlu0 %3363
        %3365 = vrot.lane.b32.xlu0 %v2980, 96
        %v3366 = vpop.permute.xlu0 %3365
        %3367 = vrot.lane.b32.xlu0 %v2981, 96
        %v3368 = vpop.permute.xlu0 %3367
        %3369 = vrot.lane.b32.xlu0 %v2982, 96
        %v3370 = vpop.permute.xlu0 %3369
        %3371 = vrot.lane.b32.xlu0 %v2983, 96
        %v3372 = vpop.permute.xlu0 %3371
        %3373 = vrot.lane.b32.xlu0 %v2984, 96
        %v3374 = vpop.permute.xlu0 %3373
        %3375 = vrot.lane.b32.xlu0 %v2985, 96
        %v3376 = vpop.permute.xlu0 %3375
        %3377 = vrot.lane.b32.xlu0 %v2986, 96
        %v3378 = vpop.permute.xlu0 %3377
        %3379 = vrot.lane.b32.xlu0 %v2987, 96
        %v3380 = vpop.permute.xlu0 %3379
        %3381 = vrot.lane.b32.xlu0 %v2988, 96
        %v3382 = vpop.permute.xlu0 %3381
        %3383 = vrot.lane.b32.xlu0 %v2989, 96
        %v3384 = vpop.permute.xlu0 %3383
        %3385 = vrot.lane.b32.xlu0 %v2990, 96
        %v3386 = vpop.permute.xlu0 %3385
        %3387 = vrot.lane.b32.xlu0 %v2991, 96
        %v3388 = vpop.permute.xlu0 %3387
        %3389 = vrot.lane.b32.xlu0 %v2992, 96
        %v3390 = vpop.permute.xlu0 %3389
        %3391 = vrot.lane.b32.xlu0 %v2993, 96
        %v3392 = vpop.permute.xlu0 %3391
        %3393 = vrot.lane.b32.xlu0 %v2994, 96
        %v3394 = vpop.permute.xlu0 %3393
        %3395 = vrot.lane.b32.xlu0 %v2995, 96
        %v3396 = vpop.permute.xlu0 %3395
        %3397 = vrot.lane.b32.xlu0 %v2996, 96
        %v3398 = vpop.permute.xlu0 %3397
        %3399 = vrot.lane.b32.xlu0 %v2997, 96
        %v3400 = vpop.permute.xlu0 %3399
        %3401 = vrot.lane.b32.xlu0 %v2998, 96
        %v3402 = vpop.permute.xlu0 %3401
        %3403 = vrot.lane.b32.xlu0 %v2999, 96
        %v3404 = vpop.permute.xlu0 %3403
        %vm3405 = vcmask 785408
        %v3406 = vsel %vm3405, %v3358, %v3360
        %v3407 = vsel %vm3405, %v3362, %v3364
        %v3408 = vsel %vm3405, %v3366, %v3368
        %v3409 = vsel %vm3405, %v3370, %v3372
        %v3410 = vsel %vm3405, %v3374, %v3376
        %v3411 = vsel %vm3405, %v3378, %v3380
        %v3412 = vsel %vm3405, %v3382, %v3384
        %v3413 = vsel %vm3405, %v3386, %v3388
        %v3414 = vsel %vm3405, %v3390, %v3392
        %v3415 = vsel %vm3405, %v3394, %v3396
        %v3416 = vsel %vm3405, %v3398, %v3400
        %v3417 = vsel %vm3405, %v3402, %v3404
        %v3431 = vsel %vm753, %v3346, 0
        %v3434 = vsel %vm753, %v3348, 0
        %v3437 = vsel %vm753, %v3350, 0
        %v3440 = vsel %vm753, %v3352, 0
        %3442 = vmatpush.bf16.msra.mxu0 %v3413
        %3443 = vmatpush.bf16.msra.mxu0 %v3412
        %3444 = vmatpush.bf16.msra.mxu0 %v3411
        %3445 = vmatpush.bf16.msra.mxu0 %v3410
        %3446 = vmatpush.bf16.msra.mxu0 %v3409
        %3447 = vmatpush.bf16.msra.mxu0 %v3408
        %3448 = vmatpush.bf16.msra.mxu0 %v3407
        %3449 = vmatpush.bf16.msra.mxu0 %v3406
        %3450 = vmatmul.bf16.gmra.mxu0 %v3345
        %v3451 = vpop.f32.mrf.mxu0
        %v3452 = vadd.f32 0.0, %v3451
        %v3453 = vpop.f32.mrf.mxu0
        %v3454 = vadd.f32 0.0, %v3453
        %3455 = vmatmul.bf16.gmra.mxu0 %v3347
        %v3456 = vpop.f32.mrf.mxu0
        %v3457 = vadd.f32 0.0, %v3456
        %v3458 = vpop.f32.mrf.mxu0
        %v3459 = vadd.f32 0.0, %v3458
        %3460 = vmatmul.bf16.gmra.mxu0 %v3349
        %v3461 = vpop.f32.mrf.mxu0
        %v3462 = vadd.f32 0.0, %v3461
        %v3463 = vpop.f32.mrf.mxu0
        %v3464 = vadd.f32 0.0, %v3463
        %3465 = vmatmul.bf16.gmra.mxu0 %v3351
        %v3466 = vpop.f32.mrf.mxu0
        %v3467 = vadd.f32 0.0, %v3466
        %v3468 = vpop.f32.mrf.mxu0
        %v3469 = vadd.f32 0.0, %v3468
        %3470 = vdwg.mxu0
        %3471 = vmatpush.bf16.msra.mxu0 0
        %3472 = vmatpush.bf16.msra.mxu0 0
        %3473 = vmatpush.bf16.msra.mxu0 0
        %3474 = vmatpush.bf16.msra.mxu0 0
        %3475 = vmatpush.bf16.msra.mxu0 %v3417
        %3476 = vmatpush.bf16.msra.mxu0 %v3416
        %3477 = vmatpush.bf16.msra.mxu0 %v3415
        %3478 = vmatpush.bf16.msra.mxu0 %v3414
        %3479 = vmatmul.bf16.gmra.mxu0 %v3431
        %v3480 = vpop.f32.mrf.mxu0
        %v3481 = vadd.f32 %v3452, %v3480
        %v3482 = vpop.f32.mrf.mxu0
        %v3483 = vadd.f32 %v3454, %v3482
        %3484 = vmatmul.bf16.gmra.mxu0 %v3434
        %v3485 = vpop.f32.mrf.mxu0
        %v3486 = vadd.f32 %v3457, %v3485
        %v3487 = vpop.f32.mrf.mxu0
        %v3488 = vadd.f32 %v3459, %v3487
        %3489 = vmatmul.bf16.gmra.mxu0 %v3437
        %v3490 = vpop.f32.mrf.mxu0
        %v3491 = vadd.f32 %v3462, %v3490
        %v3492 = vpop.f32.mrf.mxu0
        %v3493 = vadd.f32 %v3464, %v3492
        %3494 = vmatmul.bf16.gmra.mxu0 %v3440
        %v3495 = vpop.f32.mrf.mxu0
        %v3496 = vadd.f32 %v3467, %v3495
        %v3497 = vpop.f32.mrf.mxu0
        %v3498 = vadd.f32 %v3469, %v3497
        %3499 = vdwg.mxu0
        %v3500 = vadd.f32 %v3302, %v3481
        %v3501 = vadd.f32 %v3304, %v3483
        %v3502 = vadd.f32 %v3307, %v3486
        %v3503 = vadd.f32 %v3309, %v3488
        %v3504 = vadd.f32 %v3312, %v3491
        %v3505 = vadd.f32 %v3314, %v3493
        %v3506 = vadd.f32 %v3317, %v3496
        %v3507 = vadd.f32 %v3319, %v3498
        %3509 = vset.pattern.permute.xlu0 0
        %3510 = vperm.xlu0 %3509, %v2812
        %v3511 = vpop.permute.xlu0 %3510
        %3514 = vset.pattern.permute.xlu0 0
        %3515 = vperm.xlu0 %3514, %v2813
        %v3516 = vpop.permute.xlu0 %3515
        %3519 = vset.pattern.permute.xlu0 0
        %3520 = vperm.xlu0 %3519, %v2814
        %v3521 = vpop.permute.xlu0 %3520
        %3524 = vset.pattern.permute.xlu0 0
        %3525 = vperm.xlu0 %3524, %v2815
        %v3526 = vpop.permute.xlu0 %3525
        %3529 = vset.pattern.permute.xlu0 0
        %3530 = vperm.xlu0 %3529, %v2816
        %v3531 = vpop.permute.xlu0 %3530
        %3534 = vset.pattern.permute.xlu0 0
        %3535 = vperm.xlu0 %3534, %v2817
        %v3536 = vpop.permute.xlu0 %3535
        %3539 = vset.pattern.permute.xlu0 0
        %3540 = vperm.xlu0 %3539, %v2818
        %v3541 = vpop.permute.xlu0 %3540
        %3544 = vset.pattern.permute.xlu0 0
        %3545 = vperm.xlu0 %3544, %v2819
        %v3546 = vpop.permute.xlu0 %3545
        %v3548 = vadd.f32 %v3500, %v3511
        %v3549 = vadd.f32 %v3501, %v3516
        %v3550 = vadd.f32 %v3502, %v3521
        %v3551 = vadd.f32 %v3503, %v3526
        %v3552 = vadd.f32 %v3504, %v3531
        %v3553 = vadd.f32 %v3505, %v3536
        %v3554 = vadd.f32 %v3506, %v3541
        %v3555 = vadd.f32 %v3507, %v3546
        %vm3556 = vcmp.ge.f32.partialorder %v3548, 0.0
        %vm3557 = vcmp.ge.f32.partialorder %v3549, 0.0
        %vm3558 = vcmp.ge.f32.partialorder %v3550, 0.0
        %vm3559 = vcmp.ge.f32.partialorder %v3551, 0.0
        %vm3560 = vcmp.ge.f32.partialorder %v3552, 0.0
        %vm3561 = vcmp.ge.f32.partialorder %v3553, 0.0
        %vm3562 = vcmp.ge.f32.partialorder %v3554, 0.0
        %vm3563 = vcmp.ge.f32.partialorder %v3555, 0.0
        %v3564 = vmul.f32 %v3548, 0.1
        %v3565 = vmul.f32 %v3549, 0.1
        %v3566 = vmul.f32 %v3550, 0.1
        %v3567 = vmul.f32 %v3551, 0.1
        %v3568 = vmul.f32 %v3552, 0.1
        %v3569 = vmul.f32 %v3553, 0.1
        %v3570 = vmul.f32 %v3554, 0.1
        %v3571 = vmul.f32 %v3555, 0.1
        %v3572 = vsel %vm3556, %v3548, %v3564
        %v3573 = vsel %vm3557, %v3549, %v3565
        %v3574 = vsel %vm3558, %v3550, %v3566
        %v3575 = vsel %vm3559, %v3551, %v3567
        %v3576 = vsel %vm3560, %v3552, %v3568
        %v3577 = vsel %vm3561, %v3553, %v3569
        %v3578 = vsel %vm3562, %v3554, %v3570
        %v3579 = vsel %vm3563, %v3555, %v3571
        %3580 = vst [vmem:[%s609] sm:$0xff] %v3572
        %3581 = vst [vmem:[%s609 + $0x10] sm:$0xff] %v3573
        %3582 = vst [vmem:[%s609 + $0x20] sm:$0xff] %v3574
        %3583 = vst [vmem:[%s609 + $0x30] sm:$0xff] %v3575
        %3584 = vst [vmem:[%s609 + $0x40] sm:$0xff] %v3576
        %3585 = vst [vmem:[%s609 + $0x50] sm:$0xff] %v3577
        %3586 = vst [vmem:[%s609 + $0x60] sm:$0xff] %v3578
        %3587 = vst [vmem:[%s609 + $0x70] sm:$0xff] %v3579
        %v3588 = vld [vmem:[#allocation2 + $0x4] sm:$0xf]
        %v3589 = vld [vmem:[#allocation2 + $0x10] sm:$0xf]
        %v3590 = vld [vmem:[#allocation2 + $0x1c] sm:$0xf]
        %v3591 = vld [vmem:[#allocation2 + $0x28] sm:$0xf]
        %v3592 = vld [vmem:[#allocation2 + $0x34] sm:$0xf]
        %v3593 = vld [vmem:[#allocation2 + $0x40] sm:$0xf]
        %v3594 = vld [vmem:[#allocation2 + $0x4c] sm:$0xf]
        %v3595 = vld [vmem:[#allocation2 + $0x58] sm:$0xf]
        %v3596 = vld [vmem:[#allocation2 + $0x64] sm:$0xf]
        %v3597 = vld [vmem:[#allocation2 + $0x70] sm:$0xf]
        %v3598 = vld [vmem:[#allocation2 + $0x7c] sm:$0xf]
        %v3599 = vld [vmem:[#allocation2 + $0x88] sm:$0xf]
        %v3600 = vld [vmem:[#allocation2 + $0x94] sm:$0xf]
        %v3601 = vld [vmem:[#allocation2 + $0xa0] sm:$0xf]
        %v3602 = vld [vmem:[#allocation2 + $0xac] sm:$0xf]
        %v3603 = vld [vmem:[#allocation2 + $0xb8] sm:$0xf]
        %v3604 = vld [vmem:[#allocation2 + $0xc4] sm:$0xf]
        %v3605 = vld [vmem:[#allocation2 + $0xd0] sm:$0xf]
        %v3606 = vld [vmem:[#allocation2 + $0xdc] sm:$0xf]
        %v3607 = vld [vmem:[#allocation2 + $0xe8] sm:$0xf]
        %v3608 = vld [vmem:[#allocation2 + $0xf4] sm:$0xf]
        %v3609 = vld [vmem:[#allocation2 + $0x100] sm:$0xf]
        %v3610 = vld [vmem:[#allocation2 + $0x10c] sm:$0xf]
        %v3611 = vld [vmem:[#allocation2 + $0x118] sm:$0xf]
        %v3612 = vld [vmem:[#allocation2 + $0x4] sm:$0xff]
        %v3613 = vld [vmem:[#allocation2 + $0x10] sm:$0xff]
        %v3614 = vld [vmem:[#allocation2 + $0x1c] sm:$0xff]
        %v3615 = vld [vmem:[#allocation2 + $0x28] sm:$0xff]
        %v3616 = vld [vmem:[#allocation2 + $0x34] sm:$0xff]
        %v3617 = vld [vmem:[#allocation2 + $0x40] sm:$0xff]
        %v3618 = vld [vmem:[#allocation2 + $0x4c] sm:$0xff]
        %v3619 = vld [vmem:[#allocation2 + $0x58] sm:$0xff]
        %v3620 = vld [vmem:[#allocation2 + $0x64] sm:$0xff]
        %v3621 = vld [vmem:[#allocation2 + $0x70] sm:$0xff]
        %v3622 = vld [vmem:[#allocation2 + $0x7c] sm:$0xff]
        %v3623 = vld [vmem:[#allocation2 + $0x88] sm:$0xff]
        %v3624 = vld [vmem:[#allocation2 + $0x94] sm:$0xff]
        %v3625 = vld [vmem:[#allocation2 + $0xa0] sm:$0xff]
        %v3626 = vld [vmem:[#allocation2 + $0xac] sm:$0xff]
        %v3627 = vld [vmem:[#allocation2 + $0xb8] sm:$0xff]
        %v3628 = vld [vmem:[#allocation2 + $0xc4] sm:$0xff]
        %v3629 = vld [vmem:[#allocation2 + $0xd0] sm:$0xff]
        %v3630 = vld [vmem:[#allocation2 + $0xdc] sm:$0xff]
        %v3631 = vld [vmem:[#allocation2 + $0xe8] sm:$0xff]
        %v3632 = vld [vmem:[#allocation2 + $0xf4] sm:$0xff]
        %v3633 = vld [vmem:[#allocation2 + $0x100] sm:$0xff]
        %v3634 = vld [vmem:[#allocation2 + $0x10c] sm:$0xff]
        %v3635 = vld [vmem:[#allocation2 + $0x118] sm:$0xff]
        %v3660 = vunpack.c.l.b16 %v3612
        %v3661 = vunpack.c.h.b16 %v3612
        %v3662 = vunpack.c.l.b16 %v3613
        %v3663 = vunpack.c.h.b16 %v3613
        %v3664 = vunpack.c.l.b16 %v3614
        %v3665 = vunpack.c.h.b16 %v3614
        %v3666 = vunpack.c.l.b16 %v3615
        %v3667 = vunpack.c.h.b16 %v3615
        %v3668 = vunpack.c.l.b16 %v3616
        %v3669 = vunpack.c.h.b16 %v3616
        %v3670 = vunpack.c.l.b16 %v3617
        %v3671 = vunpack.c.h.b16 %v3617
        %v3672 = vunpack.c.l.b16 %v3618
        %v3673 = vunpack.c.h.b16 %v3618
        %v3674 = vunpack.c.l.b16 %v3619
        %v3675 = vunpack.c.h.b16 %v3619
        %v3676 = vunpack.c.l.b16 %v3620
        %v3677 = vunpack.c.h.b16 %v3620
        %v3678 = vunpack.c.l.b16 %v3621
        %v3679 = vunpack.c.h.b16 %v3621
        %v3680 = vunpack.c.l.b16 %v3622
        %v3681 = vunpack.c.h.b16 %v3622
        %v3682 = vunpack.c.l.b16 %v3623
        %v3683 = vunpack.c.h.b16 %v3623
        %v3684 = vunpack.c.l.b16 %v3624
        %v3685 = vunpack.c.h.b16 %v3624
        %v3686 = vunpack.c.l.b16 %v3625
        %v3687 = vunpack.c.h.b16 %v3625
        %v3688 = vunpack.c.l.b16 %v3626
        %v3689 = vunpack.c.h.b16 %v3626
        %v3690 = vunpack.c.l.b16 %v3627
        %v3691 = vunpack.c.h.b16 %v3627
        %v3692 = vunpack.c.l.b16 %v3628
        %v3693 = vunpack.c.h.b16 %v3628
        %v3694 = vunpack.c.l.b16 %v3629
        %v3695 = vunpack.c.h.b16 %v3629
        %v3696 = vunpack.c.l.b16 %v3630
        %v3697 = vunpack.c.h.b16 %v3630
        %v3698 = vunpack.c.l.b16 %v3631
        %v3699 = vunpack.c.h.b16 %v3631
        %v3700 = vunpack.c.l.b16 %v3632
        %v3701 = vunpack.c.h.b16 %v3632
        %v3702 = vunpack.c.l.b16 %v3633
        %v3703 = vunpack.c.h.b16 %v3633
        %v3704 = vunpack.c.l.b16 %v3634
        %v3705 = vunpack.c.h.b16 %v3634
        %v3706 = vunpack.c.l.b16 %v3635
        %v3707 = vunpack.c.h.b16 %v3635
        %v3708 = vpack.c.b16 %v3662, %v3660
        %v3709 = vpack.c.b16 %v3663, %v3661
        %v3710 = vpack.c.b16 %v3666, %v3664
        %v3711 = vpack.c.b16 %v3667, %v3665
        %v3712 = vpack.c.b16 %v3670, %v3668
        %v3713 = vpack.c.b16 %v3671, %v3669
        %v3714 = vpack.c.b16 %v3674, %v3672
        %v3715 = vpack.c.b16 %v3675, %v3673
        %v3716 = vpack.c.b16 %v3678, %v3676
        %v3717 = vpack.c.b16 %v3679, %v3677
        %v3718 = vpack.c.b16 %v3682, %v3680
        %v3719 = vpack.c.b16 %v3683, %v3681
        %v3720 = vpack.c.b16 %v3686, %v3684
        %v3721 = vpack.c.b16 %v3687, %v3685
        %v3722 = vpack.c.b16 %v3690, %v3688
        %v3723 = vpack.c.b16 %v3691, %v3689
        %v3724 = vpack.c.b16 %v3694, %v3692
        %v3725 = vpack.c.b16 %v3695, %v3693
        %v3726 = vpack.c.b16 %v3698, %v3696
        %v3727 = vpack.c.b16 %v3699, %v3697
        %v3728 = vpack.c.b16 %v3702, %v3700
        %v3729 = vpack.c.b16 %v3703, %v3701
        %v3730 = vpack.c.b16 %v3706, %v3704
        %v3731 = vpack.c.b16 %v3707, %v3705
        %3732 = vrot.lane.b32.xlu0 %v3708, 112
        %v3733 = vpop.permute.xlu0 %3732
        %3734 = vrot.lane.b32.xlu0 %v3709, 112
        %v3735 = vpop.permute.xlu0 %3734
        %3736 = vrot.lane.b32.xlu0 %v3710, 112
        %v3737 = vpop.permute.xlu0 %3736
        %3738 = vrot.lane.b32.xlu0 %v3711, 112
        %v3739 = vpop.permute.xlu0 %3738
        %3740 = vrot.lane.b32.xlu0 %v3712, 112
        %v3741 = vpop.permute.xlu0 %3740
        %3742 = vrot.lane.b32.xlu0 %v3713, 112
        %v3743 = vpop.permute.xlu0 %3742
        %3744 = vrot.lane.b32.xlu0 %v3714, 112
        %v3745 = vpop.permute.xlu0 %3744
        %3746 = vrot.lane.b32.xlu0 %v3715, 112
        %v3747 = vpop.permute.xlu0 %3746
        %3748 = vrot.lane.b32.xlu0 %v3716, 112
        %v3749 = vpop.permute.xlu0 %3748
        %3750 = vrot.lane.b32.xlu0 %v3717, 112
        %v3751 = vpop.permute.xlu0 %3750
        %3752 = vrot.lane.b32.xlu0 %v3718, 112
        %v3753 = vpop.permute.xlu0 %3752
        %3754 = vrot.lane.b32.xlu0 %v3719, 112
        %v3755 = vpop.permute.xlu0 %3754
        %3756 = vrot.lane.b32.xlu0 %v3720, 112
        %v3757 = vpop.permute.xlu0 %3756
        %3758 = vrot.lane.b32.xlu0 %v3721, 112
        %v3759 = vpop.permute.xlu0 %3758
        %3760 = vrot.lane.b32.xlu0 %v3722, 112
        %v3761 = vpop.permute.xlu0 %3760
        %3762 = vrot.lane.b32.xlu0 %v3723, 112
        %v3763 = vpop.permute.xlu0 %3762
        %3764 = vrot.lane.b32.xlu0 %v3724, 112
        %v3765 = vpop.permute.xlu0 %3764
        %3766 = vrot.lane.b32.xlu0 %v3725, 112
        %v3767 = vpop.permute.xlu0 %3766
        %3768 = vrot.lane.b32.xlu0 %v3726, 112
        %v3769 = vpop.permute.xlu0 %3768
        %3770 = vrot.lane.b32.xlu0 %v3727, 112
        %v3771 = vpop.permute.xlu0 %3770
        %3772 = vrot.lane.b32.xlu0 %v3728, 112
        %v3773 = vpop.permute.xlu0 %3772
        %3774 = vrot.lane.b32.xlu0 %v3729, 112
        %v3775 = vpop.permute.xlu0 %3774
        %3776 = vrot.lane.b32.xlu0 %v3730, 112
        %v3777 = vpop.permute.xlu0 %3776
        %3778 = vrot.lane.b32.xlu0 %v3731, 112
        %v3779 = vpop.permute.xlu0 %3778
        %v3780 = vsel %vm3048, %v3733, %v3735
        %v3781 = vsel %vm3048, %v3737, %v3739
        %v3782 = vsel %vm3048, %v3741, %v3743
        %v3783 = vsel %vm3048, %v3745, %v3747
        %v3784 = vsel %vm3048, %v3749, %v3751
        %v3785 = vsel %vm3048, %v3753, %v3755
        %v3786 = vsel %vm3048, %v3757, %v3759
        %v3787 = vsel %vm3048, %v3761, %v3763
        %v3788 = vsel %vm3048, %v3765, %v3767
        %v3789 = vsel %vm3048, %v3769, %v3771
        %v3790 = vsel %vm3048, %v3773, %v3775
        %v3791 = vsel %vm3048, %v3777, %v3779
        %3804 = vmatpush.bf16.msra.mxu0 %v3787
        %3805 = vmatpush.bf16.msra.mxu0 %v3786
        %3806 = vmatpush.bf16.msra.mxu0 %v3785
        %3807 = vmatpush.bf16.msra.mxu0 %v3784
        %3808 = vmatpush.bf16.msra.mxu0 %v3783
        %3809 = vmatpush.bf16.msra.mxu0 %v3782
        %3810 = vmatpush.bf16.msra.mxu0 %v3781
        %3811 = vmatpush.bf16.msra.mxu0 %v3780
        %3812 = vmatmul.bf16.gmra.mxu0 %v2892
        %v3813 = vpop.f32.mrf.mxu0
        %v3814 = vadd.f32 0.0, %v3813
        %v3815 = vpop.f32.mrf.mxu0
        %v3816 = vadd.f32 0.0, %v3815
        %3817 = vmatmul.bf16.gmra.mxu0 %v2894
        %v3818 = vpop.f32.mrf.mxu0
        %v3819 = vadd.f32 0.0, %v3818
        %v3820 = vpop.f32.mrf.mxu0
        %v3821 = vadd.f32 0.0, %v3820
        %3822 = vmatmul.bf16.gmra.mxu0 %v2896
        %v3823 = vpop.f32.mrf.mxu0
        %v3824 = vadd.f32 0.0, %v3823
        %v3825 = vpop.f32.mrf.mxu0
        %v3826 = vadd.f32 0.0, %v3825
        %3827 = vmatmul.bf16.gmra.mxu0 %v2898
        %v3828 = vpop.f32.mrf.mxu0
        %v3829 = vadd.f32 0.0, %v3828
        %v3830 = vpop.f32.mrf.mxu0
        %v3831 = vadd.f32 0.0, %v3830
        %3832 = vdwg.mxu0
        %3833 = vmatpush.bf16.msra.mxu0 0
        %3834 = vmatpush.bf16.msra.mxu0 0
        %3835 = vmatpush.bf16.msra.mxu0 0
        %3836 = vmatpush.bf16.msra.mxu0 0
        %3837 = vmatpush.bf16.msra.mxu0 %v3791
        %3838 = vmatpush.bf16.msra.mxu0 %v3790
        %3839 = vmatpush.bf16.msra.mxu0 %v3789
        %3840 = vmatpush.bf16.msra.mxu0 %v3788
        %3841 = vmatmul.bf16.gmra.mxu0 %v3074
        %v3842 = vpop.f32.mrf.mxu0
        %v3843 = vadd.f32 %v3814, %v3842
        %v3844 = vpop.f32.mrf.mxu0
        %v3845 = vadd.f32 %v3816, %v3844
        %3846 = vmatmul.bf16.gmra.mxu0 %v3077
        %v3847 = vpop.f32.mrf.mxu0
        %v3848 = vadd.f32 %v3819, %v3847
        %v3849 = vpop.f32.mrf.mxu0
        %v3850 = vadd.f32 %v3821, %v3849
        %3851 = vmatmul.bf16.gmra.mxu0 %v3080
        %v3852 = vpop.f32.mrf.mxu0
        %v3853 = vadd.f32 %v3824, %v3852
        %v3854 = vpop.f32.mrf.mxu0
        %v3855 = vadd.f32 %v3826, %v3854
        %3856 = vmatmul.bf16.gmra.mxu0 %v3083
        %v3857 = vpop.f32.mrf.mxu0
        %v3858 = vadd.f32 %v3829, %v3857
        %v3859 = vpop.f32.mrf.mxu0
        %v3860 = vadd.f32 %v3831, %v3859
        %3861 = vdwg.mxu0
        %v3886 = vunpack.c.l.b16 %v3588
        %v3887 = vunpack.c.l.b16 %v3589
        %v3888 = vunpack.c.l.b16 %v3590
        %v3889 = vunpack.c.l.b16 %v3591
        %v3890 = vunpack.c.l.b16 %v3592
        %v3891 = vunpack.c.l.b16 %v3593
        %v3892 = vunpack.c.l.b16 %v3594
        %v3893 = vunpack.c.l.b16 %v3595
        %v3894 = vunpack.c.l.b16 %v3596
        %v3895 = vunpack.c.l.b16 %v3597
        %v3896 = vunpack.c.l.b16 %v3598
        %v3897 = vunpack.c.l.b16 %v3599
        %v3898 = vunpack.c.l.b16 %v3600
        %v3899 = vunpack.c.l.b16 %v3601
        %v3900 = vunpack.c.l.b16 %v3602
        %v3901 = vunpack.c.l.b16 %v3603
        %v3902 = vunpack.c.l.b16 %v3604
        %v3903 = vunpack.c.l.b16 %v3605
        %v3904 = vunpack.c.l.b16 %v3606
        %v3905 = vunpack.c.l.b16 %v3607
        %v3906 = vunpack.c.l.b16 %v3608
        %v3907 = vunpack.c.l.b16 %v3609
        %v3908 = vunpack.c.l.b16 %v3610
        %v3909 = vunpack.c.l.b16 %v3611
        %v3910 = vpack.c.b16 %v3887, %v3886
        %v3911 = vpack.c.b16 %v3889, %v3888
        %v3912 = vpack.c.b16 %v3891, %v3890
        %v3913 = vpack.c.b16 %v3893, %v3892
        %v3914 = vpack.c.b16 %v3895, %v3894
        %v3915 = vpack.c.b16 %v3897, %v3896
        %v3916 = vpack.c.b16 %v3899, %v3898
        %v3917 = vpack.c.b16 %v3901, %v3900
        %v3918 = vpack.c.b16 %v3903, %v3902
        %v3919 = vpack.c.b16 %v3905, %v3904
        %v3920 = vpack.c.b16 %v3907, %v3906
        %v3921 = vpack.c.b16 %v3909, %v3908
        %3934 = vmatpush.bf16.msra.mxu0 %v3917
        %3935 = vmatpush.bf16.msra.mxu0 %v3916
        %3936 = vmatpush.bf16.msra.mxu0 %v3915
        %3937 = vmatpush.bf16.msra.mxu0 %v3914
        %3938 = vmatpush.bf16.msra.mxu0 %v3913
        %3939 = vmatpush.bf16.msra.mxu0 %v3912
        %3940 = vmatpush.bf16.msra.mxu0 %v3911
        %3941 = vmatpush.bf16.msra.mxu0 %v3910
        %3942 = vmatmul.bf16.gmra.mxu0 %v3167
        %v3943 = vpop.f32.mrf.mxu0
        %v3944 = vadd.f32 %v3843, %v3943
        %v3945 = vpop.f32.mrf.mxu0
        %v3946 = vadd.f32 %v3845, %v3945
        %3947 = vmatmul.bf16.gmra.mxu0 %v3169
        %v3948 = vpop.f32.mrf.mxu0
        %v3949 = vadd.f32 %v3848, %v3948
        %v3950 = vpop.f32.mrf.mxu0
        %v3951 = vadd.f32 %v3850, %v3950
        %3952 = vmatmul.bf16.gmra.mxu0 %v3171
        %v3953 = vpop.f32.mrf.mxu0
        %v3954 = vadd.f32 %v3853, %v3953
        %v3955 = vpop.f32.mrf.mxu0
        %v3956 = vadd.f32 %v3855, %v3955
        %3957 = vmatmul.bf16.gmra.mxu0 %v3173
        %v3958 = vpop.f32.mrf.mxu0
        %v3959 = vadd.f32 %v3858, %v3958
        %v3960 = vpop.f32.mrf.mxu0
        %v3961 = vadd.f32 %v3860, %v3960
        %3962 = vdwg.mxu0
        %3963 = vmatpush.bf16.msra.mxu0 0
        %3964 = vmatpush.bf16.msra.mxu0 0
        %3965 = vmatpush.bf16.msra.mxu0 0
        %3966 = vmatpush.bf16.msra.mxu0 0
        %3967 = vmatpush.bf16.msra.mxu0 %v3921
        %3968 = vmatpush.bf16.msra.mxu0 %v3920
        %3969 = vmatpush.bf16.msra.mxu0 %v3919
        %3970 = vmatpush.bf16.msra.mxu0 %v3918
        %3971 = vmatmul.bf16.gmra.mxu0 %v3252
        %v3972 = vpop.f32.mrf.mxu0
        %v3973 = vadd.f32 %v3944, %v3972
        %v3974 = vpop.f32.mrf.mxu0
        %v3975 = vadd.f32 %v3946, %v3974
        %3976 = vmatmul.bf16.gmra.mxu0 %v3255
        %v3977 = vpop.f32.mrf.mxu0
        %v3978 = vadd.f32 %v3949, %v3977
        %v3979 = vpop.f32.mrf.mxu0
        %v3980 = vadd.f32 %v3951, %v3979
        %3981 = vmatmul.bf16.gmra.mxu0 %v3258
        %v3982 = vpop.f32.mrf.mxu0
        %v3983 = vadd.f32 %v3954, %v3982
        %v3984 = vpop.f32.mrf.mxu0
        %v3985 = vadd.f32 %v3956, %v3984
        %3986 = vmatmul.bf16.gmra.mxu0 %v3261
        %v3987 = vpop.f32.mrf.mxu0
        %v3988 = vadd.f32 %v3959, %v3987
        %v3989 = vpop.f32.mrf.mxu0
        %v3990 = vadd.f32 %v3961, %v3989
        %3991 = vdwg.mxu0
        %3992 = vrot.lane.b32.xlu0 %v3708, 96
        %v3993 = vpop.permute.xlu0 %3992
        %3994 = vrot.lane.b32.xlu0 %v3709, 96
        %v3995 = vpop.permute.xlu0 %3994
        %3996 = vrot.lane.b32.xlu0 %v3710, 96
        %v3997 = vpop.permute.xlu0 %3996
        %3998 = vrot.lane.b32.xlu0 %v3711, 96
        %v3999 = vpop.permute.xlu0 %3998
        %4000 = vrot.lane.b32.xlu0 %v3712, 96
        %v4001 = vpop.permute.xlu0 %4000
        %4002 = vrot.lane.b32.xlu0 %v3713, 96
        %v4003 = vpop.permute.xlu0 %4002
        %4004 = vrot.lane.b32.xlu0 %v3714, 96
        %v4005 = vpop.permute.xlu0 %4004
        %4006 = vrot.lane.b32.xlu0 %v3715, 96
        %v4007 = vpop.permute.xlu0 %4006
        %4008 = vrot.lane.b32.xlu0 %v3716, 96
        %v4009 = vpop.permute.xlu0 %4008
        %4010 = vrot.lane.b32.xlu0 %v3717, 96
        %v4011 = vpop.permute.xlu0 %4010
        %4012 = vrot.lane.b32.xlu0 %v3718, 96
        %v4013 = vpop.permute.xlu0 %4012
        %4014 = vrot.lane.b32.xlu0 %v3719, 96
        %v4015 = vpop.permute.xlu0 %4014
        %4016 = vrot.lane.b32.xlu0 %v3720, 96
        %v4017 = vpop.permute.xlu0 %4016
        %4018 = vrot.lane.b32.xlu0 %v3721, 96
        %v4019 = vpop.permute.xlu0 %4018
        %4020 = vrot.lane.b32.xlu0 %v3722, 96
        %v4021 = vpop.permute.xlu0 %4020
        %4022 = vrot.lane.b32.xlu0 %v3723, 96
        %v4023 = vpop.permute.xlu0 %4022
        %4024 = vrot.lane.b32.xlu0 %v3724, 96
        %v4025 = vpop.permute.xlu0 %4024
        %4026 = vrot.lane.b32.xlu0 %v3725, 96
        %v4027 = vpop.permute.xlu0 %4026
        %4028 = vrot.lane.b32.xlu0 %v3726, 96
        %v4029 = vpop.permute.xlu0 %4028
        %4030 = vrot.lane.b32.xlu0 %v3727, 96
        %v4031 = vpop.permute.xlu0 %4030
        %4032 = vrot.lane.b32.xlu0 %v3728, 96
        %v4033 = vpop.permute.xlu0 %4032
        %4034 = vrot.lane.b32.xlu0 %v3729, 96
        %v4035 = vpop.permute.xlu0 %4034
        %4036 = vrot.lane.b32.xlu0 %v3730, 96
        %v4037 = vpop.permute.xlu0 %4036
        %4038 = vrot.lane.b32.xlu0 %v3731, 96
        %v4039 = vpop.permute.xlu0 %4038
        %v4040 = vsel %vm3405, %v3993, %v3995
        %v4041 = vsel %vm3405, %v3997, %v3999
        %v4042 = vsel %vm3405, %v4001, %v4003
        %v4043 = vsel %vm3405, %v4005, %v4007
        %v4044 = vsel %vm3405, %v4009, %v4011
        %v4045 = vsel %vm3405, %v4013, %v4015
        %v4046 = vsel %vm3405, %v4017, %v4019
        %v4047 = vsel %vm3405, %v4021, %v4023
        %v4048 = vsel %vm3405, %v4025, %v4027
        %v4049 = vsel %vm3405, %v4029, %v4031
        %v4050 = vsel %vm3405, %v4033, %v4035
        %v4051 = vsel %vm3405, %v4037, %v4039
        %4064 = vmatpush.bf16.msra.mxu0 %v4047
        %4065 = vmatpush.bf16.msra.mxu0 %v4046
        %4066 = vmatpush.bf16.msra.mxu0 %v4045
        %4067 = vmatpush.bf16.msra.mxu0 %v4044
        %4068 = vmatpush.bf16.msra.mxu0 %v4043
        %4069 = vmatpush.bf16.msra.mxu0 %v4042
        %4070 = vmatpush.bf16.msra.mxu0 %v4041
        %4071 = vmatpush.bf16.msra.mxu0 %v4040
        %4072 = vmatmul.bf16.gmra.mxu0 %v3345
        %v4073 = vpop.f32.mrf.mxu0
        %v4074 = vadd.f32 0.0, %v4073
        %v4075 = vpop.f32.mrf.mxu0
        %v4076 = vadd.f32 0.0, %v4075
        %4077 = vmatmul.bf16.gmra.mxu0 %v3347
        %v4078 = vpop.f32.mrf.mxu0
        %v4079 = vadd.f32 0.0, %v4078
        %v4080 = vpop.f32.mrf.mxu0
        %v4081 = vadd.f32 0.0, %v4080
        %4082 = vmatmul.bf16.gmra.mxu0 %v3349
        %v4083 = vpop.f32.mrf.mxu0
        %v4084 = vadd.f32 0.0, %v4083
        %v4085 = vpop.f32.mrf.mxu0
        %v4086 = vadd.f32 0.0, %v4085
        %4087 = vmatmul.bf16.gmra.mxu0 %v3351
        %v4088 = vpop.f32.mrf.mxu0
        %v4089 = vadd.f32 0.0, %v4088
        %v4090 = vpop.f32.mrf.mxu0
        %v4091 = vadd.f32 0.0, %v4090
        %4092 = vdwg.mxu0
        %4093 = vmatpush.bf16.msra.mxu0 0
        %4094 = vmatpush.bf16.msra.mxu0 0
        %4095 = vmatpush.bf16.msra.mxu0 0
        %4096 = vmatpush.bf16.msra.mxu0 0
        %4097 = vmatpush.bf16.msra.mxu0 %v4051
        %4098 = vmatpush.bf16.msra.mxu0 %v4050
        %4099 = vmatpush.bf16.msra.mxu0 %v4049
        %4100 = vmatpush.bf16.msra.mxu0 %v4048
        %4101 = vmatmul.bf16.gmra.mxu0 %v3431
        %v4102 = vpop.f32.mrf.mxu0
        %v4103 = vadd.f32 %v4074, %v4102
        %v4104 = vpop.f32.mrf.mxu0
        %v4105 = vadd.f32 %v4076, %v4104
        %4106 = vmatmul.bf16.gmra.mxu0 %v3434
        %v4107 = vpop.f32.mrf.mxu0
        %v4108 = vadd.f32 %v4079, %v4107
        %v4109 = vpop.f32.mrf.mxu0
        %v4110 = vadd.f32 %v4081, %v4109
        %4111 = vmatmul.bf16.gmra.mxu0 %v3437
        %v4112 = vpop.f32.mrf.mxu0
        %v4113 = vadd.f32 %v4084, %v4112
        %v4114 = vpop.f32.mrf.mxu0
        %v4115 = vadd.f32 %v4086, %v4114
        %4116 = vmatmul.bf16.gmra.mxu0 %v3440
        %v4117 = vpop.f32.mrf.mxu0
        %v4118 = vadd.f32 %v4089, %v4117
        %v4119 = vpop.f32.mrf.mxu0
        %v4120 = vadd.f32 %v4091, %v4119
        %4121 = vdwg.mxu0
        %v4122 = vadd.f32 %v3973, %v4103
        %v4123 = vadd.f32 %v3975, %v4105
        %v4124 = vadd.f32 %v3978, %v4108
        %v4125 = vadd.f32 %v3980, %v4110
        %v4126 = vadd.f32 %v3983, %v4113
        %v4127 = vadd.f32 %v3985, %v4115
        %v4128 = vadd.f32 %v3988, %v4118
        %v4129 = vadd.f32 %v3990, %v4120
        %v4130 = vadd.f32 %v4122, %v3511
        %v4131 = vadd.f32 %v4123, %v3516
        %v4132 = vadd.f32 %v4124, %v3521
        %v4133 = vadd.f32 %v4125, %v3526
        %v4134 = vadd.f32 %v4126, %v3531
        %v4135 = vadd.f32 %v4127, %v3536
        %v4136 = vadd.f32 %v4128, %v3541
        %v4137 = vadd.f32 %v4129, %v3546
        %vm4138 = vcmp.ge.f32.partialorder %v4130, 0.0
        %vm4139 = vcmp.ge.f32.partialorder %v4131, 0.0
        %vm4140 = vcmp.ge.f32.partialorder %v4132, 0.0
        %vm4141 = vcmp.ge.f32.partialorder %v4133, 0.0
        %vm4142 = vcmp.ge.f32.partialorder %v4134, 0.0
        %vm4143 = vcmp.ge.f32.partialorder %v4135, 0.0
        %vm4144 = vcmp.ge.f32.partialorder %v4136, 0.0
        %vm4145 = vcmp.ge.f32.partialorder %v4137, 0.0
        %v4146 = vmul.f32 %v4130, 0.1
        %v4147 = vmul.f32 %v4131, 0.1
        %v4148 = vmul.f32 %v4132, 0.1
        %v4149 = vmul.f32 %v4133, 0.1
        %v4150 = vmul.f32 %v4134, 0.1
        %v4151 = vmul.f32 %v4135, 0.1
        %v4152 = vmul.f32 %v4136, 0.1
        %v4153 = vmul.f32 %v4137, 0.1
        %v4154 = vsel %vm4138, %v4130, %v4146
        %v4155 = vsel %vm4139, %v4131, %v4147
        %v4156 = vsel %vm4140, %v4132, %v4148
        %v4157 = vsel %vm4141, %v4133, %v4149
        %v4158 = vsel %vm4142, %v4134, %v4150
        %v4159 = vsel %vm4143, %v4135, %v4151
        %v4160 = vsel %vm4144, %v4136, %v4152
        %v4161 = vsel %vm4145, %v4137, %v4153
        %4162 = vst [vmem:[%s609 + $0x8] sm:$0xff] %v4154
        %4163 = vst [vmem:[%s609 + $0x18] sm:$0xff] %v4155
        %4164 = vst [vmem:[%s609 + $0x28] sm:$0xff] %v4156
        %4165 = vst [vmem:[%s609 + $0x38] sm:$0xff] %v4157
        %4166 = vst [vmem:[%s609 + $0x48] sm:$0xff] %v4158
        %4167 = vst [vmem:[%s609 + $0x58] sm:$0xff] %v4159
        %4168 = vst [vmem:[%s609 + $0x68] sm:$0xff] %v4160
        %4169 = vst [vmem:[%s609 + $0x78] sm:$0xff] %v4161
        %s4170 = sand.u32 %s375, 1
        %s4171 = scalar_lea.sflag [#allocation7], %s4170
        %s4172 = sand.u32 %s375, 1
        %s4173 = smul.addr %s4172, 128
        %s4174 = scalar_lea.vmem [#allocation10], %s4173
        %s4175 = sand.u32 %s401, 1
        %s4176 = scalar_lea.sflag [#allocation12], %s4175
        %s4177 = sand.u32 %s401, 1
        %s4178 = smul.addr %s4177, 64
        %s4179 = scalar_lea.vmem [#allocation11], %s4178
        %p4180 = scmp.lt.s32.totalorder %s37, 1
        %s4181 = scalar_select %p4180, %s37, 1
        %s4182 = smul.addr %s4181, 8
        %s4183 = smul.addr %s4182, 8
        %s4184 = scalar_lea.vmem %s17, %s4183
        // Predicated region
        $region89: #{tpu_custom_call.1} parent=79 // pred_check
          %p4185 = pneg %p385
        $region90: #{tpu_custom_call.1} parent=79 // pred_check_branch
          %4187 = sbr.rel (%p4185) target = $region92
        $region91: #{tpu_custom_call.1} parent=79 // pred_region
          %4189 = vsyncadd %s4171, 0
          %s4190 = smul.addr %s37, 16
          %s4191 = smul.addr %s4190, 8
          %s4192 = scalar_lea.hbm %s15, %s4191
          %s4193 = sshll.u32 %s4174, 4
          %s4194 = int_to_ptr.vmem [resolvable:$true] %s4193
          %s4195 = sshll.u32 %s4192, 4
          %s4196 = int_to_ptr.hbm [resolvable:$true] %s4195
          %4201 = dma.vmem_to_hbm [thread:$0]  %s4194, 2048, %s4196, %s4171, 256, 256, 16
        $region92: #{tpu_custom_call.1} parent=79 // pred_fallthru
          _
        // Predicated region
        $region93: #{tpu_custom_call.1} parent=79 // pred_check
          %p4202 = pneg %p411
        $region94: #{tpu_custom_call.1} parent=79 // pred_check_branch
          %4204 = sbr.rel (%p4202) target = $region96
        $region95: #{tpu_custom_call.1} parent=79 // pred_region
          %4206 = vsyncadd %s4176, 0
          %s4207 = smul.addr %s37, 8
          %s4208 = smul.addr %s4207, 8
          %s4209 = scalar_lea.hbm %s16, %s4208
          %s4210 = sshll.u32 %s4179, 4
          %s4211 = int_to_ptr.vmem [resolvable:$true] %s4210
          %s4212 = sshll.u32 %s4209, 4
          %s4213 = int_to_ptr.hbm [resolvable:$true] %s4212
          %4218 = dma.vmem_to_hbm [thread:$0]  %s4211, 1024, %s4213, %s4176, 128, 128, 8
        $region96: #{tpu_custom_call.1} parent=79 // pred_fallthru
          _
        // Predicated region
        $region97: #{tpu_custom_call.1} parent=79 // pred_check
          %p4219 = pneg %p437
        $region98: #{tpu_custom_call.1} parent=79 // pred_check_branch
          %4221 = sbr.rel (%p4219) target = $region100
        $region99: #{tpu_custom_call.1} parent=79 // pred_region
          _
        $region100: #{tpu_custom_call.1} parent=79 // pred_fallthru
          _
      $region80: #{tpu_custom_call.1} parent=5 // pred_fallthru
        _
      %p4222 = scmp.le.s32.totalorder 2, %s32
      // Predicated region
      $region101: #{tpu_custom_call.1} parent=5 // pred_check
        %p4223 = pneg %p4222
      $region102: #{tpu_custom_call.1} parent=5 // pred_check_branch
        %4225 = sbr.rel (%p4223) target = $region104
      $region103: #{tpu_custom_call.1} parent=5 // pred_region
        %s4226 = ssub.s32 %s32, 2
        // Predicated region
        $region105: #{tpu_custom_call.1} parent=103 // pred_check
          %p4227 = pneg %p391
        $region106: #{tpu_custom_call.1} parent=103 // pred_check_branch
          %4229 = sbr.rel (%p4227) target = $region108
        $region107: #{tpu_custom_call.1} parent=103 // pred_region
          %s4230 = sand.u32 %s376, 1
          %s4231 = scalar_lea.sflag [#allocation7], %s4230
          %s4232 = sand.u32 %s376, 1
          %s4233 = smul.addr %s4232, 128
          %s4234 = scalar_lea.vmem [#allocation10], %s4233
          %4236 = dma.done %s4231, 2048
        $region108: #{tpu_custom_call.1} parent=103 // pred_fallthru
          _
        // Predicated region
        $region109: #{tpu_custom_call.1} parent=103 // pred_check
          %p4237 = pneg %p417
        $region110: #{tpu_custom_call.1} parent=103 // pred_check_branch
          %4239 = sbr.rel (%p4237) target = $region112
        $region111: #{tpu_custom_call.1} parent=103 // pred_region
          %s4240 = sand.u32 %s402, 1
          %s4241 = scalar_lea.sflag [#allocation12], %s4240
          %s4242 = sand.u32 %s402, 1
          %s4243 = smul.addr %s4242, 64
          %s4244 = scalar_lea.vmem [#allocation11], %s4243
          %4246 = dma.done %s4241, 1024
        $region112: #{tpu_custom_call.1} parent=103 // pred_fallthru
          _
        // Predicated region
        $region113: #{tpu_custom_call.1} parent=103 // pred_check
          %p4247 = pneg %p443
        $region114: #{tpu_custom_call.1} parent=103 // pred_check_branch
          %4249 = sbr.rel (%p4247) target = $region116
        $region115: #{tpu_custom_call.1} parent=103 // pred_region
          %p4250 = scmp.lt.s32.totalorder %s38, 1
          %s4251 = scalar_select %p4250, %s38, 1
          %s4252 = smul.addr %s4251, 8
          %s4253 = smul.addr %s4252, 8
          %s4254 = scalar_lea.vmem %s17, %s4253
        $region116: #{tpu_custom_call.1} parent=103 // pred_fallthru
          _
      $region104: #{tpu_custom_call.1} parent=5 // pred_fallthru
        _
    $region6: #{tpu_custom_call.1} parent=1 // loop_footer
      %s36 = sadd.s32 1, %s32
    $region7: #{tpu_custom_call.1} parent=1 // loop_footer_branch
      %31 = sbr.rel target = $region3
    $region8: #{tpu_custom_call.1} parent=1 // loop_exit
      _
    %4255 = vsyncpa [#allocation6], 1
    %s4256 = scalar_lea.sflag [#allocation6], 1
    %4257 = vsyncpa %s4256, 1
    %4258 = vsyncpa [#allocation9], 1
    %4259 = vsyncpa [#allocation7], 1
    %s4260 = scalar_lea.sflag [#allocation7], 1
    %4261 = vsyncpa %s4260, 1
    %4262 = vsyncpa [#allocation12], 1
    %s4263 = scalar_lea.sflag [#allocation12], 1
    %4264 = vsyncpa %s4263, 1

</llo_original>
